<compile_context>
chip_gen: v6e
topology: v6e:2x2x1
jax: 0.10.0
libtpu: 0.0.40
codegen_flags: <defaults>
</compile_context>

<pallas_src>
import numpy as np
import jax
import jax.numpy as jnp
from jax.experimental import pallas as pl
from jax.experimental.pallas import tpu as pltpu


# ----------------------------------------------------------------------------
# Discriminator config (stand-in for net_info.CONV_NETS) — exercises the conv,
# lrelu, instance-norm ('in'), fc and reduce_mean branches of conv_block.
# ----------------------------------------------------------------------------
LAYERS = [
    {"name": "conv", "in": 4, "out": 8, "k": 4, "s": 2, "p": 1},
    {"name": "lrelu", "slope": 0.2},
    {"name": "conv", "in": 8, "out": 16, "k": 4, "s": 2, "p": 1},
    {"name": "in"},
    {"name": "lrelu", "slope": 0.2},
    {"name": "conv", "in": 16, "out": 1, "k": 4, "s": 1, "p": 1},
    {"name": "fc", "in": 9, "out": 1},
    {"name": "reduce_mean"},
]

IN_EPS = 1e-5


def init_params(key):
    """DCGAN-style init_weights_netD: weights ~ N(0, 0.02), biases = 0."""
    params = []
    for cfg in LAYERS:
        if cfg["name"] == "conv":
            key, sub = jax.random.split(key)
            w = 0.02 * jax.random.normal(
                sub, (cfg["out"], cfg["in"], cfg["k"], cfg["k"]), jnp.float32)
            params.append({"w": w, "b": jnp.zeros((cfg["out"],), jnp.float32)})
        elif cfg["name"] == "fc":
            key, sub = jax.random.split(key)
            w = 0.02 * jax.random.normal(sub, (cfg["in"], cfg["out"]), jnp.float32)
            params.append({"w": w, "b": jnp.zeros((cfg["out"],), jnp.float32)})
        else:
            params.append({})
    return params


# ----------------------------------------------------------------------------
# Compile-time constants: 0/1 spatial-gather matrices (one per conv tap).
# G[t, h*W + w, oh*OW + ow] = 1  iff  (h, w) == (s*oh + i - p, s*ow + j - p);
# out-of-range taps simply have no 1 -> implicit zero padding.
# ----------------------------------------------------------------------------
def _conv_out_hw(h, w, k, s, p):
    return (h + 2 * p - k) // s + 1, (w + 2 * p - k) // s + 1


def _make_gather(h, w, k, s, p):
    oh, ow = _conv_out_hw(h, w, k, s, p)
    g = np.zeros((k * k, h * w, oh * ow), np.float32)
    for i in range(k):
        for j in range(k):
            t = i * k + j
            for r in range(oh):
                hh = s * r + i - p
                if hh < 0 or hh >= h:
                    continue
                for cc in range(ow):
                    ww = s * cc + j - p
                    if ww < 0 or ww >= w:
                        continue
                    g[t, hh * w + ww, r * ow + cc] = 1.0
    return g


# ----------------------------------------------------------------------------
# One-time packing: gather constants, batch-block-diagonal conv weights,
# static per-layer metadata, output shapes and a cost estimate.
# ----------------------------------------------------------------------------
def pack_params(params, x_shape):
    n, c, h, w = x_shape
    meta, operands, out_shapes, nchw_shapes = [], [], [], []
    flops, transcendentals = 0, 0
    for cfg, p in zip(LAYERS, params):
        name = cfg["name"]
        if name == "conv":
            cin, cout = cfg["in"], cfg["out"]
            k, s, pad = cfg["k"], cfg["s"], cfg["p"]
            assert cin == c
            oh, ow = _conv_out_hw(h, w, k, s, pad)
            msp = oh * ow
            g = jnp.asarray(_make_gather(h, w, k, s, pad))       # (k*k, H*W, OH*OW)
            # W (OC, C, KH, KW) -> per-tap (k*k, OC, C) -> block-diag over batch.
            wt = jnp.transpose(p["w"], (2, 3, 0, 1)).reshape(k * k, cout, cin)
            eye = jnp.eye(n, dtype=jnp.float32)
            wblk = jnp.einsum("nm,tij->tnimj", eye, wt).reshape(k * k, n * cout, n * cin)
            bblk = jnp.tile(p["b"], n).reshape(n * cout, 1)
            meta.append({"name": "conv", "taps": k * k, "cout": cout,
                         "msp": msp, "opidx": len(operands)})
            operands += [g, wblk, bblk]
            flops += k * k * (2 * (n * cin) * (h * w) * msp
                              + 2 * (n * cout) * (n * cin) * msp)
            out_shapes.append((n * cout, msp))
            nchw_shapes.append((n, cout, oh, ow))
            c, h, w = cout, oh, ow
        elif name == "lrelu":
            meta.append({"name": "lrelu", "slope": cfg["slope"]})
            out_shapes.append((n * c, h * w))
            nchw_shapes.append((n, c, h, w))
        elif name == "in":
            meta.append({"name": "in"})
            transcendentals += n * c
            out_shapes.append((n * c, h * w))
            nchw_shapes.append((n, c, h, w))
        elif name == "fc":
            meta.append({"name": "fc", "opidx": len(operands)})
            operands += [p["w"], p["b"].reshape(1, -1)]
            flops += 2 * n * cfg["in"] * cfg["out"]
            out_shapes.append((n, cfg["out"]))
            nchw_shapes.append(None)
        elif name == "reduce_mean":
            meta.append({"name": "reduce_mean"})
            out_shapes.append((n, 1))
            nchw_shapes.append(None)
        else:
            raise AssertionError("Error layer name = %s" % name)

    bytes_accessed = 4 * (x_shape[0] * x_shape[1] * x_shape[2] * x_shape[3]
                          + sum(int(np.prod(o.shape)) for o in operands)
                          + sum(int(np.prod(s)) for s in out_shapes))
    return {
        "meta": meta,
        "operands": operands,
        "out_shapes": out_shapes,
        "nchw_shapes": nchw_shapes,
        "batch": n,
        "x2_shape": (x_shape[0] * x_shape[1], x_shape[2] * x_shape[3]),
        "cost": pl.CostEstimate(flops=flops, transcendentals=transcendentals,
                                bytes_accessed=bytes_accessed),
    }


# ----------------------------------------------------------------------------
# Fused kernel: entire forward pass, all activations stay in VMEM.
# ----------------------------------------------------------------------------
def _make_kernel(meta, batch, n_operands):
    def kernel(*refs):
        x_ref = refs[0]
        op_refs = refs[1:1 + n_operands]
        out_refs = refs[1 + n_operands:]

        act = x_ref[...]                                  # (N*C, H*W), f32
        for li, m in enumerate(meta):
            name = m["name"]
            if name == "conv":
                g_ref = op_refs[m["opidx"]]
                wb_ref = op_refs[m["opidx"] + 1]
                bb_ref = op_refs[m["opidx"] + 2]
                acc = None
                for t in range(m["taps"]):
                    # spatial gather (stride + zero pad) then channel contraction
                    tap = jnp.dot(act, g_ref[t],
                                  preferred_element_type=jnp.float32)
                    contrib = jnp.dot(wb_ref[t], tap,
                                      preferred_element_type=jnp.float32)
                    acc = contrib if acc is None else acc + contrib
                act = acc + bb_ref[...]
            elif name == "lrelu":
                act = jnp.where(act >= 0, act, m["slope"] * act)
            elif name == "in":
                mu = jnp.mean(act, axis=-1, keepdims=True)
                cen = act - mu
                var = jnp.mean(cen * cen, axis=-1, keepdims=True)
                act = cen * jax.lax.rsqrt(var + IN_EPS)
            elif name == "fc":
                if act.shape[0] != batch:
                    # (N*C, H*W) -> (N, C*H*W): same element order as torch resize
                    act = act.reshape(batch, -1)
                w_ref = op_refs[m["opidx"]]
                b_ref = op_refs[m["opidx"] + 1]
                act = jnp.dot(act, w_ref[...],
                              preferred_element_type=jnp.float32) + b_ref[...]
            elif name == "reduce_mean":
                if act.shape[0] != batch:
                    act = act.reshape(batch, -1)
                act = jnp.mean(act, axis=-1, keepdims=True)
            out_refs[li][...] = act.astype(out_refs[li].dtype)

    return kernel


def _full_spec(shape):
    zeros = (0,) * len(shape)
    return pl.BlockSpec(shape, lambda i: zeros)


def make_discriminator(packed):
    meta = packed["meta"]
    out_shapes = packed["out_shapes"]
    nchw_shapes = packed["nchw_shapes"]
    batch = packed["batch"]
    operands = packed["operands"]
    n_operands = len(operands)

    kernel = _make_kernel(meta, batch, n_operands)
    in_specs = [_full_spec(packed["x2_shape"])] + [_full_spec(o.shape) for o in operands]
    out_specs = tuple(_full_spec(s) for s in out_shapes)

    fused = pl.pallas_call(
        kernel,
        out_shape=tuple(jax.ShapeDtypeStruct(s, jnp.float32) for s in out_shapes),
        grid=(1,),
        in_specs=in_specs,
        out_specs=out_specs,
        compiler_params=pltpu.CompilerParams(dimension_semantics=("arbitrary",)),
        cost_estimate=packed["cost"],
    )

    @jax.jit
    def forward(x, ops):
        """Mirrors Discriminator.forward: returns (final, input_list)."""
        n, c, h, w = x.shape
        x2 = x.reshape(n * c, h * w)          # pure reshape, no transpose
        outs = fused(x2, *ops)
        input_list = [x]
        for o, s4 in zip(outs, nchw_shapes):
            input_list.append(o if s4 is None else o.reshape(s4))
        return input_list[-1], input_list

    return forward


# ----------------------------------------------------------------------------
# plain-JAX reference (for in-script correctness check)
# ----------------------------------------------------------------------------
def reference_forward(x, params):
    outs = [x]
    h = x
    for cfg, p in zip(LAYERS, params):
        name = cfg["name"]
        if name == "conv":
            h = jax.lax.conv_general_dilated(
                h, p["w"], (cfg["s"], cfg["s"]),
                [(cfg["p"], cfg["p"]), (cfg["p"], cfg["p"])],
                dimension_numbers=("NCHW", "OIHW", "NCHW"))
            h = h + p["b"].reshape(1, -1, 1, 1)
        elif name == "lrelu":
            h = jnp.where(h >= 0, h, cfg["slope"] * h)
        elif name == "in":
            mu = jnp.mean(h, axis=(2, 3), keepdims=True)
            var = jnp.mean((h - mu) ** 2, axis=(2, 3), keepdims=True)
            h = (h - mu) / jnp.sqrt(var + IN_EPS)
        elif name == "fc":
            h = h.reshape(h.shape[0], -1) @ p["w"] + p["b"].reshape(1, -1)
        elif name == "reduce_mean":
            h = jnp.mean(h.reshape(h.shape[0], -1), axis=1, keepdims=True)
        outs.append(h)
    return h, outs


if __name__ == "__main__":
    key = jax.random.PRNGKey(0)
    key, xkey = jax.random.split(key)
    x = jax.random.normal(xkey, (2, 4, 16, 16), jnp.float32)  # NCHW
    params = init_params(key)

    packed = pack_params(params, x.shape)      # one-time weight/layout packing
    forward = make_discriminator(packed)

    final, input_list = forward(x, packed["operands"])
    jax.block_until_ready(final)

    ref_final, ref_list = reference_forward(x, params)
    assert final.shape == (2, 1)
    assert len(input_list) == len(LAYERS) + 1
    for got, ref in zip(input_list, ref_list):
        assert got.shape == ref.shape, (got.shape, ref.shape)
        assert bool(jnp.allclose(got, ref, atol=1e-4, rtol=1e-4)), \
            float(jnp.max(jnp.abs(got - ref)))

    print("KERNEL_OK")
</pallas_src>

<mosaic_0001>
module attributes {stable_mosaic.version = 11 : i64} {
  func.func @kernel(%arg0: i32, %arg1: memref<8x256xf32, #tpu.memory_space<vmem>>, %arg2: memref<16x256x64xf32, #tpu.memory_space<vmem>>, %arg3: memref<16x16x8xf32, #tpu.memory_space<vmem>>, %arg4: memref<16x1xf32, #tpu.memory_space<vmem>>, %arg5: memref<16x64x16xf32, #tpu.memory_space<vmem>>, %arg6: memref<16x32x16xf32, #tpu.memory_space<vmem>>, %arg7: memref<32x1xf32, #tpu.memory_space<vmem>>, %arg8: memref<16x16x9xf32, #tpu.memory_space<vmem>>, %arg9: memref<16x2x32xf32, #tpu.memory_space<vmem>>, %arg10: memref<2x1xf32, #tpu.memory_space<vmem>>, %arg11: memref<9x1xf32, #tpu.memory_space<vmem>>, %arg12: memref<1x1xf32, #tpu.memory_space<vmem>>, %arg13: memref<16x64xf32, #tpu.memory_space<vmem>>, %arg14: memref<16x64xf32, #tpu.memory_space<vmem>>, %arg15: memref<32x16xf32, #tpu.memory_space<vmem>>, %arg16: memref<32x16xf32, #tpu.memory_space<vmem>>, %arg17: memref<32x16xf32, #tpu.memory_space<vmem>>, %arg18: memref<2x9xf32, #tpu.memory_space<vmem>>, %arg19: memref<2x1xf32, #tpu.memory_space<vmem>>, %arg20: memref<2x1xf32, #tpu.memory_space<vmem>>) attributes {dimension_semantics = [#tpu.dimension_semantics<arbitrary>], iteration_bounds = array<i64: 1>, scalar_prefetch = 0 : i64, scratch_operands = 0 : i64, tpu.core_type = #tpu.core_type<tc>, window_params = [{pipeline_mode = #tpu.pipeline_mode<synchronous>, transform_indices = @transform_0, window_bounds = array<i64: 8, 256>}, {pipeline_mode = #tpu.pipeline_mode<synchronous>, transform_indices = @transform_1, window_bounds = array<i64: 16, 256, 64>}, {pipeline_mode = #tpu.pipeline_mode<synchronous>, transform_indices = @transform_2, window_bounds = array<i64: 16, 16, 8>}, {pipeline_mode = #tpu.pipeline_mode<synchronous>, transform_indices = @transform_3, window_bounds = array<i64: 16, 1>}, {pipeline_mode = #tpu.pipeline_mode<synchronous>, transform_indices = @transform_4, window_bounds = array<i64: 16, 64, 16>}, {pipeline_mode = #tpu.pipeline_mode<synchronous>, transform_indices = @transform_5, window_bounds = array<i64: 16, 32, 16>}, {pipeline_mode = #tpu.pipeline_mode<synchronous>, transform_indices = @transform_6, window_bounds = array<i64: 32, 1>}, {pipeline_mode = #tpu.pipeline_mode<synchronous>, transform_indices = @transform_7, window_bounds = array<i64: 16, 16, 9>}, {pipeline_mode = #tpu.pipeline_mode<synchronous>, transform_indices = @transform_8, window_bounds = array<i64: 16, 2, 32>}, {pipeline_mode = #tpu.pipeline_mode<synchronous>, transform_indices = @transform_9, window_bounds = array<i64: 2, 1>}, {pipeline_mode = #tpu.pipeline_mode<synchronous>, transform_indices = @transform_10, window_bounds = array<i64: 9, 1>}, {pipeline_mode = #tpu.pipeline_mode<synchronous>, transform_indices = @transform_11, window_bounds = array<i64: 1, 1>}, {pipeline_mode = #tpu.pipeline_mode<synchronous>, transform_indices = @transform_12, window_bounds = array<i64: 16, 64>}, {pipeline_mode = #tpu.pipeline_mode<synchronous>, transform_indices = @transform_13, window_bounds = array<i64: 16, 64>}, {pipeline_mode = #tpu.pipeline_mode<synchronous>, transform_indices = @transform_14, window_bounds = array<i64: 32, 16>}, {pipeline_mode = #tpu.pipeline_mode<synchronous>, transform_indices = @transform_15, window_bounds = array<i64: 32, 16>}, {pipeline_mode = #tpu.pipeline_mode<synchronous>, transform_indices = @transform_16, window_bounds = array<i64: 32, 16>}, {pipeline_mode = #tpu.pipeline_mode<synchronous>, transform_indices = @transform_17, window_bounds = array<i64: 2, 9>}, {pipeline_mode = #tpu.pipeline_mode<synchronous>, transform_indices = @transform_18, window_bounds = array<i64: 2, 1>}, {pipeline_mode = #tpu.pipeline_mode<synchronous>, transform_indices = @transform_19, window_bounds = array<i64: 2, 1>}]} {
    %c0 = arith.constant 0 : index
    %c0_0 = arith.constant 0 : index
    %0 = vector.load %arg1[%c0, %c0_0] : memref<8x256xf32, #tpu.memory_space<vmem>>, vector<8x256xf32>
    %c0_1 = arith.constant 0 : index
    %c0_2 = arith.constant 0 : index
    %c0_3 = arith.constant 0 : index
    %1 = vector.load %arg2[%c0_1, %c0_2, %c0_3] : memref<16x256x64xf32, #tpu.memory_space<vmem>>, vector<1x256x64xf32>
    %2 = vector.shape_cast %1 : vector<1x256x64xf32> to vector<256x64xf32>
    %cst = arith.constant dense<0.000000e+00> : vector<8x64xf32>
    %3 = tpu.matmul %0, %2, %cst {dimension_numbers = #tpu.dot_dimension_numbers<[1], [0], [0], [1], [0, 0, 1, 1], [], []>} : vector<8x256xf32>, vector<256x64xf32>, vector<8x64xf32> -> vector<8x64xf32>
    %c0_4 = arith.constant 0 : index
    %c0_5 = arith.constant 0 : index
    %c0_6 = arith.constant 0 : index
    %4 = vector.load %arg3[%c0_4, %c0_5, %c0_6] : memref<16x16x8xf32, #tpu.memory_space<vmem>>, vector<1x16x8xf32>
    %5 = vector.shape_cast %4 : vector<1x16x8xf32> to vector<16x8xf32>
    %cst_7 = arith.constant dense<0.000000e+00> : vector<16x64xf32>
    %6 = tpu.matmul %5, %3, %cst_7 {dimension_numbers = #tpu.dot_dimension_numbers<[1], [0], [0], [1], [0, 0, 1, 1], [], []>} : vector<16x8xf32>, vector<8x64xf32>, vector<16x64xf32> -> vector<16x64xf32>
    %c1 = arith.constant 1 : index
    %c0_8 = arith.constant 0 : index
    %c0_9 = arith.constant 0 : index
    %7 = vector.load %arg2[%c1, %c0_8, %c0_9] : memref<16x256x64xf32, #tpu.memory_space<vmem>>, vector<1x256x64xf32>
    %8 = vector.shape_cast %7 : vector<1x256x64xf32> to vector<256x64xf32>
    %cst_10 = arith.constant dense<0.000000e+00> : vector<8x64xf32>
    %9 = tpu.matmul %0, %8, %cst_10 {dimension_numbers = #tpu.dot_dimension_numbers<[1], [0], [0], [1], [0, 0, 1, 1], [], []>} : vector<8x256xf32>, vector<256x64xf32>, vector<8x64xf32> -> vector<8x64xf32>
    %c1_11 = arith.constant 1 : index
    %c0_12 = arith.constant 0 : index
    %c0_13 = arith.constant 0 : index
    %10 = vector.load %arg3[%c1_11, %c0_12, %c0_13] : memref<16x16x8xf32, #tpu.memory_space<vmem>>, vector<1x16x8xf32>
    %11 = vector.shape_cast %10 : vector<1x16x8xf32> to vector<16x8xf32>
    %cst_14 = arith.constant dense<0.000000e+00> : vector<16x64xf32>
    %12 = tpu.matmul %11, %9, %cst_14 {dimension_numbers = #tpu.dot_dimension_numbers<[1], [0], [0], [1], [0, 0, 1, 1], [], []>} : vector<16x8xf32>, vector<8x64xf32>, vector<16x64xf32> -> vector<16x64xf32>
    %13 = arith.addf %6, %12 : vector<16x64xf32>
    %c2 = arith.constant 2 : index
    %c0_15 = arith.constant 0 : index
    %c0_16 = arith.constant 0 : index
    %14 = vector.load %arg2[%c2, %c0_15, %c0_16] : memref<16x256x64xf32, #tpu.memory_space<vmem>>, vector<1x256x64xf32>
    %15 = vector.shape_cast %14 : vector<1x256x64xf32> to vector<256x64xf32>
    %cst_17 = arith.constant dense<0.000000e+00> : vector<8x64xf32>
    %16 = tpu.matmul %0, %15, %cst_17 {dimension_numbers = #tpu.dot_dimension_numbers<[1], [0], [0], [1], [0, 0, 1, 1], [], []>} : vector<8x256xf32>, vector<256x64xf32>, vector<8x64xf32> -> vector<8x64xf32>
    %c2_18 = arith.constant 2 : index
    %c0_19 = arith.constant 0 : index
    %c0_20 = arith.constant 0 : index
    %17 = vector.load %arg3[%c2_18, %c0_19, %c0_20] : memref<16x16x8xf32, #tpu.memory_space<vmem>>, vector<1x16x8xf32>
    %18 = vector.shape_cast %17 : vector<1x16x8xf32> to vector<16x8xf32>
    %cst_21 = arith.constant dense<0.000000e+00> : vector<16x64xf32>
    %19 = tpu.matmul %18, %16, %cst_21 {dimension_numbers = #tpu.dot_dimension_numbers<[1], [0], [0], [1], [0, 0, 1, 1], [], []>} : vector<16x8xf32>, vector<8x64xf32>, vector<16x64xf32> -> vector<16x64xf32>
    %20 = arith.addf %13, %19 : vector<16x64xf32>
    %c3 = arith.constant 3 : index
    %c0_22 = arith.constant 0 : index
    %c0_23 = arith.constant 0 : index
    %21 = vector.load %arg2[%c3, %c0_22, %c0_23] : memref<16x256x64xf32, #tpu.memory_space<vmem>>, vector<1x256x64xf32>
    %22 = vector.shape_cast %21 : vector<1x256x64xf32> to vector<256x64xf32>
    %cst_24 = arith.constant dense<0.000000e+00> : vector<8x64xf32>
    %23 = tpu.matmul %0, %22, %cst_24 {dimension_numbers = #tpu.dot_dimension_numbers<[1], [0], [0], [1], [0, 0, 1, 1], [], []>} : vector<8x256xf32>, vector<256x64xf32>, vector<8x64xf32> -> vector<8x64xf32>
    %c3_25 = arith.constant 3 : index
    %c0_26 = arith.constant 0 : index
    %c0_27 = arith.constant 0 : index
    %24 = vector.load %arg3[%c3_25, %c0_26, %c0_27] : memref<16x16x8xf32, #tpu.memory_space<vmem>>, vector<1x16x8xf32>
    %25 = vector.shape_cast %24 : vector<1x16x8xf32> to vector<16x8xf32>
    %cst_28 = arith.constant dense<0.000000e+00> : vector<16x64xf32>
    %26 = tpu.matmul %25, %23, %cst_28 {dimension_numbers = #tpu.dot_dimension_numbers<[1], [0], [0], [1], [0, 0, 1, 1], [], []>} : vector<16x8xf32>, vector<8x64xf32>, vector<16x64xf32> -> vector<16x64xf32>
    %27 = arith.addf %20, %26 : vector<16x64xf32>
    %c4 = arith.constant 4 : index
    %c0_29 = arith.constant 0 : index
    %c0_30 = arith.constant 0 : index
    %28 = vector.load %arg2[%c4, %c0_29, %c0_30] : memref<16x256x64xf32, #tpu.memory_space<vmem>>, vector<1x256x64xf32>
    %29 = vector.shape_cast %28 : vector<1x256x64xf32> to vector<256x64xf32>
    %cst_31 = arith.constant dense<0.000000e+00> : vector<8x64xf32>
    %30 = tpu.matmul %0, %29, %cst_31 {dimension_numbers = #tpu.dot_dimension_numbers<[1], [0], [0], [1], [0, 0, 1, 1], [], []>} : vector<8x256xf32>, vector<256x64xf32>, vector<8x64xf32> -> vector<8x64xf32>
    %c4_32 = arith.constant 4 : index
    %c0_33 = arith.constant 0 : index
    %c0_34 = arith.constant 0 : index
    %31 = vector.load %arg3[%c4_32, %c0_33, %c0_34] : memref<16x16x8xf32, #tpu.memory_space<vmem>>, vector<1x16x8xf32>
    %32 = vector.shape_cast %31 : vector<1x16x8xf32> to vector<16x8xf32>
    %cst_35 = arith.constant dense<0.000000e+00> : vector<16x64xf32>
    %33 = tpu.matmul %32, %30, %cst_35 {dimension_numbers = #tpu.dot_dimension_numbers<[1], [0], [0], [1], [0, 0, 1, 1], [], []>} : vector<16x8xf32>, vector<8x64xf32>, vector<16x64xf32> -> vector<16x64xf32>
    %34 = arith.addf %27, %33 : vector<16x64xf32>
    %c5 = arith.constant 5 : index
    %c0_36 = arith.constant 0 : index
    %c0_37 = arith.constant 0 : index
    %35 = vector.load %arg2[%c5, %c0_36, %c0_37] : memref<16x256x64xf32, #tpu.memory_space<vmem>>, vector<1x256x64xf32>
    %36 = vector.shape_cast %35 : vector<1x256x64xf32> to vector<256x64xf32>
    %cst_38 = arith.constant dense<0.000000e+00> : vector<8x64xf32>
    %37 = tpu.matmul %0, %36, %cst_38 {dimension_numbers = #tpu.dot_dimension_numbers<[1], [0], [0], [1], [0, 0, 1, 1], [], []>} : vector<8x256xf32>, vector<256x64xf32>, vector<8x64xf32> -> vector<8x64xf32>
    %c5_39 = arith.constant 5 : index
    %c0_40 = arith.constant 0 : index
    %c0_41 = arith.constant 0 : index
    %38 = vector.load %arg3[%c5_39, %c0_40, %c0_41] : memref<16x16x8xf32, #tpu.memory_space<vmem>>, vector<1x16x8xf32>
    %39 = vector.shape_cast %38 : vector<1x16x8xf32> to vector<16x8xf32>
    %cst_42 = arith.constant dense<0.000000e+00> : vector<16x64xf32>
    %40 = tpu.matmul %39, %37, %cst_42 {dimension_numbers = #tpu.dot_dimension_numbers<[1], [0], [0], [1], [0, 0, 1, 1], [], []>} : vector<16x8xf32>, vector<8x64xf32>, vector<16x64xf32> -> vector<16x64xf32>
    %41 = arith.addf %34, %40 : vector<16x64xf32>
    %c6 = arith.constant 6 : index
    %c0_43 = arith.constant 0 : index
    %c0_44 = arith.constant 0 : index
    %42 = vector.load %arg2[%c6, %c0_43, %c0_44] : memref<16x256x64xf32, #tpu.memory_space<vmem>>, vector<1x256x64xf32>
    %43 = vector.shape_cast %42 : vector<1x256x64xf32> to vector<256x64xf32>
    %cst_45 = arith.constant dense<0.000000e+00> : vector<8x64xf32>
    %44 = tpu.matmul %0, %43, %cst_45 {dimension_numbers = #tpu.dot_dimension_numbers<[1], [0], [0], [1], [0, 0, 1, 1], [], []>} : vector<8x256xf32>, vector<256x64xf32>, vector<8x64xf32> -> vector<8x64xf32>
    %c6_46 = arith.constant 6 : index
    %c0_47 = arith.constant 0 : index
    %c0_48 = arith.constant 0 : index
    %45 = vector.load %arg3[%c6_46, %c0_47, %c0_48] : memref<16x16x8xf32, #tpu.memory_space<vmem>>, vector<1x16x8xf32>
    %46 = vector.shape_cast %45 : vector<1x16x8xf32> to vector<16x8xf32>
    %cst_49 = arith.constant dense<0.000000e+00> : vector<16x64xf32>
    %47 = tpu.matmul %46, %44, %cst_49 {dimension_numbers = #tpu.dot_dimension_numbers<[1], [0], [0], [1], [0, 0, 1, 1], [], []>} : vector<16x8xf32>, vector<8x64xf32>, vector<16x64xf32> -> vector<16x64xf32>
    %48 = arith.addf %41, %47 : vector<16x64xf32>
    %c7 = arith.constant 7 : index
    %c0_50 = arith.constant 0 : index
    %c0_51 = arith.constant 0 : index
    %49 = vector.load %arg2[%c7, %c0_50, %c0_51] : memref<16x256x64xf32, #tpu.memory_space<vmem>>, vector<1x256x64xf32>
    %50 = vector.shape_cast %49 : vector<1x256x64xf32> to vector<256x64xf32>
    %cst_52 = arith.constant dense<0.000000e+00> : vector<8x64xf32>
    %51 = tpu.matmul %0, %50, %cst_52 {dimension_numbers = #tpu.dot_dimension_numbers<[1], [0], [0], [1], [0, 0, 1, 1], [], []>} : vector<8x256xf32>, vector<256x64xf32>, vector<8x64xf32> -> vector<8x64xf32>
    %c7_53 = arith.constant 7 : index
    %c0_54 = arith.constant 0 : index
    %c0_55 = arith.constant 0 : index
    %52 = vector.load %arg3[%c7_53, %c0_54, %c0_55] : memref<16x16x8xf32, #tpu.memory_space<vmem>>, vector<1x16x8xf32>
    %53 = vector.shape_cast %52 : vector<1x16x8xf32> to vector<16x8xf32>
    %cst_56 = arith.constant dense<0.000000e+00> : vector<16x64xf32>
    %54 = tpu.matmul %53, %51, %cst_56 {dimension_numbers = #tpu.dot_dimension_numbers<[1], [0], [0], [1], [0, 0, 1, 1], [], []>} : vector<16x8xf32>, vector<8x64xf32>, vector<16x64xf32> -> vector<16x64xf32>
    %55 = arith.addf %48, %54 : vector<16x64xf32>
    %c8 = arith.constant 8 : index
    %c0_57 = arith.constant 0 : index
    %c0_58 = arith.constant 0 : index
    %56 = vector.load %arg2[%c8, %c0_57, %c0_58] : memref<16x256x64xf32, #tpu.memory_space<vmem>>, vector<1x256x64xf32>
    %57 = vector.shape_cast %56 : vector<1x256x64xf32> to vector<256x64xf32>
    %cst_59 = arith.constant dense<0.000000e+00> : vector<8x64xf32>
    %58 = tpu.matmul %0, %57, %cst_59 {dimension_numbers = #tpu.dot_dimension_numbers<[1], [0], [0], [1], [0, 0, 1, 1], [], []>} : vector<8x256xf32>, vector<256x64xf32>, vector<8x64xf32> -> vector<8x64xf32>
    %c8_60 = arith.constant 8 : index
    %c0_61 = arith.constant 0 : index
    %c0_62 = arith.constant 0 : index
    %59 = vector.load %arg3[%c8_60, %c0_61, %c0_62] : memref<16x16x8xf32, #tpu.memory_space<vmem>>, vector<1x16x8xf32>
    %60 = vector.shape_cast %59 : vector<1x16x8xf32> to vector<16x8xf32>
    %cst_63 = arith.constant dense<0.000000e+00> : vector<16x64xf32>
    %61 = tpu.matmul %60, %58, %cst_63 {dimension_numbers = #tpu.dot_dimension_numbers<[1], [0], [0], [1], [0, 0, 1, 1], [], []>} : vector<16x8xf32>, vector<8x64xf32>, vector<16x64xf32> -> vector<16x64xf32>
    %62 = arith.addf %55, %61 : vector<16x64xf32>
    %c9 = arith.constant 9 : index
    %c0_64 = arith.constant 0 : index
    %c0_65 = arith.constant 0 : index
    %63 = vector.load %arg2[%c9, %c0_64, %c0_65] : memref<16x256x64xf32, #tpu.memory_space<vmem>>, vector<1x256x64xf32>
    %64 = vector.shape_cast %63 : vector<1x256x64xf32> to vector<256x64xf32>
    %cst_66 = arith.constant dense<0.000000e+00> : vector<8x64xf32>
    %65 = tpu.matmul %0, %64, %cst_66 {dimension_numbers = #tpu.dot_dimension_numbers<[1], [0], [0], [1], [0, 0, 1, 1], [], []>} : vector<8x256xf32>, vector<256x64xf32>, vector<8x64xf32> -> vector<8x64xf32>
    %c9_67 = arith.constant 9 : index
    %c0_68 = arith.constant 0 : index
    %c0_69 = arith.constant 0 : index
    %66 = vector.load %arg3[%c9_67, %c0_68, %c0_69] : memref<16x16x8xf32, #tpu.memory_space<vmem>>, vector<1x16x8xf32>
    %67 = vector.shape_cast %66 : vector<1x16x8xf32> to vector<16x8xf32>
    %cst_70 = arith.constant dense<0.000000e+00> : vector<16x64xf32>
    %68 = tpu.matmul %67, %65, %cst_70 {dimension_numbers = #tpu.dot_dimension_numbers<[1], [0], [0], [1], [0, 0, 1, 1], [], []>} : vector<16x8xf32>, vector<8x64xf32>, vector<16x64xf32> -> vector<16x64xf32>
    %69 = arith.addf %62, %68 : vector<16x64xf32>
    %c10 = arith.constant 10 : index
    %c0_71 = arith.constant 0 : index
    %c0_72 = arith.constant 0 : index
    %70 = vector.load %arg2[%c10, %c0_71, %c0_72] : memref<16x256x64xf32, #tpu.memory_space<vmem>>, vector<1x256x64xf32>
    %71 = vector.shape_cast %70 : vector<1x256x64xf32> to vector<256x64xf32>
    %cst_73 = arith.constant dense<0.000000e+00> : vector<8x64xf32>
    %72 = tpu.matmul %0, %71, %cst_73 {dimension_numbers = #tpu.dot_dimension_numbers<[1], [0], [0], [1], [0, 0, 1, 1], [], []>} : vector<8x256xf32>, vector<256x64xf32>, vector<8x64xf32> -> vector<8x64xf32>
    %c10_74 = arith.constant 10 : index
    %c0_75 = arith.constant 0 : index
    %c0_76 = arith.constant 0 : index
    %73 = vector.load %arg3[%c10_74, %c0_75, %c0_76] : memref<16x16x8xf32, #tpu.memory_space<vmem>>, vector<1x16x8xf32>
    %74 = vector.shape_cast %73 : vector<1x16x8xf32> to vector<16x8xf32>
    %cst_77 = arith.constant dense<0.000000e+00> : vector<16x64xf32>
    %75 = tpu.matmul %74, %72, %cst_77 {dimension_numbers = #tpu.dot_dimension_numbers<[1], [0], [0], [1], [0, 0, 1, 1], [], []>} : vector<16x8xf32>, vector<8x64xf32>, vector<16x64xf32> -> vector<16x64xf32>
    %76 = arith.addf %69, %75 : vector<16x64xf32>
    %c11 = arith.constant 11 : index
    %c0_78 = arith.constant 0 : index
    %c0_79 = arith.constant 0 : index
    %77 = vector.load %arg2[%c11, %c0_78, %c0_79] : memref<16x256x64xf32, #tpu.memory_space<vmem>>, vector<1x256x64xf32>
    %78 = vector.shape_cast %77 : vector<1x256x64xf32> to vector<256x64xf32>
    %cst_80 = arith.constant dense<0.000000e+00> : vector<8x64xf32>
    %79 = tpu.matmul %0, %78, %cst_80 {dimension_numbers = #tpu.dot_dimension_numbers<[1], [0], [0], [1], [0, 0, 1, 1], [], []>} : vector<8x256xf32>, vector<256x64xf32>, vector<8x64xf32> -> vector<8x64xf32>
    %c11_81 = arith.constant 11 : index
    %c0_82 = arith.constant 0 : index
    %c0_83 = arith.constant 0 : index
    %80 = vector.load %arg3[%c11_81, %c0_82, %c0_83] : memref<16x16x8xf32, #tpu.memory_space<vmem>>, vector<1x16x8xf32>
    %81 = vector.shape_cast %80 : vector<1x16x8xf32> to vector<16x8xf32>
    %cst_84 = arith.constant dense<0.000000e+00> : vector<16x64xf32>
    %82 = tpu.matmul %81, %79, %cst_84 {dimension_numbers = #tpu.dot_dimension_numbers<[1], [0], [0], [1], [0, 0, 1, 1], [], []>} : vector<16x8xf32>, vector<8x64xf32>, vector<16x64xf32> -> vector<16x64xf32>
    %83 = arith.addf %76, %82 : vector<16x64xf32>
    %c12 = arith.constant 12 : index
    %c0_85 = arith.constant 0 : index
    %c0_86 = arith.constant 0 : index
    %84 = vector.load %arg2[%c12, %c0_85, %c0_86] : memref<16x256x64xf32, #tpu.memory_space<vmem>>, vector<1x256x64xf32>
    %85 = vector.shape_cast %84 : vector<1x256x64xf32> to vector<256x64xf32>
    %cst_87 = arith.constant dense<0.000000e+00> : vector<8x64xf32>
    %86 = tpu.matmul %0, %85, %cst_87 {dimension_numbers = #tpu.dot_dimension_numbers<[1], [0], [0], [1], [0, 0, 1, 1], [], []>} : vector<8x256xf32>, vector<256x64xf32>, vector<8x64xf32> -> vector<8x64xf32>
    %c12_88 = arith.constant 12 : index
    %c0_89 = arith.constant 0 : index
    %c0_90 = arith.constant 0 : index
    %87 = vector.load %arg3[%c12_88, %c0_89, %c0_90] : memref<16x16x8xf32, #tpu.memory_space<vmem>>, vector<1x16x8xf32>
    %88 = vector.shape_cast %87 : vector<1x16x8xf32> to vector<16x8xf32>
    %cst_91 = arith.constant dense<0.000000e+00> : vector<16x64xf32>
    %89 = tpu.matmul %88, %86, %cst_91 {dimension_numbers = #tpu.dot_dimension_numbers<[1], [0], [0], [1], [0, 0, 1, 1], [], []>} : vector<16x8xf32>, vector<8x64xf32>, vector<16x64xf32> -> vector<16x64xf32>
    %90 = arith.addf %83, %89 : vector<16x64xf32>
    %c13 = arith.constant 13 : index
    %c0_92 = arith.constant 0 : index
    %c0_93 = arith.constant 0 : index
    %91 = vector.load %arg2[%c13, %c0_92, %c0_93] : memref<16x256x64xf32, #tpu.memory_space<vmem>>, vector<1x256x64xf32>
    %92 = vector.shape_cast %91 : vector<1x256x64xf32> to vector<256x64xf32>
    %cst_94 = arith.constant dense<0.000000e+00> : vector<8x64xf32>
    %93 = tpu.matmul %0, %92, %cst_94 {dimension_numbers = #tpu.dot_dimension_numbers<[1], [0], [0], [1], [0, 0, 1, 1], [], []>} : vector<8x256xf32>, vector<256x64xf32>, vector<8x64xf32> -> vector<8x64xf32>
    %c13_95 = arith.constant 13 : index
    %c0_96 = arith.constant 0 : index
    %c0_97 = arith.constant 0 : index
    %94 = vector.load %arg3[%c13_95, %c0_96, %c0_97] : memref<16x16x8xf32, #tpu.memory_space<vmem>>, vector<1x16x8xf32>
    %95 = vector.shape_cast %94 : vector<1x16x8xf32> to vector<16x8xf32>
    %cst_98 = arith.constant dense<0.000000e+00> : vector<16x64xf32>
    %96 = tpu.matmul %95, %93, %cst_98 {dimension_numbers = #tpu.dot_dimension_numbers<[1], [0], [0], [1], [0, 0, 1, 1], [], []>} : vector<16x8xf32>, vector<8x64xf32>, vector<16x64xf32> -> vector<16x64xf32>
    %97 = arith.addf %90, %96 : vector<16x64xf32>
    %c14 = arith.constant 14 : index
    %c0_99 = arith.constant 0 : index
    %c0_100 = arith.constant 0 : index
    %98 = vector.load %arg2[%c14, %c0_99, %c0_100] : memref<16x256x64xf32, #tpu.memory_space<vmem>>, vector<1x256x64xf32>
    %99 = vector.shape_cast %98 : vector<1x256x64xf32> to vector<256x64xf32>
    %cst_101 = arith.constant dense<0.000000e+00> : vector<8x64xf32>
    %100 = tpu.matmul %0, %99, %cst_101 {dimension_numbers = #tpu.dot_dimension_numbers<[1], [0], [0], [1], [0, 0, 1, 1], [], []>} : vector<8x256xf32>, vector<256x64xf32>, vector<8x64xf32> -> vector<8x64xf32>
    %c14_102 = arith.constant 14 : index
    %c0_103 = arith.constant 0 : index
    %c0_104 = arith.constant 0 : index
    %101 = vector.load %arg3[%c14_102, %c0_103, %c0_104] : memref<16x16x8xf32, #tpu.memory_space<vmem>>, vector<1x16x8xf32>
    %102 = vector.shape_cast %101 : vector<1x16x8xf32> to vector<16x8xf32>
    %cst_105 = arith.constant dense<0.000000e+00> : vector<16x64xf32>
    %103 = tpu.matmul %102, %100, %cst_105 {dimension_numbers = #tpu.dot_dimension_numbers<[1], [0], [0], [1], [0, 0, 1, 1], [], []>} : vector<16x8xf32>, vector<8x64xf32>, vector<16x64xf32> -> vector<16x64xf32>
    %104 = arith.addf %97, %103 : vector<16x64xf32>
    %c15 = arith.constant 15 : index
    %c0_106 = arith.constant 0 : index
    %c0_107 = arith.constant 0 : index
    %105 = vector.load %arg2[%c15, %c0_106, %c0_107] : memref<16x256x64xf32, #tpu.memory_space<vmem>>, vector<1x256x64xf32>
    %106 = vector.shape_cast %105 : vector<1x256x64xf32> to vector<256x64xf32>
    %cst_108 = arith.constant dense<0.000000e+00> : vector<8x64xf32>
    %107 = tpu.matmul %0, %106, %cst_108 {dimension_numbers = #tpu.dot_dimension_numbers<[1], [0], [0], [1], [0, 0, 1, 1], [], []>} : vector<8x256xf32>, vector<256x64xf32>, vector<8x64xf32> -> vector<8x64xf32>
    %c15_109 = arith.constant 15 : index
    %c0_110 = arith.constant 0 : index
    %c0_111 = arith.constant 0 : index
    %108 = vector.load %arg3[%c15_109, %c0_110, %c0_111] : memref<16x16x8xf32, #tpu.memory_space<vmem>>, vector<1x16x8xf32>
    %109 = vector.shape_cast %108 : vector<1x16x8xf32> to vector<16x8xf32>
    %cst_112 = arith.constant dense<0.000000e+00> : vector<16x64xf32>
    %110 = tpu.matmul %109, %107, %cst_112 {dimension_numbers = #tpu.dot_dimension_numbers<[1], [0], [0], [1], [0, 0, 1, 1], [], []>} : vector<16x8xf32>, vector<8x64xf32>, vector<16x64xf32> -> vector<16x64xf32>
    %111 = arith.addf %104, %110 : vector<16x64xf32>
    %c0_113 = arith.constant 0 : index
    %c0_114 = arith.constant 0 : index
    %112 = vector.load %arg4[%c0_113, %c0_114] : memref<16x1xf32, #tpu.memory_space<vmem>>, vector<16x1xf32>
    %113 = vector.broadcast %112 : vector<16x1xf32> to vector<16x64xf32>
    %114 = arith.addf %111, %113 : vector<16x64xf32>
    %c0_115 = arith.constant 0 : index
    %c0_116 = arith.constant 0 : index
    %115 = vector.load %arg13[%c0_115, %c0_116] : memref<16x64xf32, #tpu.memory_space<vmem>>, vector<16x64xf32>
    tpu.vector_store %arg13[%c0_115, %c0_116], %114 {strides = array<i32>} : memref<16x64xf32, #tpu.memory_space<vmem>>, vector<16x64xf32>,
    %cst_117 = arith.constant 0.000000e+00 : f32
    %116 = vector.broadcast %cst_117 : f32 to vector<16x64xf32>
    %117 = arith.cmpf oge, %114, %116 : vector<16x64xf32>
    %cst_118 = arith.constant 2.000000e-01 : f32
    %118 = vector.broadcast %cst_118 : f32 to vector<16x64xf32>
    %119 = arith.mulf %118, %114 : vector<16x64xf32>
    %120 = arith.select %117, %114, %119 : vector<16x64xi1>, vector<16x64xf32>
    %c0_119 = arith.constant 0 : index
    %c0_120 = arith.constant 0 : index
    %121 = vector.load %arg14[%c0_119, %c0_120] : memref<16x64xf32, #tpu.memory_space<vmem>>, vector<16x64xf32>
    tpu.vector_store %arg14[%c0_119, %c0_120], %120 {strides = array<i32>} : memref<16x64xf32, #tpu.memory_space<vmem>>, vector<16x64xf32>,
    %c0_121 = arith.constant 0 : index
    %c0_122 = arith.constant 0 : index
    %c0_123 = arith.constant 0 : index
    %122 = vector.load %arg5[%c0_121, %c0_122, %c0_123] : memref<16x64x16xf32, #tpu.memory_space<vmem>>, vector<1x64x16xf32>
    %123 = vector.shape_cast %122 : vector<1x64x16xf32> to vector<64x16xf32>
    %cst_124 = arith.constant dense<0.000000e+00> : vector<16x16xf32>
    %124 = tpu.matmul %120, %123, %cst_124 {dimension_numbers = #tpu.dot_dimension_numbers<[1], [0], [0], [1], [0, 0, 1, 1], [], []>} : vector<16x64xf32>, vector<64x16xf32>, vector<16x16xf32> -> vector<16x16xf32>
    %c0_125 = arith.constant 0 : index
    %c0_126 = arith.constant 0 : index
    %c0_127 = arith.constant 0 : index
    %125 = vector.load %arg6[%c0_125, %c0_126, %c0_127] : memref<16x32x16xf32, #tpu.memory_space<vmem>>, vector<1x32x16xf32>
    %126 = vector.shape_cast %125 : vector<1x32x16xf32> to vector<32x16xf32>
    %cst_128 = arith.constant dense<0.000000e+00> : vector<32x16xf32>
    %127 = tpu.matmul %126, %124, %cst_128 {dimension_numbers = #tpu.dot_dimension_numbers<[1], [0], [0], [1], [0, 0, 1, 1], [], []>} : vector<32x16xf32>, vector<16x16xf32>, vector<32x16xf32> -> vector<32x16xf32>
    %c1_129 = arith.constant 1 : index
    %c0_130 = arith.constant 0 : index
    %c0_131 = arith.constant 0 : index
    %128 = vector.load %arg5[%c1_129, %c0_130, %c0_131] : memref<16x64x16xf32, #tpu.memory_space<vmem>>, vector<1x64x16xf32>
    %129 = vector.shape_cast %128 : vector<1x64x16xf32> to vector<64x16xf32>
    %cst_132 = arith.constant dense<0.000000e+00> : vector<16x16xf32>
    %130 = tpu.matmul %120, %129, %cst_132 {dimension_numbers = #tpu.dot_dimension_numbers<[1], [0], [0], [1], [0, 0, 1, 1], [], []>} : vector<16x64xf32>, vector<64x16xf32>, vector<16x16xf32> -> vector<16x16xf32>
    %c1_133 = arith.constant 1 : index
    %c0_134 = arith.constant 0 : index
    %c0_135 = arith.constant 0 : index
    %131 = vector.load %arg6[%c1_133, %c0_134, %c0_135] : memref<16x32x16xf32, #tpu.memory_space<vmem>>, vector<1x32x16xf32>
    %132 = vector.shape_cast %131 : vector<1x32x16xf32> to vector<32x16xf32>
    %cst_136 = arith.constant dense<0.000000e+00> : vector<32x16xf32>
    %133 = tpu.matmul %132, %130, %cst_136 {dimension_numbers = #tpu.dot_dimension_numbers<[1], [0], [0], [1], [0, 0, 1, 1], [], []>} : vector<32x16xf32>, vector<16x16xf32>, vector<32x16xf32> -> vector<32x16xf32>
    %134 = arith.addf %127, %133 : vector<32x16xf32>
    %c2_137 = arith.constant 2 : index
    %c0_138 = arith.constant 0 : index
    %c0_139 = arith.constant 0 : index
    %135 = vector.load %arg5[%c2_137, %c0_138, %c0_139] : memref<16x64x16xf32, #tpu.memory_space<vmem>>, vector<1x64x16xf32>
    %136 = vector.shape_cast %135 : vector<1x64x16xf32> to vector<64x16xf32>
    %cst_140 = arith.constant dense<0.000000e+00> : vector<16x16xf32>
    %137 = tpu.matmul %120, %136, %cst_140 {dimension_numbers = #tpu.dot_dimension_numbers<[1], [0], [0], [1], [0, 0, 1, 1], [], []>} : vector<16x64xf32>, vector<64x16xf32>, vector<16x16xf32> -> vector<16x16xf32>
    %c2_141 = arith.constant 2 : index
    %c0_142 = arith.constant 0 : index
    %c0_143 = arith.constant 0 : index
    %138 = vector.load %arg6[%c2_141, %c0_142, %c0_143] : memref<16x32x16xf32, #tpu.memory_space<vmem>>, vector<1x32x16xf32>
    %139 = vector.shape_cast %138 : vector<1x32x16xf32> to vector<32x16xf32>
    %cst_144 = arith.constant dense<0.000000e+00> : vector<32x16xf32>
    %140 = tpu.matmul %139, %137, %cst_144 {dimension_numbers = #tpu.dot_dimension_numbers<[1], [0], [0], [1], [0, 0, 1, 1], [], []>} : vector<32x16xf32>, vector<16x16xf32>, vector<32x16xf32> -> vector<32x16xf32>
    %141 = arith.addf %134, %140 : vector<32x16xf32>
    %c3_145 = arith.constant 3 : index
    %c0_146 = arith.constant 0 : index
    %c0_147 = arith.constant 0 : index
    %142 = vector.load %arg5[%c3_145, %c0_146, %c0_147] : memref<16x64x16xf32, #tpu.memory_space<vmem>>, vector<1x64x16xf32>
    %143 = vector.shape_cast %142 : vector<1x64x16xf32> to vector<64x16xf32>
    %cst_148 = arith.constant dense<0.000000e+00> : vector<16x16xf32>
    %144 = tpu.matmul %120, %143, %cst_148 {dimension_numbers = #tpu.dot_dimension_numbers<[1], [0], [0], [1], [0, 0, 1, 1], [], []>} : vector<16x64xf32>, vector<64x16xf32>, vector<16x16xf32> -> vector<16x16xf32>
    %c3_149 = arith.constant 3 : index
    %c0_150 = arith.constant 0 : index
    %c0_151 = arith.constant 0 : index
    %145 = vector.load %arg6[%c3_149, %c0_150, %c0_151] : memref<16x32x16xf32, #tpu.memory_space<vmem>>, vector<1x32x16xf32>
    %146 = vector.shape_cast %145 : vector<1x32x16xf32> to vector<32x16xf32>
    %cst_152 = arith.constant dense<0.000000e+00> : vector<32x16xf32>
    %147 = tpu.matmul %146, %144, %cst_152 {dimension_numbers = #tpu.dot_dimension_numbers<[1], [0], [0], [1], [0, 0, 1, 1], [], []>} : vector<32x16xf32>, vector<16x16xf32>, vector<32x16xf32> -> vector<32x16xf32>
    %148 = arith.addf %141, %147 : vector<32x16xf32>
    %c4_153 = arith.constant 4 : index
    %c0_154 = arith.constant 0 : index
    %c0_155 = arith.constant 0 : index
    %149 = vector.load %arg5[%c4_153, %c0_154, %c0_155] : memref<16x64x16xf32, #tpu.memory_space<vmem>>, vector<1x64x16xf32>
    %150 = vector.shape_cast %149 : vector<1x64x16xf32> to vector<64x16xf32>
    %cst_156 = arith.constant dense<0.000000e+00> : vector<16x16xf32>
    %151 = tpu.matmul %120, %150, %cst_156 {dimension_numbers = #tpu.dot_dimension_numbers<[1], [0], [0], [1], [0, 0, 1, 1], [], []>} : vector<16x64xf32>, vector<64x16xf32>, vector<16x16xf32> -> vector<16x16xf32>
    %c4_157 = arith.constant 4 : index
    %c0_158 = arith.constant 0 : index
    %c0_159 = arith.constant 0 : index
    %152 = vector.load %arg6[%c4_157, %c0_158, %c0_159] : memref<16x32x16xf32, #tpu.memory_space<vmem>>, vector<1x32x16xf32>
    %153 = vector.shape_cast %152 : vector<1x32x16xf32> to vector<32x16xf32>
    %cst_160 = arith.constant dense<0.000000e+00> : vector<32x16xf32>
    %154 = tpu.matmul %153, %151, %cst_160 {dimension_numbers = #tpu.dot_dimension_numbers<[1], [0], [0], [1], [0, 0, 1, 1], [], []>} : vector<32x16xf32>, vector<16x16xf32>, vector<32x16xf32> -> vector<32x16xf32>
    %155 = arith.addf %148, %154 : vector<32x16xf32>
    %c5_161 = arith.constant 5 : index
    %c0_162 = arith.constant 0 : index
    %c0_163 = arith.constant 0 : index
    %156 = vector.load %arg5[%c5_161, %c0_162, %c0_163] : memref<16x64x16xf32, #tpu.memory_space<vmem>>, vector<1x64x16xf32>
    %157 = vector.shape_cast %156 : vector<1x64x16xf32> to vector<64x16xf32>
    %cst_164 = arith.constant dense<0.000000e+00> : vector<16x16xf32>
    %158 = tpu.matmul %120, %157, %cst_164 {dimension_numbers = #tpu.dot_dimension_numbers<[1], [0], [0], [1], [0, 0, 1, 1], [], []>} : vector<16x64xf32>, vector<64x16xf32>, vector<16x16xf32> -> vector<16x16xf32>
    %c5_165 = arith.constant 5 : index
    %c0_166 = arith.constant 0 : index
    %c0_167 = arith.constant 0 : index
    %159 = vector.load %arg6[%c5_165, %c0_166, %c0_167] : memref<16x32x16xf32, #tpu.memory_space<vmem>>, vector<1x32x16xf32>
    %160 = vector.shape_cast %159 : vector<1x32x16xf32> to vector<32x16xf32>
    %cst_168 = arith.constant dense<0.000000e+00> : vector<32x16xf32>
    %161 = tpu.matmul %160, %158, %cst_168 {dimension_numbers = #tpu.dot_dimension_numbers<[1], [0], [0], [1], [0, 0, 1, 1], [], []>} : vector<32x16xf32>, vector<16x16xf32>, vector<32x16xf32> -> vector<32x16xf32>
    %162 = arith.addf %155, %161 : vector<32x16xf32>
    %c6_169 = arith.constant 6 : index
    %c0_170 = arith.constant 0 : index
    %c0_171 = arith.constant 0 : index
    %163 = vector.load %arg5[%c6_169, %c0_170, %c0_171] : memref<16x64x16xf32, #tpu.memory_space<vmem>>, vector<1x64x16xf32>
    %164 = vector.shape_cast %163 : vector<1x64x16xf32> to vector<64x16xf32>
    %cst_172 = arith.constant dense<0.000000e+00> : vector<16x16xf32>
    %165 = tpu.matmul %120, %164, %cst_172 {dimension_numbers = #tpu.dot_dimension_numbers<[1], [0], [0], [1], [0, 0, 1, 1], [], []>} : vector<16x64xf32>, vector<64x16xf32>, vector<16x16xf32> -> vector<16x16xf32>
    %c6_173 = arith.constant 6 : index
    %c0_174 = arith.constant 0 : index
    %c0_175 = arith.constant 0 : index
    %166 = vector.load %arg6[%c6_173, %c0_174, %c0_175] : memref<16x32x16xf32, #tpu.memory_space<vmem>>, vector<1x32x16xf32>
    %167 = vector.shape_cast %166 : vector<1x32x16xf32> to vector<32x16xf32>
    %cst_176 = arith.constant dense<0.000000e+00> : vector<32x16xf32>
    %168 = tpu.matmul %167, %165, %cst_176 {dimension_numbers = #tpu.dot_dimension_numbers<[1], [0], [0], [1], [0, 0, 1, 1], [], []>} : vector<32x16xf32>, vector<16x16xf32>, vector<32x16xf32> -> vector<32x16xf32>
    %169 = arith.addf %162, %168 : vector<32x16xf32>
    %c7_177 = arith.constant 7 : index
    %c0_178 = arith.constant 0 : index
    %c0_179 = arith.constant 0 : index
    %170 = vector.load %arg5[%c7_177, %c0_178, %c0_179] : memref<16x64x16xf32, #tpu.memory_space<vmem>>, vector<1x64x16xf32>
    %171 = vector.shape_cast %170 : vector<1x64x16xf32> to vector<64x16xf32>
    %cst_180 = arith.constant dense<0.000000e+00> : vector<16x16xf32>
    %172 = tpu.matmul %120, %171, %cst_180 {dimension_numbers = #tpu.dot_dimension_numbers<[1], [0], [0], [1], [0, 0, 1, 1], [], []>} : vector<16x64xf32>, vector<64x16xf32>, vector<16x16xf32> -> vector<16x16xf32>
    %c7_181 = arith.constant 7 : index
    %c0_182 = arith.constant 0 : index
    %c0_183 = arith.constant 0 : index
    %173 = vector.load %arg6[%c7_181, %c0_182, %c0_183] : memref<16x32x16xf32, #tpu.memory_space<vmem>>, vector<1x32x16xf32>
    %174 = vector.shape_cast %173 : vector<1x32x16xf32> to vector<32x16xf32>
    %cst_184 = arith.constant dense<0.000000e+00> : vector<32x16xf32>
    %175 = tpu.matmul %174, %172, %cst_184 {dimension_numbers = #tpu.dot_dimension_numbers<[1], [0], [0], [1], [0, 0, 1, 1], [], []>} : vector<32x16xf32>, vector<16x16xf32>, vector<32x16xf32> -> vector<32x16xf32>
    %176 = arith.addf %169, %175 : vector<32x16xf32>
    %c8_185 = arith.constant 8 : index
    %c0_186 = arith.constant 0 : index
    %c0_187 = arith.constant 0 : index
    %177 = vector.load %arg5[%c8_185, %c0_186, %c0_187] : memref<16x64x16xf32, #tpu.memory_space<vmem>>, vector<1x64x16xf32>
    %178 = vector.shape_cast %177 : vector<1x64x16xf32> to vector<64x16xf32>
    %cst_188 = arith.constant dense<0.000000e+00> : vector<16x16xf32>
    %179 = tpu.matmul %120, %178, %cst_188 {dimension_numbers = #tpu.dot_dimension_numbers<[1], [0], [0], [1], [0, 0, 1, 1], [], []>} : vector<16x64xf32>, vector<64x16xf32>, vector<16x16xf32> -> vector<16x16xf32>
    %c8_189 = arith.constant 8 : index
    %c0_190 = arith.constant 0 : index
    %c0_191 = arith.constant 0 : index
    %180 = vector.load %arg6[%c8_189, %c0_190, %c0_191] : memref<16x32x16xf32, #tpu.memory_space<vmem>>, vector<1x32x16xf32>
    %181 = vector.shape_cast %180 : vector<1x32x16xf32> to vector<32x16xf32>
    %cst_192 = arith.constant dense<0.000000e+00> : vector<32x16xf32>
    %182 = tpu.matmul %181, %179, %cst_192 {dimension_numbers = #tpu.dot_dimension_numbers<[1], [0], [0], [1], [0, 0, 1, 1], [], []>} : vector<32x16xf32>, vector<16x16xf32>, vector<32x16xf32> -> vector<32x16xf32>
    %183 = arith.addf %176, %182 : vector<32x16xf32>
    %c9_193 = arith.constant 9 : index
    %c0_194 = arith.constant 0 : index
    %c0_195 = arith.constant 0 : index
    %184 = vector.load %arg5[%c9_193, %c0_194, %c0_195] : memref<16x64x16xf32, #tpu.memory_space<vmem>>, vector<1x64x16xf32>
    %185 = vector.shape_cast %184 : vector<1x64x16xf32> to vector<64x16xf32>
    %cst_196 = arith.constant dense<0.000000e+00> : vector<16x16xf32>
    %186 = tpu.matmul %120, %185, %cst_196 {dimension_numbers = #tpu.dot_dimension_numbers<[1], [0], [0], [1], [0, 0, 1, 1], [], []>} : vector<16x64xf32>, vector<64x16xf32>, vector<16x16xf32> -> vector<16x16xf32>
    %c9_197 = arith.constant 9 : index
    %c0_198 = arith.constant 0 : index
    %c0_199 = arith.constant 0 : index
    %187 = vector.load %arg6[%c9_197, %c0_198, %c0_199] : memref<16x32x16xf32, #tpu.memory_space<vmem>>, vector<1x32x16xf32>
    %188 = vector.shape_cast %187 : vector<1x32x16xf32> to vector<32x16xf32>
    %cst_200 = arith.constant dense<0.000000e+00> : vector<32x16xf32>
    %189 = tpu.matmul %188, %186, %cst_200 {dimension_numbers = #tpu.dot_dimension_numbers<[1], [0], [0], [1], [0, 0, 1, 1], [], []>} : vector<32x16xf32>, vector<16x16xf32>, vector<32x16xf32> -> vector<32x16xf32>
    %190 = arith.addf %183, %189 : vector<32x16xf32>
    %c10_201 = arith.constant 10 : index
    %c0_202 = arith.constant 0 : index
    %c0_203 = arith.constant 0 : index
    %191 = vector.load %arg5[%c10_201, %c0_202, %c0_203] : memref<16x64x16xf32, #tpu.memory_space<vmem>>, vector<1x64x16xf32>
    %192 = vector.shape_cast %191 : vector<1x64x16xf32> to vector<64x16xf32>
    %cst_204 = arith.constant dense<0.000000e+00> : vector<16x16xf32>
    %193 = tpu.matmul %120, %192, %cst_204 {dimension_numbers = #tpu.dot_dimension_numbers<[1], [0], [0], [1], [0, 0, 1, 1], [], []>} : vector<16x64xf32>, vector<64x16xf32>, vector<16x16xf32> -> vector<16x16xf32>
    %c10_205 = arith.constant 10 : index
    %c0_206 = arith.constant 0 : index
    %c0_207 = arith.constant 0 : index
    %194 = vector.load %arg6[%c10_205, %c0_206, %c0_207] : memref<16x32x16xf32, #tpu.memory_space<vmem>>, vector<1x32x16xf32>
    %195 = vector.shape_cast %194 : vector<1x32x16xf32> to vector<32x16xf32>
    %cst_208 = arith.constant dense<0.000000e+00> : vector<32x16xf32>
    %196 = tpu.matmul %195, %193, %cst_208 {dimension_numbers = #tpu.dot_dimension_numbers<[1], [0], [0], [1], [0, 0, 1, 1], [], []>} : vector<32x16xf32>, vector<16x16xf32>, vector<32x16xf32> -> vector<32x16xf32>
    %197 = arith.addf %190, %196 : vector<32x16xf32>
    %c11_209 = arith.constant 11 : index
    %c0_210 = arith.constant 0 : index
    %c0_211 = arith.constant 0 : index
    %198 = vector.load %arg5[%c11_209, %c0_210, %c0_211] : memref<16x64x16xf32, #tpu.memory_space<vmem>>, vector<1x64x16xf32>
    %199 = vector.shape_cast %198 : vector<1x64x16xf32> to vector<64x16xf32>
    %cst_212 = arith.constant dense<0.000000e+00> : vector<16x16xf32>
    %200 = tpu.matmul %120, %199, %cst_212 {dimension_numbers = #tpu.dot_dimension_numbers<[1], [0], [0], [1], [0, 0, 1, 1], [], []>} : vector<16x64xf32>, vector<64x16xf32>, vector<16x16xf32> -> vector<16x16xf32>
    %c11_213 = arith.constant 11 : index
    %c0_214 = arith.constant 0 : index
    %c0_215 = arith.constant 0 : index
    %201 = vector.load %arg6[%c11_213, %c0_214, %c0_215] : memref<16x32x16xf32, #tpu.memory_space<vmem>>, vector<1x32x16xf32>
    %202 = vector.shape_cast %201 : vector<1x32x16xf32> to vector<32x16xf32>
    %cst_216 = arith.constant dense<0.000000e+00> : vector<32x16xf32>
    %203 = tpu.matmul %202, %200, %cst_216 {dimension_numbers = #tpu.dot_dimension_numbers<[1], [0], [0], [1], [0, 0, 1, 1], [], []>} : vector<32x16xf32>, vector<16x16xf32>, vector<32x16xf32> -> vector<32x16xf32>
    %204 = arith.addf %197, %203 : vector<32x16xf32>
    %c12_217 = arith.constant 12 : index
    %c0_218 = arith.constant 0 : index
    %c0_219 = arith.constant 0 : index
    %205 = vector.load %arg5[%c12_217, %c0_218, %c0_219] : memref<16x64x16xf32, #tpu.memory_space<vmem>>, vector<1x64x16xf32>
    %206 = vector.shape_cast %205 : vector<1x64x16xf32> to vector<64x16xf32>
    %cst_220 = arith.constant dense<0.000000e+00> : vector<16x16xf32>
    %207 = tpu.matmul %120, %206, %cst_220 {dimension_numbers = #tpu.dot_dimension_numbers<[1], [0], [0], [1], [0, 0, 1, 1], [], []>} : vector<16x64xf32>, vector<64x16xf32>, vector<16x16xf32> -> vector<16x16xf32>
    %c12_221 = arith.constant 12 : index
    %c0_222 = arith.constant 0 : index
    %c0_223 = arith.constant 0 : index
    %208 = vector.load %arg6[%c12_221, %c0_222, %c0_223] : memref<16x32x16xf32, #tpu.memory_space<vmem>>, vector<1x32x16xf32>
    %209 = vector.shape_cast %208 : vector<1x32x16xf32> to vector<32x16xf32>
    %cst_224 = arith.constant dense<0.000000e+00> : vector<32x16xf32>
    %210 = tpu.matmul %209, %207, %cst_224 {dimension_numbers = #tpu.dot_dimension_numbers<[1], [0], [0], [1], [0, 0, 1, 1], [], []>} : vector<32x16xf32>, vector<16x16xf32>, vector<32x16xf32> -> vector<32x16xf32>
    %211 = arith.addf %204, %210 : vector<32x16xf32>
    %c13_225 = arith.constant 13 : index
    %c0_226 = arith.constant 0 : index
    %c0_227 = arith.constant 0 : index
    %212 = vector.load %arg5[%c13_225, %c0_226, %c0_227] : memref<16x64x16xf32, #tpu.memory_space<vmem>>, vector<1x64x16xf32>
    %213 = vector.shape_cast %212 : vector<1x64x16xf32> to vector<64x16xf32>
    %cst_228 = arith.constant dense<0.000000e+00> : vector<16x16xf32>
    %214 = tpu.matmul %120, %213, %cst_228 {dimension_numbers = #tpu.dot_dimension_numbers<[1], [0], [0], [1], [0, 0, 1, 1], [], []>} : vector<16x64xf32>, vector<64x16xf32>, vector<16x16xf32> -> vector<16x16xf32>
    %c13_229 = arith.constant 13 : index
    %c0_230 = arith.constant 0 : index
    %c0_231 = arith.constant 0 : index
    %215 = vector.load %arg6[%c13_229, %c0_230, %c0_231] : memref<16x32x16xf32, #tpu.memory_space<vmem>>, vector<1x32x16xf32>
    %216 = vector.shape_cast %215 : vector<1x32x16xf32> to vector<32x16xf32>
    %cst_232 = arith.constant dense<0.000000e+00> : vector<32x16xf32>
    %217 = tpu.matmul %216, %214, %cst_232 {dimension_numbers = #tpu.dot_dimension_numbers<[1], [0], [0], [1], [0, 0, 1, 1], [], []>} : vector<32x16xf32>, vector<16x16xf32>, vector<32x16xf32> -> vector<32x16xf32>
    %218 = arith.addf %211, %217 : vector<32x16xf32>
    %c14_233 = arith.constant 14 : index
    %c0_234 = arith.constant 0 : index
    %c0_235 = arith.constant 0 : index
    %219 = vector.load %arg5[%c14_233, %c0_234, %c0_235] : memref<16x64x16xf32, #tpu.memory_space<vmem>>, vector<1x64x16xf32>
    %220 = vector.shape_cast %219 : vector<1x64x16xf32> to vector<64x16xf32>
    %cst_236 = arith.constant dense<0.000000e+00> : vector<16x16xf32>
    %221 = tpu.matmul %120, %220, %cst_236 {dimension_numbers = #tpu.dot_dimension_numbers<[1], [0], [0], [1], [0, 0, 1, 1], [], []>} : vector<16x64xf32>, vector<64x16xf32>, vector<16x16xf32> -> vector<16x16xf32>
    %c14_237 = arith.constant 14 : index
    %c0_238 = arith.constant 0 : index
    %c0_239 = arith.constant 0 : index
    %222 = vector.load %arg6[%c14_237, %c0_238, %c0_239] : memref<16x32x16xf32, #tpu.memory_space<vmem>>, vector<1x32x16xf32>
    %223 = vector.shape_cast %222 : vector<1x32x16xf32> to vector<32x16xf32>
    %cst_240 = arith.constant dense<0.000000e+00> : vector<32x16xf32>
    %224 = tpu.matmul %223, %221, %cst_240 {dimension_numbers = #tpu.dot_dimension_numbers<[1], [0], [0], [1], [0, 0, 1, 1], [], []>} : vector<32x16xf32>, vector<16x16xf32>, vector<32x16xf32> -> vector<32x16xf32>
    %225 = arith.addf %218, %224 : vector<32x16xf32>
    %c15_241 = arith.constant 15 : index
    %c0_242 = arith.constant 0 : index
    %c0_243 = arith.constant 0 : index
    %226 = vector.load %arg5[%c15_241, %c0_242, %c0_243] : memref<16x64x16xf32, #tpu.memory_space<vmem>>, vector<1x64x16xf32>
    %227 = vector.shape_cast %226 : vector<1x64x16xf32> to vector<64x16xf32>
    %cst_244 = arith.constant dense<0.000000e+00> : vector<16x16xf32>
    %228 = tpu.matmul %120, %227, %cst_244 {dimension_numbers = #tpu.dot_dimension_numbers<[1], [0], [0], [1], [0, 0, 1, 1], [], []>} : vector<16x64xf32>, vector<64x16xf32>, vector<16x16xf32> -> vector<16x16xf32>
    %c15_245 = arith.constant 15 : index
    %c0_246 = arith.constant 0 : index
    %c0_247 = arith.constant 0 : index
    %229 = vector.load %arg6[%c15_245, %c0_246, %c0_247] : memref<16x32x16xf32, #tpu.memory_space<vmem>>, vector<1x32x16xf32>
    %230 = vector.shape_cast %229 : vector<1x32x16xf32> to vector<32x16xf32>
    %cst_248 = arith.constant dense<0.000000e+00> : vector<32x16xf32>
    %231 = tpu.matmul %230, %228, %cst_248 {dimension_numbers = #tpu.dot_dimension_numbers<[1], [0], [0], [1], [0, 0, 1, 1], [], []>} : vector<32x16xf32>, vector<16x16xf32>, vector<32x16xf32> -> vector<32x16xf32>
    %232 = arith.addf %225, %231 : vector<32x16xf32>
    %c0_249 = arith.constant 0 : index
    %c0_250 = arith.constant 0 : index
    %233 = vector.load %arg7[%c0_249, %c0_250] : memref<32x1xf32, #tpu.memory_space<vmem>>, vector<32x1xf32>
    %234 = vector.broadcast %233 : vector<32x1xf32> to vector<32x16xf32>
    %235 = arith.addf %232, %234 : vector<32x16xf32>
    %c0_251 = arith.constant 0 : index
    %c0_252 = arith.constant 0 : index
    %236 = vector.load %arg15[%c0_251, %c0_252] : memref<32x16xf32, #tpu.memory_space<vmem>>, vector<32x16xf32>
    tpu.vector_store %arg15[%c0_251, %c0_252], %235 {strides = array<i32>} : memref<32x16xf32, #tpu.memory_space<vmem>>, vector<32x16xf32>,
    %cst_253 = arith.constant dense<0.000000e+00> : vector<32xf32>
    %237 = vector.multi_reduction <add>, %235, %cst_253 [1] : vector<32x16xf32> to vector<32xf32>
    %238 = vector.shape_cast %237 : vector<32xf32> to vector<32x1xf32>
    %cst_254 = arith.constant 1.600000e+01 : f32
    %239 = vector.broadcast %cst_254 : f32 to vector<32x1xf32>
    %240 = arith.divf %238, %239 : vector<32x1xf32>
    %241 = vector.broadcast %240 : vector<32x1xf32> to vector<32x16xf32>
    %242 = arith.subf %235, %241 : vector<32x16xf32>
    %243 = arith.mulf %242, %242 : vector<32x16xf32>
    %cst_255 = arith.constant dense<0.000000e+00> : vector<32xf32>
    %244 = vector.multi_reduction <add>, %243, %cst_255 [1] : vector<32x16xf32> to vector<32xf32>
    %245 = vector.shape_cast %244 : vector<32xf32> to vector<32x1xf32>
    %cst_256 = arith.constant 1.600000e+01 : f32
    %246 = vector.broadcast %cst_256 : f32 to vector<32x1xf32>
    %247 = arith.divf %245, %246 : vector<32x1xf32>
    %cst_257 = arith.constant 9.99999974E-6 : f32
    %248 = vector.broadcast %cst_257 : f32 to vector<32x1xf32>
    %249 = arith.addf %247, %248 : vector<32x1xf32>
    %250 = math.rsqrt %249 : vector<32x1xf32>
    %251 = vector.broadcast %250 : vector<32x1xf32> to vector<32x16xf32>
    %252 = arith.mulf %242, %251 : vector<32x16xf32>
    %c0_258 = arith.constant 0 : index
    %c0_259 = arith.constant 0 : index
    %253 = vector.load %arg16[%c0_258, %c0_259] : memref<32x16xf32, #tpu.memory_space<vmem>>, vector<32x16xf32>
    tpu.vector_store %arg16[%c0_258, %c0_259], %252 {strides = array<i32>} : memref<32x16xf32, #tpu.memory_space<vmem>>, vector<32x16xf32>,
    %cst_260 = arith.constant 0.000000e+00 : f32
    %254 = vector.broadcast %cst_260 : f32 to vector<32x16xf32>
    %255 = arith.cmpf oge, %252, %254 : vector<32x16xf32>
    %cst_261 = arith.constant 2.000000e-01 : f32
    %256 = vector.broadcast %cst_261 : f32 to vector<32x16xf32>
    %257 = arith.mulf %256, %252 : vector<32x16xf32>
    %258 = arith.select %255, %252, %257 : vector<32x16xi1>, vector<32x16xf32>
    %c0_262 = arith.constant 0 : index
    %c0_263 = arith.constant 0 : index
    %259 = vector.load %arg17[%c0_262, %c0_263] : memref<32x16xf32, #tpu.memory_space<vmem>>, vector<32x16xf32>
    tpu.vector_store %arg17[%c0_262, %c0_263], %258 {strides = array<i32>} : memref<32x16xf32, #tpu.memory_space<vmem>>, vector<32x16xf32>,
    %c0_264 = arith.constant 0 : index
    %c0_265 = arith.constant 0 : index
    %c0_266 = arith.constant 0 : index
    %260 = vector.load %arg8[%c0_264, %c0_265, %c0_266] : memref<16x16x9xf32, #tpu.memory_space<vmem>>, vector<1x16x9xf32>
    %261 = vector.shape_cast %260 : vector<1x16x9xf32> to vector<16x9xf32>
    %cst_267 = arith.constant dense<0.000000e+00> : vector<32x9xf32>
    %262 = tpu.matmul %258, %261, %cst_267 {dimension_numbers = #tpu.dot_dimension_numbers<[1], [0], [0], [1], [0, 0, 1, 1], [], []>} : vector<32x16xf32>, vector<16x9xf32>, vector<32x9xf32> -> vector<32x9xf32>
    %c0_268 = arith.constant 0 : index
    %c0_269 = arith.constant 0 : index
    %c0_270 = arith.constant 0 : index
    %263 = vector.load %arg9[%c0_268, %c0_269, %c0_270] : memref<16x2x32xf32, #tpu.memory_space<vmem>>, vector<1x2x32xf32>
    %264 = vector.shape_cast %263 : vector<1x2x32xf32> to vector<2x32xf32>
    %cst_271 = arith.constant dense<0.000000e+00> : vector<2x9xf32>
    %265 = tpu.matmul %264, %262, %cst_271 {dimension_numbers = #tpu.dot_dimension_numbers<[1], [0], [0], [1], [0, 0, 1, 1], [], []>} : vector<2x32xf32>, vector<32x9xf32>, vector<2x9xf32> -> vector<2x9xf32>
    %c1_272 = arith.constant 1 : index
    %c0_273 = arith.constant 0 : index
    %c0_274 = arith.constant 0 : index
    %266 = vector.load %arg8[%c1_272, %c0_273, %c0_274] : memref<16x16x9xf32, #tpu.memory_space<vmem>>, vector<1x16x9xf32>
    %267 = vector.shape_cast %266 : vector<1x16x9xf32> to vector<16x9xf32>
    %cst_275 = arith.constant dense<0.000000e+00> : vector<32x9xf32>
    %268 = tpu.matmul %258, %267, %cst_275 {dimension_numbers = #tpu.dot_dimension_numbers<[1], [0], [0], [1], [0, 0, 1, 1], [], []>} : vector<32x16xf32>, vector<16x9xf32>, vector<32x9xf32> -> vector<32x9xf32>
    %c1_276 = arith.constant 1 : index
    %c0_277 = arith.constant 0 : index
    %c0_278 = arith.constant 0 : index
    %269 = vector.load %arg9[%c1_276, %c0_277, %c0_278] : memref<16x2x32xf32, #tpu.memory_space<vmem>>, vector<1x2x32xf32>
    %270 = vector.shape_cast %269 : vector<1x2x32xf32> to vector<2x32xf32>
    %cst_279 = arith.constant dense<0.000000e+00> : vector<2x9xf32>
    %271 = tpu.matmul %270, %268, %cst_279 {dimension_numbers = #tpu.dot_dimension_numbers<[1], [0], [0], [1], [0, 0, 1, 1], [], []>} : vector<2x32xf32>, vector<32x9xf32>, vector<2x9xf32> -> vector<2x9xf32>
    %272 = arith.addf %265, %271 : vector<2x9xf32>
    %c2_280 = arith.constant 2 : index
    %c0_281 = arith.constant 0 : index
    %c0_282 = arith.constant 0 : index
    %273 = vector.load %arg8[%c2_280, %c0_281, %c0_282] : memref<16x16x9xf32, #tpu.memory_space<vmem>>, vector<1x16x9xf32>
    %274 = vector.shape_cast %273 : vector<1x16x9xf32> to vector<16x9xf32>
    %cst_283 = arith.constant dense<0.000000e+00> : vector<32x9xf32>
    %275 = tpu.matmul %258, %274, %cst_283 {dimension_numbers = #tpu.dot_dimension_numbers<[1], [0], [0], [1], [0, 0, 1, 1], [], []>} : vector<32x16xf32>, vector<16x9xf32>, vector<32x9xf32> -> vector<32x9xf32>
    %c2_284 = arith.constant 2 : index
    %c0_285 = arith.constant 0 : index
    %c0_286 = arith.constant 0 : index
    %276 = vector.load %arg9[%c2_284, %c0_285, %c0_286] : memref<16x2x32xf32, #tpu.memory_space<vmem>>, vector<1x2x32xf32>
    %277 = vector.shape_cast %276 : vector<1x2x32xf32> to vector<2x32xf32>
    %cst_287 = arith.constant dense<0.000000e+00> : vector<2x9xf32>
    %278 = tpu.matmul %277, %275, %cst_287 {dimension_numbers = #tpu.dot_dimension_numbers<[1], [0], [0], [1], [0, 0, 1, 1], [], []>} : vector<2x32xf32>, vector<32x9xf32>, vector<2x9xf32> -> vector<2x9xf32>
    %279 = arith.addf %272, %278 : vector<2x9xf32>
    %c3_288 = arith.constant 3 : index
    %c0_289 = arith.constant 0 : index
    %c0_290 = arith.constant 0 : index
    %280 = vector.load %arg8[%c3_288, %c0_289, %c0_290] : memref<16x16x9xf32, #tpu.memory_space<vmem>>, vector<1x16x9xf32>
    %281 = vector.shape_cast %280 : vector<1x16x9xf32> to vector<16x9xf32>
    %cst_291 = arith.constant dense<0.000000e+00> : vector<32x9xf32>
    %282 = tpu.matmul %258, %281, %cst_291 {dimension_numbers = #tpu.dot_dimension_numbers<[1], [0], [0], [1], [0, 0, 1, 1], [], []>} : vector<32x16xf32>, vector<16x9xf32>, vector<32x9xf32> -> vector<32x9xf32>
    %c3_292 = arith.constant 3 : index
    %c0_293 = arith.constant 0 : index
    %c0_294 = arith.constant 0 : index
    %283 = vector.load %arg9[%c3_292, %c0_293, %c0_294] : memref<16x2x32xf32, #tpu.memory_space<vmem>>, vector<1x2x32xf32>
    %284 = vector.shape_cast %283 : vector<1x2x32xf32> to vector<2x32xf32>
    %cst_295 = arith.constant dense<0.000000e+00> : vector<2x9xf32>
    %285 = tpu.matmul %284, %282, %cst_295 {dimension_numbers = #tpu.dot_dimension_numbers<[1], [0], [0], [1], [0, 0, 1, 1], [], []>} : vector<2x32xf32>, vector<32x9xf32>, vector<2x9xf32> -> vector<2x9xf32>
    %286 = arith.addf %279, %285 : vector<2x9xf32>
    %c4_296 = arith.constant 4 : index
    %c0_297 = arith.constant 0 : index
    %c0_298 = arith.constant 0 : index
    %287 = vector.load %arg8[%c4_296, %c0_297, %c0_298] : memref<16x16x9xf32, #tpu.memory_space<vmem>>, vector<1x16x9xf32>
    %288 = vector.shape_cast %287 : vector<1x16x9xf32> to vector<16x9xf32>
    %cst_299 = arith.constant dense<0.000000e+00> : vector<32x9xf32>
    %289 = tpu.matmul %258, %288, %cst_299 {dimension_numbers = #tpu.dot_dimension_numbers<[1], [0], [0], [1], [0, 0, 1, 1], [], []>} : vector<32x16xf32>, vector<16x9xf32>, vector<32x9xf32> -> vector<32x9xf32>
    %c4_300 = arith.constant 4 : index
    %c0_301 = arith.constant 0 : index
    %c0_302 = arith.constant 0 : index
    %290 = vector.load %arg9[%c4_300, %c0_301, %c0_302] : memref<16x2x32xf32, #tpu.memory_space<vmem>>, vector<1x2x32xf32>
    %291 = vector.shape_cast %290 : vector<1x2x32xf32> to vector<2x32xf32>
    %cst_303 = arith.constant dense<0.000000e+00> : vector<2x9xf32>
    %292 = tpu.matmul %291, %289, %cst_303 {dimension_numbers = #tpu.dot_dimension_numbers<[1], [0], [0], [1], [0, 0, 1, 1], [], []>} : vector<2x32xf32>, vector<32x9xf32>, vector<2x9xf32> -> vector<2x9xf32>
    %293 = arith.addf %286, %292 : vector<2x9xf32>
    %c5_304 = arith.constant 5 : index
    %c0_305 = arith.constant 0 : index
    %c0_306 = arith.constant 0 : index
    %294 = vector.load %arg8[%c5_304, %c0_305, %c0_306] : memref<16x16x9xf32, #tpu.memory_space<vmem>>, vector<1x16x9xf32>
    %295 = vector.shape_cast %294 : vector<1x16x9xf32> to vector<16x9xf32>
    %cst_307 = arith.constant dense<0.000000e+00> : vector<32x9xf32>
    %296 = tpu.matmul %258, %295, %cst_307 {dimension_numbers = #tpu.dot_dimension_numbers<[1], [0], [0], [1], [0, 0, 1, 1], [], []>} : vector<32x16xf32>, vector<16x9xf32>, vector<32x9xf32> -> vector<32x9xf32>
    %c5_308 = arith.constant 5 : index
    %c0_309 = arith.constant 0 : index
    %c0_310 = arith.constant 0 : index
    %297 = vector.load %arg9[%c5_308, %c0_309, %c0_310] : memref<16x2x32xf32, #tpu.memory_space<vmem>>, vector<1x2x32xf32>
    %298 = vector.shape_cast %297 : vector<1x2x32xf32> to vector<2x32xf32>
    %cst_311 = arith.constant dense<0.000000e+00> : vector<2x9xf32>
    %299 = tpu.matmul %298, %296, %cst_311 {dimension_numbers = #tpu.dot_dimension_numbers<[1], [0], [0], [1], [0, 0, 1, 1], [], []>} : vector<2x32xf32>, vector<32x9xf32>, vector<2x9xf32> -> vector<2x9xf32>
    %300 = arith.addf %293, %299 : vector<2x9xf32>
    %c6_312 = arith.constant 6 : index
    %c0_313 = arith.constant 0 : index
    %c0_314 = arith.constant 0 : index
    %301 = vector.load %arg8[%c6_312, %c0_313, %c0_314] : memref<16x16x9xf32, #tpu.memory_space<vmem>>, vector<1x16x9xf32>
    %302 = vector.shape_cast %301 : vector<1x16x9xf32> to vector<16x9xf32>
    %cst_315 = arith.constant dense<0.000000e+00> : vector<32x9xf32>
    %303 = tpu.matmul %258, %302, %cst_315 {dimension_numbers = #tpu.dot_dimension_numbers<[1], [0], [0], [1], [0, 0, 1, 1], [], []>} : vector<32x16xf32>, vector<16x9xf32>, vector<32x9xf32> -> vector<32x9xf32>
    %c6_316 = arith.constant 6 : index
    %c0_317 = arith.constant 0 : index
    %c0_318 = arith.constant 0 : index
    %304 = vector.load %arg9[%c6_316, %c0_317, %c0_318] : memref<16x2x32xf32, #tpu.memory_space<vmem>>, vector<1x2x32xf32>
    %305 = vector.shape_cast %304 : vector<1x2x32xf32> to vector<2x32xf32>
    %cst_319 = arith.constant dense<0.000000e+00> : vector<2x9xf32>
    %306 = tpu.matmul %305, %303, %cst_319 {dimension_numbers = #tpu.dot_dimension_numbers<[1], [0], [0], [1], [0, 0, 1, 1], [], []>} : vector<2x32xf32>, vector<32x9xf32>, vector<2x9xf32> -> vector<2x9xf32>
    %307 = arith.addf %300, %306 : vector<2x9xf32>
    %c7_320 = arith.constant 7 : index
    %c0_321 = arith.constant 0 : index
    %c0_322 = arith.constant 0 : index
    %308 = vector.load %arg8[%c7_320, %c0_321, %c0_322] : memref<16x16x9xf32, #tpu.memory_space<vmem>>, vector<1x16x9xf32>
    %309 = vector.shape_cast %308 : vector<1x16x9xf32> to vector<16x9xf32>
    %cst_323 = arith.constant dense<0.000000e+00> : vector<32x9xf32>
    %310 = tpu.matmul %258, %309, %cst_323 {dimension_numbers = #tpu.dot_dimension_numbers<[1], [0], [0], [1], [0, 0, 1, 1], [], []>} : vector<32x16xf32>, vector<16x9xf32>, vector<32x9xf32> -> vector<32x9xf32>
    %c7_324 = arith.constant 7 : index
    %c0_325 = arith.constant 0 : index
    %c0_326 = arith.constant 0 : index
    %311 = vector.load %arg9[%c7_324, %c0_325, %c0_326] : memref<16x2x32xf32, #tpu.memory_space<vmem>>, vector<1x2x32xf32>
    %312 = vector.shape_cast %311 : vector<1x2x32xf32> to vector<2x32xf32>
    %cst_327 = arith.constant dense<0.000000e+00> : vector<2x9xf32>
    %313 = tpu.matmul %312, %310, %cst_327 {dimension_numbers = #tpu.dot_dimension_numbers<[1], [0], [0], [1], [0, 0, 1, 1], [], []>} : vector<2x32xf32>, vector<32x9xf32>, vector<2x9xf32> -> vector<2x9xf32>
    %314 = arith.addf %307, %313 : vector<2x9xf32>
    %c8_328 = arith.constant 8 : index
    %c0_329 = arith.constant 0 : index
    %c0_330 = arith.constant 0 : index
    %315 = vector.load %arg8[%c8_328, %c0_329, %c0_330] : memref<16x16x9xf32, #tpu.memory_space<vmem>>, vector<1x16x9xf32>
    %316 = vector.shape_cast %315 : vector<1x16x9xf32> to vector<16x9xf32>
    %cst_331 = arith.constant dense<0.000000e+00> : vector<32x9xf32>
    %317 = tpu.matmul %258, %316, %cst_331 {dimension_numbers = #tpu.dot_dimension_numbers<[1], [0], [0], [1], [0, 0, 1, 1], [], []>} : vector<32x16xf32>, vector<16x9xf32>, vector<32x9xf32> -> vector<32x9xf32>
    %c8_332 = arith.constant 8 : index
    %c0_333 = arith.constant 0 : index
    %c0_334 = arith.constant 0 : index
    %318 = vector.load %arg9[%c8_332, %c0_333, %c0_334] : memref<16x2x32xf32, #tpu.memory_space<vmem>>, vector<1x2x32xf32>
    %319 = vector.shape_cast %318 : vector<1x2x32xf32> to vector<2x32xf32>
    %cst_335 = arith.constant dense<0.000000e+00> : vector<2x9xf32>
    %320 = tpu.matmul %319, %317, %cst_335 {dimension_numbers = #tpu.dot_dimension_numbers<[1], [0], [0], [1], [0, 0, 1, 1], [], []>} : vector<2x32xf32>, vector<32x9xf32>, vector<2x9xf32> -> vector<2x9xf32>
    %321 = arith.addf %314, %320 : vector<2x9xf32>
    %c9_336 = arith.constant 9 : index
    %c0_337 = arith.constant 0 : index
    %c0_338 = arith.constant 0 : index
    %322 = vector.load %arg8[%c9_336, %c0_337, %c0_338] : memref<16x16x9xf32, #tpu.memory_space<vmem>>, vector<1x16x9xf32>
    %323 = vector.shape_cast %322 : vector<1x16x9xf32> to vector<16x9xf32>
    %cst_339 = arith.constant dense<0.000000e+00> : vector<32x9xf32>
    %324 = tpu.matmul %258, %323, %cst_339 {dimension_numbers = #tpu.dot_dimension_numbers<[1], [0], [0], [1], [0, 0, 1, 1], [], []>} : vector<32x16xf32>, vector<16x9xf32>, vector<32x9xf32> -> vector<32x9xf32>
    %c9_340 = arith.constant 9 : index
    %c0_341 = arith.constant 0 : index
    %c0_342 = arith.constant 0 : index
    %325 = vector.load %arg9[%c9_340, %c0_341, %c0_342] : memref<16x2x32xf32, #tpu.memory_space<vmem>>, vector<1x2x32xf32>
    %326 = vector.shape_cast %325 : vector<1x2x32xf32> to vector<2x32xf32>
    %cst_343 = arith.constant dense<0.000000e+00> : vector<2x9xf32>
    %327 = tpu.matmul %326, %324, %cst_343 {dimension_numbers = #tpu.dot_dimension_numbers<[1], [0], [0], [1], [0, 0, 1, 1], [], []>} : vector<2x32xf32>, vector<32x9xf32>, vector<2x9xf32> -> vector<2x9xf32>
    %328 = arith.addf %321, %327 : vector<2x9xf32>
    %c10_344 = arith.constant 10 : index
    %c0_345 = arith.constant 0 : index
    %c0_346 = arith.constant 0 : index
    %329 = vector.load %arg8[%c10_344, %c0_345, %c0_346] : memref<16x16x9xf32, #tpu.memory_space<vmem>>, vector<1x16x9xf32>
    %330 = vector.shape_cast %329 : vector<1x16x9xf32> to vector<16x9xf32>
    %cst_347 = arith.constant dense<0.000000e+00> : vector<32x9xf32>
    %331 = tpu.matmul %258, %330, %cst_347 {dimension_numbers = #tpu.dot_dimension_numbers<[1], [0], [0], [1], [0, 0, 1, 1], [], []>} : vector<32x16xf32>, vector<16x9xf32>, vector<32x9xf32> -> vector<32x9xf32>
    %c10_348 = arith.constant 10 : index
    %c0_349 = arith.constant 0 : index
    %c0_350 = arith.constant 0 : index
    %332 = vector.load %arg9[%c10_348, %c0_349, %c0_350] : memref<16x2x32xf32, #tpu.memory_space<vmem>>, vector<1x2x32xf32>
    %333 = vector.shape_cast %332 : vector<1x2x32xf32> to vector<2x32xf32>
    %cst_351 = arith.constant dense<0.000000e+00> : vector<2x9xf32>
    %334 = tpu.matmul %333, %331, %cst_351 {dimension_numbers = #tpu.dot_dimension_numbers<[1], [0], [0], [1], [0, 0, 1, 1], [], []>} : vector<2x32xf32>, vector<32x9xf32>, vector<2x9xf32> -> vector<2x9xf32>
    %335 = arith.addf %328, %334 : vector<2x9xf32>
    %c11_352 = arith.constant 11 : index
    %c0_353 = arith.constant 0 : index
    %c0_354 = arith.constant 0 : index
    %336 = vector.load %arg8[%c11_352, %c0_353, %c0_354] : memref<16x16x9xf32, #tpu.memory_space<vmem>>, vector<1x16x9xf32>
    %337 = vector.shape_cast %336 : vector<1x16x9xf32> to vector<16x9xf32>
    %cst_355 = arith.constant dense<0.000000e+00> : vector<32x9xf32>
    %338 = tpu.matmul %258, %337, %cst_355 {dimension_numbers = #tpu.dot_dimension_numbers<[1], [0], [0], [1], [0, 0, 1, 1], [], []>} : vector<32x16xf32>, vector<16x9xf32>, vector<32x9xf32> -> vector<32x9xf32>
    %c11_356 = arith.constant 11 : index
    %c0_357 = arith.constant 0 : index
    %c0_358 = arith.constant 0 : index
    %339 = vector.load %arg9[%c11_356, %c0_357, %c0_358] : memref<16x2x32xf32, #tpu.memory_space<vmem>>, vector<1x2x32xf32>
    %340 = vector.shape_cast %339 : vector<1x2x32xf32> to vector<2x32xf32>
    %cst_359 = arith.constant dense<0.000000e+00> : vector<2x9xf32>
    %341 = tpu.matmul %340, %338, %cst_359 {dimension_numbers = #tpu.dot_dimension_numbers<[1], [0], [0], [1], [0, 0, 1, 1], [], []>} : vector<2x32xf32>, vector<32x9xf32>, vector<2x9xf32> -> vector<2x9xf32>
    %342 = arith.addf %335, %341 : vector<2x9xf32>
    %c12_360 = arith.constant 12 : index
    %c0_361 = arith.constant 0 : index
    %c0_362 = arith.constant 0 : index
    %343 = vector.load %arg8[%c12_360, %c0_361, %c0_362] : memref<16x16x9xf32, #tpu.memory_space<vmem>>, vector<1x16x9xf32>
    %344 = vector.shape_cast %343 : vector<1x16x9xf32> to vector<16x9xf32>
    %cst_363 = arith.constant dense<0.000000e+00> : vector<32x9xf32>
    %345 = tpu.matmul %258, %344, %cst_363 {dimension_numbers = #tpu.dot_dimension_numbers<[1], [0], [0], [1], [0, 0, 1, 1], [], []>} : vector<32x16xf32>, vector<16x9xf32>, vector<32x9xf32> -> vector<32x9xf32>
    %c12_364 = arith.constant 12 : index
    %c0_365 = arith.constant 0 : index
    %c0_366 = arith.constant 0 : index
    %346 = vector.load %arg9[%c12_364, %c0_365, %c0_366] : memref<16x2x32xf32, #tpu.memory_space<vmem>>, vector<1x2x32xf32>
    %347 = vector.shape_cast %346 : vector<1x2x32xf32> to vector<2x32xf32>
    %cst_367 = arith.constant dense<0.000000e+00> : vector<2x9xf32>
    %348 = tpu.matmul %347, %345, %cst_367 {dimension_numbers = #tpu.dot_dimension_numbers<[1], [0], [0], [1], [0, 0, 1, 1], [], []>} : vector<2x32xf32>, vector<32x9xf32>, vector<2x9xf32> -> vector<2x9xf32>
    %349 = arith.addf %342, %348 : vector<2x9xf32>
    %c13_368 = arith.constant 13 : index
    %c0_369 = arith.constant 0 : index
    %c0_370 = arith.constant 0 : index
    %350 = vector.load %arg8[%c13_368, %c0_369, %c0_370] : memref<16x16x9xf32, #tpu.memory_space<vmem>>, vector<1x16x9xf32>
    %351 = vector.shape_cast %350 : vector<1x16x9xf32> to vector<16x9xf32>
    %cst_371 = arith.constant dense<0.000000e+00> : vector<32x9xf32>
    %352 = tpu.matmul %258, %351, %cst_371 {dimension_numbers = #tpu.dot_dimension_numbers<[1], [0], [0], [1], [0, 0, 1, 1], [], []>} : vector<32x16xf32>, vector<16x9xf32>, vector<32x9xf32> -> vector<32x9xf32>
    %c13_372 = arith.constant 13 : index
    %c0_373 = arith.constant 0 : index
    %c0_374 = arith.constant 0 : index
    %353 = vector.load %arg9[%c13_372, %c0_373, %c0_374] : memref<16x2x32xf32, #tpu.memory_space<vmem>>, vector<1x2x32xf32>
    %354 = vector.shape_cast %353 : vector<1x2x32xf32> to vector<2x32xf32>
    %cst_375 = arith.constant dense<0.000000e+00> : vector<2x9xf32>
    %355 = tpu.matmul %354, %352, %cst_375 {dimension_numbers = #tpu.dot_dimension_numbers<[1], [0], [0], [1], [0, 0, 1, 1], [], []>} : vector<2x32xf32>, vector<32x9xf32>, vector<2x9xf32> -> vector<2x9xf32>
    %356 = arith.addf %349, %355 : vector<2x9xf32>
    %c14_376 = arith.constant 14 : index
    %c0_377 = arith.constant 0 : index
    %c0_378 = arith.constant 0 : index
    %357 = vector.load %arg8[%c14_376, %c0_377, %c0_378] : memref<16x16x9xf32, #tpu.memory_space<vmem>>, vector<1x16x9xf32>
    %358 = vector.shape_cast %357 : vector<1x16x9xf32> to vector<16x9xf32>
    %cst_379 = arith.constant dense<0.000000e+00> : vector<32x9xf32>
    %359 = tpu.matmul %258, %358, %cst_379 {dimension_numbers = #tpu.dot_dimension_numbers<[1], [0], [0], [1], [0, 0, 1, 1], [], []>} : vector<32x16xf32>, vector<16x9xf32>, vector<32x9xf32> -> vector<32x9xf32>
    %c14_380 = arith.constant 14 : index
    %c0_381 = arith.constant 0 : index
    %c0_382 = arith.constant 0 : index
    %360 = vector.load %arg9[%c14_380, %c0_381, %c0_382] : memref<16x2x32xf32, #tpu.memory_space<vmem>>, vector<1x2x32xf32>
    %361 = vector.shape_cast %360 : vector<1x2x32xf32> to vector<2x32xf32>
    %cst_383 = arith.constant dense<0.000000e+00> : vector<2x9xf32>
    %362 = tpu.matmul %361, %359, %cst_383 {dimension_numbers = #tpu.dot_dimension_numbers<[1], [0], [0], [1], [0, 0, 1, 1], [], []>} : vector<2x32xf32>, vector<32x9xf32>, vector<2x9xf32> -> vector<2x9xf32>
    %363 = arith.addf %356, %362 : vector<2x9xf32>
    %c15_384 = arith.constant 15 : index
    %c0_385 = arith.constant 0 : index
    %c0_386 = arith.constant 0 : index
    %364 = vector.load %arg8[%c15_384, %c0_385, %c0_386] : memref<16x16x9xf32, #tpu.memory_space<vmem>>, vector<1x16x9xf32>
    %365 = vector.shape_cast %364 : vector<1x16x9xf32> to vector<16x9xf32>
    %cst_387 = arith.constant dense<0.000000e+00> : vector<32x9xf32>
    %366 = tpu.matmul %258, %365, %cst_387 {dimension_numbers = #tpu.dot_dimension_numbers<[1], [0], [0], [1], [0, 0, 1, 1], [], []>} : vector<32x16xf32>, vector<16x9xf32>, vector<32x9xf32> -> vector<32x9xf32>
    %c15_388 = arith.constant 15 : index
    %c0_389 = arith.constant 0 : index
    %c0_390 = arith.constant 0 : index
    %367 = vector.load %arg9[%c15_388, %c0_389, %c0_390] : memref<16x2x32xf32, #tpu.memory_space<vmem>>, vector<1x2x32xf32>
    %368 = vector.shape_cast %367 : vector<1x2x32xf32> to vector<2x32xf32>
    %cst_391 = arith.constant dense<0.000000e+00> : vector<2x9xf32>
    %369 = tpu.matmul %368, %366, %cst_391 {dimension_numbers = #tpu.dot_dimension_numbers<[1], [0], [0], [1], [0, 0, 1, 1], [], []>} : vector<2x32xf32>, vector<32x9xf32>, vector<2x9xf32> -> vector<2x9xf32>
    %370 = arith.addf %363, %369 : vector<2x9xf32>
    %c0_392 = arith.constant 0 : index
    %c0_393 = arith.constant 0 : index
    %371 = vector.load %arg10[%c0_392, %c0_393] : memref<2x1xf32, #tpu.memory_space<vmem>>, vector<2x1xf32>
    %372 = vector.broadcast %371 : vector<2x1xf32> to vector<2x9xf32>
    %373 = arith.addf %370, %372 : vector<2x9xf32>
    %c0_394 = arith.constant 0 : index
    %c0_395 = arith.constant 0 : index
    %374 = vector.load %arg18[%c0_394, %c0_395] : memref<2x9xf32, #tpu.memory_space<vmem>>, vector<2x9xf32>
    tpu.vector_store %arg18[%c0_394, %c0_395], %373 {strides = array<i32>} : memref<2x9xf32, #tpu.memory_space<vmem>>, vector<2x9xf32>,
    %c0_396 = arith.constant 0 : index
    %c0_397 = arith.constant 0 : index
    %375 = vector.load %arg11[%c0_396, %c0_397] : memref<9x1xf32, #tpu.memory_space<vmem>>, vector<9x1xf32>
    %cst_398 = arith.constant dense<0.000000e+00> : vector<2x1xf32>
    %376 = tpu.matmul %373, %375, %cst_398 {dimension_numbers = #tpu.dot_dimension_numbers<[1], [0], [0], [1], [0, 0, 1, 1], [], []>} : vector<2x9xf32>, vector<9x1xf32>, vector<2x1xf32> -> vector<2x1xf32>
    %c0_399 = arith.constant 0 : index
    %c0_400 = arith.constant 0 : index
    %377 = vector.load %arg12[%c0_399, %c0_400] : memref<1x1xf32, #tpu.memory_space<vmem>>, vector<1x1xf32>
    %378 = vector.broadcast %377 : vector<1x1xf32> to vector<2x1xf32>
    %379 = arith.addf %376, %378 : vector<2x1xf32>
    %c0_401 = arith.constant 0 : index
    %c0_402 = arith.constant 0 : index
    %380 = vector.load %arg19[%c0_401, %c0_402] : memref<2x1xf32, #tpu.memory_space<vmem>>, vector<2x1xf32>
    tpu.vector_store %arg19[%c0_401, %c0_402], %379 {strides = array<i32>} : memref<2x1xf32, #tpu.memory_space<vmem>>, vector<2x1xf32>,
    %cst_403 = arith.constant dense<0.000000e+00> : vector<2xf32>
    %381 = vector.multi_reduction <add>, %379, %cst_403 [1] : vector<2x1xf32> to vector<2xf32>
    %382 = vector.shape_cast %381 : vector<2xf32> to vector<2x1xf32>
    %cst_404 = arith.constant 1.000000e+00 : f32
    %383 = vector.broadcast %cst_404 : f32 to vector<2x1xf32>
    %384 = arith.divf %382, %383 : vector<2x1xf32>
    %c0_405 = arith.constant 0 : index
    %c0_406 = arith.constant 0 : index
    %385 = vector.load %arg20[%c0_405, %c0_406] : memref<2x1xf32, #tpu.memory_space<vmem>>, vector<2x1xf32>
    tpu.vector_store %arg20[%c0_405, %c0_406], %384 {strides = array<i32>} : memref<2x1xf32, #tpu.memory_space<vmem>>, vector<2x1xf32>,
    return
  }
  func.func @transform_0(%arg0: i32) -> (i32, i32) {
    %c0_i32 = arith.constant 0 : i32
    %c0_i32_0 = arith.constant 0 : i32
    %c0_i32_1 = arith.constant 0 : i32
    return %c0_i32, %c0_i32_0 : i32, i32
  }
  func.func @transform_1(%arg0: i32) -> (i32, i32, i32) {
    %c0_i32 = arith.constant 0 : i32
    %c0_i32_0 = arith.constant 0 : i32
    %c0_i32_1 = arith.constant 0 : i32
    %c0_i32_2 = arith.constant 0 : i32
    return %c0_i32, %c0_i32_0, %c0_i32_1 : i32, i32, i32
  }
  func.func @transform_2(%arg0: i32) -> (i32, i32, i32) {
    %c0_i32 = arith.constant 0 : i32
    %c0_i32_0 = arith.constant 0 : i32
    %c0_i32_1 = arith.constant 0 : i32
    %c0_i32_2 = arith.constant 0 : i32
    return %c0_i32, %c0_i32_0, %c0_i32_1 : i32, i32, i32
  }
  func.func @transform_3(%arg0: i32) -> (i32, i32) {
    %c0_i32 = arith.constant 0 : i32
    %c0_i32_0 = arith.constant 0 : i32
    %c0_i32_1 = arith.constant 0 : i32
    return %c0_i32, %c0_i32_0 : i32, i32
  }
  func.func @transform_4(%arg0: i32) -> (i32, i32, i32) {
    %c0_i32 = arith.constant 0 : i32
    %c0_i32_0 = arith.constant 0 : i32
    %c0_i32_1 = arith.constant 0 : i32
    %c0_i32_2 = arith.constant 0 : i32
    return %c0_i32, %c0_i32_0, %c0_i32_1 : i32, i32, i32
  }
  func.func @transform_5(%arg0: i32) -> (i32, i32, i32) {
    %c0_i32 = arith.constant 0 : i32
    %c0_i32_0 = arith.constant 0 : i32
    %c0_i32_1 = arith.constant 0 : i32
    %c0_i32_2 = arith.constant 0 : i32
    return %c0_i32, %c0_i32_0, %c0_i32_1 : i32, i32, i32
  }
  func.func @transform_6(%arg0: i32) -> (i32, i32) {
    %c0_i32 = arith.constant 0 : i32
    %c0_i32_0 = arith.constant 0 : i32
    %c0_i32_1 = arith.constant 0 : i32
    return %c0_i32, %c0_i32_0 : i32, i32
  }
  func.func @transform_7(%arg0: i32) -> (i32, i32, i32) {
    %c0_i32 = arith.constant 0 : i32
    %c0_i32_0 = arith.constant 0 : i32
    %c0_i32_1 = arith.constant 0 : i32
    %c0_i32_2 = arith.constant 0 : i32
    return %c0_i32, %c0_i32_0, %c0_i32_1 : i32, i32, i32
  }
  func.func @transform_8(%arg0: i32) -> (i32, i32, i32) {
    %c0_i32 = arith.constant 0 : i32
    %c0_i32_0 = arith.constant 0 : i32
    %c0_i32_1 = arith.constant 0 : i32
    %c0_i32_2 = arith.constant 0 : i32
    return %c0_i32, %c0_i32_0, %c0_i32_1 : i32, i32, i32
  }
  func.func @transform_9(%arg0: i32) -> (i32, i32) {
    %c0_i32 = arith.constant 0 : i32
    %c0_i32_0 = arith.constant 0 : i32
    %c0_i32_1 = arith.constant 0 : i32
    return %c0_i32, %c0_i32_0 : i32, i32
  }
  func.func @transform_10(%arg0: i32) -> (i32, i32) {
    %c0_i32 = arith.constant 0 : i32
    %c0_i32_0 = arith.constant 0 : i32
    %c0_i32_1 = arith.constant 0 : i32
    return %c0_i32, %c0_i32_0 : i32, i32
  }
  func.func @transform_11(%arg0: i32) -> (i32, i32) {
    %c0_i32 = arith.constant 0 : i32
    %c0_i32_0 = arith.constant 0 : i32
    %c0_i32_1 = arith.constant 0 : i32
    return %c0_i32, %c0_i32_0 : i32, i32
  }
  func.func @transform_12(%arg0: i32) -> (i32, i32) {
    %c0_i32 = arith.constant 0 : i32
    %c0_i32_0 = arith.constant 0 : i32
    %c0_i32_1 = arith.constant 0 : i32
    return %c0_i32, %c0_i32_0 : i32, i32
  }
  func.func @transform_13(%arg0: i32) -> (i32, i32) {
    %c0_i32 = arith.constant 0 : i32
    %c0_i32_0 = arith.constant 0 : i32
    %c0_i32_1 = arith.constant 0 : i32
    return %c0_i32, %c0_i32_0 : i32, i32
  }
  func.func @transform_14(%arg0: i32) -> (i32, i32) {
    %c0_i32 = arith.constant 0 : i32
    %c0_i32_0 = arith.constant 0 : i32
    %c0_i32_1 = arith.constant 0 : i32
    return %c0_i32, %c0_i32_0 : i32, i32
  }
  func.func @transform_15(%arg0: i32) -> (i32, i32) {
    %c0_i32 = arith.constant 0 : i32
    %c0_i32_0 = arith.constant 0 : i32
    %c0_i32_1 = arith.constant 0 : i32
    return %c0_i32, %c0_i32_0 : i32, i32
  }
  func.func @transform_16(%arg0: i32) -> (i32, i32) {
    %c0_i32 = arith.constant 0 : i32
    %c0_i32_0 = arith.constant 0 : i32
    %c0_i32_1 = arith.constant 0 : i32
    return %c0_i32, %c0_i32_0 : i32, i32
  }
  func.func @transform_17(%arg0: i32) -> (i32, i32) {
    %c0_i32 = arith.constant 0 : i32
    %c0_i32_0 = arith.constant 0 : i32
    %c0_i32_1 = arith.constant 0 : i32
    return %c0_i32, %c0_i32_0 : i32, i32
  }
  func.func @transform_18(%arg0: i32) -> (i32, i32) {
    %c0_i32 = arith.constant 0 : i32
    %c0_i32_0 = arith.constant 0 : i32
    %c0_i32_1 = arith.constant 0 : i32
    return %c0_i32, %c0_i32_0 : i32, i32
  }
  func.func @transform_19(%arg0: i32) -> (i32, i32) {
    %c0_i32 = arith.constant 0 : i32
    %c0_i32_0 = arith.constant 0 : i32
    %c0_i32_1 = arith.constant 0 : i32
    return %c0_i32, %c0_i32_0 : i32, i32
  }
}

</mosaic_0001>

<llo_original>
// kernel: forward.1
$region0: #{forward.1}
  #allocation0 [shape = 'u32[]', space=smem, size = 0x4, offset = 0x4, fixed_abs, tag = 'smem constant byte address 0x4 - core index']
  #allocation1 [shape = 'u32[144,128]{1,0:T(1,128)}', space=vmem, size = 0x12000, scoped, tag = 'internal scratch']
  #allocation2 [shape = 'f32[1,1]{1,0:T(1,128)S(1)}', space=vmem, size = 0x200, scoped, tag = 'scoped memory for forward.1']
  %s0 = inlined_call_operand.vmem [shape: f32[8,256], index: 0, kind: input, shape index: {}]
  %s1 = inlined_call_operand.vmem [shape: f32[16,256,64], index: 1, kind: input, shape index: {}]
  %s2 = inlined_call_operand.vmem [shape: f32[16,16,8], index: 2, kind: input, shape index: {}]
  %s3 = inlined_call_operand.vmem [shape: f32[16,1], index: 3, kind: input, shape index: {}]
  %s4 = inlined_call_operand.vmem [shape: f32[16,64,16], index: 4, kind: input, shape index: {}]
  %s5 = inlined_call_operand.vmem [shape: f32[16,32,16], index: 5, kind: input, shape index: {}]
  %s6 = inlined_call_operand.vmem [shape: f32[32,1], index: 6, kind: input, shape index: {}]
  %s7 = inlined_call_operand.vmem [shape: f32[16,16,9], index: 7, kind: input, shape index: {}]
  %s8 = inlined_call_operand.vmem [shape: f32[16,2,32], index: 8, kind: input, shape index: {}]
  %s9 = inlined_call_operand.vmem [shape: f32[2,1], index: 9, kind: input, shape index: {}]
  %s10 = inlined_call_operand.vmem [shape: f32[9,1], index: 10, kind: input, shape index: {}]
  %s11 = inlined_call_operand.<no memory space> [shape: f32[1,1], index: 11, kind: input, shape index: {}]
  %s12 = inlined_call_operand.vmem [shape: f32[16,64], index: 12, kind: output, shape index: {0}]
  %s13 = inlined_call_operand.vmem [shape: f32[16,64], index: 13, kind: output, shape index: {1}]
  %s14 = inlined_call_operand.vmem [shape: f32[32,16], index: 14, kind: output, shape index: {2}]
  %s15 = inlined_call_operand.vmem [shape: f32[32,16], index: 15, kind: output, shape index: {3}]
  %s16 = inlined_call_operand.vmem [shape: f32[32,16], index: 16, kind: output, shape index: {4}]
  %s17 = inlined_call_operand.vmem [shape: f32[2,9], index: 17, kind: output, shape index: {5}]
  %s18 = inlined_call_operand.vmem [shape: f32[2,1], index: 18, kind: output, shape index: {6}]
  %s19 = inlined_call_operand.vmem [shape: f32[2,1], index: 19, kind: output, shape index: {7}]
  %20 = xla_tuple %s12, %s13, %s14, %s15, %s16, %s17, %s18, %s19
  %s21 = sld [smem:[#allocation0]]
  $region114: #{forward.1} parent=0
    _
  %s23 = ssub.s32 1, %s21
  %s24 = scalar_select 0, %s23, %s21
  %v25 = vstv %s11
  %26 = vst [vmem:[#allocation2] sm:$0x1] %v25
  // Predicated region
  $region2: #{forward.1} parent=0 // pred_check
    _
  $region3: #{forward.1} parent=0 // pred_check_branch
    %28 = sbr.rel (0) target = $region5
  $region4: #{forward.1} parent=0 // pred_region
    _
  $region5: #{forward.1} parent=0 // pred_fallthru
    _
  // Predicated region
  $region6: #{forward.1} parent=0 // pred_check
    _
  $region7: #{forward.1} parent=0 // pred_check_branch
    %30 = sbr.rel (0) target = $region9
  $region8: #{forward.1} parent=0 // pred_region
    _
  $region9: #{forward.1} parent=0 // pred_fallthru
    _
  // Predicated region
  $region10: #{forward.1} parent=0 // pred_check
    _
  $region11: #{forward.1} parent=0 // pred_check_branch
    %32 = sbr.rel (0) target = $region13
  $region12: #{forward.1} parent=0 // pred_region
    _
  $region13: #{forward.1} parent=0 // pred_fallthru
    _
  // Predicated region
  $region14: #{forward.1} parent=0 // pred_check
    _
  $region15: #{forward.1} parent=0 // pred_check_branch
    %34 = sbr.rel (0) target = $region17
  $region16: #{forward.1} parent=0 // pred_region
    _
  $region17: #{forward.1} parent=0 // pred_fallthru
    _
  // Predicated region
  $region18: #{forward.1} parent=0 // pred_check
    _
  $region19: #{forward.1} parent=0 // pred_check_branch
    %36 = sbr.rel (0) target = $region21
  $region20: #{forward.1} parent=0 // pred_region
    _
  $region21: #{forward.1} parent=0 // pred_fallthru
    _
  // Predicated region
  $region22: #{forward.1} parent=0 // pred_check
    _
  $region23: #{forward.1} parent=0 // pred_check_branch
    %38 = sbr.rel (0) target = $region25
  $region24: #{forward.1} parent=0 // pred_region
    _
  $region25: #{forward.1} parent=0 // pred_fallthru
    _
  // Predicated region
  $region26: #{forward.1} parent=0 // pred_check
    _
  $region27: #{forward.1} parent=0 // pred_check_branch
    %40 = sbr.rel (0) target = $region29
  $region28: #{forward.1} parent=0 // pred_region
    _
  $region29: #{forward.1} parent=0 // pred_fallthru
    _
  // Predicated region
  $region30: #{forward.1} parent=0 // pred_check
    _
  $region31: #{forward.1} parent=0 // pred_check_branch
    %42 = sbr.rel (0) target = $region33
  $region32: #{forward.1} parent=0 // pred_region
    _
  $region33: #{forward.1} parent=0 // pred_fallthru
    _
  // Predicated region
  $region34: #{forward.1} parent=0 // pred_check
    _
  $region35: #{forward.1} parent=0 // pred_check_branch
    %44 = sbr.rel (0) target = $region37
  $region36: #{forward.1} parent=0 // pred_region
    _
  $region37: #{forward.1} parent=0 // pred_fallthru
    _
  // Predicated region
  $region38: #{forward.1} parent=0 // pred_check
    _
  $region39: #{forward.1} parent=0 // pred_check_branch
    %46 = sbr.rel (0) target = $region41
  $region40: #{forward.1} parent=0 // pred_region
    _
  $region41: #{forward.1} parent=0 // pred_fallthru
    _
  // Predicated region
  $region42: #{forward.1} parent=0 // pred_check
    _
  $region43: #{forward.1} parent=0 // pred_check_branch
    %48 = sbr.rel (0) target = $region45
  $region44: #{forward.1} parent=0 // pred_region
    _
  $region45: #{forward.1} parent=0 // pred_fallthru
    _
  // Predicated region
  $region46: #{forward.1} parent=0 // pred_check
    _
  $region47: #{forward.1} parent=0 // pred_check_branch
    %50 = sbr.rel (0) target = $region49
  $region48: #{forward.1} parent=0 // pred_region
    _
  $region49: #{forward.1} parent=0 // pred_fallthru
    _
  %v51 = vld [vmem:[%s0] sm:$0xff]
  %v52 = vld [vmem:[%s0 + $0x8] sm:$0xff]
  %v53 = vld [vmem:[%s1] sm:$0xff]
  %v54 = vld [vmem:[%s1 + $0x8] sm:$0xff]
  %v55 = vld [vmem:[%s1 + $0x10] sm:$0xff]
  %v56 = vld [vmem:[%s1 + $0x18] sm:$0xff]
  %v57 = vld [vmem:[%s1 + $0x20] sm:$0xff]
  %v58 = vld [vmem:[%s1 + $0x28] sm:$0xff]
  %v59 = vld [vmem:[%s1 + $0x30] sm:$0xff]
  %v60 = vld [vmem:[%s1 + $0x38] sm:$0xff]
  %v61 = vld [vmem:[%s1 + $0x40] sm:$0xff]
  %v62 = vld [vmem:[%s1 + $0x48] sm:$0xff]
  %v63 = vld [vmem:[%s1 + $0x50] sm:$0xff]
  %v64 = vld [vmem:[%s1 + $0x58] sm:$0xff]
  %v65 = vld [vmem:[%s1 + $0x60] sm:$0xff]
  %v66 = vld [vmem:[%s1 + $0x68] sm:$0xff]
  %v67 = vld [vmem:[%s1 + $0x70] sm:$0xff]
  %v68 = vld [vmem:[%s1 + $0x78] sm:$0xff]
  %v69 = vld [vmem:[%s1 + $0x80] sm:$0xff]
  %v70 = vld [vmem:[%s1 + $0x88] sm:$0xff]
  %v71 = vld [vmem:[%s1 + $0x90] sm:$0xff]
  %v72 = vld [vmem:[%s1 + $0x98] sm:$0xff]
  %v73 = vld [vmem:[%s1 + $0xa0] sm:$0xff]
  %v74 = vld [vmem:[%s1 + $0xa8] sm:$0xff]
  %v75 = vld [vmem:[%s1 + $0xb0] sm:$0xff]
  %v76 = vld [vmem:[%s1 + $0xb8] sm:$0xff]
  %v77 = vld [vmem:[%s1 + $0xc0] sm:$0xff]
  %v78 = vld [vmem:[%s1 + $0xc8] sm:$0xff]
  %v79 = vld [vmem:[%s1 + $0xd0] sm:$0xff]
  %v80 = vld [vmem:[%s1 + $0xd8] sm:$0xff]
  %v81 = vld [vmem:[%s1 + $0xe0] sm:$0xff]
  %v82 = vld [vmem:[%s1 + $0xe8] sm:$0xff]
  %v83 = vld [vmem:[%s1 + $0xf0] sm:$0xff]
  %v84 = vld [vmem:[%s1 + $0xf8] sm:$0xff]
  %85 = vmatprep.subr.mxu0 0.0
  %86 = vmatpush1.msra.mxu0 %v68
  %87 = vmatprep.subr.mxu0 0.0
  %88 = vmatpush1.msra.mxu0 %v67
  %89 = vmatprep.subr.mxu0 0.0
  %90 = vmatpush1.msra.mxu0 %v66
  %91 = vmatprep.subr.mxu0 0.0
  %92 = vmatpush1.msra.mxu0 %v65
  %93 = vmatprep.subr.mxu0 0.0
  %94 = vmatpush1.msra.mxu0 %v64
  %95 = vmatprep.subr.mxu0 0.0
  %96 = vmatpush1.msra.mxu0 %v63
  %97 = vmatprep.subr.mxu0 0.0
  %98 = vmatpush1.msra.mxu0 %v62
  %99 = vmatprep.subr.mxu0 0.0
  %100 = vmatpush1.msra.mxu0 %v61
  %101 = vmatprep.subr.mxu0 0.0
  %102 = vmatpush1.msra.mxu0 %v60
  %103 = vmatprep.subr.mxu0 0.0
  %104 = vmatpush1.msra.mxu0 %v59
  %105 = vmatprep.subr.mxu0 0.0
  %106 = vmatpush1.msra.mxu0 %v58
  %107 = vmatprep.subr.mxu0 0.0
  %108 = vmatpush1.msra.mxu0 %v57
  %109 = vmatprep.subr.mxu0 0.0
  %110 = vmatpush1.msra.mxu0 %v56
  %111 = vmatprep.subr.mxu0 0.0
  %112 = vmatpush1.msra.mxu0 %v55
  %113 = vmatprep.subr.mxu0 0.0
  %114 = vmatpush1.msra.mxu0 %v54
  %115 = vmatprep.subr.mxu0 0.0
  %116 = vmatpush1.msra.mxu0 %v53
  %117 = vmatprep.subr.mxu0 0.0
  %118 = vmatpush2.msra.mxu0 %v84
  %119 = vmatprep.subr.mxu0 0.0
  %120 = vmatpush2.msra.mxu0 %v83
  %121 = vmatprep.subr.mxu0 0.0
  %122 = vmatpush2.msra.mxu0 %v82
  %123 = vmatprep.subr.mxu0 0.0
  %124 = vmatpush2.msra.mxu0 %v81
  %125 = vmatprep.subr.mxu0 0.0
  %126 = vmatpush2.msra.mxu0 %v80
  %127 = vmatprep.subr.mxu0 0.0
  %128 = vmatpush2.msra.mxu0 %v79
  %129 = vmatprep.subr.mxu0 0.0
  %130 = vmatpush2.msra.mxu0 %v78
  %131 = vmatprep.subr.mxu0 0.0
  %132 = vmatpush2.msra.mxu0 %v77
  %133 = vmatprep.subr.mxu0 0.0
  %134 = vmatpush2.msra.mxu0 %v76
  %135 = vmatprep.subr.mxu0 0.0
  %136 = vmatpush2.msra.mxu0 %v75
  %137 = vmatprep.subr.mxu0 0.0
  %138 = vmatpush2.msra.mxu0 %v74
  %139 = vmatprep.subr.mxu0 0.0
  %140 = vmatpush2.msra.mxu0 %v73
  %141 = vmatprep.subr.mxu0 0.0
  %142 = vmatpush2.msra.mxu0 %v72
  %143 = vmatprep.subr.mxu0 0.0
  %144 = vmatpush2.msra.mxu0 %v71
  %145 = vmatprep.subr.mxu0 0.0
  %146 = vmatpush2.msra.mxu0 %v70
  %147 = vmatprep.subr.mxu0 0.0
  %148 = vmatpush2.msra.mxu0 %v69
  %149 = vmatprep.mubr.f32.mxu0 %v52
  %150 = vmatmul.mubr.f32.gmra.mxu0 %v51
  %v151 = vpop.f32.mrf.mxu0
  %v152 = vadd.f32 0.0, %v151
  %v153 = vpop.f32.mrf.mxu0
  %154 = vdwg.mxu0
  %v155 = vld [vmem:[%s2] sm:$0xff]
  %v156 = vld [vmem:[%s2 + $0x8] sm:$0xff]
  %s157 = scalar_lea.vmem %s1, 256
  %v158 = vld [vmem:[%s157] sm:$0xff]
  %v159 = vld [vmem:[%s157 + $0x8] sm:$0xff]
  %v160 = vld [vmem:[%s157 + $0x10] sm:$0xff]
  %v161 = vld [vmem:[%s157 + $0x18] sm:$0xff]
  %v162 = vld [vmem:[%s157 + $0x20] sm:$0xff]
  %v163 = vld [vmem:[%s157 + $0x28] sm:$0xff]
  %v164 = vld [vmem:[%s157 + $0x30] sm:$0xff]
  %v165 = vld [vmem:[%s157 + $0x38] sm:$0xff]
  %v166 = vld [vmem:[%s157 + $0x40] sm:$0xff]
  %v167 = vld [vmem:[%s157 + $0x48] sm:$0xff]
  %v168 = vld [vmem:[%s157 + $0x50] sm:$0xff]
  %v169 = vld [vmem:[%s157 + $0x58] sm:$0xff]
  %v170 = vld [vmem:[%s157 + $0x60] sm:$0xff]
  %v171 = vld [vmem:[%s157 + $0x68] sm:$0xff]
  %v172 = vld [vmem:[%s157 + $0x70] sm:$0xff]
  %v173 = vld [vmem:[%s157 + $0x78] sm:$0xff]
  %v174 = vld [vmem:[%s157 + $0x80] sm:$0xff]
  %v175 = vld [vmem:[%s157 + $0x88] sm:$0xff]
  %v176 = vld [vmem:[%s157 + $0x90] sm:$0xff]
  %v177 = vld [vmem:[%s157 + $0x98] sm:$0xff]
  %v178 = vld [vmem:[%s157 + $0xa0] sm:$0xff]
  %v179 = vld [vmem:[%s157 + $0xa8] sm:$0xff]
  %v180 = vld [vmem:[%s157 + $0xb0] sm:$0xff]
  %v181 = vld [vmem:[%s157 + $0xb8] sm:$0xff]
  %v182 = vld [vmem:[%s157 + $0xc0] sm:$0xff]
  %v183 = vld [vmem:[%s157 + $0xc8] sm:$0xff]
  %v184 = vld [vmem:[%s157 + $0xd0] sm:$0xff]
  %v185 = vld [vmem:[%s157 + $0xd8] sm:$0xff]
  %v186 = vld [vmem:[%s157 + $0xe0] sm:$0xff]
  %v187 = vld [vmem:[%s157 + $0xe8] sm:$0xff]
  %v188 = vld [vmem:[%s157 + $0xf0] sm:$0xff]
  %v189 = vld [vmem:[%s157 + $0xf8] sm:$0xff]
  %190 = vmatprep.subr.mxu0 0.0
  %191 = vmatpush1.msra.mxu0 %v173
  %192 = vmatprep.subr.mxu0 0.0
  %193 = vmatpush1.msra.mxu0 %v172
  %194 = vmatprep.subr.mxu0 0.0
  %195 = vmatpush1.msra.mxu0 %v171
  %196 = vmatprep.subr.mxu0 0.0
  %197 = vmatpush1.msra.mxu0 %v170
  %198 = vmatprep.subr.mxu0 0.0
  %199 = vmatpush1.msra.mxu0 %v169
  %200 = vmatprep.subr.mxu0 0.0
  %201 = vmatpush1.msra.mxu0 %v168
  %202 = vmatprep.subr.mxu0 0.0
  %203 = vmatpush1.msra.mxu0 %v167
  %204 = vmatprep.subr.mxu0 0.0
  %205 = vmatpush1.msra.mxu0 %v166
  %206 = vmatprep.subr.mxu0 0.0
  %207 = vmatpush1.msra.mxu0 %v165
  %208 = vmatprep.subr.mxu0 0.0
  %209 = vmatpush1.msra.mxu0 %v164
  %210 = vmatprep.subr.mxu0 0.0
  %211 = vmatpush1.msra.mxu0 %v163
  %212 = vmatprep.subr.mxu0 0.0
  %213 = vmatpush1.msra.mxu0 %v162
  %214 = vmatprep.subr.mxu0 0.0
  %215 = vmatpush1.msra.mxu0 %v161
  %216 = vmatprep.subr.mxu0 0.0
  %217 = vmatpush1.msra.mxu0 %v160
  %218 = vmatprep.subr.mxu0 0.0
  %219 = vmatpush1.msra.mxu0 %v159
  %220 = vmatprep.subr.mxu0 0.0
  %221 = vmatpush1.msra.mxu0 %v158
  %222 = vmatprep.subr.mxu0 0.0
  %223 = vmatpush2.msra.mxu0 %v189
  %224 = vmatprep.subr.mxu0 0.0
  %225 = vmatpush2.msra.mxu0 %v188
  %226 = vmatprep.subr.mxu0 0.0
  %227 = vmatpush2.msra.mxu0 %v187
  %228 = vmatprep.subr.mxu0 0.0
  %229 = vmatpush2.msra.mxu0 %v186
  %230 = vmatprep.subr.mxu0 0.0
  %231 = vmatpush2.msra.mxu0 %v185
  %232 = vmatprep.subr.mxu0 0.0
  %233 = vmatpush2.msra.mxu0 %v184
  %234 = vmatprep.subr.mxu0 0.0
  %235 = vmatpush2.msra.mxu0 %v183
  %236 = vmatprep.subr.mxu0 0.0
  %237 = vmatpush2.msra.mxu0 %v182
  %238 = vmatprep.subr.mxu0 0.0
  %239 = vmatpush2.msra.mxu0 %v181
  %240 = vmatprep.subr.mxu0 0.0
  %241 = vmatpush2.msra.mxu0 %v180
  %242 = vmatprep.subr.mxu0 0.0
  %243 = vmatpush2.msra.mxu0 %v179
  %244 = vmatprep.subr.mxu0 0.0
  %245 = vmatpush2.msra.mxu0 %v178
  %246 = vmatprep.subr.mxu0 0.0
  %247 = vmatpush2.msra.mxu0 %v177
  %248 = vmatprep.subr.mxu0 0.0
  %249 = vmatpush2.msra.mxu0 %v176
  %250 = vmatprep.subr.mxu0 0.0
  %251 = vmatpush2.msra.mxu0 %v175
  %252 = vmatprep.subr.mxu0 0.0
  %253 = vmatpush2.msra.mxu0 %v174
  %254 = vmatprep.mubr.f32.mxu0 %v52
  %255 = vmatmul.mubr.f32.gmra.mxu0 %v51
  %v256 = vpop.f32.mrf.mxu0
  %v257 = vadd.f32 0.0, %v256
  %v258 = vpop.f32.mrf.mxu0
  %259 = vdwg.mxu0
  %s260 = scalar_lea.vmem %s2, 16
  %v261 = vld [vmem:[%s260] sm:$0xff]
  %v262 = vld [vmem:[%s260 + $0x8] sm:$0xff]
  %vm263 = vcmask 64512
  %v265 = vsel %vm263, %v261, 0
  %v268 = vsel %vm263, %v262, 0
  %270 = vmatprep.subr.mxu0 0.0
  %271 = vmatpush1.msra.mxu0 0.0
  %272 = vmatprep.subr.mxu0 0.0
  %273 = vmatpush1.msra.mxu0 0.0
  %274 = vmatprep.subr.mxu0 0.0
  %275 = vmatpush1.msra.mxu0 0.0
  %276 = vmatprep.subr.mxu0 0.0
  %277 = vmatpush1.msra.mxu0 0.0
  %278 = vmatprep.subr.mxu0 0.0
  %279 = vmatpush1.msra.mxu0 0.0
  %280 = vmatprep.subr.mxu0 0.0
  %281 = vmatpush1.msra.mxu0 0.0
  %282 = vmatprep.subr.mxu0 0.0
  %283 = vmatpush1.msra.mxu0 0.0
  %284 = vmatprep.subr.mxu0 0.0
  %285 = vmatpush1.msra.mxu0 0.0
  %286 = vmatprep.subr.mxu0 0.0
  %287 = vmatpush1.msra.mxu0 0.0
  %288 = vmatprep.subr.mxu0 0.0
  %289 = vmatpush1.msra.mxu0 0.0
  %290 = vmatprep.subr.mxu0 0.0
  %291 = vmatpush1.msra.mxu0 0.0
  %292 = vmatprep.subr.mxu0 0.0
  %293 = vmatpush1.msra.mxu0 0.0
  %294 = vmatprep.subr.mxu0 0.0
  %295 = vmatpush1.msra.mxu0 0.0
  %296 = vmatprep.subr.mxu0 0.0
  %297 = vmatpush1.msra.mxu0 0.0
  %298 = vmatprep.subr.mxu0 0.0
  %299 = vmatpush1.msra.mxu0 0.0
  %300 = vmatprep.subr.mxu0 0.0
  %301 = vmatpush1.msra.mxu0 %v257
  %302 = vmatprep.subr.mxu0 0.0
  %303 = vmatpush2.msra.mxu0 0.0
  %304 = vmatprep.subr.mxu0 0.0
  %305 = vmatpush2.msra.mxu0 0.0
  %306 = vmatprep.subr.mxu0 0.0
  %307 = vmatpush2.msra.mxu0 0.0
  %308 = vmatprep.subr.mxu0 0.0
  %309 = vmatpush2.msra.mxu0 0.0
  %310 = vmatprep.subr.mxu0 0.0
  %311 = vmatpush2.msra.mxu0 0.0
  %312 = vmatprep.subr.mxu0 0.0
  %313 = vmatpush2.msra.mxu0 0.0
  %314 = vmatprep.subr.mxu0 0.0
  %315 = vmatpush2.msra.mxu0 0.0
  %316 = vmatprep.subr.mxu0 0.0
  %317 = vmatpush2.msra.mxu0 0.0
  %318 = vmatprep.subr.mxu0 0.0
  %319 = vmatpush2.msra.mxu0 0.0
  %320 = vmatprep.subr.mxu0 0.0
  %321 = vmatpush2.msra.mxu0 0.0
  %322 = vmatprep.subr.mxu0 0.0
  %323 = vmatpush2.msra.mxu0 0.0
  %324 = vmatprep.subr.mxu0 0.0
  %325 = vmatpush2.msra.mxu0 0.0
  %326 = vmatprep.subr.mxu0 0.0
  %327 = vmatpush2.msra.mxu0 0.0
  %328 = vmatprep.subr.mxu0 0.0
  %329 = vmatpush2.msra.mxu0 0.0
  %330 = vmatprep.subr.mxu0 0.0
  %331 = vmatpush2.msra.mxu0 0.0
  %332 = vmatprep.subr.mxu0 0.0
  %333 = vmatpush2.msra.mxu0 0.0
  %334 = vmatprep.mubr.f32.mxu0 0.0
  %335 = vmatmul.mubr.f32.gmra.mxu0 %v265
  %v336 = vpop.f32.mrf.mxu0
  %v337 = vadd.f32 0.0, %v336
  %v338 = vpop.f32.mrf.mxu0
  %339 = vmatprep.mubr.f32.mxu0 0.0
  %340 = vmatmul.mubr.f32.gmra.mxu0 %v268
  %v341 = vpop.f32.mrf.mxu0
  %v342 = vadd.f32 0.0, %v341
  %v343 = vpop.f32.mrf.mxu0
  %344 = vdwg.mxu0
  %v346 = vsel %vm263, %v155, 0
  %v349 = vsel %vm263, %v156, 0
  %351 = vmatprep.subr.mxu0 0.0
  %352 = vmatpush1.msra.mxu0 0.0
  %353 = vmatprep.subr.mxu0 0.0
  %354 = vmatpush1.msra.mxu0 0.0
  %355 = vmatprep.subr.mxu0 0.0
  %356 = vmatpush1.msra.mxu0 0.0
  %357 = vmatprep.subr.mxu0 0.0
  %358 = vmatpush1.msra.mxu0 0.0
  %359 = vmatprep.subr.mxu0 0.0
  %360 = vmatpush1.msra.mxu0 0.0
  %361 = vmatprep.subr.mxu0 0.0
  %362 = vmatpush1.msra.mxu0 0.0
  %363 = vmatprep.subr.mxu0 0.0
  %364 = vmatpush1.msra.mxu0 0.0
  %365 = vmatprep.subr.mxu0 0.0
  %366 = vmatpush1.msra.mxu0 0.0
  %367 = vmatprep.subr.mxu0 0.0
  %368 = vmatpush1.msra.mxu0 0.0
  %369 = vmatprep.subr.mxu0 0.0
  %370 = vmatpush1.msra.mxu0 0.0
  %371 = vmatprep.subr.mxu0 0.0
  %372 = vmatpush1.msra.mxu0 0.0
  %373 = vmatprep.subr.mxu0 0.0
  %374 = vmatpush1.msra.mxu0 0.0
  %375 = vmatprep.subr.mxu0 0.0
  %376 = vmatpush1.msra.mxu0 0.0
  %377 = vmatprep.subr.mxu0 0.0
  %378 = vmatpush1.msra.mxu0 0.0
  %379 = vmatprep.subr.mxu0 0.0
  %380 = vmatpush1.msra.mxu0 0.0
  %381 = vmatprep.subr.mxu0 0.0
  %382 = vmatpush1.msra.mxu0 %v152
  %383 = vmatprep.subr.mxu0 0.0
  %384 = vmatpush2.msra.mxu0 0.0
  %385 = vmatprep.subr.mxu0 0.0
  %386 = vmatpush2.msra.mxu0 0.0
  %387 = vmatprep.subr.mxu0 0.0
  %388 = vmatpush2.msra.mxu0 0.0
  %389 = vmatprep.subr.mxu0 0.0
  %390 = vmatpush2.msra.mxu0 0.0
  %391 = vmatprep.subr.mxu0 0.0
  %392 = vmatpush2.msra.mxu0 0.0
  %393 = vmatprep.subr.mxu0 0.0
  %394 = vmatpush2.msra.mxu0 0.0
  %395 = vmatprep.subr.mxu0 0.0
  %396 = vmatpush2.msra.mxu0 0.0
  %397 = vmatprep.subr.mxu0 0.0
  %398 = vmatpush2.msra.mxu0 0.0
  %399 = vmatprep.subr.mxu0 0.0
  %400 = vmatpush2.msra.mxu0 0.0
  %401 = vmatprep.subr.mxu0 0.0
  %402 = vmatpush2.msra.mxu0 0.0
  %403 = vmatprep.subr.mxu0 0.0
  %404 = vmatpush2.msra.mxu0 0.0
  %405 = vmatprep.subr.mxu0 0.0
  %406 = vmatpush2.msra.mxu0 0.0
  %407 = vmatprep.subr.mxu0 0.0
  %408 = vmatpush2.msra.mxu0 0.0
  %409 = vmatprep.subr.mxu0 0.0
  %410 = vmatpush2.msra.mxu0 0.0
  %411 = vmatprep.subr.mxu0 0.0
  %412 = vmatpush2.msra.mxu0 0.0
  %413 = vmatprep.subr.mxu0 0.0
  %414 = vmatpush2.msra.mxu0 0.0
  %415 = vmatprep.mubr.f32.mxu0 0.0
  %416 = vmatmul.mubr.f32.gmra.mxu0 %v346
  %v417 = vpop.f32.mrf.mxu0
  %v418 = vadd.f32 %v337, %v417
  %v419 = vpop.f32.mrf.mxu0
  %420 = vmatprep.mubr.f32.mxu0 0.0
  %421 = vmatmul.mubr.f32.gmra.mxu0 %v349
  %v422 = vpop.f32.mrf.mxu0
  %v423 = vadd.f32 %v342, %v422
  %v424 = vpop.f32.mrf.mxu0
  %425 = vdwg.mxu0
  %s426 = scalar_lea.vmem %s1, 512
  %v427 = vld [vmem:[%s426] sm:$0xff]
  %v428 = vld [vmem:[%s426 + $0x8] sm:$0xff]
  %v429 = vld [vmem:[%s426 + $0x10] sm:$0xff]
  %v430 = vld [vmem:[%s426 + $0x18] sm:$0xff]
  %v431 = vld [vmem:[%s426 + $0x20] sm:$0xff]
  %v432 = vld [vmem:[%s426 + $0x28] sm:$0xff]
  %v433 = vld [vmem:[%s426 + $0x30] sm:$0xff]
  %v434 = vld [vmem:[%s426 + $0x38] sm:$0xff]
  %v435 = vld [vmem:[%s426 + $0x40] sm:$0xff]
  %v436 = vld [vmem:[%s426 + $0x48] sm:$0xff]
  %v437 = vld [vmem:[%s426 + $0x50] sm:$0xff]
  %v438 = vld [vmem:[%s426 + $0x58] sm:$0xff]
  %v439 = vld [vmem:[%s426 + $0x60] sm:$0xff]
  %v440 = vld [vmem:[%s426 + $0x68] sm:$0xff]
  %v441 = vld [vmem:[%s426 + $0x70] sm:$0xff]
  %v442 = vld [vmem:[%s426 + $0x78] sm:$0xff]
  %v443 = vld [vmem:[%s426 + $0x80] sm:$0xff]
  %v444 = vld [vmem:[%s426 + $0x88] sm:$0xff]
  %v445 = vld [vmem:[%s426 + $0x90] sm:$0xff]
  %v446 = vld [vmem:[%s426 + $0x98] sm:$0xff]
  %v447 = vld [vmem:[%s426 + $0xa0] sm:$0xff]
  %v448 = vld [vmem:[%s426 + $0xa8] sm:$0xff]
  %v449 = vld [vmem:[%s426 + $0xb0] sm:$0xff]
  %v450 = vld [vmem:[%s426 + $0xb8] sm:$0xff]
  %v451 = vld [vmem:[%s426 + $0xc0] sm:$0xff]
  %v452 = vld [vmem:[%s426 + $0xc8] sm:$0xff]
  %v453 = vld [vmem:[%s426 + $0xd0] sm:$0xff]
  %v454 = vld [vmem:[%s426 + $0xd8] sm:$0xff]
  %v455 = vld [vmem:[%s426 + $0xe0] sm:$0xff]
  %v456 = vld [vmem:[%s426 + $0xe8] sm:$0xff]
  %v457 = vld [vmem:[%s426 + $0xf0] sm:$0xff]
  %v458 = vld [vmem:[%s426 + $0xf8] sm:$0xff]
  %459 = vmatprep.subr.mxu0 0.0
  %460 = vmatpush1.msra.mxu0 %v442
  %461 = vmatprep.subr.mxu0 0.0
  %462 = vmatpush1.msra.mxu0 %v441
  %463 = vmatprep.subr.mxu0 0.0
  %464 = vmatpush1.msra.mxu0 %v440
  %465 = vmatprep.subr.mxu0 0.0
  %466 = vmatpush1.msra.mxu0 %v439
  %467 = vmatprep.subr.mxu0 0.0
  %468 = vmatpush1.msra.mxu0 %v438
  %469 = vmatprep.subr.mxu0 0.0
  %470 = vmatpush1.msra.mxu0 %v437
  %471 = vmatprep.subr.mxu0 0.0
  %472 = vmatpush1.msra.mxu0 %v436
  %473 = vmatprep.subr.mxu0 0.0
  %474 = vmatpush1.msra.mxu0 %v435
  %475 = vmatprep.subr.mxu0 0.0
  %476 = vmatpush1.msra.mxu0 %v434
  %477 = vmatprep.subr.mxu0 0.0
  %478 = vmatpush1.msra.mxu0 %v433
  %479 = vmatprep.subr.mxu0 0.0
  %480 = vmatpush1.msra.mxu0 %v432
  %481 = vmatprep.subr.mxu0 0.0
  %482 = vmatpush1.msra.mxu0 %v431
  %483 = vmatprep.subr.mxu0 0.0
  %484 = vmatpush1.msra.mxu0 %v430
  %485 = vmatprep.subr.mxu0 0.0
  %486 = vmatpush1.msra.mxu0 %v429
  %487 = vmatprep.subr.mxu0 0.0
  %488 = vmatpush1.msra.mxu0 %v428
  %489 = vmatprep.subr.mxu0 0.0
  %490 = vmatpush1.msra.mxu0 %v427
  %491 = vmatprep.subr.mxu0 0.0
  %492 = vmatpush2.msra.mxu0 %v458
  %493 = vmatprep.subr.mxu0 0.0
  %494 = vmatpush2.msra.mxu0 %v457
  %495 = vmatprep.subr.mxu0 0.0
  %496 = vmatpush2.msra.mxu0 %v456
  %497 = vmatprep.subr.mxu0 0.0
  %498 = vmatpush2.msra.mxu0 %v455
  %499 = vmatprep.subr.mxu0 0.0
  %500 = vmatpush2.msra.mxu0 %v454
  %501 = vmatprep.subr.mxu0 0.0
  %502 = vmatpush2.msra.mxu0 %v453
  %503 = vmatprep.subr.mxu0 0.0
  %504 = vmatpush2.msra.mxu0 %v452
  %505 = vmatprep.subr.mxu0 0.0
  %506 = vmatpush2.msra.mxu0 %v451
  %507 = vmatprep.subr.mxu0 0.0
  %508 = vmatpush2.msra.mxu0 %v450
  %509 = vmatprep.subr.mxu0 0.0
  %510 = vmatpush2.msra.mxu0 %v449
  %511 = vmatprep.subr.mxu0 0.0
  %512 = vmatpush2.msra.mxu0 %v448
  %513 = vmatprep.subr.mxu0 0.0
  %514 = vmatpush2.msra.mxu0 %v447
  %515 = vmatprep.subr.mxu0 0.0
  %516 = vmatpush2.msra.mxu0 %v446
  %517 = vmatprep.subr.mxu0 0.0
  %518 = vmatpush2.msra.mxu0 %v445
  %519 = vmatprep.subr.mxu0 0.0
  %520 = vmatpush2.msra.mxu0 %v444
  %521 = vmatprep.subr.mxu0 0.0
  %522 = vmatpush2.msra.mxu0 %v443
  %523 = vmatprep.mubr.f32.mxu0 %v52
  %524 = vmatmul.mubr.f32.gmra.mxu0 %v51
  %v525 = vpop.f32.mrf.mxu0
  %v526 = vadd.f32 0.0, %v525
  %v527 = vpop.f32.mrf.mxu0
  %528 = vdwg.mxu0
  %s529 = scalar_lea.vmem %s2, 32
  %v530 = vld [vmem:[%s529] sm:$0xff]
  %v531 = vld [vmem:[%s529 + $0x8] sm:$0xff]
  %v533 = vsel %vm263, %v530, 0
  %v536 = vsel %vm263, %v531, 0
  %538 = vmatprep.subr.mxu0 0.0
  %539 = vmatpush1.msra.mxu0 0.0
  %540 = vmatprep.subr.mxu0 0.0
  %541 = vmatpush1.msra.mxu0 0.0
  %542 = vmatprep.subr.mxu0 0.0
  %543 = vmatpush1.msra.mxu0 0.0
  %544 = vmatprep.subr.mxu0 0.0
  %545 = vmatpush1.msra.mxu0 0.0
  %546 = vmatprep.subr.mxu0 0.0
  %547 = vmatpush1.msra.mxu0 0.0
  %548 = vmatprep.subr.mxu0 0.0
  %549 = vmatpush1.msra.mxu0 0.0
  %550 = vmatprep.subr.mxu0 0.0
  %551 = vmatpush1.msra.mxu0 0.0
  %552 = vmatprep.subr.mxu0 0.0
  %553 = vmatpush1.msra.mxu0 0.0
  %554 = vmatprep.subr.mxu0 0.0
  %555 = vmatpush1.msra.mxu0 0.0
  %556 = vmatprep.subr.mxu0 0.0
  %557 = vmatpush1.msra.mxu0 0.0
  %558 = vmatprep.subr.mxu0 0.0
  %559 = vmatpush1.msra.mxu0 0.0
  %560 = vmatprep.subr.mxu0 0.0
  %561 = vmatpush1.msra.mxu0 0.0
  %562 = vmatprep.subr.mxu0 0.0
  %563 = vmatpush1.msra.mxu0 0.0
  %564 = vmatprep.subr.mxu0 0.0
  %565 = vmatpush1.msra.mxu0 0.0
  %566 = vmatprep.subr.mxu0 0.0
  %567 = vmatpush1.msra.mxu0 0.0
  %568 = vmatprep.subr.mxu0 0.0
  %569 = vmatpush1.msra.mxu0 %v526
  %570 = vmatprep.subr.mxu0 0.0
  %571 = vmatpush2.msra.mxu0 0.0
  %572 = vmatprep.subr.mxu0 0.0
  %573 = vmatpush2.msra.mxu0 0.0
  %574 = vmatprep.subr.mxu0 0.0
  %575 = vmatpush2.msra.mxu0 0.0
  %576 = vmatprep.subr.mxu0 0.0
  %577 = vmatpush2.msra.mxu0 0.0
  %578 = vmatprep.subr.mxu0 0.0
  %579 = vmatpush2.msra.mxu0 0.0
  %580 = vmatprep.subr.mxu0 0.0
  %581 = vmatpush2.msra.mxu0 0.0
  %582 = vmatprep.subr.mxu0 0.0
  %583 = vmatpush2.msra.mxu0 0.0
  %584 = vmatprep.subr.mxu0 0.0
  %585 = vmatpush2.msra.mxu0 0.0
  %586 = vmatprep.subr.mxu0 0.0
  %587 = vmatpush2.msra.mxu0 0.0
  %588 = vmatprep.subr.mxu0 0.0
  %589 = vmatpush2.msra.mxu0 0.0
  %590 = vmatprep.subr.mxu0 0.0
  %591 = vmatpush2.msra.mxu0 0.0
  %592 = vmatprep.subr.mxu0 0.0
  %593 = vmatpush2.msra.mxu0 0.0
  %594 = vmatprep.subr.mxu0 0.0
  %595 = vmatpush2.msra.mxu0 0.0
  %596 = vmatprep.subr.mxu0 0.0
  %597 = vmatpush2.msra.mxu0 0.0
  %598 = vmatprep.subr.mxu0 0.0
  %599 = vmatpush2.msra.mxu0 0.0
  %600 = vmatprep.subr.mxu0 0.0
  %601 = vmatpush2.msra.mxu0 0.0
  %602 = vmatprep.mubr.f32.mxu0 0.0
  %603 = vmatmul.mubr.f32.gmra.mxu0 %v533
  %v604 = vpop.f32.mrf.mxu0
  %v605 = vadd.f32 0.0, %v604
  %v606 = vpop.f32.mrf.mxu0
  %607 = vmatprep.mubr.f32.mxu0 0.0
  %608 = vmatmul.mubr.f32.gmra.mxu0 %v536
  %v609 = vpop.f32.mrf.mxu0
  %v610 = vadd.f32 0.0, %v609
  %v611 = vpop.f32.mrf.mxu0
  %612 = vdwg.mxu0
  %v613 = vadd.f32 %v418, %v605
  %v614 = vadd.f32 %v423, %v610
  %s615 = scalar_lea.vmem %s1, 768
  %v616 = vld [vmem:[%s615] sm:$0xff]
  %v617 = vld [vmem:[%s615 + $0x8] sm:$0xff]
  %v618 = vld [vmem:[%s615 + $0x10] sm:$0xff]
  %v619 = vld [vmem:[%s615 + $0x18] sm:$0xff]
  %v620 = vld [vmem:[%s615 + $0x20] sm:$0xff]
  %v621 = vld [vmem:[%s615 + $0x28] sm:$0xff]
  %v622 = vld [vmem:[%s615 + $0x30] sm:$0xff]
  %v623 = vld [vmem:[%s615 + $0x38] sm:$0xff]
  %v624 = vld [vmem:[%s615 + $0x40] sm:$0xff]
  %v625 = vld [vmem:[%s615 + $0x48] sm:$0xff]
  %v626 = vld [vmem:[%s615 + $0x50] sm:$0xff]
  %v627 = vld [vmem:[%s615 + $0x58] sm:$0xff]
  %v628 = vld [vmem:[%s615 + $0x60] sm:$0xff]
  %v629 = vld [vmem:[%s615 + $0x68] sm:$0xff]
  %v630 = vld [vmem:[%s615 + $0x70] sm:$0xff]
  %v631 = vld [vmem:[%s615 + $0x78] sm:$0xff]
  %v632 = vld [vmem:[%s615 + $0x80] sm:$0xff]
  %v633 = vld [vmem:[%s615 + $0x88] sm:$0xff]
  %v634 = vld [vmem:[%s615 + $0x90] sm:$0xff]
  %v635 = vld [vmem:[%s615 + $0x98] sm:$0xff]
  %v636 = vld [vmem:[%s615 + $0xa0] sm:$0xff]
  %v637 = vld [vmem:[%s615 + $0xa8] sm:$0xff]
  %v638 = vld [vmem:[%s615 + $0xb0] sm:$0xff]
  %v639 = vld [vmem:[%s615 + $0xb8] sm:$0xff]
  %v640 = vld [vmem:[%s615 + $0xc0] sm:$0xff]
  %v641 = vld [vmem:[%s615 + $0xc8] sm:$0xff]
  %v642 = vld [vmem:[%s615 + $0xd0] sm:$0xff]
  %v643 = vld [vmem:[%s615 + $0xd8] sm:$0xff]
  %v644 = vld [vmem:[%s615 + $0xe0] sm:$0xff]
  %v645 = vld [vmem:[%s615 + $0xe8] sm:$0xff]
  %v646 = vld [vmem:[%s615 + $0xf0] sm:$0xff]
  %v647 = vld [vmem:[%s615 + $0xf8] sm:$0xff]
  %648 = vmatprep.subr.mxu0 0.0
  %649 = vmatpush1.msra.mxu0 %v631
  %650 = vmatprep.subr.mxu0 0.0
  %651 = vmatpush1.msra.mxu0 %v630
  %652 = vmatprep.subr.mxu0 0.0
  %653 = vmatpush1.msra.mxu0 %v629
  %654 = vmatprep.subr.mxu0 0.0
  %655 = vmatpush1.msra.mxu0 %v628
  %656 = vmatprep.subr.mxu0 0.0
  %657 = vmatpush1.msra.mxu0 %v627
  %658 = vmatprep.subr.mxu0 0.0
  %659 = vmatpush1.msra.mxu0 %v626
  %660 = vmatprep.subr.mxu0 0.0
  %661 = vmatpush1.msra.mxu0 %v625
  %662 = vmatprep.subr.mxu0 0.0
  %663 = vmatpush1.msra.mxu0 %v624
  %664 = vmatprep.subr.mxu0 0.0
  %665 = vmatpush1.msra.mxu0 %v623
  %666 = vmatprep.subr.mxu0 0.0
  %667 = vmatpush1.msra.mxu0 %v622
  %668 = vmatprep.subr.mxu0 0.0
  %669 = vmatpush1.msra.mxu0 %v621
  %670 = vmatprep.subr.mxu0 0.0
  %671 = vmatpush1.msra.mxu0 %v620
  %672 = vmatprep.subr.mxu0 0.0
  %673 = vmatpush1.msra.mxu0 %v619
  %674 = vmatprep.subr.mxu0 0.0
  %675 = vmatpush1.msra.mxu0 %v618
  %676 = vmatprep.subr.mxu0 0.0
  %677 = vmatpush1.msra.mxu0 %v617
  %678 = vmatprep.subr.mxu0 0.0
  %679 = vmatpush1.msra.mxu0 %v616
  %680 = vmatprep.subr.mxu0 0.0
  %681 = vmatpush2.msra.mxu0 %v647
  %682 = vmatprep.subr.mxu0 0.0
  %683 = vmatpush2.msra.mxu0 %v646
  %684 = vmatprep.subr.mxu0 0.0
  %685 = vmatpush2.msra.mxu0 %v645
  %686 = vmatprep.subr.mxu0 0.0
  %687 = vmatpush2.msra.mxu0 %v644
  %688 = vmatprep.subr.mxu0 0.0
  %689 = vmatpush2.msra.mxu0 %v643
  %690 = vmatprep.subr.mxu0 0.0
  %691 = vmatpush2.msra.mxu0 %v642
  %692 = vmatprep.subr.mxu0 0.0
  %693 = vmatpush2.msra.mxu0 %v641
  %694 = vmatprep.subr.mxu0 0.0
  %695 = vmatpush2.msra.mxu0 %v640
  %696 = vmatprep.subr.mxu0 0.0
  %697 = vmatpush2.msra.mxu0 %v639
  %698 = vmatprep.subr.mxu0 0.0
  %699 = vmatpush2.msra.mxu0 %v638
  %700 = vmatprep.subr.mxu0 0.0
  %701 = vmatpush2.msra.mxu0 %v637
  %702 = vmatprep.subr.mxu0 0.0
  %703 = vmatpush2.msra.mxu0 %v636
  %704 = vmatprep.subr.mxu0 0.0
  %705 = vmatpush2.msra.mxu0 %v635
  %706 = vmatprep.subr.mxu0 0.0
  %707 = vmatpush2.msra.mxu0 %v634
  %708 = vmatprep.subr.mxu0 0.0
  %709 = vmatpush2.msra.mxu0 %v633
  %710 = vmatprep.subr.mxu0 0.0
  %711 = vmatpush2.msra.mxu0 %v632
  %712 = vmatprep.mubr.f32.mxu0 %v52
  %713 = vmatmul.mubr.f32.gmra.mxu0 %v51
  %v714 = vpop.f32.mrf.mxu0
  %v715 = vadd.f32 0.0, %v714
  %v716 = vpop.f32.mrf.mxu0
  %717 = vdwg.mxu0
  %s718 = scalar_lea.vmem %s2, 48
  %v719 = vld [vmem:[%s718] sm:$0xff]
  %v720 = vld [vmem:[%s718 + $0x8] sm:$0xff]
  %v722 = vsel %vm263, %v719, 0
  %v725 = vsel %vm263, %v720, 0
  %727 = vmatprep.subr.mxu0 0.0
  %728 = vmatpush1.msra.mxu0 0.0
  %729 = vmatprep.subr.mxu0 0.0
  %730 = vmatpush1.msra.mxu0 0.0
  %731 = vmatprep.subr.mxu0 0.0
  %732 = vmatpush1.msra.mxu0 0.0
  %733 = vmatprep.subr.mxu0 0.0
  %734 = vmatpush1.msra.mxu0 0.0
  %735 = vmatprep.subr.mxu0 0.0
  %736 = vmatpush1.msra.mxu0 0.0
  %737 = vmatprep.subr.mxu0 0.0
  %738 = vmatpush1.msra.mxu0 0.0
  %739 = vmatprep.subr.mxu0 0.0
  %740 = vmatpush1.msra.mxu0 0.0
  %741 = vmatprep.subr.mxu0 0.0
  %742 = vmatpush1.msra.mxu0 0.0
  %743 = vmatprep.subr.mxu0 0.0
  %744 = vmatpush1.msra.mxu0 0.0
  %745 = vmatprep.subr.mxu0 0.0
  %746 = vmatpush1.msra.mxu0 0.0
  %747 = vmatprep.subr.mxu0 0.0
  %748 = vmatpush1.msra.mxu0 0.0
  %749 = vmatprep.subr.mxu0 0.0
  %750 = vmatpush1.msra.mxu0 0.0
  %751 = vmatprep.subr.mxu0 0.0
  %752 = vmatpush1.msra.mxu0 0.0
  %753 = vmatprep.subr.mxu0 0.0
  %754 = vmatpush1.msra.mxu0 0.0
  %755 = vmatprep.subr.mxu0 0.0
  %756 = vmatpush1.msra.mxu0 0.0
  %757 = vmatprep.subr.mxu0 0.0
  %758 = vmatpush1.msra.mxu0 %v715
  %759 = vmatprep.subr.mxu0 0.0
  %760 = vmatpush2.msra.mxu0 0.0
  %761 = vmatprep.subr.mxu0 0.0
  %762 = vmatpush2.msra.mxu0 0.0
  %763 = vmatprep.subr.mxu0 0.0
  %764 = vmatpush2.msra.mxu0 0.0
  %765 = vmatprep.subr.mxu0 0.0
  %766 = vmatpush2.msra.mxu0 0.0
  %767 = vmatprep.subr.mxu0 0.0
  %768 = vmatpush2.msra.mxu0 0.0
  %769 = vmatprep.subr.mxu0 0.0
  %770 = vmatpush2.msra.mxu0 0.0
  %771 = vmatprep.subr.mxu0 0.0
  %772 = vmatpush2.msra.mxu0 0.0
  %773 = vmatprep.subr.mxu0 0.0
  %774 = vmatpush2.msra.mxu0 0.0
  %775 = vmatprep.subr.mxu0 0.0
  %776 = vmatpush2.msra.mxu0 0.0
  %777 = vmatprep.subr.mxu0 0.0
  %778 = vmatpush2.msra.mxu0 0.0
  %779 = vmatprep.subr.mxu0 0.0
  %780 = vmatpush2.msra.mxu0 0.0
  %781 = vmatprep.subr.mxu0 0.0
  %782 = vmatpush2.msra.mxu0 0.0
  %783 = vmatprep.subr.mxu0 0.0
  %784 = vmatpush2.msra.mxu0 0.0
  %785 = vmatprep.subr.mxu0 0.0
  %786 = vmatpush2.msra.mxu0 0.0
  %787 = vmatprep.subr.mxu0 0.0
  %788 = vmatpush2.msra.mxu0 0.0
  %789 = vmatprep.subr.mxu0 0.0
  %790 = vmatpush2.msra.mxu0 0.0
  %791 = vmatprep.mubr.f32.mxu0 0.0
  %792 = vmatmul.mubr.f32.gmra.mxu0 %v722
  %v793 = vpop.f32.mrf.mxu0
  %v794 = vadd.f32 0.0, %v793
  %v795 = vpop.f32.mrf.mxu0
  %796 = vmatprep.mubr.f32.mxu0 0.0
  %797 = vmatmul.mubr.f32.gmra.mxu0 %v725
  %v798 = vpop.f32.mrf.mxu0
  %v799 = vadd.f32 0.0, %v798
  %v800 = vpop.f32.mrf.mxu0
  %801 = vdwg.mxu0
  %v802 = vadd.f32 %v613, %v794
  %v803 = vadd.f32 %v614, %v799
  %s804 = scalar_lea.vmem %s1, 1024
  %v805 = vld [vmem:[%s804] sm:$0xff]
  %v806 = vld [vmem:[%s804 + $0x8] sm:$0xff]
  %v807 = vld [vmem:[%s804 + $0x10] sm:$0xff]
  %v808 = vld [vmem:[%s804 + $0x18] sm:$0xff]
  %v809 = vld [vmem:[%s804 + $0x20] sm:$0xff]
  %v810 = vld [vmem:[%s804 + $0x28] sm:$0xff]
  %v811 = vld [vmem:[%s804 + $0x30] sm:$0xff]
  %v812 = vld [vmem:[%s804 + $0x38] sm:$0xff]
  %v813 = vld [vmem:[%s804 + $0x40] sm:$0xff]
  %v814 = vld [vmem:[%s804 + $0x48] sm:$0xff]
  %v815 = vld [vmem:[%s804 + $0x50] sm:$0xff]
  %v816 = vld [vmem:[%s804 + $0x58] sm:$0xff]
  %v817 = vld [vmem:[%s804 + $0x60] sm:$0xff]
  %v818 = vld [vmem:[%s804 + $0x68] sm:$0xff]
  %v819 = vld [vmem:[%s804 + $0x70] sm:$0xff]
  %v820 = vld [vmem:[%s804 + $0x78] sm:$0xff]
  %v821 = vld [vmem:[%s804 + $0x80] sm:$0xff]
  %v822 = vld [vmem:[%s804 + $0x88] sm:$0xff]
  %v823 = vld [vmem:[%s804 + $0x90] sm:$0xff]
  %v824 = vld [vmem:[%s804 + $0x98] sm:$0xff]
  %v825 = vld [vmem:[%s804 + $0xa0] sm:$0xff]
  %v826 = vld [vmem:[%s804 + $0xa8] sm:$0xff]
  %v827 = vld [vmem:[%s804 + $0xb0] sm:$0xff]
  %v828 = vld [vmem:[%s804 + $0xb8] sm:$0xff]
  %v829 = vld [vmem:[%s804 + $0xc0] sm:$0xff]
  %v830 = vld [vmem:[%s804 + $0xc8] sm:$0xff]
  %v831 = vld [vmem:[%s804 + $0xd0] sm:$0xff]
  %v832 = vld [vmem:[%s804 + $0xd8] sm:$0xff]
  %v833 = vld [vmem:[%s804 + $0xe0] sm:$0xff]
  %v834 = vld [vmem:[%s804 + $0xe8] sm:$0xff]
  %v835 = vld [vmem:[%s804 + $0xf0] sm:$0xff]
  %v836 = vld [vmem:[%s804 + $0xf8] sm:$0xff]
  %837 = vmatprep.subr.mxu0 0.0
  %838 = vmatpush1.msra.mxu0 %v820
  %839 = vmatprep.subr.mxu0 0.0
  %840 = vmatpush1.msra.mxu0 %v819
  %841 = vmatprep.subr.mxu0 0.0
  %842 = vmatpush1.msra.mxu0 %v818
  %843 = vmatprep.subr.mxu0 0.0
  %844 = vmatpush1.msra.mxu0 %v817
  %845 = vmatprep.subr.mxu0 0.0
  %846 = vmatpush1.msra.mxu0 %v816
  %847 = vmatprep.subr.mxu0 0.0
  %848 = vmatpush1.msra.mxu0 %v815
  %849 = vmatprep.subr.mxu0 0.0
  %850 = vmatpush1.msra.mxu0 %v814
  %851 = vmatprep.subr.mxu0 0.0
  %852 = vmatpush1.msra.mxu0 %v813
  %853 = vmatprep.subr.mxu0 0.0
  %854 = vmatpush1.msra.mxu0 %v812
  %855 = vmatprep.subr.mxu0 0.0
  %856 = vmatpush1.msra.mxu0 %v811
  %857 = vmatprep.subr.mxu0 0.0
  %858 = vmatpush1.msra.mxu0 %v810
  %859 = vmatprep.subr.mxu0 0.0
  %860 = vmatpush1.msra.mxu0 %v809
  %861 = vmatprep.subr.mxu0 0.0
  %862 = vmatpush1.msra.mxu0 %v808
  %863 = vmatprep.subr.mxu0 0.0
  %864 = vmatpush1.msra.mxu0 %v807
  %865 = vmatprep.subr.mxu0 0.0
  %866 = vmatpush1.msra.mxu0 %v806
  %867 = vmatprep.subr.mxu0 0.0
  %868 = vmatpush1.msra.mxu0 %v805
  %869 = vmatprep.subr.mxu0 0.0
  %870 = vmatpush2.msra.mxu0 %v836
  %871 = vmatprep.subr.mxu0 0.0
  %872 = vmatpush2.msra.mxu0 %v835
  %873 = vmatprep.subr.mxu0 0.0
  %874 = vmatpush2.msra.mxu0 %v834
  %875 = vmatprep.subr.mxu0 0.0
  %876 = vmatpush2.msra.mxu0 %v833
  %877 = vmatprep.subr.mxu0 0.0
  %878 = vmatpush2.msra.mxu0 %v832
  %879 = vmatprep.subr.mxu0 0.0
  %880 = vmatpush2.msra.mxu0 %v831
  %881 = vmatprep.subr.mxu0 0.0
  %882 = vmatpush2.msra.mxu0 %v830
  %883 = vmatprep.subr.mxu0 0.0
  %884 = vmatpush2.msra.mxu0 %v829
  %885 = vmatprep.subr.mxu0 0.0
  %886 = vmatpush2.msra.mxu0 %v828
  %887 = vmatprep.subr.mxu0 0.0
  %888 = vmatpush2.msra.mxu0 %v827
  %889 = vmatprep.subr.mxu0 0.0
  %890 = vmatpush2.msra.mxu0 %v826
  %891 = vmatprep.subr.mxu0 0.0
  %892 = vmatpush2.msra.mxu0 %v825
  %893 = vmatprep.subr.mxu0 0.0
  %894 = vmatpush2.msra.mxu0 %v824
  %895 = vmatprep.subr.mxu0 0.0
  %896 = vmatpush2.msra.mxu0 %v823
  %897 = vmatprep.subr.mxu0 0.0
  %898 = vmatpush2.msra.mxu0 %v822
  %899 = vmatprep.subr.mxu0 0.0
  %900 = vmatpush2.msra.mxu0 %v821
  %901 = vmatprep.mubr.f32.mxu0 %v52
  %902 = vmatmul.mubr.f32.gmra.mxu0 %v51
  %v903 = vpop.f32.mrf.mxu0
  %v904 = vadd.f32 0.0, %v903
  %v905 = vpop.f32.mrf.mxu0
  %906 = vdwg.mxu0
  %s907 = scalar_lea.vmem %s2, 64
  %v908 = vld [vmem:[%s907] sm:$0xff]
  %v909 = vld [vmem:[%s907 + $0x8] sm:$0xff]
  %v911 = vsel %vm263, %v908, 0
  %v914 = vsel %vm263, %v909, 0
  %916 = vmatprep.subr.mxu0 0.0
  %917 = vmatpush1.msra.mxu0 0.0
  %918 = vmatprep.subr.mxu0 0.0
  %919 = vmatpush1.msra.mxu0 0.0
  %920 = vmatprep.subr.mxu0 0.0
  %921 = vmatpush1.msra.mxu0 0.0
  %922 = vmatprep.subr.mxu0 0.0
  %923 = vmatpush1.msra.mxu0 0.0
  %924 = vmatprep.subr.mxu0 0.0
  %925 = vmatpush1.msra.mxu0 0.0
  %926 = vmatprep.subr.mxu0 0.0
  %927 = vmatpush1.msra.mxu0 0.0
  %928 = vmatprep.subr.mxu0 0.0
  %929 = vmatpush1.msra.mxu0 0.0
  %930 = vmatprep.subr.mxu0 0.0
  %931 = vmatpush1.msra.mxu0 0.0
  %932 = vmatprep.subr.mxu0 0.0
  %933 = vmatpush1.msra.mxu0 0.0
  %934 = vmatprep.subr.mxu0 0.0
  %935 = vmatpush1.msra.mxu0 0.0
  %936 = vmatprep.subr.mxu0 0.0
  %937 = vmatpush1.msra.mxu0 0.0
  %938 = vmatprep.subr.mxu0 0.0
  %939 = vmatpush1.msra.mxu0 0.0
  %940 = vmatprep.subr.mxu0 0.0
  %941 = vmatpush1.msra.mxu0 0.0
  %942 = vmatprep.subr.mxu0 0.0
  %943 = vmatpush1.msra.mxu0 0.0
  %944 = vmatprep.subr.mxu0 0.0
  %945 = vmatpush1.msra.mxu0 0.0
  %946 = vmatprep.subr.mxu0 0.0
  %947 = vmatpush1.msra.mxu0 %v904
  %948 = vmatprep.subr.mxu0 0.0
  %949 = vmatpush2.msra.mxu0 0.0
  %950 = vmatprep.subr.mxu0 0.0
  %951 = vmatpush2.msra.mxu0 0.0
  %952 = vmatprep.subr.mxu0 0.0
  %953 = vmatpush2.msra.mxu0 0.0
  %954 = vmatprep.subr.mxu0 0.0
  %955 = vmatpush2.msra.mxu0 0.0
  %956 = vmatprep.subr.mxu0 0.0
  %957 = vmatpush2.msra.mxu0 0.0
  %958 = vmatprep.subr.mxu0 0.0
  %959 = vmatpush2.msra.mxu0 0.0
  %960 = vmatprep.subr.mxu0 0.0
  %961 = vmatpush2.msra.mxu0 0.0
  %962 = vmatprep.subr.mxu0 0.0
  %963 = vmatpush2.msra.mxu0 0.0
  %964 = vmatprep.subr.mxu0 0.0
  %965 = vmatpush2.msra.mxu0 0.0
  %966 = vmatprep.subr.mxu0 0.0
  %967 = vmatpush2.msra.mxu0 0.0
  %968 = vmatprep.subr.mxu0 0.0
  %969 = vmatpush2.msra.mxu0 0.0
  %970 = vmatprep.subr.mxu0 0.0
  %971 = vmatpush2.msra.mxu0 0.0
  %972 = vmatprep.subr.mxu0 0.0
  %973 = vmatpush2.msra.mxu0 0.0
  %974 = vmatprep.subr.mxu0 0.0
  %975 = vmatpush2.msra.mxu0 0.0
  %976 = vmatprep.subr.mxu0 0.0
  %977 = vmatpush2.msra.mxu0 0.0
  %978 = vmatprep.subr.mxu0 0.0
  %979 = vmatpush2.msra.mxu0 0.0
  %980 = vmatprep.mubr.f32.mxu0 0.0
  %981 = vmatmul.mubr.f32.gmra.mxu0 %v911
  %v982 = vpop.f32.mrf.mxu0
  %v983 = vadd.f32 0.0, %v982
  %v984 = vpop.f32.mrf.mxu0
  %985 = vmatprep.mubr.f32.mxu0 0.0
  %986 = vmatmul.mubr.f32.gmra.mxu0 %v914
  %v987 = vpop.f32.mrf.mxu0
  %v988 = vadd.f32 0.0, %v987
  %v989 = vpop.f32.mrf.mxu0
  %990 = vdwg.mxu0
  %v991 = vadd.f32 %v802, %v983
  %v992 = vadd.f32 %v803, %v988
  %s993 = scalar_lea.vmem %s1, 1280
  %v994 = vld [vmem:[%s993] sm:$0xff]
  %v995 = vld [vmem:[%s993 + $0x8] sm:$0xff]
  %v996 = vld [vmem:[%s993 + $0x10] sm:$0xff]
  %v997 = vld [vmem:[%s993 + $0x18] sm:$0xff]
  %v998 = vld [vmem:[%s993 + $0x20] sm:$0xff]
  %v999 = vld [vmem:[%s993 + $0x28] sm:$0xff]
  %v1000 = vld [vmem:[%s993 + $0x30] sm:$0xff]
  %v1001 = vld [vmem:[%s993 + $0x38] sm:$0xff]
  %v1002 = vld [vmem:[%s993 + $0x40] sm:$0xff]
  %v1003 = vld [vmem:[%s993 + $0x48] sm:$0xff]
  %v1004 = vld [vmem:[%s993 + $0x50] sm:$0xff]
  %v1005 = vld [vmem:[%s993 + $0x58] sm:$0xff]
  %v1006 = vld [vmem:[%s993 + $0x60] sm:$0xff]
  %v1007 = vld [vmem:[%s993 + $0x68] sm:$0xff]
  %v1008 = vld [vmem:[%s993 + $0x70] sm:$0xff]
  %v1009 = vld [vmem:[%s993 + $0x78] sm:$0xff]
  %v1010 = vld [vmem:[%s993 + $0x80] sm:$0xff]
  %v1011 = vld [vmem:[%s993 + $0x88] sm:$0xff]
  %v1012 = vld [vmem:[%s993 + $0x90] sm:$0xff]
  %v1013 = vld [vmem:[%s993 + $0x98] sm:$0xff]
  %v1014 = vld [vmem:[%s993 + $0xa0] sm:$0xff]
  %v1015 = vld [vmem:[%s993 + $0xa8] sm:$0xff]
  %v1016 = vld [vmem:[%s993 + $0xb0] sm:$0xff]
  %v1017 = vld [vmem:[%s993 + $0xb8] sm:$0xff]
  %v1018 = vld [vmem:[%s993 + $0xc0] sm:$0xff]
  %v1019 = vld [vmem:[%s993 + $0xc8] sm:$0xff]
  %v1020 = vld [vmem:[%s993 + $0xd0] sm:$0xff]
  %v1021 = vld [vmem:[%s993 + $0xd8] sm:$0xff]
  %v1022 = vld [vmem:[%s993 + $0xe0] sm:$0xff]
  %v1023 = vld [vmem:[%s993 + $0xe8] sm:$0xff]
  %v1024 = vld [vmem:[%s993 + $0xf0] sm:$0xff]
  %v1025 = vld [vmem:[%s993 + $0xf8] sm:$0xff]
  %1026 = vmatprep.subr.mxu0 0.0
  %1027 = vmatpush1.msra.mxu0 %v1009
  %1028 = vmatprep.subr.mxu0 0.0
  %1029 = vmatpush1.msra.mxu0 %v1008
  %1030 = vmatprep.subr.mxu0 0.0
  %1031 = vmatpush1.msra.mxu0 %v1007
  %1032 = vmatprep.subr.mxu0 0.0
  %1033 = vmatpush1.msra.mxu0 %v1006
  %1034 = vmatprep.subr.mxu0 0.0
  %1035 = vmatpush1.msra.mxu0 %v1005
  %1036 = vmatprep.subr.mxu0 0.0
  %1037 = vmatpush1.msra.mxu0 %v1004
  %1038 = vmatprep.subr.mxu0 0.0
  %1039 = vmatpush1.msra.mxu0 %v1003
  %1040 = vmatprep.subr.mxu0 0.0
  %1041 = vmatpush1.msra.mxu0 %v1002
  %1042 = vmatprep.subr.mxu0 0.0
  %1043 = vmatpush1.msra.mxu0 %v1001
  %1044 = vmatprep.subr.mxu0 0.0
  %1045 = vmatpush1.msra.mxu0 %v1000
  %1046 = vmatprep.subr.mxu0 0.0
  %1047 = vmatpush1.msra.mxu0 %v999
  %1048 = vmatprep.subr.mxu0 0.0
  %1049 = vmatpush1.msra.mxu0 %v998
  %1050 = vmatprep.subr.mxu0 0.0
  %1051 = vmatpush1.msra.mxu0 %v997
  %1052 = vmatprep.subr.mxu0 0.0
  %1053 = vmatpush1.msra.mxu0 %v996
  %1054 = vmatprep.subr.mxu0 0.0
  %1055 = vmatpush1.msra.mxu0 %v995
  %1056 = vmatprep.subr.mxu0 0.0
  %1057 = vmatpush1.msra.mxu0 %v994
  %1058 = vmatprep.subr.mxu0 0.0
  %1059 = vmatpush2.msra.mxu0 %v1025
  %1060 = vmatprep.subr.mxu0 0.0
  %1061 = vmatpush2.msra.mxu0 %v1024
  %1062 = vmatprep.subr.mxu0 0.0
  %1063 = vmatpush2.msra.mxu0 %v1023
  %1064 = vmatprep.subr.mxu0 0.0
  %1065 = vmatpush2.msra.mxu0 %v1022
  %1066 = vmatprep.subr.mxu0 0.0
  %1067 = vmatpush2.msra.mxu0 %v1021
  %1068 = vmatprep.subr.mxu0 0.0
  %1069 = vmatpush2.msra.mxu0 %v1020
  %1070 = vmatprep.subr.mxu0 0.0
  %1071 = vmatpush2.msra.mxu0 %v1019
  %1072 = vmatprep.subr.mxu0 0.0
  %1073 = vmatpush2.msra.mxu0 %v1018
  %1074 = vmatprep.subr.mxu0 0.0
  %1075 = vmatpush2.msra.mxu0 %v1017
  %1076 = vmatprep.subr.mxu0 0.0
  %1077 = vmatpush2.msra.mxu0 %v1016
  %1078 = vmatprep.subr.mxu0 0.0
  %1079 = vmatpush2.msra.mxu0 %v1015
  %1080 = vmatprep.subr.mxu0 0.0
  %1081 = vmatpush2.msra.mxu0 %v1014
  %1082 = vmatprep.subr.mxu0 0.0
  %1083 = vmatpush2.msra.mxu0 %v1013
  %1084 = vmatprep.subr.mxu0 0.0
  %1085 = vmatpush2.msra.mxu0 %v1012
  %1086 = vmatprep.subr.mxu0 0.0
  %1087 = vmatpush2.msra.mxu0 %v1011
  %1088 = vmatprep.subr.mxu0 0.0
  %1089 = vmatpush2.msra.mxu0 %v1010
  %1090 = vmatprep.mubr.f32.mxu0 %v52
  %1091 = vmatmul.mubr.f32.gmra.mxu0 %v51
  %v1092 = vpop.f32.mrf.mxu0
  %v1093 = vadd.f32 0.0, %v1092
  %v1094 = vpop.f32.mrf.mxu0
  %1095 = vdwg.mxu0
  %s1096 = scalar_lea.vmem %s2, 80
  %v1097 = vld [vmem:[%s1096] sm:$0xff]
  %v1098 = vld [vmem:[%s1096 + $0x8] sm:$0xff]
  %v1100 = vsel %vm263, %v1097, 0
  %v1103 = vsel %vm263, %v1098, 0
  %1105 = vmatprep.subr.mxu0 0.0
  %1106 = vmatpush1.msra.mxu0 0.0
  %1107 = vmatprep.subr.mxu0 0.0
  %1108 = vmatpush1.msra.mxu0 0.0
  %1109 = vmatprep.subr.mxu0 0.0
  %1110 = vmatpush1.msra.mxu0 0.0
  %1111 = vmatprep.subr.mxu0 0.0
  %1112 = vmatpush1.msra.mxu0 0.0
  %1113 = vmatprep.subr.mxu0 0.0
  %1114 = vmatpush1.msra.mxu0 0.0
  %1115 = vmatprep.subr.mxu0 0.0
  %1116 = vmatpush1.msra.mxu0 0.0
  %1117 = vmatprep.subr.mxu0 0.0
  %1118 = vmatpush1.msra.mxu0 0.0
  %1119 = vmatprep.subr.mxu0 0.0
  %1120 = vmatpush1.msra.mxu0 0.0
  %1121 = vmatprep.subr.mxu0 0.0
  %1122 = vmatpush1.msra.mxu0 0.0
  %1123 = vmatprep.subr.mxu0 0.0
  %1124 = vmatpush1.msra.mxu0 0.0
  %1125 = vmatprep.subr.mxu0 0.0
  %1126 = vmatpush1.msra.mxu0 0.0
  %1127 = vmatprep.subr.mxu0 0.0
  %1128 = vmatpush1.msra.mxu0 0.0
  %1129 = vmatprep.subr.mxu0 0.0
  %1130 = vmatpush1.msra.mxu0 0.0
  %1131 = vmatprep.subr.mxu0 0.0
  %1132 = vmatpush1.msra.mxu0 0.0
  %1133 = vmatprep.subr.mxu0 0.0
  %1134 = vmatpush1.msra.mxu0 0.0
  %1135 = vmatprep.subr.mxu0 0.0
  %1136 = vmatpush1.msra.mxu0 %v1093
  %1137 = vmatprep.subr.mxu0 0.0
  %1138 = vmatpush2.msra.mxu0 0.0
  %1139 = vmatprep.subr.mxu0 0.0
  %1140 = vmatpush2.msra.mxu0 0.0
  %1141 = vmatprep.subr.mxu0 0.0
  %1142 = vmatpush2.msra.mxu0 0.0
  %1143 = vmatprep.subr.mxu0 0.0
  %1144 = vmatpush2.msra.mxu0 0.0
  %1145 = vmatprep.subr.mxu0 0.0
  %1146 = vmatpush2.msra.mxu0 0.0
  %1147 = vmatprep.subr.mxu0 0.0
  %1148 = vmatpush2.msra.mxu0 0.0
  %1149 = vmatprep.subr.mxu0 0.0
  %1150 = vmatpush2.msra.mxu0 0.0
  %1151 = vmatprep.subr.mxu0 0.0
  %1152 = vmatpush2.msra.mxu0 0.0
  %1153 = vmatprep.subr.mxu0 0.0
  %1154 = vmatpush2.msra.mxu0 0.0
  %1155 = vmatprep.subr.mxu0 0.0
  %1156 = vmatpush2.msra.mxu0 0.0
  %1157 = vmatprep.subr.mxu0 0.0
  %1158 = vmatpush2.msra.mxu0 0.0
  %1159 = vmatprep.subr.mxu0 0.0
  %1160 = vmatpush2.msra.mxu0 0.0
  %1161 = vmatprep.subr.mxu0 0.0
  %1162 = vmatpush2.msra.mxu0 0.0
  %1163 = vmatprep.subr.mxu0 0.0
  %1164 = vmatpush2.msra.mxu0 0.0
  %1165 = vmatprep.subr.mxu0 0.0
  %1166 = vmatpush2.msra.mxu0 0.0
  %1167 = vmatprep.subr.mxu0 0.0
  %1168 = vmatpush2.msra.mxu0 0.0
  %1169 = vmatprep.mubr.f32.mxu0 0.0
  %1170 = vmatmul.mubr.f32.gmra.mxu0 %v1100
  %v1171 = vpop.f32.mrf.mxu0
  %v1172 = vadd.f32 0.0, %v1171
  %v1173 = vpop.f32.mrf.mxu0
  %1174 = vmatprep.mubr.f32.mxu0 0.0
  %1175 = vmatmul.mubr.f32.gmra.mxu0 %v1103
  %v1176 = vpop.f32.mrf.mxu0
  %v1177 = vadd.f32 0.0, %v1176
  %v1178 = vpop.f32.mrf.mxu0
  %1179 = vdwg.mxu0
  %v1180 = vadd.f32 %v991, %v1172
  %v1181 = vadd.f32 %v992, %v1177
  %s1182 = scalar_lea.vmem %s1, 1536
  %v1183 = vld [vmem:[%s1182] sm:$0xff]
  %v1184 = vld [vmem:[%s1182 + $0x8] sm:$0xff]
  %v1185 = vld [vmem:[%s1182 + $0x10] sm:$0xff]
  %v1186 = vld [vmem:[%s1182 + $0x18] sm:$0xff]
  %v1187 = vld [vmem:[%s1182 + $0x20] sm:$0xff]
  %v1188 = vld [vmem:[%s1182 + $0x28] sm:$0xff]
  %v1189 = vld [vmem:[%s1182 + $0x30] sm:$0xff]
  %v1190 = vld [vmem:[%s1182 + $0x38] sm:$0xff]
  %v1191 = vld [vmem:[%s1182 + $0x40] sm:$0xff]
  %v1192 = vld [vmem:[%s1182 + $0x48] sm:$0xff]
  %v1193 = vld [vmem:[%s1182 + $0x50] sm:$0xff]
  %v1194 = vld [vmem:[%s1182 + $0x58] sm:$0xff]
  %v1195 = vld [vmem:[%s1182 + $0x60] sm:$0xff]
  %v1196 = vld [vmem:[%s1182 + $0x68] sm:$0xff]
  %v1197 = vld [vmem:[%s1182 + $0x70] sm:$0xff]
  %v1198 = vld [vmem:[%s1182 + $0x78] sm:$0xff]
  %v1199 = vld [vmem:[%s1182 + $0x80] sm:$0xff]
  %v1200 = vld [vmem:[%s1182 + $0x88] sm:$0xff]
  %v1201 = vld [vmem:[%s1182 + $0x90] sm:$0xff]
  %v1202 = vld [vmem:[%s1182 + $0x98] sm:$0xff]
  %v1203 = vld [vmem:[%s1182 + $0xa0] sm:$0xff]
  %v1204 = vld [vmem:[%s1182 + $0xa8] sm:$0xff]
  %v1205 = vld [vmem:[%s1182 + $0xb0] sm:$0xff]
  %v1206 = vld [vmem:[%s1182 + $0xb8] sm:$0xff]
  %v1207 = vld [vmem:[%s1182 + $0xc0] sm:$0xff]
  %v1208 = vld [vmem:[%s1182 + $0xc8] sm:$0xff]
  %v1209 = vld [vmem:[%s1182 + $0xd0] sm:$0xff]
  %v1210 = vld [vmem:[%s1182 + $0xd8] sm:$0xff]
  %v1211 = vld [vmem:[%s1182 + $0xe0] sm:$0xff]
  %v1212 = vld [vmem:[%s1182 + $0xe8] sm:$0xff]
  %v1213 = vld [vmem:[%s1182 + $0xf0] sm:$0xff]
  %v1214 = vld [vmem:[%s1182 + $0xf8] sm:$0xff]
  %1215 = vmatprep.subr.mxu0 0.0
  %1216 = vmatpush1.msra.mxu0 %v1198
  %1217 = vmatprep.subr.mxu0 0.0
  %1218 = vmatpush1.msra.mxu0 %v1197
  %1219 = vmatprep.subr.mxu0 0.0
  %1220 = vmatpush1.msra.mxu0 %v1196
  %1221 = vmatprep.subr.mxu0 0.0
  %1222 = vmatpush1.msra.mxu0 %v1195
  %1223 = vmatprep.subr.mxu0 0.0
  %1224 = vmatpush1.msra.mxu0 %v1194
  %1225 = vmatprep.subr.mxu0 0.0
  %1226 = vmatpush1.msra.mxu0 %v1193
  %1227 = vmatprep.subr.mxu0 0.0
  %1228 = vmatpush1.msra.mxu0 %v1192
  %1229 = vmatprep.subr.mxu0 0.0
  %1230 = vmatpush1.msra.mxu0 %v1191
  %1231 = vmatprep.subr.mxu0 0.0
  %1232 = vmatpush1.msra.mxu0 %v1190
  %1233 = vmatprep.subr.mxu0 0.0
  %1234 = vmatpush1.msra.mxu0 %v1189
  %1235 = vmatprep.subr.mxu0 0.0
  %1236 = vmatpush1.msra.mxu0 %v1188
  %1237 = vmatprep.subr.mxu0 0.0
  %1238 = vmatpush1.msra.mxu0 %v1187
  %1239 = vmatprep.subr.mxu0 0.0
  %1240 = vmatpush1.msra.mxu0 %v1186
  %1241 = vmatprep.subr.mxu0 0.0
  %1242 = vmatpush1.msra.mxu0 %v1185
  %1243 = vmatprep.subr.mxu0 0.0
  %1244 = vmatpush1.msra.mxu0 %v1184
  %1245 = vmatprep.subr.mxu0 0.0
  %1246 = vmatpush1.msra.mxu0 %v1183
  %1247 = vmatprep.subr.mxu0 0.0
  %1248 = vmatpush2.msra.mxu0 %v1214
  %1249 = vmatprep.subr.mxu0 0.0
  %1250 = vmatpush2.msra.mxu0 %v1213
  %1251 = vmatprep.subr.mxu0 0.0
  %1252 = vmatpush2.msra.mxu0 %v1212
  %1253 = vmatprep.subr.mxu0 0.0
  %1254 = vmatpush2.msra.mxu0 %v1211
  %1255 = vmatprep.subr.mxu0 0.0
  %1256 = vmatpush2.msra.mxu0 %v1210
  %1257 = vmatprep.subr.mxu0 0.0
  %1258 = vmatpush2.msra.mxu0 %v1209
  %1259 = vmatprep.subr.mxu0 0.0
  %1260 = vmatpush2.msra.mxu0 %v1208
  %1261 = vmatprep.subr.mxu0 0.0
  %1262 = vmatpush2.msra.mxu0 %v1207
  %1263 = vmatprep.subr.mxu0 0.0
  %1264 = vmatpush2.msra.mxu0 %v1206
  %1265 = vmatprep.subr.mxu0 0.0
  %1266 = vmatpush2.msra.mxu0 %v1205
  %1267 = vmatprep.subr.mxu0 0.0
  %1268 = vmatpush2.msra.mxu0 %v1204
  %1269 = vmatprep.subr.mxu0 0.0
  %1270 = vmatpush2.msra.mxu0 %v1203
  %1271 = vmatprep.subr.mxu0 0.0
  %1272 = vmatpush2.msra.mxu0 %v1202
  %1273 = vmatprep.subr.mxu0 0.0
  %1274 = vmatpush2.msra.mxu0 %v1201
  %1275 = vmatprep.subr.mxu0 0.0
  %1276 = vmatpush2.msra.mxu0 %v1200
  %1277 = vmatprep.subr.mxu0 0.0
  %1278 = vmatpush2.msra.mxu0 %v1199
  %1279 = vmatprep.mubr.f32.mxu0 %v52
  %1280 = vmatmul.mubr.f32.gmra.mxu0 %v51
  %v1281 = vpop.f32.mrf.mxu0
  %v1282 = vadd.f32 0.0, %v1281
  %v1283 = vpop.f32.mrf.mxu0
  %1284 = vdwg.mxu0
  %s1285 = scalar_lea.vmem %s2, 96
  %v1286 = vld [vmem:[%s1285] sm:$0xff]
  %v1287 = vld [vmem:[%s1285 + $0x8] sm:$0xff]
  %v1289 = vsel %vm263, %v1286, 0
  %v1292 = vsel %vm263, %v1287, 0
  %1294 = vmatprep.subr.mxu0 0.0
  %1295 = vmatpush1.msra.mxu0 0.0
  %1296 = vmatprep.subr.mxu0 0.0
  %1297 = vmatpush1.msra.mxu0 0.0
  %1298 = vmatprep.subr.mxu0 0.0
  %1299 = vmatpush1.msra.mxu0 0.0
  %1300 = vmatprep.subr.mxu0 0.0
  %1301 = vmatpush1.msra.mxu0 0.0
  %1302 = vmatprep.subr.mxu0 0.0
  %1303 = vmatpush1.msra.mxu0 0.0
  %1304 = vmatprep.subr.mxu0 0.0
  %1305 = vmatpush1.msra.mxu0 0.0
  %1306 = vmatprep.subr.mxu0 0.0
  %1307 = vmatpush1.msra.mxu0 0.0
  %1308 = vmatprep.subr.mxu0 0.0
  %1309 = vmatpush1.msra.mxu0 0.0
  %1310 = vmatprep.subr.mxu0 0.0
  %1311 = vmatpush1.msra.mxu0 0.0
  %1312 = vmatprep.subr.mxu0 0.0
  %1313 = vmatpush1.msra.mxu0 0.0
  %1314 = vmatprep.subr.mxu0 0.0
  %1315 = vmatpush1.msra.mxu0 0.0
  %1316 = vmatprep.subr.mxu0 0.0
  %1317 = vmatpush1.msra.mxu0 0.0
  %1318 = vmatprep.subr.mxu0 0.0
  %1319 = vmatpush1.msra.mxu0 0.0
  %1320 = vmatprep.subr.mxu0 0.0
  %1321 = vmatpush1.msra.mxu0 0.0
  %1322 = vmatprep.subr.mxu0 0.0
  %1323 = vmatpush1.msra.mxu0 0.0
  %1324 = vmatprep.subr.mxu0 0.0
  %1325 = vmatpush1.msra.mxu0 %v1282
  %1326 = vmatprep.subr.mxu0 0.0
  %1327 = vmatpush2.msra.mxu0 0.0
  %1328 = vmatprep.subr.mxu0 0.0
  %1329 = vmatpush2.msra.mxu0 0.0
  %1330 = vmatprep.subr.mxu0 0.0
  %1331 = vmatpush2.msra.mxu0 0.0
  %1332 = vmatprep.subr.mxu0 0.0
  %1333 = vmatpush2.msra.mxu0 0.0
  %1334 = vmatprep.subr.mxu0 0.0
  %1335 = vmatpush2.msra.mxu0 0.0
  %1336 = vmatprep.subr.mxu0 0.0
  %1337 = vmatpush2.msra.mxu0 0.0
  %1338 = vmatprep.subr.mxu0 0.0
  %1339 = vmatpush2.msra.mxu0 0.0
  %1340 = vmatprep.subr.mxu0 0.0
  %1341 = vmatpush2.msra.mxu0 0.0
  %1342 = vmatprep.subr.mxu0 0.0
  %1343 = vmatpush2.msra.mxu0 0.0
  %1344 = vmatprep.subr.mxu0 0.0
  %1345 = vmatpush2.msra.mxu0 0.0
  %1346 = vmatprep.subr.mxu0 0.0
  %1347 = vmatpush2.msra.mxu0 0.0
  %1348 = vmatprep.subr.mxu0 0.0
  %1349 = vmatpush2.msra.mxu0 0.0
  %1350 = vmatprep.subr.mxu0 0.0
  %1351 = vmatpush2.msra.mxu0 0.0
  %1352 = vmatprep.subr.mxu0 0.0
  %1353 = vmatpush2.msra.mxu0 0.0
  %1354 = vmatprep.subr.mxu0 0.0
  %1355 = vmatpush2.msra.mxu0 0.0
  %1356 = vmatprep.subr.mxu0 0.0
  %1357 = vmatpush2.msra.mxu0 0.0
  %1358 = vmatprep.mubr.f32.mxu0 0.0
  %1359 = vmatmul.mubr.f32.gmra.mxu0 %v1289
  %v1360 = vpop.f32.mrf.mxu0
  %v1361 = vadd.f32 0.0, %v1360
  %v1362 = vpop.f32.mrf.mxu0
  %1363 = vmatprep.mubr.f32.mxu0 0.0
  %1364 = vmatmul.mubr.f32.gmra.mxu0 %v1292
  %v1365 = vpop.f32.mrf.mxu0
  %v1366 = vadd.f32 0.0, %v1365
  %v1367 = vpop.f32.mrf.mxu0
  %1368 = vdwg.mxu0
  %v1369 = vadd.f32 %v1180, %v1361
  %v1370 = vadd.f32 %v1181, %v1366
  %s1371 = scalar_lea.vmem %s1, 1792
  %v1372 = vld [vmem:[%s1371] sm:$0xff]
  %v1373 = vld [vmem:[%s1371 + $0x8] sm:$0xff]
  %v1374 = vld [vmem:[%s1371 + $0x10] sm:$0xff]
  %v1375 = vld [vmem:[%s1371 + $0x18] sm:$0xff]
  %v1376 = vld [vmem:[%s1371 + $0x20] sm:$0xff]
  %v1377 = vld [vmem:[%s1371 + $0x28] sm:$0xff]
  %v1378 = vld [vmem:[%s1371 + $0x30] sm:$0xff]
  %v1379 = vld [vmem:[%s1371 + $0x38] sm:$0xff]
  %v1380 = vld [vmem:[%s1371 + $0x40] sm:$0xff]
  %v1381 = vld [vmem:[%s1371 + $0x48] sm:$0xff]
  %v1382 = vld [vmem:[%s1371 + $0x50] sm:$0xff]
  %v1383 = vld [vmem:[%s1371 + $0x58] sm:$0xff]
  %v1384 = vld [vmem:[%s1371 + $0x60] sm:$0xff]
  %v1385 = vld [vmem:[%s1371 + $0x68] sm:$0xff]
  %v1386 = vld [vmem:[%s1371 + $0x70] sm:$0xff]
  %v1387 = vld [vmem:[%s1371 + $0x78] sm:$0xff]
  %v1388 = vld [vmem:[%s1371 + $0x80] sm:$0xff]
  %v1389 = vld [vmem:[%s1371 + $0x88] sm:$0xff]
  %v1390 = vld [vmem:[%s1371 + $0x90] sm:$0xff]
  %v1391 = vld [vmem:[%s1371 + $0x98] sm:$0xff]
  %v1392 = vld [vmem:[%s1371 + $0xa0] sm:$0xff]
  %v1393 = vld [vmem:[%s1371 + $0xa8] sm:$0xff]
  %v1394 = vld [vmem:[%s1371 + $0xb0] sm:$0xff]
  %v1395 = vld [vmem:[%s1371 + $0xb8] sm:$0xff]
  %v1396 = vld [vmem:[%s1371 + $0xc0] sm:$0xff]
  %v1397 = vld [vmem:[%s1371 + $0xc8] sm:$0xff]
  %v1398 = vld [vmem:[%s1371 + $0xd0] sm:$0xff]
  %v1399 = vld [vmem:[%s1371 + $0xd8] sm:$0xff]
  %v1400 = vld [vmem:[%s1371 + $0xe0] sm:$0xff]
  %v1401 = vld [vmem:[%s1371 + $0xe8] sm:$0xff]
  %v1402 = vld [vmem:[%s1371 + $0xf0] sm:$0xff]
  %v1403 = vld [vmem:[%s1371 + $0xf8] sm:$0xff]
  %1404 = vmatprep.subr.mxu0 0.0
  %1405 = vmatpush1.msra.mxu0 %v1387
  %1406 = vmatprep.subr.mxu0 0.0
  %1407 = vmatpush1.msra.mxu0 %v1386
  %1408 = vmatprep.subr.mxu0 0.0
  %1409 = vmatpush1.msra.mxu0 %v1385
  %1410 = vmatprep.subr.mxu0 0.0
  %1411 = vmatpush1.msra.mxu0 %v1384
  %1412 = vmatprep.subr.mxu0 0.0
  %1413 = vmatpush1.msra.mxu0 %v1383
  %1414 = vmatprep.subr.mxu0 0.0
  %1415 = vmatpush1.msra.mxu0 %v1382
  %1416 = vmatprep.subr.mxu0 0.0
  %1417 = vmatpush1.msra.mxu0 %v1381
  %1418 = vmatprep.subr.mxu0 0.0
  %1419 = vmatpush1.msra.mxu0 %v1380
  %1420 = vmatprep.subr.mxu0 0.0
  %1421 = vmatpush1.msra.mxu0 %v1379
  %1422 = vmatprep.subr.mxu0 0.0
  %1423 = vmatpush1.msra.mxu0 %v1378
  %1424 = vmatprep.subr.mxu0 0.0
  %1425 = vmatpush1.msra.mxu0 %v1377
  %1426 = vmatprep.subr.mxu0 0.0
  %1427 = vmatpush1.msra.mxu0 %v1376
  %1428 = vmatprep.subr.mxu0 0.0
  %1429 = vmatpush1.msra.mxu0 %v1375
  %1430 = vmatprep.subr.mxu0 0.0
  %1431 = vmatpush1.msra.mxu0 %v1374
  %1432 = vmatprep.subr.mxu0 0.0
  %1433 = vmatpush1.msra.mxu0 %v1373
  %1434 = vmatprep.subr.mxu0 0.0
  %1435 = vmatpush1.msra.mxu0 %v1372
  %1436 = vmatprep.subr.mxu0 0.0
  %1437 = vmatpush2.msra.mxu0 %v1403
  %1438 = vmatprep.subr.mxu0 0.0
  %1439 = vmatpush2.msra.mxu0 %v1402
  %1440 = vmatprep.subr.mxu0 0.0
  %1441 = vmatpush2.msra.mxu0 %v1401
  %1442 = vmatprep.subr.mxu0 0.0
  %1443 = vmatpush2.msra.mxu0 %v1400
  %1444 = vmatprep.subr.mxu0 0.0
  %1445 = vmatpush2.msra.mxu0 %v1399
  %1446 = vmatprep.subr.mxu0 0.0
  %1447 = vmatpush2.msra.mxu0 %v1398
  %1448 = vmatprep.subr.mxu0 0.0
  %1449 = vmatpush2.msra.mxu0 %v1397
  %1450 = vmatprep.subr.mxu0 0.0
  %1451 = vmatpush2.msra.mxu0 %v1396
  %1452 = vmatprep.subr.mxu0 0.0
  %1453 = vmatpush2.msra.mxu0 %v1395
  %1454 = vmatprep.subr.mxu0 0.0
  %1455 = vmatpush2.msra.mxu0 %v1394
  %1456 = vmatprep.subr.mxu0 0.0
  %1457 = vmatpush2.msra.mxu0 %v1393
  %1458 = vmatprep.subr.mxu0 0.0
  %1459 = vmatpush2.msra.mxu0 %v1392
  %1460 = vmatprep.subr.mxu0 0.0
  %1461 = vmatpush2.msra.mxu0 %v1391
  %1462 = vmatprep.subr.mxu0 0.0
  %1463 = vmatpush2.msra.mxu0 %v1390
  %1464 = vmatprep.subr.mxu0 0.0
  %1465 = vmatpush2.msra.mxu0 %v1389
  %1466 = vmatprep.subr.mxu0 0.0
  %1467 = vmatpush2.msra.mxu0 %v1388
  %1468 = vmatprep.mubr.f32.mxu0 %v52
  %1469 = vmatmul.mubr.f32.gmra.mxu0 %v51
  %v1470 = vpop.f32.mrf.mxu0
  %v1471 = vadd.f32 0.0, %v1470
  %v1472 = vpop.f32.mrf.mxu0
  %1473 = vdwg.mxu0
  %s1474 = scalar_lea.vmem %s2, 112
  %v1475 = vld [vmem:[%s1474] sm:$0xff]
  %v1476 = vld [vmem:[%s1474 + $0x8] sm:$0xff]
  %v1478 = vsel %vm263, %v1475, 0
  %v1481 = vsel %vm263, %v1476, 0
  %1483 = vmatprep.subr.mxu0 0.0
  %1484 = vmatpush1.msra.mxu0 0.0
  %1485 = vmatprep.subr.mxu0 0.0
  %1486 = vmatpush1.msra.mxu0 0.0
  %1487 = vmatprep.subr.mxu0 0.0
  %1488 = vmatpush1.msra.mxu0 0.0
  %1489 = vmatprep.subr.mxu0 0.0
  %1490 = vmatpush1.msra.mxu0 0.0
  %1491 = vmatprep.subr.mxu0 0.0
  %1492 = vmatpush1.msra.mxu0 0.0
  %1493 = vmatprep.subr.mxu0 0.0
  %1494 = vmatpush1.msra.mxu0 0.0
  %1495 = vmatprep.subr.mxu0 0.0
  %1496 = vmatpush1.msra.mxu0 0.0
  %1497 = vmatprep.subr.mxu0 0.0
  %1498 = vmatpush1.msra.mxu0 0.0
  %1499 = vmatprep.subr.mxu0 0.0
  %1500 = vmatpush1.msra.mxu0 0.0
  %1501 = vmatprep.subr.mxu0 0.0
  %1502 = vmatpush1.msra.mxu0 0.0
  %1503 = vmatprep.subr.mxu0 0.0
  %1504 = vmatpush1.msra.mxu0 0.0
  %1505 = vmatprep.subr.mxu0 0.0
  %1506 = vmatpush1.msra.mxu0 0.0
  %1507 = vmatprep.subr.mxu0 0.0
  %1508 = vmatpush1.msra.mxu0 0.0
  %1509 = vmatprep.subr.mxu0 0.0
  %1510 = vmatpush1.msra.mxu0 0.0
  %1511 = vmatprep.subr.mxu0 0.0
  %1512 = vmatpush1.msra.mxu0 0.0
  %1513 = vmatprep.subr.mxu0 0.0
  %1514 = vmatpush1.msra.mxu0 %v1471
  %1515 = vmatprep.subr.mxu0 0.0
  %1516 = vmatpush2.msra.mxu0 0.0
  %1517 = vmatprep.subr.mxu0 0.0
  %1518 = vmatpush2.msra.mxu0 0.0
  %1519 = vmatprep.subr.mxu0 0.0
  %1520 = vmatpush2.msra.mxu0 0.0
  %1521 = vmatprep.subr.mxu0 0.0
  %1522 = vmatpush2.msra.mxu0 0.0
  %1523 = vmatprep.subr.mxu0 0.0
  %1524 = vmatpush2.msra.mxu0 0.0
  %1525 = vmatprep.subr.mxu0 0.0
  %1526 = vmatpush2.msra.mxu0 0.0
  %1527 = vmatprep.subr.mxu0 0.0
  %1528 = vmatpush2.msra.mxu0 0.0
  %1529 = vmatprep.subr.mxu0 0.0
  %1530 = vmatpush2.msra.mxu0 0.0
  %1531 = vmatprep.subr.mxu0 0.0
  %1532 = vmatpush2.msra.mxu0 0.0
  %1533 = vmatprep.subr.mxu0 0.0
  %1534 = vmatpush2.msra.mxu0 0.0
  %1535 = vmatprep.subr.mxu0 0.0
  %1536 = vmatpush2.msra.mxu0 0.0
  %1537 = vmatprep.subr.mxu0 0.0
  %1538 = vmatpush2.msra.mxu0 0.0
  %1539 = vmatprep.subr.mxu0 0.0
  %1540 = vmatpush2.msra.mxu0 0.0
  %1541 = vmatprep.subr.mxu0 0.0
  %1542 = vmatpush2.msra.mxu0 0.0
  %1543 = vmatprep.subr.mxu0 0.0
  %1544 = vmatpush2.msra.mxu0 0.0
  %1545 = vmatprep.subr.mxu0 0.0
  %1546 = vmatpush2.msra.mxu0 0.0
  %1547 = vmatprep.mubr.f32.mxu0 0.0
  %1548 = vmatmul.mubr.f32.gmra.mxu0 %v1478
  %v1549 = vpop.f32.mrf.mxu0
  %v1550 = vadd.f32 0.0, %v1549
  %v1551 = vpop.f32.mrf.mxu0
  %1552 = vmatprep.mubr.f32.mxu0 0.0
  %1553 = vmatmul.mubr.f32.gmra.mxu0 %v1481
  %v1554 = vpop.f32.mrf.mxu0
  %v1555 = vadd.f32 0.0, %v1554
  %v1556 = vpop.f32.mrf.mxu0
  %1557 = vdwg.mxu0
  %v1558 = vadd.f32 %v1369, %v1550
  %v1559 = vadd.f32 %v1370, %v1555
  %s1560 = scalar_lea.vmem %s1, 2048
  %v1561 = vld [vmem:[%s1560] sm:$0xff]
  %v1562 = vld [vmem:[%s1560 + $0x8] sm:$0xff]
  %v1563 = vld [vmem:[%s1560 + $0x10] sm:$0xff]
  %v1564 = vld [vmem:[%s1560 + $0x18] sm:$0xff]
  %v1565 = vld [vmem:[%s1560 + $0x20] sm:$0xff]
  %v1566 = vld [vmem:[%s1560 + $0x28] sm:$0xff]
  %v1567 = vld [vmem:[%s1560 + $0x30] sm:$0xff]
  %v1568 = vld [vmem:[%s1560 + $0x38] sm:$0xff]
  %v1569 = vld [vmem:[%s1560 + $0x40] sm:$0xff]
  %v1570 = vld [vmem:[%s1560 + $0x48] sm:$0xff]
  %v1571 = vld [vmem:[%s1560 + $0x50] sm:$0xff]
  %v1572 = vld [vmem:[%s1560 + $0x58] sm:$0xff]
  %v1573 = vld [vmem:[%s1560 + $0x60] sm:$0xff]
  %v1574 = vld [vmem:[%s1560 + $0x68] sm:$0xff]
  %v1575 = vld [vmem:[%s1560 + $0x70] sm:$0xff]
  %v1576 = vld [vmem:[%s1560 + $0x78] sm:$0xff]
  %v1577 = vld [vmem:[%s1560 + $0x80] sm:$0xff]
  %v1578 = vld [vmem:[%s1560 + $0x88] sm:$0xff]
  %v1579 = vld [vmem:[%s1560 + $0x90] sm:$0xff]
  %v1580 = vld [vmem:[%s1560 + $0x98] sm:$0xff]
  %v1581 = vld [vmem:[%s1560 + $0xa0] sm:$0xff]
  %v1582 = vld [vmem:[%s1560 + $0xa8] sm:$0xff]
  %v1583 = vld [vmem:[%s1560 + $0xb0] sm:$0xff]
  %v1584 = vld [vmem:[%s1560 + $0xb8] sm:$0xff]
  %v1585 = vld [vmem:[%s1560 + $0xc0] sm:$0xff]
  %v1586 = vld [vmem:[%s1560 + $0xc8] sm:$0xff]
  %v1587 = vld [vmem:[%s1560 + $0xd0] sm:$0xff]
  %v1588 = vld [vmem:[%s1560 + $0xd8] sm:$0xff]
  %v1589 = vld [vmem:[%s1560 + $0xe0] sm:$0xff]
  %v1590 = vld [vmem:[%s1560 + $0xe8] sm:$0xff]
  %v1591 = vld [vmem:[%s1560 + $0xf0] sm:$0xff]
  %v1592 = vld [vmem:[%s1560 + $0xf8] sm:$0xff]
  %1593 = vmatprep.subr.mxu0 0.0
  %1594 = vmatpush1.msra.mxu0 %v1576
  %1595 = vmatprep.subr.mxu0 0.0
  %1596 = vmatpush1.msra.mxu0 %v1575
  %1597 = vmatprep.subr.mxu0 0.0
  %1598 = vmatpush1.msra.mxu0 %v1574
  %1599 = vmatprep.subr.mxu0 0.0
  %1600 = vmatpush1.msra.mxu0 %v1573
  %1601 = vmatprep.subr.mxu0 0.0
  %1602 = vmatpush1.msra.mxu0 %v1572
  %1603 = vmatprep.subr.mxu0 0.0
  %1604 = vmatpush1.msra.mxu0 %v1571
  %1605 = vmatprep.subr.mxu0 0.0
  %1606 = vmatpush1.msra.mxu0 %v1570
  %1607 = vmatprep.subr.mxu0 0.0
  %1608 = vmatpush1.msra.mxu0 %v1569
  %1609 = vmatprep.subr.mxu0 0.0
  %1610 = vmatpush1.msra.mxu0 %v1568
  %1611 = vmatprep.subr.mxu0 0.0
  %1612 = vmatpush1.msra.mxu0 %v1567
  %1613 = vmatprep.subr.mxu0 0.0
  %1614 = vmatpush1.msra.mxu0 %v1566
  %1615 = vmatprep.subr.mxu0 0.0
  %1616 = vmatpush1.msra.mxu0 %v1565
  %1617 = vmatprep.subr.mxu0 0.0
  %1618 = vmatpush1.msra.mxu0 %v1564
  %1619 = vmatprep.subr.mxu0 0.0
  %1620 = vmatpush1.msra.mxu0 %v1563
  %1621 = vmatprep.subr.mxu0 0.0
  %1622 = vmatpush1.msra.mxu0 %v1562
  %1623 = vmatprep.subr.mxu0 0.0
  %1624 = vmatpush1.msra.mxu0 %v1561
  %1625 = vmatprep.subr.mxu0 0.0
  %1626 = vmatpush2.msra.mxu0 %v1592
  %1627 = vmatprep.subr.mxu0 0.0
  %1628 = vmatpush2.msra.mxu0 %v1591
  %1629 = vmatprep.subr.mxu0 0.0
  %1630 = vmatpush2.msra.mxu0 %v1590
  %1631 = vmatprep.subr.mxu0 0.0
  %1632 = vmatpush2.msra.mxu0 %v1589
  %1633 = vmatprep.subr.mxu0 0.0
  %1634 = vmatpush2.msra.mxu0 %v1588
  %1635 = vmatprep.subr.mxu0 0.0
  %1636 = vmatpush2.msra.mxu0 %v1587
  %1637 = vmatprep.subr.mxu0 0.0
  %1638 = vmatpush2.msra.mxu0 %v1586
  %1639 = vmatprep.subr.mxu0 0.0
  %1640 = vmatpush2.msra.mxu0 %v1585
  %1641 = vmatprep.subr.mxu0 0.0
  %1642 = vmatpush2.msra.mxu0 %v1584
  %1643 = vmatprep.subr.mxu0 0.0
  %1644 = vmatpush2.msra.mxu0 %v1583
  %1645 = vmatprep.subr.mxu0 0.0
  %1646 = vmatpush2.msra.mxu0 %v1582
  %1647 = vmatprep.subr.mxu0 0.0
  %1648 = vmatpush2.msra.mxu0 %v1581
  %1649 = vmatprep.subr.mxu0 0.0
  %1650 = vmatpush2.msra.mxu0 %v1580
  %1651 = vmatprep.subr.mxu0 0.0
  %1652 = vmatpush2.msra.mxu0 %v1579
  %1653 = vmatprep.subr.mxu0 0.0
  %1654 = vmatpush2.msra.mxu0 %v1578
  %1655 = vmatprep.subr.mxu0 0.0
  %1656 = vmatpush2.msra.mxu0 %v1577
  %1657 = vmatprep.mubr.f32.mxu0 %v52
  %1658 = vmatmul.mubr.f32.gmra.mxu0 %v51
  %v1659 = vpop.f32.mrf.mxu0
  %v1660 = vadd.f32 0.0, %v1659
  %v1661 = vpop.f32.mrf.mxu0
  %1662 = vdwg.mxu0
  %s1663 = scalar_lea.vmem %s2, 128
  %v1664 = vld [vmem:[%s1663] sm:$0xff]
  %v1665 = vld [vmem:[%s1663 + $0x8] sm:$0xff]
  %v1667 = vsel %vm263, %v1664, 0
  %v1670 = vsel %vm263, %v1665, 0
  %1672 = vmatprep.subr.mxu0 0.0
  %1673 = vmatpush1.msra.mxu0 0.0
  %1674 = vmatprep.subr.mxu0 0.0
  %1675 = vmatpush1.msra.mxu0 0.0
  %1676 = vmatprep.subr.mxu0 0.0
  %1677 = vmatpush1.msra.mxu0 0.0
  %1678 = vmatprep.subr.mxu0 0.0
  %1679 = vmatpush1.msra.mxu0 0.0
  %1680 = vmatprep.subr.mxu0 0.0
  %1681 = vmatpush1.msra.mxu0 0.0
  %1682 = vmatprep.subr.mxu0 0.0
  %1683 = vmatpush1.msra.mxu0 0.0
  %1684 = vmatprep.subr.mxu0 0.0
  %1685 = vmatpush1.msra.mxu0 0.0
  %1686 = vmatprep.subr.mxu0 0.0
  %1687 = vmatpush1.msra.mxu0 0.0
  %1688 = vmatprep.subr.mxu0 0.0
  %1689 = vmatpush1.msra.mxu0 0.0
  %1690 = vmatprep.subr.mxu0 0.0
  %1691 = vmatpush1.msra.mxu0 0.0
  %1692 = vmatprep.subr.mxu0 0.0
  %1693 = vmatpush1.msra.mxu0 0.0
  %1694 = vmatprep.subr.mxu0 0.0
  %1695 = vmatpush1.msra.mxu0 0.0
  %1696 = vmatprep.subr.mxu0 0.0
  %1697 = vmatpush1.msra.mxu0 0.0
  %1698 = vmatprep.subr.mxu0 0.0
  %1699 = vmatpush1.msra.mxu0 0.0
  %1700 = vmatprep.subr.mxu0 0.0
  %1701 = vmatpush1.msra.mxu0 0.0
  %1702 = vmatprep.subr.mxu0 0.0
  %1703 = vmatpush1.msra.mxu0 %v1660
  %1704 = vmatprep.subr.mxu0 0.0
  %1705 = vmatpush2.msra.mxu0 0.0
  %1706 = vmatprep.subr.mxu0 0.0
  %1707 = vmatpush2.msra.mxu0 0.0
  %1708 = vmatprep.subr.mxu0 0.0
  %1709 = vmatpush2.msra.mxu0 0.0
  %1710 = vmatprep.subr.mxu0 0.0
  %1711 = vmatpush2.msra.mxu0 0.0
  %1712 = vmatprep.subr.mxu0 0.0
  %1713 = vmatpush2.msra.mxu0 0.0
  %1714 = vmatprep.subr.mxu0 0.0
  %1715 = vmatpush2.msra.mxu0 0.0
  %1716 = vmatprep.subr.mxu0 0.0
  %1717 = vmatpush2.msra.mxu0 0.0
  %1718 = vmatprep.subr.mxu0 0.0
  %1719 = vmatpush2.msra.mxu0 0.0
  %1720 = vmatprep.subr.mxu0 0.0
  %1721 = vmatpush2.msra.mxu0 0.0
  %1722 = vmatprep.subr.mxu0 0.0
  %1723 = vmatpush2.msra.mxu0 0.0
  %1724 = vmatprep.subr.mxu0 0.0
  %1725 = vmatpush2.msra.mxu0 0.0
  %1726 = vmatprep.subr.mxu0 0.0
  %1727 = vmatpush2.msra.mxu0 0.0
  %1728 = vmatprep.subr.mxu0 0.0
  %1729 = vmatpush2.msra.mxu0 0.0
  %1730 = vmatprep.subr.mxu0 0.0
  %1731 = vmatpush2.msra.mxu0 0.0
  %1732 = vmatprep.subr.mxu0 0.0
  %1733 = vmatpush2.msra.mxu0 0.0
  %1734 = vmatprep.subr.mxu0 0.0
  %1735 = vmatpush2.msra.mxu0 0.0
  %1736 = vmatprep.mubr.f32.mxu0 0.0
  %1737 = vmatmul.mubr.f32.gmra.mxu0 %v1667
  %v1738 = vpop.f32.mrf.mxu0
  %v1739 = vadd.f32 0.0, %v1738
  %v1740 = vpop.f32.mrf.mxu0
  %1741 = vmatprep.mubr.f32.mxu0 0.0
  %1742 = vmatmul.mubr.f32.gmra.mxu0 %v1670
  %v1743 = vpop.f32.mrf.mxu0
  %v1744 = vadd.f32 0.0, %v1743
  %v1745 = vpop.f32.mrf.mxu0
  %1746 = vdwg.mxu0
  %v1747 = vadd.f32 %v1558, %v1739
  %v1748 = vadd.f32 %v1559, %v1744
  %s1749 = scalar_lea.vmem %s1, 2304
  %v1750 = vld [vmem:[%s1749] sm:$0xff]
  %v1751 = vld [vmem:[%s1749 + $0x8] sm:$0xff]
  %v1752 = vld [vmem:[%s1749 + $0x10] sm:$0xff]
  %v1753 = vld [vmem:[%s1749 + $0x18] sm:$0xff]
  %v1754 = vld [vmem:[%s1749 + $0x20] sm:$0xff]
  %v1755 = vld [vmem:[%s1749 + $0x28] sm:$0xff]
  %v1756 = vld [vmem:[%s1749 + $0x30] sm:$0xff]
  %v1757 = vld [vmem:[%s1749 + $0x38] sm:$0xff]
  %v1758 = vld [vmem:[%s1749 + $0x40] sm:$0xff]
  %v1759 = vld [vmem:[%s1749 + $0x48] sm:$0xff]
  %v1760 = vld [vmem:[%s1749 + $0x50] sm:$0xff]
  %v1761 = vld [vmem:[%s1749 + $0x58] sm:$0xff]
  %v1762 = vld [vmem:[%s1749 + $0x60] sm:$0xff]
  %v1763 = vld [vmem:[%s1749 + $0x68] sm:$0xff]
  %v1764 = vld [vmem:[%s1749 + $0x70] sm:$0xff]
  %v1765 = vld [vmem:[%s1749 + $0x78] sm:$0xff]
  %v1766 = vld [vmem:[%s1749 + $0x80] sm:$0xff]
  %v1767 = vld [vmem:[%s1749 + $0x88] sm:$0xff]
  %v1768 = vld [vmem:[%s1749 + $0x90] sm:$0xff]
  %v1769 = vld [vmem:[%s1749 + $0x98] sm:$0xff]
  %v1770 = vld [vmem:[%s1749 + $0xa0] sm:$0xff]
  %v1771 = vld [vmem:[%s1749 + $0xa8] sm:$0xff]
  %v1772 = vld [vmem:[%s1749 + $0xb0] sm:$0xff]
  %v1773 = vld [vmem:[%s1749 + $0xb8] sm:$0xff]
  %v1774 = vld [vmem:[%s1749 + $0xc0] sm:$0xff]
  %v1775 = vld [vmem:[%s1749 + $0xc8] sm:$0xff]
  %v1776 = vld [vmem:[%s1749 + $0xd0] sm:$0xff]
  %v1777 = vld [vmem:[%s1749 + $0xd8] sm:$0xff]
  %v1778 = vld [vmem:[%s1749 + $0xe0] sm:$0xff]
  %v1779 = vld [vmem:[%s1749 + $0xe8] sm:$0xff]
  %v1780 = vld [vmem:[%s1749 + $0xf0] sm:$0xff]
  %v1781 = vld [vmem:[%s1749 + $0xf8] sm:$0xff]
  %1782 = vmatprep.subr.mxu0 0.0
  %1783 = vmatpush1.msra.mxu0 %v1765
  %1784 = vmatprep.subr.mxu0 0.0
  %1785 = vmatpush1.msra.mxu0 %v1764
  %1786 = vmatprep.subr.mxu0 0.0
  %1787 = vmatpush1.msra.mxu0 %v1763
  %1788 = vmatprep.subr.mxu0 0.0
  %1789 = vmatpush1.msra.mxu0 %v1762
  %1790 = vmatprep.subr.mxu0 0.0
  %1791 = vmatpush1.msra.mxu0 %v1761
  %1792 = vmatprep.subr.mxu0 0.0
  %1793 = vmatpush1.msra.mxu0 %v1760
  %1794 = vmatprep.subr.mxu0 0.0
  %1795 = vmatpush1.msra.mxu0 %v1759
  %1796 = vmatprep.subr.mxu0 0.0
  %1797 = vmatpush1.msra.mxu0 %v1758
  %1798 = vmatprep.subr.mxu0 0.0
  %1799 = vmatpush1.msra.mxu0 %v1757
  %1800 = vmatprep.subr.mxu0 0.0
  %1801 = vmatpush1.msra.mxu0 %v1756
  %1802 = vmatprep.subr.mxu0 0.0
  %1803 = vmatpush1.msra.mxu0 %v1755
  %1804 = vmatprep.subr.mxu0 0.0
  %1805 = vmatpush1.msra.mxu0 %v1754
  %1806 = vmatprep.subr.mxu0 0.0
  %1807 = vmatpush1.msra.mxu0 %v1753
  %1808 = vmatprep.subr.mxu0 0.0
  %1809 = vmatpush1.msra.mxu0 %v1752
  %1810 = vmatprep.subr.mxu0 0.0
  %1811 = vmatpush1.msra.mxu0 %v1751
  %1812 = vmatprep.subr.mxu0 0.0
  %1813 = vmatpush1.msra.mxu0 %v1750
  %1814 = vmatprep.subr.mxu0 0.0
  %1815 = vmatpush2.msra.mxu0 %v1781
  %1816 = vmatprep.subr.mxu0 0.0
  %1817 = vmatpush2.msra.mxu0 %v1780
  %1818 = vmatprep.subr.mxu0 0.0
  %1819 = vmatpush2.msra.mxu0 %v1779
  %1820 = vmatprep.subr.mxu0 0.0
  %1821 = vmatpush2.msra.mxu0 %v1778
  %1822 = vmatprep.subr.mxu0 0.0
  %1823 = vmatpush2.msra.mxu0 %v1777
  %1824 = vmatprep.subr.mxu0 0.0
  %1825 = vmatpush2.msra.mxu0 %v1776
  %1826 = vmatprep.subr.mxu0 0.0
  %1827 = vmatpush2.msra.mxu0 %v1775
  %1828 = vmatprep.subr.mxu0 0.0
  %1829 = vmatpush2.msra.mxu0 %v1774
  %1830 = vmatprep.subr.mxu0 0.0
  %1831 = vmatpush2.msra.mxu0 %v1773
  %1832 = vmatprep.subr.mxu0 0.0
  %1833 = vmatpush2.msra.mxu0 %v1772
  %1834 = vmatprep.subr.mxu0 0.0
  %1835 = vmatpush2.msra.mxu0 %v1771
  %1836 = vmatprep.subr.mxu0 0.0
  %1837 = vmatpush2.msra.mxu0 %v1770
  %1838 = vmatprep.subr.mxu0 0.0
  %1839 = vmatpush2.msra.mxu0 %v1769
  %1840 = vmatprep.subr.mxu0 0.0
  %1841 = vmatpush2.msra.mxu0 %v1768
  %1842 = vmatprep.subr.mxu0 0.0
  %1843 = vmatpush2.msra.mxu0 %v1767
  %1844 = vmatprep.subr.mxu0 0.0
  %1845 = vmatpush2.msra.mxu0 %v1766
  %1846 = vmatprep.mubr.f32.mxu0 %v52
  %1847 = vmatmul.mubr.f32.gmra.mxu0 %v51
  %v1848 = vpop.f32.mrf.mxu0
  %v1849 = vadd.f32 0.0, %v1848
  %v1850 = vpop.f32.mrf.mxu0
  %1851 = vdwg.mxu0
  %s1852 = scalar_lea.vmem %s2, 144
  %v1853 = vld [vmem:[%s1852] sm:$0xff]
  %v1854 = vld [vmem:[%s1852 + $0x8] sm:$0xff]
  %v1856 = vsel %vm263, %v1853, 0
  %v1859 = vsel %vm263, %v1854, 0
  %1861 = vmatprep.subr.mxu0 0.0
  %1862 = vmatpush1.msra.mxu0 0.0
  %1863 = vmatprep.subr.mxu0 0.0
  %1864 = vmatpush1.msra.mxu0 0.0
  %1865 = vmatprep.subr.mxu0 0.0
  %1866 = vmatpush1.msra.mxu0 0.0
  %1867 = vmatprep.subr.mxu0 0.0
  %1868 = vmatpush1.msra.mxu0 0.0
  %1869 = vmatprep.subr.mxu0 0.0
  %1870 = vmatpush1.msra.mxu0 0.0
  %1871 = vmatprep.subr.mxu0 0.0
  %1872 = vmatpush1.msra.mxu0 0.0
  %1873 = vmatprep.subr.mxu0 0.0
  %1874 = vmatpush1.msra.mxu0 0.0
  %1875 = vmatprep.subr.mxu0 0.0
  %1876 = vmatpush1.msra.mxu0 0.0
  %1877 = vmatprep.subr.mxu0 0.0
  %1878 = vmatpush1.msra.mxu0 0.0
  %1879 = vmatprep.subr.mxu0 0.0
  %1880 = vmatpush1.msra.mxu0 0.0
  %1881 = vmatprep.subr.mxu0 0.0
  %1882 = vmatpush1.msra.mxu0 0.0
  %1883 = vmatprep.subr.mxu0 0.0
  %1884 = vmatpush1.msra.mxu0 0.0
  %1885 = vmatprep.subr.mxu0 0.0
  %1886 = vmatpush1.msra.mxu0 0.0
  %1887 = vmatprep.subr.mxu0 0.0
  %1888 = vmatpush1.msra.mxu0 0.0
  %1889 = vmatprep.subr.mxu0 0.0
  %1890 = vmatpush1.msra.mxu0 0.0
  %1891 = vmatprep.subr.mxu0 0.0
  %1892 = vmatpush1.msra.mxu0 %v1849
  %1893 = vmatprep.subr.mxu0 0.0
  %1894 = vmatpush2.msra.mxu0 0.0
  %1895 = vmatprep.subr.mxu0 0.0
  %1896 = vmatpush2.msra.mxu0 0.0
  %1897 = vmatprep.subr.mxu0 0.0
  %1898 = vmatpush2.msra.mxu0 0.0
  %1899 = vmatprep.subr.mxu0 0.0
  %1900 = vmatpush2.msra.mxu0 0.0
  %1901 = vmatprep.subr.mxu0 0.0
  %1902 = vmatpush2.msra.mxu0 0.0
  %1903 = vmatprep.subr.mxu0 0.0
  %1904 = vmatpush2.msra.mxu0 0.0
  %1905 = vmatprep.subr.mxu0 0.0
  %1906 = vmatpush2.msra.mxu0 0.0
  %1907 = vmatprep.subr.mxu0 0.0
  %1908 = vmatpush2.msra.mxu0 0.0
  %1909 = vmatprep.subr.mxu0 0.0
  %1910 = vmatpush2.msra.mxu0 0.0
  %1911 = vmatprep.subr.mxu0 0.0
  %1912 = vmatpush2.msra.mxu0 0.0
  %1913 = vmatprep.subr.mxu0 0.0
  %1914 = vmatpush2.msra.mxu0 0.0
  %1915 = vmatprep.subr.mxu0 0.0
  %1916 = vmatpush2.msra.mxu0 0.0
  %1917 = vmatprep.subr.mxu0 0.0
  %1918 = vmatpush2.msra.mxu0 0.0
  %1919 = vmatprep.subr.mxu0 0.0
  %1920 = vmatpush2.msra.mxu0 0.0
  %1921 = vmatprep.subr.mxu0 0.0
  %1922 = vmatpush2.msra.mxu0 0.0
  %1923 = vmatprep.subr.mxu0 0.0
  %1924 = vmatpush2.msra.mxu0 0.0
  %1925 = vmatprep.mubr.f32.mxu0 0.0
  %1926 = vmatmul.mubr.f32.gmra.mxu0 %v1856
  %v1927 = vpop.f32.mrf.mxu0
  %v1928 = vadd.f32 0.0, %v1927
  %v1929 = vpop.f32.mrf.mxu0
  %1930 = vmatprep.mubr.f32.mxu0 0.0
  %1931 = vmatmul.mubr.f32.gmra.mxu0 %v1859
  %v1932 = vpop.f32.mrf.mxu0
  %v1933 = vadd.f32 0.0, %v1932
  %v1934 = vpop.f32.mrf.mxu0
  %1935 = vdwg.mxu0
  %v1936 = vadd.f32 %v1747, %v1928
  %v1937 = vadd.f32 %v1748, %v1933
  %s1938 = scalar_lea.vmem %s1, 2560
  %v1939 = vld [vmem:[%s1938] sm:$0xff]
  %v1940 = vld [vmem:[%s1938 + $0x8] sm:$0xff]
  %v1941 = vld [vmem:[%s1938 + $0x10] sm:$0xff]
  %v1942 = vld [vmem:[%s1938 + $0x18] sm:$0xff]
  %v1943 = vld [vmem:[%s1938 + $0x20] sm:$0xff]
  %v1944 = vld [vmem:[%s1938 + $0x28] sm:$0xff]
  %v1945 = vld [vmem:[%s1938 + $0x30] sm:$0xff]
  %v1946 = vld [vmem:[%s1938 + $0x38] sm:$0xff]
  %v1947 = vld [vmem:[%s1938 + $0x40] sm:$0xff]
  %v1948 = vld [vmem:[%s1938 + $0x48] sm:$0xff]
  %v1949 = vld [vmem:[%s1938 + $0x50] sm:$0xff]
  %v1950 = vld [vmem:[%s1938 + $0x58] sm:$0xff]
  %v1951 = vld [vmem:[%s1938 + $0x60] sm:$0xff]
  %v1952 = vld [vmem:[%s1938 + $0x68] sm:$0xff]
  %v1953 = vld [vmem:[%s1938 + $0x70] sm:$0xff]
  %v1954 = vld [vmem:[%s1938 + $0x78] sm:$0xff]
  %v1955 = vld [vmem:[%s1938 + $0x80] sm:$0xff]
  %v1956 = vld [vmem:[%s1938 + $0x88] sm:$0xff]
  %v1957 = vld [vmem:[%s1938 + $0x90] sm:$0xff]
  %v1958 = vld [vmem:[%s1938 + $0x98] sm:$0xff]
  %v1959 = vld [vmem:[%s1938 + $0xa0] sm:$0xff]
  %v1960 = vld [vmem:[%s1938 + $0xa8] sm:$0xff]
  %v1961 = vld [vmem:[%s1938 + $0xb0] sm:$0xff]
  %v1962 = vld [vmem:[%s1938 + $0xb8] sm:$0xff]
  %v1963 = vld [vmem:[%s1938 + $0xc0] sm:$0xff]
  %v1964 = vld [vmem:[%s1938 + $0xc8] sm:$0xff]
  %v1965 = vld [vmem:[%s1938 + $0xd0] sm:$0xff]
  %v1966 = vld [vmem:[%s1938 + $0xd8] sm:$0xff]
  %v1967 = vld [vmem:[%s1938 + $0xe0] sm:$0xff]
  %v1968 = vld [vmem:[%s1938 + $0xe8] sm:$0xff]
  %v1969 = vld [vmem:[%s1938 + $0xf0] sm:$0xff]
  %v1970 = vld [vmem:[%s1938 + $0xf8] sm:$0xff]
  %1971 = vmatprep.subr.mxu0 0.0
  %1972 = vmatpush1.msra.mxu0 %v1954
  %1973 = vmatprep.subr.mxu0 0.0
  %1974 = vmatpush1.msra.mxu0 %v1953
  %1975 = vmatprep.subr.mxu0 0.0
  %1976 = vmatpush1.msra.mxu0 %v1952
  %1977 = vmatprep.subr.mxu0 0.0
  %1978 = vmatpush1.msra.mxu0 %v1951
  %1979 = vmatprep.subr.mxu0 0.0
  %1980 = vmatpush1.msra.mxu0 %v1950
  %1981 = vmatprep.subr.mxu0 0.0
  %1982 = vmatpush1.msra.mxu0 %v1949
  %1983 = vmatprep.subr.mxu0 0.0
  %1984 = vmatpush1.msra.mxu0 %v1948
  %1985 = vmatprep.subr.mxu0 0.0
  %1986 = vmatpush1.msra.mxu0 %v1947
  %1987 = vmatprep.subr.mxu0 0.0
  %1988 = vmatpush1.msra.mxu0 %v1946
  %1989 = vmatprep.subr.mxu0 0.0
  %1990 = vmatpush1.msra.mxu0 %v1945
  %1991 = vmatprep.subr.mxu0 0.0
  %1992 = vmatpush1.msra.mxu0 %v1944
  %1993 = vmatprep.subr.mxu0 0.0
  %1994 = vmatpush1.msra.mxu0 %v1943
  %1995 = vmatprep.subr.mxu0 0.0
  %1996 = vmatpush1.msra.mxu0 %v1942
  %1997 = vmatprep.subr.mxu0 0.0
  %1998 = vmatpush1.msra.mxu0 %v1941
  %1999 = vmatprep.subr.mxu0 0.0
  %2000 = vmatpush1.msra.mxu0 %v1940
  %2001 = vmatprep.subr.mxu0 0.0
  %2002 = vmatpush1.msra.mxu0 %v1939
  %2003 = vmatprep.subr.mxu0 0.0
  %2004 = vmatpush2.msra.mxu0 %v1970
  %2005 = vmatprep.subr.mxu0 0.0
  %2006 = vmatpush2.msra.mxu0 %v1969
  %2007 = vmatprep.subr.mxu0 0.0
  %2008 = vmatpush2.msra.mxu0 %v1968
  %2009 = vmatprep.subr.mxu0 0.0
  %2010 = vmatpush2.msra.mxu0 %v1967
  %2011 = vmatprep.subr.mxu0 0.0
  %2012 = vmatpush2.msra.mxu0 %v1966
  %2013 = vmatprep.subr.mxu0 0.0
  %2014 = vmatpush2.msra.mxu0 %v1965
  %2015 = vmatprep.subr.mxu0 0.0
  %2016 = vmatpush2.msra.mxu0 %v1964
  %2017 = vmatprep.subr.mxu0 0.0
  %2018 = vmatpush2.msra.mxu0 %v1963
  %2019 = vmatprep.subr.mxu0 0.0
  %2020 = vmatpush2.msra.mxu0 %v1962
  %2021 = vmatprep.subr.mxu0 0.0
  %2022 = vmatpush2.msra.mxu0 %v1961
  %2023 = vmatprep.subr.mxu0 0.0
  %2024 = vmatpush2.msra.mxu0 %v1960
  %2025 = vmatprep.subr.mxu0 0.0
  %2026 = vmatpush2.msra.mxu0 %v1959
  %2027 = vmatprep.subr.mxu0 0.0
  %2028 = vmatpush2.msra.mxu0 %v1958
  %2029 = vmatprep.subr.mxu0 0.0
  %2030 = vmatpush2.msra.mxu0 %v1957
  %2031 = vmatprep.subr.mxu0 0.0
  %2032 = vmatpush2.msra.mxu0 %v1956
  %2033 = vmatprep.subr.mxu0 0.0
  %2034 = vmatpush2.msra.mxu0 %v1955
  %2035 = vmatprep.mubr.f32.mxu0 %v52
  %2036 = vmatmul.mubr.f32.gmra.mxu0 %v51
  %v2037 = vpop.f32.mrf.mxu0
  %v2038 = vadd.f32 0.0, %v2037
  %v2039 = vpop.f32.mrf.mxu0
  %2040 = vdwg.mxu0
  %s2041 = scalar_lea.vmem %s2, 160
  %v2042 = vld [vmem:[%s2041] sm:$0xff]
  %v2043 = vld [vmem:[%s2041 + $0x8] sm:$0xff]
  %v2045 = vsel %vm263, %v2042, 0
  %v2048 = vsel %vm263, %v2043, 0
  %2050 = vmatprep.subr.mxu0 0.0
  %2051 = vmatpush1.msra.mxu0 0.0
  %2052 = vmatprep.subr.mxu0 0.0
  %2053 = vmatpush1.msra.mxu0 0.0
  %2054 = vmatprep.subr.mxu0 0.0
  %2055 = vmatpush1.msra.mxu0 0.0
  %2056 = vmatprep.subr.mxu0 0.0
  %2057 = vmatpush1.msra.mxu0 0.0
  %2058 = vmatprep.subr.mxu0 0.0
  %2059 = vmatpush1.msra.mxu0 0.0
  %2060 = vmatprep.subr.mxu0 0.0
  %2061 = vmatpush1.msra.mxu0 0.0
  %2062 = vmatprep.subr.mxu0 0.0
  %2063 = vmatpush1.msra.mxu0 0.0
  %2064 = vmatprep.subr.mxu0 0.0
  %2065 = vmatpush1.msra.mxu0 0.0
  %2066 = vmatprep.subr.mxu0 0.0
  %2067 = vmatpush1.msra.mxu0 0.0
  %2068 = vmatprep.subr.mxu0 0.0
  %2069 = vmatpush1.msra.mxu0 0.0
  %2070 = vmatprep.subr.mxu0 0.0
  %2071 = vmatpush1.msra.mxu0 0.0
  %2072 = vmatprep.subr.mxu0 0.0
  %2073 = vmatpush1.msra.mxu0 0.0
  %2074 = vmatprep.subr.mxu0 0.0
  %2075 = vmatpush1.msra.mxu0 0.0
  %2076 = vmatprep.subr.mxu0 0.0
  %2077 = vmatpush1.msra.mxu0 0.0
  %2078 = vmatprep.subr.mxu0 0.0
  %2079 = vmatpush1.msra.mxu0 0.0
  %2080 = vmatprep.subr.mxu0 0.0
  %2081 = vmatpush1.msra.mxu0 %v2038
  %2082 = vmatprep.subr.mxu0 0.0
  %2083 = vmatpush2.msra.mxu0 0.0
  %2084 = vmatprep.subr.mxu0 0.0
  %2085 = vmatpush2.msra.mxu0 0.0
  %2086 = vmatprep.subr.mxu0 0.0
  %2087 = vmatpush2.msra.mxu0 0.0
  %2088 = vmatprep.subr.mxu0 0.0
  %2089 = vmatpush2.msra.mxu0 0.0
  %2090 = vmatprep.subr.mxu0 0.0
  %2091 = vmatpush2.msra.mxu0 0.0
  %2092 = vmatprep.subr.mxu0 0.0
  %2093 = vmatpush2.msra.mxu0 0.0
  %2094 = vmatprep.subr.mxu0 0.0
  %2095 = vmatpush2.msra.mxu0 0.0
  %2096 = vmatprep.subr.mxu0 0.0
  %2097 = vmatpush2.msra.mxu0 0.0
  %2098 = vmatprep.subr.mxu0 0.0
  %2099 = vmatpush2.msra.mxu0 0.0
  %2100 = vmatprep.subr.mxu0 0.0
  %2101 = vmatpush2.msra.mxu0 0.0
  %2102 = vmatprep.subr.mxu0 0.0
  %2103 = vmatpush2.msra.mxu0 0.0
  %2104 = vmatprep.subr.mxu0 0.0
  %2105 = vmatpush2.msra.mxu0 0.0
  %2106 = vmatprep.subr.mxu0 0.0
  %2107 = vmatpush2.msra.mxu0 0.0
  %2108 = vmatprep.subr.mxu0 0.0
  %2109 = vmatpush2.msra.mxu0 0.0
  %2110 = vmatprep.subr.mxu0 0.0
  %2111 = vmatpush2.msra.mxu0 0.0
  %2112 = vmatprep.subr.mxu0 0.0
  %2113 = vmatpush2.msra.mxu0 0.0
  %2114 = vmatprep.mubr.f32.mxu0 0.0
  %2115 = vmatmul.mubr.f32.gmra.mxu0 %v2045
  %v2116 = vpop.f32.mrf.mxu0
  %v2117 = vadd.f32 0.0, %v2116
  %v2118 = vpop.f32.mrf.mxu0
  %2119 = vmatprep.mubr.f32.mxu0 0.0
  %2120 = vmatmul.mubr.f32.gmra.mxu0 %v2048
  %v2121 = vpop.f32.mrf.mxu0
  %v2122 = vadd.f32 0.0, %v2121
  %v2123 = vpop.f32.mrf.mxu0
  %2124 = vdwg.mxu0
  %v2125 = vadd.f32 %v1936, %v2117
  %v2126 = vadd.f32 %v1937, %v2122
  %s2127 = scalar_lea.vmem %s1, 2816
  %v2128 = vld [vmem:[%s2127] sm:$0xff]
  %v2129 = vld [vmem:[%s2127 + $0x8] sm:$0xff]
  %v2130 = vld [vmem:[%s2127 + $0x10] sm:$0xff]
  %v2131 = vld [vmem:[%s2127 + $0x18] sm:$0xff]
  %v2132 = vld [vmem:[%s2127 + $0x20] sm:$0xff]
  %v2133 = vld [vmem:[%s2127 + $0x28] sm:$0xff]
  %v2134 = vld [vmem:[%s2127 + $0x30] sm:$0xff]
  %v2135 = vld [vmem:[%s2127 + $0x38] sm:$0xff]
  %v2136 = vld [vmem:[%s2127 + $0x40] sm:$0xff]
  %v2137 = vld [vmem:[%s2127 + $0x48] sm:$0xff]
  %v2138 = vld [vmem:[%s2127 + $0x50] sm:$0xff]
  %v2139 = vld [vmem:[%s2127 + $0x58] sm:$0xff]
  %v2140 = vld [vmem:[%s2127 + $0x60] sm:$0xff]
  %v2141 = vld [vmem:[%s2127 + $0x68] sm:$0xff]
  %v2142 = vld [vmem:[%s2127 + $0x70] sm:$0xff]
  %v2143 = vld [vmem:[%s2127 + $0x78] sm:$0xff]
  %v2144 = vld [vmem:[%s2127 + $0x80] sm:$0xff]
  %v2145 = vld [vmem:[%s2127 + $0x88] sm:$0xff]
  %v2146 = vld [vmem:[%s2127 + $0x90] sm:$0xff]
  %v2147 = vld [vmem:[%s2127 + $0x98] sm:$0xff]
  %v2148 = vld [vmem:[%s2127 + $0xa0] sm:$0xff]
  %v2149 = vld [vmem:[%s2127 + $0xa8] sm:$0xff]
  %v2150 = vld [vmem:[%s2127 + $0xb0] sm:$0xff]
  %v2151 = vld [vmem:[%s2127 + $0xb8] sm:$0xff]
  %v2152 = vld [vmem:[%s2127 + $0xc0] sm:$0xff]
  %v2153 = vld [vmem:[%s2127 + $0xc8] sm:$0xff]
  %v2154 = vld [vmem:[%s2127 + $0xd0] sm:$0xff]
  %v2155 = vld [vmem:[%s2127 + $0xd8] sm:$0xff]
  %v2156 = vld [vmem:[%s2127 + $0xe0] sm:$0xff]
  %v2157 = vld [vmem:[%s2127 + $0xe8] sm:$0xff]
  %v2158 = vld [vmem:[%s2127 + $0xf0] sm:$0xff]
  %v2159 = vld [vmem:[%s2127 + $0xf8] sm:$0xff]
  %2160 = vmatprep.subr.mxu0 0.0
  %2161 = vmatpush1.msra.mxu0 %v2143
  %2162 = vmatprep.subr.mxu0 0.0
  %2163 = vmatpush1.msra.mxu0 %v2142
  %2164 = vmatprep.subr.mxu0 0.0
  %2165 = vmatpush1.msra.mxu0 %v2141
  %2166 = vmatprep.subr.mxu0 0.0
  %2167 = vmatpush1.msra.mxu0 %v2140
  %2168 = vmatprep.subr.mxu0 0.0
  %2169 = vmatpush1.msra.mxu0 %v2139
  %2170 = vmatprep.subr.mxu0 0.0
  %2171 = vmatpush1.msra.mxu0 %v2138
  %2172 = vmatprep.subr.mxu0 0.0
  %2173 = vmatpush1.msra.mxu0 %v2137
  %2174 = vmatprep.subr.mxu0 0.0
  %2175 = vmatpush1.msra.mxu0 %v2136
  %2176 = vmatprep.subr.mxu0 0.0
  %2177 = vmatpush1.msra.mxu0 %v2135
  %2178 = vmatprep.subr.mxu0 0.0
  %2179 = vmatpush1.msra.mxu0 %v2134
  %2180 = vmatprep.subr.mxu0 0.0
  %2181 = vmatpush1.msra.mxu0 %v2133
  %2182 = vmatprep.subr.mxu0 0.0
  %2183 = vmatpush1.msra.mxu0 %v2132
  %2184 = vmatprep.subr.mxu0 0.0
  %2185 = vmatpush1.msra.mxu0 %v2131
  %2186 = vmatprep.subr.mxu0 0.0
  %2187 = vmatpush1.msra.mxu0 %v2130
  %2188 = vmatprep.subr.mxu0 0.0
  %2189 = vmatpush1.msra.mxu0 %v2129
  %2190 = vmatprep.subr.mxu0 0.0
  %2191 = vmatpush1.msra.mxu0 %v2128
  %2192 = vmatprep.subr.mxu0 0.0
  %2193 = vmatpush2.msra.mxu0 %v2159
  %2194 = vmatprep.subr.mxu0 0.0
  %2195 = vmatpush2.msra.mxu0 %v2158
  %2196 = vmatprep.subr.mxu0 0.0
  %2197 = vmatpush2.msra.mxu0 %v2157
  %2198 = vmatprep.subr.mxu0 0.0
  %2199 = vmatpush2.msra.mxu0 %v2156
  %2200 = vmatprep.subr.mxu0 0.0
  %2201 = vmatpush2.msra.mxu0 %v2155
  %2202 = vmatprep.subr.mxu0 0.0
  %2203 = vmatpush2.msra.mxu0 %v2154
  %2204 = vmatprep.subr.mxu0 0.0
  %2205 = vmatpush2.msra.mxu0 %v2153
  %2206 = vmatprep.subr.mxu0 0.0
  %2207 = vmatpush2.msra.mxu0 %v2152
  %2208 = vmatprep.subr.mxu0 0.0
  %2209 = vmatpush2.msra.mxu0 %v2151
  %2210 = vmatprep.subr.mxu0 0.0
  %2211 = vmatpush2.msra.mxu0 %v2150
  %2212 = vmatprep.subr.mxu0 0.0
  %2213 = vmatpush2.msra.mxu0 %v2149
  %2214 = vmatprep.subr.mxu0 0.0
  %2215 = vmatpush2.msra.mxu0 %v2148
  %2216 = vmatprep.subr.mxu0 0.0
  %2217 = vmatpush2.msra.mxu0 %v2147
  %2218 = vmatprep.subr.mxu0 0.0
  %2219 = vmatpush2.msra.mxu0 %v2146
  %2220 = vmatprep.subr.mxu0 0.0
  %2221 = vmatpush2.msra.mxu0 %v2145
  %2222 = vmatprep.subr.mxu0 0.0
  %2223 = vmatpush2.msra.mxu0 %v2144
  %2224 = vmatprep.mubr.f32.mxu0 %v52
  %2225 = vmatmul.mubr.f32.gmra.mxu0 %v51
  %v2226 = vpop.f32.mrf.mxu0
  %v2227 = vadd.f32 0.0, %v2226
  %v2228 = vpop.f32.mrf.mxu0
  %2229 = vdwg.mxu0
  %s2230 = scalar_lea.vmem %s2, 176
  %v2231 = vld [vmem:[%s2230] sm:$0xff]
  %v2232 = vld [vmem:[%s2230 + $0x8] sm:$0xff]
  %v2234 = vsel %vm263, %v2231, 0
  %v2237 = vsel %vm263, %v2232, 0
  %2239 = vmatprep.subr.mxu0 0.0
  %2240 = vmatpush1.msra.mxu0 0.0
  %2241 = vmatprep.subr.mxu0 0.0
  %2242 = vmatpush1.msra.mxu0 0.0
  %2243 = vmatprep.subr.mxu0 0.0
  %2244 = vmatpush1.msra.mxu0 0.0
  %2245 = vmatprep.subr.mxu0 0.0
  %2246 = vmatpush1.msra.mxu0 0.0
  %2247 = vmatprep.subr.mxu0 0.0
  %2248 = vmatpush1.msra.mxu0 0.0
  %2249 = vmatprep.subr.mxu0 0.0
  %2250 = vmatpush1.msra.mxu0 0.0
  %2251 = vmatprep.subr.mxu0 0.0
  %2252 = vmatpush1.msra.mxu0 0.0
  %2253 = vmatprep.subr.mxu0 0.0
  %2254 = vmatpush1.msra.mxu0 0.0
  %2255 = vmatprep.subr.mxu0 0.0
  %2256 = vmatpush1.msra.mxu0 0.0
  %2257 = vmatprep.subr.mxu0 0.0
  %2258 = vmatpush1.msra.mxu0 0.0
  %2259 = vmatprep.subr.mxu0 0.0
  %2260 = vmatpush1.msra.mxu0 0.0
  %2261 = vmatprep.subr.mxu0 0.0
  %2262 = vmatpush1.msra.mxu0 0.0
  %2263 = vmatprep.subr.mxu0 0.0
  %2264 = vmatpush1.msra.mxu0 0.0
  %2265 = vmatprep.subr.mxu0 0.0
  %2266 = vmatpush1.msra.mxu0 0.0
  %2267 = vmatprep.subr.mxu0 0.0
  %2268 = vmatpush1.msra.mxu0 0.0
  %2269 = vmatprep.subr.mxu0 0.0
  %2270 = vmatpush1.msra.mxu0 %v2227
  %2271 = vmatprep.subr.mxu0 0.0
  %2272 = vmatpush2.msra.mxu0 0.0
  %2273 = vmatprep.subr.mxu0 0.0
  %2274 = vmatpush2.msra.mxu0 0.0
  %2275 = vmatprep.subr.mxu0 0.0
  %2276 = vmatpush2.msra.mxu0 0.0
  %2277 = vmatprep.subr.mxu0 0.0
  %2278 = vmatpush2.msra.mxu0 0.0
  %2279 = vmatprep.subr.mxu0 0.0
  %2280 = vmatpush2.msra.mxu0 0.0
  %2281 = vmatprep.subr.mxu0 0.0
  %2282 = vmatpush2.msra.mxu0 0.0
  %2283 = vmatprep.subr.mxu0 0.0
  %2284 = vmatpush2.msra.mxu0 0.0
  %2285 = vmatprep.subr.mxu0 0.0
  %2286 = vmatpush2.msra.mxu0 0.0
  %2287 = vmatprep.subr.mxu0 0.0
  %2288 = vmatpush2.msra.mxu0 0.0
  %2289 = vmatprep.subr.mxu0 0.0
  %2290 = vmatpush2.msra.mxu0 0.0
  %2291 = vmatprep.subr.mxu0 0.0
  %2292 = vmatpush2.msra.mxu0 0.0
  %2293 = vmatprep.subr.mxu0 0.0
  %2294 = vmatpush2.msra.mxu0 0.0
  %2295 = vmatprep.subr.mxu0 0.0
  %2296 = vmatpush2.msra.mxu0 0.0
  %2297 = vmatprep.subr.mxu0 0.0
  %2298 = vmatpush2.msra.mxu0 0.0
  %2299 = vmatprep.subr.mxu0 0.0
  %2300 = vmatpush2.msra.mxu0 0.0
  %2301 = vmatprep.subr.mxu0 0.0
  %2302 = vmatpush2.msra.mxu0 0.0
  %2303 = vmatprep.mubr.f32.mxu0 0.0
  %2304 = vmatmul.mubr.f32.gmra.mxu0 %v2234
  %v2305 = vpop.f32.mrf.mxu0
  %v2306 = vadd.f32 0.0, %v2305
  %v2307 = vpop.f32.mrf.mxu0
  %2308 = vmatprep.mubr.f32.mxu0 0.0
  %2309 = vmatmul.mubr.f32.gmra.mxu0 %v2237
  %v2310 = vpop.f32.mrf.mxu0
  %v2311 = vadd.f32 0.0, %v2310
  %v2312 = vpop.f32.mrf.mxu0
  %2313 = vdwg.mxu0
  %v2314 = vadd.f32 %v2125, %v2306
  %v2315 = vadd.f32 %v2126, %v2311
  %s2316 = scalar_lea.vmem %s1, 3072
  %v2317 = vld [vmem:[%s2316] sm:$0xff]
  %v2318 = vld [vmem:[%s2316 + $0x8] sm:$0xff]
  %v2319 = vld [vmem:[%s2316 + $0x10] sm:$0xff]
  %v2320 = vld [vmem:[%s2316 + $0x18] sm:$0xff]
  %v2321 = vld [vmem:[%s2316 + $0x20] sm:$0xff]
  %v2322 = vld [vmem:[%s2316 + $0x28] sm:$0xff]
  %v2323 = vld [vmem:[%s2316 + $0x30] sm:$0xff]
  %v2324 = vld [vmem:[%s2316 + $0x38] sm:$0xff]
  %v2325 = vld [vmem:[%s2316 + $0x40] sm:$0xff]
  %v2326 = vld [vmem:[%s2316 + $0x48] sm:$0xff]
  %v2327 = vld [vmem:[%s2316 + $0x50] sm:$0xff]
  %v2328 = vld [vmem:[%s2316 + $0x58] sm:$0xff]
  %v2329 = vld [vmem:[%s2316 + $0x60] sm:$0xff]
  %v2330 = vld [vmem:[%s2316 + $0x68] sm:$0xff]
  %v2331 = vld [vmem:[%s2316 + $0x70] sm:$0xff]
  %v2332 = vld [vmem:[%s2316 + $0x78] sm:$0xff]
  %v2333 = vld [vmem:[%s2316 + $0x80] sm:$0xff]
  %v2334 = vld [vmem:[%s2316 + $0x88] sm:$0xff]
  %v2335 = vld [vmem:[%s2316 + $0x90] sm:$0xff]
  %v2336 = vld [vmem:[%s2316 + $0x98] sm:$0xff]
  %v2337 = vld [vmem:[%s2316 + $0xa0] sm:$0xff]
  %v2338 = vld [vmem:[%s2316 + $0xa8] sm:$0xff]
  %v2339 = vld [vmem:[%s2316 + $0xb0] sm:$0xff]
  %v2340 = vld [vmem:[%s2316 + $0xb8] sm:$0xff]
  %v2341 = vld [vmem:[%s2316 + $0xc0] sm:$0xff]
  %v2342 = vld [vmem:[%s2316 + $0xc8] sm:$0xff]
  %v2343 = vld [vmem:[%s2316 + $0xd0] sm:$0xff]
  %v2344 = vld [vmem:[%s2316 + $0xd8] sm:$0xff]
  %v2345 = vld [vmem:[%s2316 + $0xe0] sm:$0xff]
  %v2346 = vld [vmem:[%s2316 + $0xe8] sm:$0xff]
  %v2347 = vld [vmem:[%s2316 + $0xf0] sm:$0xff]
  %v2348 = vld [vmem:[%s2316 + $0xf8] sm:$0xff]
  %2349 = vmatprep.subr.mxu0 0.0
  %2350 = vmatpush1.msra.mxu0 %v2332
  %2351 = vmatprep.subr.mxu0 0.0
  %2352 = vmatpush1.msra.mxu0 %v2331
  %2353 = vmatprep.subr.mxu0 0.0
  %2354 = vmatpush1.msra.mxu0 %v2330
  %2355 = vmatprep.subr.mxu0 0.0
  %2356 = vmatpush1.msra.mxu0 %v2329
  %2357 = vmatprep.subr.mxu0 0.0
  %2358 = vmatpush1.msra.mxu0 %v2328
  %2359 = vmatprep.subr.mxu0 0.0
  %2360 = vmatpush1.msra.mxu0 %v2327
  %2361 = vmatprep.subr.mxu0 0.0
  %2362 = vmatpush1.msra.mxu0 %v2326
  %2363 = vmatprep.subr.mxu0 0.0
  %2364 = vmatpush1.msra.mxu0 %v2325
  %2365 = vmatprep.subr.mxu0 0.0
  %2366 = vmatpush1.msra.mxu0 %v2324
  %2367 = vmatprep.subr.mxu0 0.0
  %2368 = vmatpush1.msra.mxu0 %v2323
  %2369 = vmatprep.subr.mxu0 0.0
  %2370 = vmatpush1.msra.mxu0 %v2322
  %2371 = vmatprep.subr.mxu0 0.0
  %2372 = vmatpush1.msra.mxu0 %v2321
  %2373 = vmatprep.subr.mxu0 0.0
  %2374 = vmatpush1.msra.mxu0 %v2320
  %2375 = vmatprep.subr.mxu0 0.0
  %2376 = vmatpush1.msra.mxu0 %v2319
  %2377 = vmatprep.subr.mxu0 0.0
  %2378 = vmatpush1.msra.mxu0 %v2318
  %2379 = vmatprep.subr.mxu0 0.0
  %2380 = vmatpush1.msra.mxu0 %v2317
  %2381 = vmatprep.subr.mxu0 0.0
  %2382 = vmatpush2.msra.mxu0 %v2348
  %2383 = vmatprep.subr.mxu0 0.0
  %2384 = vmatpush2.msra.mxu0 %v2347
  %2385 = vmatprep.subr.mxu0 0.0
  %2386 = vmatpush2.msra.mxu0 %v2346
  %2387 = vmatprep.subr.mxu0 0.0
  %2388 = vmatpush2.msra.mxu0 %v2345
  %2389 = vmatprep.subr.mxu0 0.0
  %2390 = vmatpush2.msra.mxu0 %v2344
  %2391 = vmatprep.subr.mxu0 0.0
  %2392 = vmatpush2.msra.mxu0 %v2343
  %2393 = vmatprep.subr.mxu0 0.0
  %2394 = vmatpush2.msra.mxu0 %v2342
  %2395 = vmatprep.subr.mxu0 0.0
  %2396 = vmatpush2.msra.mxu0 %v2341
  %2397 = vmatprep.subr.mxu0 0.0
  %2398 = vmatpush2.msra.mxu0 %v2340
  %2399 = vmatprep.subr.mxu0 0.0
  %2400 = vmatpush2.msra.mxu0 %v2339
  %2401 = vmatprep.subr.mxu0 0.0
  %2402 = vmatpush2.msra.mxu0 %v2338
  %2403 = vmatprep.subr.mxu0 0.0
  %2404 = vmatpush2.msra.mxu0 %v2337
  %2405 = vmatprep.subr.mxu0 0.0
  %2406 = vmatpush2.msra.mxu0 %v2336
  %2407 = vmatprep.subr.mxu0 0.0
  %2408 = vmatpush2.msra.mxu0 %v2335
  %2409 = vmatprep.subr.mxu0 0.0
  %2410 = vmatpush2.msra.mxu0 %v2334
  %2411 = vmatprep.subr.mxu0 0.0
  %2412 = vmatpush2.msra.mxu0 %v2333
  %2413 = vmatprep.mubr.f32.mxu0 %v52
  %2414 = vmatmul.mubr.f32.gmra.mxu0 %v51
  %v2415 = vpop.f32.mrf.mxu0
  %v2416 = vadd.f32 0.0, %v2415
  %v2417 = vpop.f32.mrf.mxu0
  %2418 = vdwg.mxu0
  %s2419 = scalar_lea.vmem %s2, 192
  %v2420 = vld [vmem:[%s2419] sm:$0xff]
  %v2421 = vld [vmem:[%s2419 + $0x8] sm:$0xff]
  %v2423 = vsel %vm263, %v2420, 0
  %v2426 = vsel %vm263, %v2421, 0
  %2428 = vmatprep.subr.mxu0 0.0
  %2429 = vmatpush1.msra.mxu0 0.0
  %2430 = vmatprep.subr.mxu0 0.0
  %2431 = vmatpush1.msra.mxu0 0.0
  %2432 = vmatprep.subr.mxu0 0.0
  %2433 = vmatpush1.msra.mxu0 0.0
  %2434 = vmatprep.subr.mxu0 0.0
  %2435 = vmatpush1.msra.mxu0 0.0
  %2436 = vmatprep.subr.mxu0 0.0
  %2437 = vmatpush1.msra.mxu0 0.0
  %2438 = vmatprep.subr.mxu0 0.0
  %2439 = vmatpush1.msra.mxu0 0.0
  %2440 = vmatprep.subr.mxu0 0.0
  %2441 = vmatpush1.msra.mxu0 0.0
  %2442 = vmatprep.subr.mxu0 0.0
  %2443 = vmatpush1.msra.mxu0 0.0
  %2444 = vmatprep.subr.mxu0 0.0
  %2445 = vmatpush1.msra.mxu0 0.0
  %2446 = vmatprep.subr.mxu0 0.0
  %2447 = vmatpush1.msra.mxu0 0.0
  %2448 = vmatprep.subr.mxu0 0.0
  %2449 = vmatpush1.msra.mxu0 0.0
  %2450 = vmatprep.subr.mxu0 0.0
  %2451 = vmatpush1.msra.mxu0 0.0
  %2452 = vmatprep.subr.mxu0 0.0
  %2453 = vmatpush1.msra.mxu0 0.0
  %2454 = vmatprep.subr.mxu0 0.0
  %2455 = vmatpush1.msra.mxu0 0.0
  %2456 = vmatprep.subr.mxu0 0.0
  %2457 = vmatpush1.msra.mxu0 0.0
  %2458 = vmatprep.subr.mxu0 0.0
  %2459 = vmatpush1.msra.mxu0 %v2416
  %2460 = vmatprep.subr.mxu0 0.0
  %2461 = vmatpush2.msra.mxu0 0.0
  %2462 = vmatprep.subr.mxu0 0.0
  %2463 = vmatpush2.msra.mxu0 0.0
  %2464 = vmatprep.subr.mxu0 0.0
  %2465 = vmatpush2.msra.mxu0 0.0
  %2466 = vmatprep.subr.mxu0 0.0
  %2467 = vmatpush2.msra.mxu0 0.0
  %2468 = vmatprep.subr.mxu0 0.0
  %2469 = vmatpush2.msra.mxu0 0.0
  %2470 = vmatprep.subr.mxu0 0.0
  %2471 = vmatpush2.msra.mxu0 0.0
  %2472 = vmatprep.subr.mxu0 0.0
  %2473 = vmatpush2.msra.mxu0 0.0
  %2474 = vmatprep.subr.mxu0 0.0
  %2475 = vmatpush2.msra.mxu0 0.0
  %2476 = vmatprep.subr.mxu0 0.0
  %2477 = vmatpush2.msra.mxu0 0.0
  %2478 = vmatprep.subr.mxu0 0.0
  %2479 = vmatpush2.msra.mxu0 0.0
  %2480 = vmatprep.subr.mxu0 0.0
  %2481 = vmatpush2.msra.mxu0 0.0
  %2482 = vmatprep.subr.mxu0 0.0
  %2483 = vmatpush2.msra.mxu0 0.0
  %2484 = vmatprep.subr.mxu0 0.0
  %2485 = vmatpush2.msra.mxu0 0.0
  %2486 = vmatprep.subr.mxu0 0.0
  %2487 = vmatpush2.msra.mxu0 0.0
  %2488 = vmatprep.subr.mxu0 0.0
  %2489 = vmatpush2.msra.mxu0 0.0
  %2490 = vmatprep.subr.mxu0 0.0
  %2491 = vmatpush2.msra.mxu0 0.0
  %2492 = vmatprep.mubr.f32.mxu0 0.0
  %2493 = vmatmul.mubr.f32.gmra.mxu0 %v2423
  %v2494 = vpop.f32.mrf.mxu0
  %v2495 = vadd.f32 0.0, %v2494
  %v2496 = vpop.f32.mrf.mxu0
  %2497 = vmatprep.mubr.f32.mxu0 0.0
  %2498 = vmatmul.mubr.f32.gmra.mxu0 %v2426
  %v2499 = vpop.f32.mrf.mxu0
  %v2500 = vadd.f32 0.0, %v2499
  %v2501 = vpop.f32.mrf.mxu0
  %2502 = vdwg.mxu0
  %v2503 = vadd.f32 %v2314, %v2495
  %v2504 = vadd.f32 %v2315, %v2500
  %s2505 = scalar_lea.vmem %s1, 3328
  %v2506 = vld [vmem:[%s2505] sm:$0xff]
  %v2507 = vld [vmem:[%s2505 + $0x8] sm:$0xff]
  %v2508 = vld [vmem:[%s2505 + $0x10] sm:$0xff]
  %v2509 = vld [vmem:[%s2505 + $0x18] sm:$0xff]
  %v2510 = vld [vmem:[%s2505 + $0x20] sm:$0xff]
  %v2511 = vld [vmem:[%s2505 + $0x28] sm:$0xff]
  %v2512 = vld [vmem:[%s2505 + $0x30] sm:$0xff]
  %v2513 = vld [vmem:[%s2505 + $0x38] sm:$0xff]
  %v2514 = vld [vmem:[%s2505 + $0x40] sm:$0xff]
  %v2515 = vld [vmem:[%s2505 + $0x48] sm:$0xff]
  %v2516 = vld [vmem:[%s2505 + $0x50] sm:$0xff]
  %v2517 = vld [vmem:[%s2505 + $0x58] sm:$0xff]
  %v2518 = vld [vmem:[%s2505 + $0x60] sm:$0xff]
  %v2519 = vld [vmem:[%s2505 + $0x68] sm:$0xff]
  %v2520 = vld [vmem:[%s2505 + $0x70] sm:$0xff]
  %v2521 = vld [vmem:[%s2505 + $0x78] sm:$0xff]
  %v2522 = vld [vmem:[%s2505 + $0x80] sm:$0xff]
  %v2523 = vld [vmem:[%s2505 + $0x88] sm:$0xff]
  %v2524 = vld [vmem:[%s2505 + $0x90] sm:$0xff]
  %v2525 = vld [vmem:[%s2505 + $0x98] sm:$0xff]
  %v2526 = vld [vmem:[%s2505 + $0xa0] sm:$0xff]
  %v2527 = vld [vmem:[%s2505 + $0xa8] sm:$0xff]
  %v2528 = vld [vmem:[%s2505 + $0xb0] sm:$0xff]
  %v2529 = vld [vmem:[%s2505 + $0xb8] sm:$0xff]
  %v2530 = vld [vmem:[%s2505 + $0xc0] sm:$0xff]
  %v2531 = vld [vmem:[%s2505 + $0xc8] sm:$0xff]
  %v2532 = vld [vmem:[%s2505 + $0xd0] sm:$0xff]
  %v2533 = vld [vmem:[%s2505 + $0xd8] sm:$0xff]
  %v2534 = vld [vmem:[%s2505 + $0xe0] sm:$0xff]
  %v2535 = vld [vmem:[%s2505 + $0xe8] sm:$0xff]
  %v2536 = vld [vmem:[%s2505 + $0xf0] sm:$0xff]
  %v2537 = vld [vmem:[%s2505 + $0xf8] sm:$0xff]
  %2538 = vmatprep.subr.mxu0 0.0
  %2539 = vmatpush1.msra.mxu0 %v2521
  %2540 = vmatprep.subr.mxu0 0.0
  %2541 = vmatpush1.msra.mxu0 %v2520
  %2542 = vmatprep.subr.mxu0 0.0
  %2543 = vmatpush1.msra.mxu0 %v2519
  %2544 = vmatprep.subr.mxu0 0.0
  %2545 = vmatpush1.msra.mxu0 %v2518
  %2546 = vmatprep.subr.mxu0 0.0
  %2547 = vmatpush1.msra.mxu0 %v2517
  %2548 = vmatprep.subr.mxu0 0.0
  %2549 = vmatpush1.msra.mxu0 %v2516
  %2550 = vmatprep.subr.mxu0 0.0
  %2551 = vmatpush1.msra.mxu0 %v2515
  %2552 = vmatprep.subr.mxu0 0.0
  %2553 = vmatpush1.msra.mxu0 %v2514
  %2554 = vmatprep.subr.mxu0 0.0
  %2555 = vmatpush1.msra.mxu0 %v2513
  %2556 = vmatprep.subr.mxu0 0.0
  %2557 = vmatpush1.msra.mxu0 %v2512
  %2558 = vmatprep.subr.mxu0 0.0
  %2559 = vmatpush1.msra.mxu0 %v2511
  %2560 = vmatprep.subr.mxu0 0.0
  %2561 = vmatpush1.msra.mxu0 %v2510
  %2562 = vmatprep.subr.mxu0 0.0
  %2563 = vmatpush1.msra.mxu0 %v2509
  %2564 = vmatprep.subr.mxu0 0.0
  %2565 = vmatpush1.msra.mxu0 %v2508
  %2566 = vmatprep.subr.mxu0 0.0
  %2567 = vmatpush1.msra.mxu0 %v2507
  %2568 = vmatprep.subr.mxu0 0.0
  %2569 = vmatpush1.msra.mxu0 %v2506
  %2570 = vmatprep.subr.mxu0 0.0
  %2571 = vmatpush2.msra.mxu0 %v2537
  %2572 = vmatprep.subr.mxu0 0.0
  %2573 = vmatpush2.msra.mxu0 %v2536
  %2574 = vmatprep.subr.mxu0 0.0
  %2575 = vmatpush2.msra.mxu0 %v2535
  %2576 = vmatprep.subr.mxu0 0.0
  %2577 = vmatpush2.msra.mxu0 %v2534
  %2578 = vmatprep.subr.mxu0 0.0
  %2579 = vmatpush2.msra.mxu0 %v2533
  %2580 = vmatprep.subr.mxu0 0.0
  %2581 = vmatpush2.msra.mxu0 %v2532
  %2582 = vmatprep.subr.mxu0 0.0
  %2583 = vmatpush2.msra.mxu0 %v2531
  %2584 = vmatprep.subr.mxu0 0.0
  %2585 = vmatpush2.msra.mxu0 %v2530
  %2586 = vmatprep.subr.mxu0 0.0
  %2587 = vmatpush2.msra.mxu0 %v2529
  %2588 = vmatprep.subr.mxu0 0.0
  %2589 = vmatpush2.msra.mxu0 %v2528
  %2590 = vmatprep.subr.mxu0 0.0
  %2591 = vmatpush2.msra.mxu0 %v2527
  %2592 = vmatprep.subr.mxu0 0.0
  %2593 = vmatpush2.msra.mxu0 %v2526
  %2594 = vmatprep.subr.mxu0 0.0
  %2595 = vmatpush2.msra.mxu0 %v2525
  %2596 = vmatprep.subr.mxu0 0.0
  %2597 = vmatpush2.msra.mxu0 %v2524
  %2598 = vmatprep.subr.mxu0 0.0
  %2599 = vmatpush2.msra.mxu0 %v2523
  %2600 = vmatprep.subr.mxu0 0.0
  %2601 = vmatpush2.msra.mxu0 %v2522
  %2602 = vmatprep.mubr.f32.mxu0 %v52
  %2603 = vmatmul.mubr.f32.gmra.mxu0 %v51
  %v2604 = vpop.f32.mrf.mxu0
  %v2605 = vadd.f32 0.0, %v2604
  %v2606 = vpop.f32.mrf.mxu0
  %2607 = vdwg.mxu0
  %s2608 = scalar_lea.vmem %s2, 208
  %v2609 = vld [vmem:[%s2608] sm:$0xff]
  %v2610 = vld [vmem:[%s2608 + $0x8] sm:$0xff]
  %v2612 = vsel %vm263, %v2609, 0
  %v2615 = vsel %vm263, %v2610, 0
  %2617 = vmatprep.subr.mxu0 0.0
  %2618 = vmatpush1.msra.mxu0 0.0
  %2619 = vmatprep.subr.mxu0 0.0
  %2620 = vmatpush1.msra.mxu0 0.0
  %2621 = vmatprep.subr.mxu0 0.0
  %2622 = vmatpush1.msra.mxu0 0.0
  %2623 = vmatprep.subr.mxu0 0.0
  %2624 = vmatpush1.msra.mxu0 0.0
  %2625 = vmatprep.subr.mxu0 0.0
  %2626 = vmatpush1.msra.mxu0 0.0
  %2627 = vmatprep.subr.mxu0 0.0
  %2628 = vmatpush1.msra.mxu0 0.0
  %2629 = vmatprep.subr.mxu0 0.0
  %2630 = vmatpush1.msra.mxu0 0.0
  %2631 = vmatprep.subr.mxu0 0.0
  %2632 = vmatpush1.msra.mxu0 0.0
  %2633 = vmatprep.subr.mxu0 0.0
  %2634 = vmatpush1.msra.mxu0 0.0
  %2635 = vmatprep.subr.mxu0 0.0
  %2636 = vmatpush1.msra.mxu0 0.0
  %2637 = vmatprep.subr.mxu0 0.0
  %2638 = vmatpush1.msra.mxu0 0.0
  %2639 = vmatprep.subr.mxu0 0.0
  %2640 = vmatpush1.msra.mxu0 0.0
  %2641 = vmatprep.subr.mxu0 0.0
  %2642 = vmatpush1.msra.mxu0 0.0
  %2643 = vmatprep.subr.mxu0 0.0
  %2644 = vmatpush1.msra.mxu0 0.0
  %2645 = vmatprep.subr.mxu0 0.0
  %2646 = vmatpush1.msra.mxu0 0.0
  %2647 = vmatprep.subr.mxu0 0.0
  %2648 = vmatpush1.msra.mxu0 %v2605
  %2649 = vmatprep.subr.mxu0 0.0
  %2650 = vmatpush2.msra.mxu0 0.0
  %2651 = vmatprep.subr.mxu0 0.0
  %2652 = vmatpush2.msra.mxu0 0.0
  %2653 = vmatprep.subr.mxu0 0.0
  %2654 = vmatpush2.msra.mxu0 0.0
  %2655 = vmatprep.subr.mxu0 0.0
  %2656 = vmatpush2.msra.mxu0 0.0
  %2657 = vmatprep.subr.mxu0 0.0
  %2658 = vmatpush2.msra.mxu0 0.0
  %2659 = vmatprep.subr.mxu0 0.0
  %2660 = vmatpush2.msra.mxu0 0.0
  %2661 = vmatprep.subr.mxu0 0.0
  %2662 = vmatpush2.msra.mxu0 0.0
  %2663 = vmatprep.subr.mxu0 0.0
  %2664 = vmatpush2.msra.mxu0 0.0
  %2665 = vmatprep.subr.mxu0 0.0
  %2666 = vmatpush2.msra.mxu0 0.0
  %2667 = vmatprep.subr.mxu0 0.0
  %2668 = vmatpush2.msra.mxu0 0.0
  %2669 = vmatprep.subr.mxu0 0.0
  %2670 = vmatpush2.msra.mxu0 0.0
  %2671 = vmatprep.subr.mxu0 0.0
  %2672 = vmatpush2.msra.mxu0 0.0
  %2673 = vmatprep.subr.mxu0 0.0
  %2674 = vmatpush2.msra.mxu0 0.0
  %2675 = vmatprep.subr.mxu0 0.0
  %2676 = vmatpush2.msra.mxu0 0.0
  %2677 = vmatprep.subr.mxu0 0.0
  %2678 = vmatpush2.msra.mxu0 0.0
  %2679 = vmatprep.subr.mxu0 0.0
  %2680 = vmatpush2.msra.mxu0 0.0
  %2681 = vmatprep.mubr.f32.mxu0 0.0
  %2682 = vmatmul.mubr.f32.gmra.mxu0 %v2612
  %v2683 = vpop.f32.mrf.mxu0
  %v2684 = vadd.f32 0.0, %v2683
  %v2685 = vpop.f32.mrf.mxu0
  %2686 = vmatprep.mubr.f32.mxu0 0.0
  %2687 = vmatmul.mubr.f32.gmra.mxu0 %v2615
  %v2688 = vpop.f32.mrf.mxu0
  %v2689 = vadd.f32 0.0, %v2688
  %v2690 = vpop.f32.mrf.mxu0
  %2691 = vdwg.mxu0
  %v2692 = vadd.f32 %v2503, %v2684
  %v2693 = vadd.f32 %v2504, %v2689
  %s2694 = scalar_lea.vmem %s1, 3584
  %v2695 = vld [vmem:[%s2694] sm:$0xff]
  %v2696 = vld [vmem:[%s2694 + $0x8] sm:$0xff]
  %v2697 = vld [vmem:[%s2694 + $0x10] sm:$0xff]
  %v2698 = vld [vmem:[%s2694 + $0x18] sm:$0xff]
  %v2699 = vld [vmem:[%s2694 + $0x20] sm:$0xff]
  %v2700 = vld [vmem:[%s2694 + $0x28] sm:$0xff]
  %v2701 = vld [vmem:[%s2694 + $0x30] sm:$0xff]
  %v2702 = vld [vmem:[%s2694 + $0x38] sm:$0xff]
  %v2703 = vld [vmem:[%s2694 + $0x40] sm:$0xff]
  %v2704 = vld [vmem:[%s2694 + $0x48] sm:$0xff]
  %v2705 = vld [vmem:[%s2694 + $0x50] sm:$0xff]
  %v2706 = vld [vmem:[%s2694 + $0x58] sm:$0xff]
  %v2707 = vld [vmem:[%s2694 + $0x60] sm:$0xff]
  %v2708 = vld [vmem:[%s2694 + $0x68] sm:$0xff]
  %v2709 = vld [vmem:[%s2694 + $0x70] sm:$0xff]
  %v2710 = vld [vmem:[%s2694 + $0x78] sm:$0xff]
  %v2711 = vld [vmem:[%s2694 + $0x80] sm:$0xff]
  %v2712 = vld [vmem:[%s2694 + $0x88] sm:$0xff]
  %v2713 = vld [vmem:[%s2694 + $0x90] sm:$0xff]
  %v2714 = vld [vmem:[%s2694 + $0x98] sm:$0xff]
  %v2715 = vld [vmem:[%s2694 + $0xa0] sm:$0xff]
  %v2716 = vld [vmem:[%s2694 + $0xa8] sm:$0xff]
  %v2717 = vld [vmem:[%s2694 + $0xb0] sm:$0xff]
  %v2718 = vld [vmem:[%s2694 + $0xb8] sm:$0xff]
  %v2719 = vld [vmem:[%s2694 + $0xc0] sm:$0xff]
  %v2720 = vld [vmem:[%s2694 + $0xc8] sm:$0xff]
  %v2721 = vld [vmem:[%s2694 + $0xd0] sm:$0xff]
  %v2722 = vld [vmem:[%s2694 + $0xd8] sm:$0xff]
  %v2723 = vld [vmem:[%s2694 + $0xe0] sm:$0xff]
  %v2724 = vld [vmem:[%s2694 + $0xe8] sm:$0xff]
  %v2725 = vld [vmem:[%s2694 + $0xf0] sm:$0xff]
  %v2726 = vld [vmem:[%s2694 + $0xf8] sm:$0xff]
  %2727 = vmatprep.subr.mxu0 0.0
  %2728 = vmatpush1.msra.mxu0 %v2710
  %2729 = vmatprep.subr.mxu0 0.0
  %2730 = vmatpush1.msra.mxu0 %v2709
  %2731 = vmatprep.subr.mxu0 0.0
  %2732 = vmatpush1.msra.mxu0 %v2708
  %2733 = vmatprep.subr.mxu0 0.0
  %2734 = vmatpush1.msra.mxu0 %v2707
  %2735 = vmatprep.subr.mxu0 0.0
  %2736 = vmatpush1.msra.mxu0 %v2706
  %2737 = vmatprep.subr.mxu0 0.0
  %2738 = vmatpush1.msra.mxu0 %v2705
  %2739 = vmatprep.subr.mxu0 0.0
  %2740 = vmatpush1.msra.mxu0 %v2704
  %2741 = vmatprep.subr.mxu0 0.0
  %2742 = vmatpush1.msra.mxu0 %v2703
  %2743 = vmatprep.subr.mxu0 0.0
  %2744 = vmatpush1.msra.mxu0 %v2702
  %2745 = vmatprep.subr.mxu0 0.0
  %2746 = vmatpush1.msra.mxu0 %v2701
  %2747 = vmatprep.subr.mxu0 0.0
  %2748 = vmatpush1.msra.mxu0 %v2700
  %2749 = vmatprep.subr.mxu0 0.0
  %2750 = vmatpush1.msra.mxu0 %v2699
  %2751 = vmatprep.subr.mxu0 0.0
  %2752 = vmatpush1.msra.mxu0 %v2698
  %2753 = vmatprep.subr.mxu0 0.0
  %2754 = vmatpush1.msra.mxu0 %v2697
  %2755 = vmatprep.subr.mxu0 0.0
  %2756 = vmatpush1.msra.mxu0 %v2696
  %2757 = vmatprep.subr.mxu0 0.0
  %2758 = vmatpush1.msra.mxu0 %v2695
  %2759 = vmatprep.subr.mxu0 0.0
  %2760 = vmatpush2.msra.mxu0 %v2726
  %2761 = vmatprep.subr.mxu0 0.0
  %2762 = vmatpush2.msra.mxu0 %v2725
  %2763 = vmatprep.subr.mxu0 0.0
  %2764 = vmatpush2.msra.mxu0 %v2724
  %2765 = vmatprep.subr.mxu0 0.0
  %2766 = vmatpush2.msra.mxu0 %v2723
  %2767 = vmatprep.subr.mxu0 0.0
  %2768 = vmatpush2.msra.mxu0 %v2722
  %2769 = vmatprep.subr.mxu0 0.0
  %2770 = vmatpush2.msra.mxu0 %v2721
  %2771 = vmatprep.subr.mxu0 0.0
  %2772 = vmatpush2.msra.mxu0 %v2720
  %2773 = vmatprep.subr.mxu0 0.0
  %2774 = vmatpush2.msra.mxu0 %v2719
  %2775 = vmatprep.subr.mxu0 0.0
  %2776 = vmatpush2.msra.mxu0 %v2718
  %2777 = vmatprep.subr.mxu0 0.0
  %2778 = vmatpush2.msra.mxu0 %v2717
  %2779 = vmatprep.subr.mxu0 0.0
  %2780 = vmatpush2.msra.mxu0 %v2716
  %2781 = vmatprep.subr.mxu0 0.0
  %2782 = vmatpush2.msra.mxu0 %v2715
  %2783 = vmatprep.subr.mxu0 0.0
  %2784 = vmatpush2.msra.mxu0 %v2714
  %2785 = vmatprep.subr.mxu0 0.0
  %2786 = vmatpush2.msra.mxu0 %v2713
  %2787 = vmatprep.subr.mxu0 0.0
  %2788 = vmatpush2.msra.mxu0 %v2712
  %2789 = vmatprep.subr.mxu0 0.0
  %2790 = vmatpush2.msra.mxu0 %v2711
  %2791 = vmatprep.mubr.f32.mxu0 %v52
  %2792 = vmatmul.mubr.f32.gmra.mxu0 %v51
  %v2793 = vpop.f32.mrf.mxu0
  %v2794 = vadd.f32 0.0, %v2793
  %v2795 = vpop.f32.mrf.mxu0
  %2796 = vdwg.mxu0
  %s2797 = scalar_lea.vmem %s2, 224
  %v2798 = vld [vmem:[%s2797] sm:$0xff]
  %v2799 = vld [vmem:[%s2797 + $0x8] sm:$0xff]
  %v2801 = vsel %vm263, %v2798, 0
  %v2804 = vsel %vm263, %v2799, 0
  %2806 = vmatprep.subr.mxu0 0.0
  %2807 = vmatpush1.msra.mxu0 0.0
  %2808 = vmatprep.subr.mxu0 0.0
  %2809 = vmatpush1.msra.mxu0 0.0
  %2810 = vmatprep.subr.mxu0 0.0
  %2811 = vmatpush1.msra.mxu0 0.0
  %2812 = vmatprep.subr.mxu0 0.0
  %2813 = vmatpush1.msra.mxu0 0.0
  %2814 = vmatprep.subr.mxu0 0.0
  %2815 = vmatpush1.msra.mxu0 0.0
  %2816 = vmatprep.subr.mxu0 0.0
  %2817 = vmatpush1.msra.mxu0 0.0
  %2818 = vmatprep.subr.mxu0 0.0
  %2819 = vmatpush1.msra.mxu0 0.0
  %2820 = vmatprep.subr.mxu0 0.0
  %2821 = vmatpush1.msra.mxu0 0.0
  %2822 = vmatprep.subr.mxu0 0.0
  %2823 = vmatpush1.msra.mxu0 0.0
  %2824 = vmatprep.subr.mxu0 0.0
  %2825 = vmatpush1.msra.mxu0 0.0
  %2826 = vmatprep.subr.mxu0 0.0
  %2827 = vmatpush1.msra.mxu0 0.0
  %2828 = vmatprep.subr.mxu0 0.0
  %2829 = vmatpush1.msra.mxu0 0.0
  %2830 = vmatprep.subr.mxu0 0.0
  %2831 = vmatpush1.msra.mxu0 0.0
  %2832 = vmatprep.subr.mxu0 0.0
  %2833 = vmatpush1.msra.mxu0 0.0
  %2834 = vmatprep.subr.mxu0 0.0
  %2835 = vmatpush1.msra.mxu0 0.0
  %2836 = vmatprep.subr.mxu0 0.0
  %2837 = vmatpush1.msra.mxu0 %v2794
  %2838 = vmatprep.subr.mxu0 0.0
  %2839 = vmatpush2.msra.mxu0 0.0
  %2840 = vmatprep.subr.mxu0 0.0
  %2841 = vmatpush2.msra.mxu0 0.0
  %2842 = vmatprep.subr.mxu0 0.0
  %2843 = vmatpush2.msra.mxu0 0.0
  %2844 = vmatprep.subr.mxu0 0.0
  %2845 = vmatpush2.msra.mxu0 0.0
  %2846 = vmatprep.subr.mxu0 0.0
  %2847 = vmatpush2.msra.mxu0 0.0
  %2848 = vmatprep.subr.mxu0 0.0
  %2849 = vmatpush2.msra.mxu0 0.0
  %2850 = vmatprep.subr.mxu0 0.0
  %2851 = vmatpush2.msra.mxu0 0.0
  %2852 = vmatprep.subr.mxu0 0.0
  %2853 = vmatpush2.msra.mxu0 0.0
  %2854 = vmatprep.subr.mxu0 0.0
  %2855 = vmatpush2.msra.mxu0 0.0
  %2856 = vmatprep.subr.mxu0 0.0
  %2857 = vmatpush2.msra.mxu0 0.0
  %2858 = vmatprep.subr.mxu0 0.0
  %2859 = vmatpush2.msra.mxu0 0.0
  %2860 = vmatprep.subr.mxu0 0.0
  %2861 = vmatpush2.msra.mxu0 0.0
  %2862 = vmatprep.subr.mxu0 0.0
  %2863 = vmatpush2.msra.mxu0 0.0
  %2864 = vmatprep.subr.mxu0 0.0
  %2865 = vmatpush2.msra.mxu0 0.0
  %2866 = vmatprep.subr.mxu0 0.0
  %2867 = vmatpush2.msra.mxu0 0.0
  %2868 = vmatprep.subr.mxu0 0.0
  %2869 = vmatpush2.msra.mxu0 0.0
  %2870 = vmatprep.mubr.f32.mxu0 0.0
  %2871 = vmatmul.mubr.f32.gmra.mxu0 %v2801
  %v2872 = vpop.f32.mrf.mxu0
  %v2873 = vadd.f32 0.0, %v2872
  %v2874 = vpop.f32.mrf.mxu0
  %2875 = vmatprep.mubr.f32.mxu0 0.0
  %2876 = vmatmul.mubr.f32.gmra.mxu0 %v2804
  %v2877 = vpop.f32.mrf.mxu0
  %v2878 = vadd.f32 0.0, %v2877
  %v2879 = vpop.f32.mrf.mxu0
  %2880 = vdwg.mxu0
  %v2881 = vadd.f32 %v2692, %v2873
  %v2882 = vadd.f32 %v2693, %v2878
  %s2883 = scalar_lea.vmem %s1, 3840
  %v2884 = vld [vmem:[%s2883] sm:$0xff]
  %v2885 = vld [vmem:[%s2883 + $0x8] sm:$0xff]
  %v2886 = vld [vmem:[%s2883 + $0x10] sm:$0xff]
  %v2887 = vld [vmem:[%s2883 + $0x18] sm:$0xff]
  %v2888 = vld [vmem:[%s2883 + $0x20] sm:$0xff]
  %v2889 = vld [vmem:[%s2883 + $0x28] sm:$0xff]
  %v2890 = vld [vmem:[%s2883 + $0x30] sm:$0xff]
  %v2891 = vld [vmem:[%s2883 + $0x38] sm:$0xff]
  %v2892 = vld [vmem:[%s2883 + $0x40] sm:$0xff]
  %v2893 = vld [vmem:[%s2883 + $0x48] sm:$0xff]
  %v2894 = vld [vmem:[%s2883 + $0x50] sm:$0xff]
  %v2895 = vld [vmem:[%s2883 + $0x58] sm:$0xff]
  %v2896 = vld [vmem:[%s2883 + $0x60] sm:$0xff]
  %v2897 = vld [vmem:[%s2883 + $0x68] sm:$0xff]
  %v2898 = vld [vmem:[%s2883 + $0x70] sm:$0xff]
  %v2899 = vld [vmem:[%s2883 + $0x78] sm:$0xff]
  %v2900 = vld [vmem:[%s2883 + $0x80] sm:$0xff]
  %v2901 = vld [vmem:[%s2883 + $0x88] sm:$0xff]
  %v2902 = vld [vmem:[%s2883 + $0x90] sm:$0xff]
  %v2903 = vld [vmem:[%s2883 + $0x98] sm:$0xff]
  %v2904 = vld [vmem:[%s2883 + $0xa0] sm:$0xff]
  %v2905 = vld [vmem:[%s2883 + $0xa8] sm:$0xff]
  %v2906 = vld [vmem:[%s2883 + $0xb0] sm:$0xff]
  %v2907 = vld [vmem:[%s2883 + $0xb8] sm:$0xff]
  %v2908 = vld [vmem:[%s2883 + $0xc0] sm:$0xff]
  %v2909 = vld [vmem:[%s2883 + $0xc8] sm:$0xff]
  %v2910 = vld [vmem:[%s2883 + $0xd0] sm:$0xff]
  %v2911 = vld [vmem:[%s2883 + $0xd8] sm:$0xff]
  %v2912 = vld [vmem:[%s2883 + $0xe0] sm:$0xff]
  %v2913 = vld [vmem:[%s2883 + $0xe8] sm:$0xff]
  %v2914 = vld [vmem:[%s2883 + $0xf0] sm:$0xff]
  %v2915 = vld [vmem:[%s2883 + $0xf8] sm:$0xff]
  %2916 = vmatprep.subr.mxu0 0.0
  %2917 = vmatpush1.msra.mxu0 %v2899
  %2918 = vmatprep.subr.mxu0 0.0
  %2919 = vmatpush1.msra.mxu0 %v2898
  %2920 = vmatprep.subr.mxu0 0.0
  %2921 = vmatpush1.msra.mxu0 %v2897
  %2922 = vmatprep.subr.mxu0 0.0
  %2923 = vmatpush1.msra.mxu0 %v2896
  %2924 = vmatprep.subr.mxu0 0.0
  %2925 = vmatpush1.msra.mxu0 %v2895
  %2926 = vmatprep.subr.mxu0 0.0
  %2927 = vmatpush1.msra.mxu0 %v2894
  %2928 = vmatprep.subr.mxu0 0.0
  %2929 = vmatpush1.msra.mxu0 %v2893
  %2930 = vmatprep.subr.mxu0 0.0
  %2931 = vmatpush1.msra.mxu0 %v2892
  %2932 = vmatprep.subr.mxu0 0.0
  %2933 = vmatpush1.msra.mxu0 %v2891
  %2934 = vmatprep.subr.mxu0 0.0
  %2935 = vmatpush1.msra.mxu0 %v2890
  %2936 = vmatprep.subr.mxu0 0.0
  %2937 = vmatpush1.msra.mxu0 %v2889
  %2938 = vmatprep.subr.mxu0 0.0
  %2939 = vmatpush1.msra.mxu0 %v2888
  %2940 = vmatprep.subr.mxu0 0.0
  %2941 = vmatpush1.msra.mxu0 %v2887
  %2942 = vmatprep.subr.mxu0 0.0
  %2943 = vmatpush1.msra.mxu0 %v2886
  %2944 = vmatprep.subr.mxu0 0.0
  %2945 = vmatpush1.msra.mxu0 %v2885
  %2946 = vmatprep.subr.mxu0 0.0
  %2947 = vmatpush1.msra.mxu0 %v2884
  %2948 = vmatprep.subr.mxu0 0.0
  %2949 = vmatpush2.msra.mxu0 %v2915
  %2950 = vmatprep.subr.mxu0 0.0
  %2951 = vmatpush2.msra.mxu0 %v2914
  %2952 = vmatprep.subr.mxu0 0.0
  %2953 = vmatpush2.msra.mxu0 %v2913
  %2954 = vmatprep.subr.mxu0 0.0
  %2955 = vmatpush2.msra.mxu0 %v2912
  %2956 = vmatprep.subr.mxu0 0.0
  %2957 = vmatpush2.msra.mxu0 %v2911
  %2958 = vmatprep.subr.mxu0 0.0
  %2959 = vmatpush2.msra.mxu0 %v2910
  %2960 = vmatprep.subr.mxu0 0.0
  %2961 = vmatpush2.msra.mxu0 %v2909
  %2962 = vmatprep.subr.mxu0 0.0
  %2963 = vmatpush2.msra.mxu0 %v2908
  %2964 = vmatprep.subr.mxu0 0.0
  %2965 = vmatpush2.msra.mxu0 %v2907
  %2966 = vmatprep.subr.mxu0 0.0
  %2967 = vmatpush2.msra.mxu0 %v2906
  %2968 = vmatprep.subr.mxu0 0.0
  %2969 = vmatpush2.msra.mxu0 %v2905
  %2970 = vmatprep.subr.mxu0 0.0
  %2971 = vmatpush2.msra.mxu0 %v2904
  %2972 = vmatprep.subr.mxu0 0.0
  %2973 = vmatpush2.msra.mxu0 %v2903
  %2974 = vmatprep.subr.mxu0 0.0
  %2975 = vmatpush2.msra.mxu0 %v2902
  %2976 = vmatprep.subr.mxu0 0.0
  %2977 = vmatpush2.msra.mxu0 %v2901
  %2978 = vmatprep.subr.mxu0 0.0
  %2979 = vmatpush2.msra.mxu0 %v2900
  %2980 = vmatprep.mubr.f32.mxu0 %v52
  %2981 = vmatmul.mubr.f32.gmra.mxu0 %v51
  %v2982 = vpop.f32.mrf.mxu0
  %v2983 = vadd.f32 0.0, %v2982
  %v2984 = vpop.f32.mrf.mxu0
  %2985 = vdwg.mxu0
  %s2986 = scalar_lea.vmem %s2, 240
  %v2987 = vld [vmem:[%s2986] sm:$0xff]
  %v2988 = vld [vmem:[%s2986 + $0x8] sm:$0xff]
  %v2990 = vsel %vm263, %v2987, 0
  %v2993 = vsel %vm263, %v2988, 0
  %2995 = vmatprep.subr.mxu0 0.0
  %2996 = vmatpush1.msra.mxu0 0.0
  %2997 = vmatprep.subr.mxu0 0.0
  %2998 = vmatpush1.msra.mxu0 0.0
  %2999 = vmatprep.subr.mxu0 0.0
  %3000 = vmatpush1.msra.mxu0 0.0
  %3001 = vmatprep.subr.mxu0 0.0
  %3002 = vmatpush1.msra.mxu0 0.0
  %3003 = vmatprep.subr.mxu0 0.0
  %3004 = vmatpush1.msra.mxu0 0.0
  %3005 = vmatprep.subr.mxu0 0.0
  %3006 = vmatpush1.msra.mxu0 0.0
  %3007 = vmatprep.subr.mxu0 0.0
  %3008 = vmatpush1.msra.mxu0 0.0
  %3009 = vmatprep.subr.mxu0 0.0
  %3010 = vmatpush1.msra.mxu0 0.0
  %3011 = vmatprep.subr.mxu0 0.0
  %3012 = vmatpush1.msra.mxu0 0.0
  %3013 = vmatprep.subr.mxu0 0.0
  %3014 = vmatpush1.msra.mxu0 0.0
  %3015 = vmatprep.subr.mxu0 0.0
  %3016 = vmatpush1.msra.mxu0 0.0
  %3017 = vmatprep.subr.mxu0 0.0
  %3018 = vmatpush1.msra.mxu0 0.0
  %3019 = vmatprep.subr.mxu0 0.0
  %3020 = vmatpush1.msra.mxu0 0.0
  %3021 = vmatprep.subr.mxu0 0.0
  %3022 = vmatpush1.msra.mxu0 0.0
  %3023 = vmatprep.subr.mxu0 0.0
  %3024 = vmatpush1.msra.mxu0 0.0
  %3025 = vmatprep.subr.mxu0 0.0
  %3026 = vmatpush1.msra.mxu0 %v2983
  %3027 = vmatprep.subr.mxu0 0.0
  %3028 = vmatpush2.msra.mxu0 0.0
  %3029 = vmatprep.subr.mxu0 0.0
  %3030 = vmatpush2.msra.mxu0 0.0
  %3031 = vmatprep.subr.mxu0 0.0
  %3032 = vmatpush2.msra.mxu0 0.0
  %3033 = vmatprep.subr.mxu0 0.0
  %3034 = vmatpush2.msra.mxu0 0.0
  %3035 = vmatprep.subr.mxu0 0.0
  %3036 = vmatpush2.msra.mxu0 0.0
  %3037 = vmatprep.subr.mxu0 0.0
  %3038 = vmatpush2.msra.mxu0 0.0
  %3039 = vmatprep.subr.mxu0 0.0
  %3040 = vmatpush2.msra.mxu0 0.0
  %3041 = vmatprep.subr.mxu0 0.0
  %3042 = vmatpush2.msra.mxu0 0.0
  %3043 = vmatprep.subr.mxu0 0.0
  %3044 = vmatpush2.msra.mxu0 0.0
  %3045 = vmatprep.subr.mxu0 0.0
  %3046 = vmatpush2.msra.mxu0 0.0
  %3047 = vmatprep.subr.mxu0 0.0
  %3048 = vmatpush2.msra.mxu0 0.0
  %3049 = vmatprep.subr.mxu0 0.0
  %3050 = vmatpush2.msra.mxu0 0.0
  %3051 = vmatprep.subr.mxu0 0.0
  %3052 = vmatpush2.msra.mxu0 0.0
  %3053 = vmatprep.subr.mxu0 0.0
  %3054 = vmatpush2.msra.mxu0 0.0
  %3055 = vmatprep.subr.mxu0 0.0
  %3056 = vmatpush2.msra.mxu0 0.0
  %3057 = vmatprep.subr.mxu0 0.0
  %3058 = vmatpush2.msra.mxu0 0.0
  %3059 = vmatprep.mubr.f32.mxu0 0.0
  %3060 = vmatmul.mubr.f32.gmra.mxu0 %v2990
  %v3061 = vpop.f32.mrf.mxu0
  %v3062 = vadd.f32 0.0, %v3061
  %v3063 = vpop.f32.mrf.mxu0
  %3064 = vmatprep.mubr.f32.mxu0 0.0
  %3065 = vmatmul.mubr.f32.gmra.mxu0 %v2993
  %v3066 = vpop.f32.mrf.mxu0
  %v3067 = vadd.f32 0.0, %v3066
  %v3068 = vpop.f32.mrf.mxu0
  %3069 = vdwg.mxu0
  %v3070 = vadd.f32 %v2881, %v3062
  %v3071 = vadd.f32 %v2882, %v3067
  %v3072 = vld [vmem:[%s3] sm:$0xff]
  %v3073 = vld [vmem:[%s3 + $0x8] sm:$0xff]
  %3075 = vset.pattern.permute.xlu0 0
  %3076 = vperm.xlu0 %3075, %v3072
  %v3077 = vpop.permute.xlu0 %3076
  %3080 = vset.pattern.permute.xlu0 0
  %3081 = vperm.xlu0 %3080, %v3073
  %v3082 = vpop.permute.xlu0 %3081
  %v3084 = vadd.f32 %v3070, %v3077
  %v3085 = vadd.f32 %v3071, %v3082
  %vm3086 = vcmask 523264
  %3087 = vst.msk [vmem:[%s12] sm:$0xff] %vm3086, %v3084
  %3088 = vst.msk [vmem:[%s12 + $0x8] sm:$0xff] %vm3086, %v3085
  %vm3089 = vcmp.ge.f32.partialorder %v3084, 0.0
  %vm3090 = vcmp.ge.f32.partialorder %v3085, 0.0
  %v3091 = vmul.f32 %v3084, 0.2
  %v3092 = vmul.f32 %v3085, 0.2
  %v3093 = vsel %vm3089, %v3084, %v3091
  %v3094 = vsel %vm3090, %v3085, %v3092
  %3095 = vst.msk [vmem:[%s13] sm:$0xff] %vm3086, %v3093
  %3096 = vst.msk [vmem:[%s13 + $0x8] sm:$0xff] %vm3086, %v3094
  %v3097 = vld [vmem:[%s4] sm:$0xff]
  %v3098 = vld [vmem:[%s4 + $0x8] sm:$0xff]
  %v3099 = vld [vmem:[%s4 + $0x10] sm:$0xff]
  %v3100 = vld [vmem:[%s4 + $0x18] sm:$0xff]
  %v3101 = vld [vmem:[%s4 + $0x20] sm:$0xff]
  %v3102 = vld [vmem:[%s4 + $0x28] sm:$0xff]
  %v3103 = vld [vmem:[%s4 + $0x30] sm:$0xff]
  %v3104 = vld [vmem:[%s4 + $0x38] sm:$0xff]
  %v3106 = vsel %vm3086, %v3093, 0
  %v3109 = vsel %vm3086, %v3094, 0
  %3111 = vmatprep.subr.mxu0 0.0
  %3112 = vmatpush1.msra.mxu0 0.0
  %3113 = vmatprep.subr.mxu0 0.0
  %3114 = vmatpush1.msra.mxu0 0.0
  %3115 = vmatprep.subr.mxu0 0.0
  %3116 = vmatpush1.msra.mxu0 0.0
  %3117 = vmatprep.subr.mxu0 0.0
  %3118 = vmatpush1.msra.mxu0 0.0
  %3119 = vmatprep.subr.mxu0 0.0
  %3120 = vmatpush1.msra.mxu0 0.0
  %3121 = vmatprep.subr.mxu0 0.0
  %3122 = vmatpush1.msra.mxu0 0.0
  %3123 = vmatprep.subr.mxu0 0.0
  %3124 = vmatpush1.msra.mxu0 0.0
  %3125 = vmatprep.subr.mxu0 0.0
  %3126 = vmatpush1.msra.mxu0 0.0
  %3127 = vmatprep.subr.mxu0 0.0
  %3128 = vmatpush1.msra.mxu0 %v3104
  %3129 = vmatprep.subr.mxu0 0.0
  %3130 = vmatpush1.msra.mxu0 %v3103
  %3131 = vmatprep.subr.mxu0 0.0
  %3132 = vmatpush1.msra.mxu0 %v3102
  %3133 = vmatprep.subr.mxu0 0.0
  %3134 = vmatpush1.msra.mxu0 %v3101
  %3135 = vmatprep.subr.mxu0 0.0
  %3136 = vmatpush1.msra.mxu0 %v3100
  %3137 = vmatprep.subr.mxu0 0.0
  %3138 = vmatpush1.msra.mxu0 %v3099
  %3139 = vmatprep.subr.mxu0 0.0
  %3140 = vmatpush1.msra.mxu0 %v3098
  %3141 = vmatprep.subr.mxu0 0.0
  %3142 = vmatpush1.msra.mxu0 %v3097
  %3143 = vmatprep.subr.mxu0 0.0
  %3144 = vmatpush2.msra.mxu0 0.0
  %3145 = vmatprep.subr.mxu0 0.0
  %3146 = vmatpush2.msra.mxu0 0.0
  %3147 = vmatprep.subr.mxu0 0.0
  %3148 = vmatpush2.msra.mxu0 0.0
  %3149 = vmatprep.subr.mxu0 0.0
  %3150 = vmatpush2.msra.mxu0 0.0
  %3151 = vmatprep.subr.mxu0 0.0
  %3152 = vmatpush2.msra.mxu0 0.0
  %3153 = vmatprep.subr.mxu0 0.0
  %3154 = vmatpush2.msra.mxu0 0.0
  %3155 = vmatprep.subr.mxu0 0.0
  %3156 = vmatpush2.msra.mxu0 0.0
  %3157 = vmatprep.subr.mxu0 0.0
  %3158 = vmatpush2.msra.mxu0 0.0
  %3159 = vmatprep.subr.mxu0 0.0
  %3160 = vmatpush2.msra.mxu0 0.0
  %3161 = vmatprep.subr.mxu0 0.0
  %3162 = vmatpush2.msra.mxu0 0.0
  %3163 = vmatprep.subr.mxu0 0.0
  %3164 = vmatpush2.msra.mxu0 0.0
  %3165 = vmatprep.subr.mxu0 0.0
  %3166 = vmatpush2.msra.mxu0 0.0
  %3167 = vmatprep.subr.mxu0 0.0
  %3168 = vmatpush2.msra.mxu0 0.0
  %3169 = vmatprep.subr.mxu0 0.0
  %3170 = vmatpush2.msra.mxu0 0.0
  %3171 = vmatprep.subr.mxu0 0.0
  %3172 = vmatpush2.msra.mxu0 0.0
  %3173 = vmatprep.subr.mxu0 0.0
  %3174 = vmatpush2.msra.mxu0 0.0
  %3175 = vmatprep.mubr.f32.mxu0 0.0
  %3176 = vmatmul.mubr.f32.gmra.mxu0 %v3106
  %v3177 = vpop.f32.mrf.mxu0
  %v3178 = vadd.f32 0.0, %v3177
  %v3179 = vpop.f32.mrf.mxu0
  %3180 = vmatprep.mubr.f32.mxu0 0.0
  %3181 = vmatmul.mubr.f32.gmra.mxu0 %v3109
  %v3182 = vpop.f32.mrf.mxu0
  %v3183 = vadd.f32 0.0, %v3182
  %v3184 = vpop.f32.mrf.mxu0
  %3185 = vdwg.mxu0
  %v3186 = vld [vmem:[%s5] sm:$0xff]
  %v3187 = vld [vmem:[%s5 + $0x8] sm:$0xff]
  %v3188 = vld [vmem:[%s5 + $0x10] sm:$0xff]
  %v3189 = vld [vmem:[%s5 + $0x18] sm:$0xff]
  %s3190 = scalar_lea.vmem %s4, 64
  %v3191 = vld [vmem:[%s3190] sm:$0xff]
  %v3192 = vld [vmem:[%s3190 + $0x8] sm:$0xff]
  %v3193 = vld [vmem:[%s3190 + $0x10] sm:$0xff]
  %v3194 = vld [vmem:[%s3190 + $0x18] sm:$0xff]
  %v3195 = vld [vmem:[%s3190 + $0x20] sm:$0xff]
  %v3196 = vld [vmem:[%s3190 + $0x28] sm:$0xff]
  %v3197 = vld [vmem:[%s3190 + $0x30] sm:$0xff]
  %v3198 = vld [vmem:[%s3190 + $0x38] sm:$0xff]
  %3199 = vmatprep.subr.mxu0 0.0
  %3200 = vmatpush1.msra.mxu0 0.0
  %3201 = vmatprep.subr.mxu0 0.0
  %3202 = vmatpush1.msra.mxu0 0.0
  %3203 = vmatprep.subr.mxu0 0.0
  %3204 = vmatpush1.msra.mxu0 0.0
  %3205 = vmatprep.subr.mxu0 0.0
  %3206 = vmatpush1.msra.mxu0 0.0
  %3207 = vmatprep.subr.mxu0 0.0
  %3208 = vmatpush1.msra.mxu0 0.0
  %3209 = vmatprep.subr.mxu0 0.0
  %3210 = vmatpush1.msra.mxu0 0.0
  %3211 = vmatprep.subr.mxu0 0.0
  %3212 = vmatpush1.msra.mxu0 0.0
  %3213 = vmatprep.subr.mxu0 0.0
  %3214 = vmatpush1.msra.mxu0 0.0
  %3215 = vmatprep.subr.mxu0 0.0
  %3216 = vmatpush1.msra.mxu0 %v3198
  %3217 = vmatprep.subr.mxu0 0.0
  %3218 = vmatpush1.msra.mxu0 %v3197
  %3219 = vmatprep.subr.mxu0 0.0
  %3220 = vmatpush1.msra.mxu0 %v3196
  %3221 = vmatprep.subr.mxu0 0.0
  %3222 = vmatpush1.msra.mxu0 %v3195
  %3223 = vmatprep.subr.mxu0 0.0
  %3224 = vmatpush1.msra.mxu0 %v3194
  %3225 = vmatprep.subr.mxu0 0.0
  %3226 = vmatpush1.msra.mxu0 %v3193
  %3227 = vmatprep.subr.mxu0 0.0
  %3228 = vmatpush1.msra.mxu0 %v3192
  %3229 = vmatprep.subr.mxu0 0.0
  %3230 = vmatpush1.msra.mxu0 %v3191
  %3231 = vmatprep.subr.mxu0 0.0
  %3232 = vmatpush2.msra.mxu0 0.0
  %3233 = vmatprep.subr.mxu0 0.0
  %3234 = vmatpush2.msra.mxu0 0.0
  %3235 = vmatprep.subr.mxu0 0.0
  %3236 = vmatpush2.msra.mxu0 0.0
  %3237 = vmatprep.subr.mxu0 0.0
  %3238 = vmatpush2.msra.mxu0 0.0
  %3239 = vmatprep.subr.mxu0 0.0
  %3240 = vmatpush2.msra.mxu0 0.0
  %3241 = vmatprep.subr.mxu0 0.0
  %3242 = vmatpush2.msra.mxu0 0.0
  %3243 = vmatprep.subr.mxu0 0.0
  %3244 = vmatpush2.msra.mxu0 0.0
  %3245 = vmatprep.subr.mxu0 0.0
  %3246 = vmatpush2.msra.mxu0 0.0
  %3247 = vmatprep.subr.mxu0 0.0
  %3248 = vmatpush2.msra.mxu0 0.0
  %3249 = vmatprep.subr.mxu0 0.0
  %3250 = vmatpush2.msra.mxu0 0.0
  %3251 = vmatprep.subr.mxu0 0.0
  %3252 = vmatpush2.msra.mxu0 0.0
  %3253 = vmatprep.subr.mxu0 0.0
  %3254 = vmatpush2.msra.mxu0 0.0
  %3255 = vmatprep.subr.mxu0 0.0
  %3256 = vmatpush2.msra.mxu0 0.0
  %3257 = vmatprep.subr.mxu0 0.0
  %3258 = vmatpush2.msra.mxu0 0.0
  %3259 = vmatprep.subr.mxu0 0.0
  %3260 = vmatpush2.msra.mxu0 0.0
  %3261 = vmatprep.subr.mxu0 0.0
  %3262 = vmatpush2.msra.mxu0 0.0
  %3263 = vmatprep.mubr.f32.mxu0 0.0
  %3264 = vmatmul.mubr.f32.gmra.mxu0 %v3106
  %v3265 = vpop.f32.mrf.mxu0
  %v3266 = vadd.f32 0.0, %v3265
  %v3267 = vpop.f32.mrf.mxu0
  %3268 = vmatprep.mubr.f32.mxu0 0.0
  %3269 = vmatmul.mubr.f32.gmra.mxu0 %v3109
  %v3270 = vpop.f32.mrf.mxu0
  %v3271 = vadd.f32 0.0, %v3270
  %v3272 = vpop.f32.mrf.mxu0
  %3273 = vdwg.mxu0
  %s3274 = scalar_lea.vmem %s5, 32
  %v3275 = vld [vmem:[%s3274] sm:$0xff]
  %v3276 = vld [vmem:[%s3274 + $0x8] sm:$0xff]
  %v3277 = vld [vmem:[%s3274 + $0x10] sm:$0xff]
  %v3278 = vld [vmem:[%s3274 + $0x18] sm:$0xff]
  %vm3279 = vcmask 130048
  %v3281 = vsel %vm3279, %v3275, 0
  %v3284 = vsel %vm3279, %v3276, 0
  %v3287 = vsel %vm3279, %v3277, 0
  %v3290 = vsel %vm3279, %v3278, 0
  %3292 = vmatprep.subr.mxu0 0.0
  %3293 = vmatpush1.msra.mxu0 0.0
  %3294 = vmatprep.subr.mxu0 0.0
  %3295 = vmatpush1.msra.mxu0 0.0
  %3296 = vmatprep.subr.mxu0 0.0
  %3297 = vmatpush1.msra.mxu0 0.0
  %3298 = vmatprep.subr.mxu0 0.0
  %3299 = vmatpush1.msra.mxu0 0.0
  %3300 = vmatprep.subr.mxu0 0.0
  %3301 = vmatpush1.msra.mxu0 0.0
  %3302 = vmatprep.subr.mxu0 0.0
  %3303 = vmatpush1.msra.mxu0 0.0
  %3304 = vmatprep.subr.mxu0 0.0
  %3305 = vmatpush1.msra.mxu0 0.0
  %3306 = vmatprep.subr.mxu0 0.0
  %3307 = vmatpush1.msra.mxu0 0.0
  %3308 = vmatprep.subr.mxu0 0.0
  %3309 = vmatpush1.msra.mxu0 0.0
  %3310 = vmatprep.subr.mxu0 0.0
  %3311 = vmatpush1.msra.mxu0 0.0
  %3312 = vmatprep.subr.mxu0 0.0
  %3313 = vmatpush1.msra.mxu0 0.0
  %3314 = vmatprep.subr.mxu0 0.0
  %3315 = vmatpush1.msra.mxu0 0.0
  %3316 = vmatprep.subr.mxu0 0.0
  %3317 = vmatpush1.msra.mxu0 0.0
  %3318 = vmatprep.subr.mxu0 0.0
  %3319 = vmatpush1.msra.mxu0 0.0
  %3320 = vmatprep.subr.mxu0 0.0
  %3321 = vmatpush1.msra.mxu0 %v3271
  %3322 = vmatprep.subr.mxu0 0.0
  %3323 = vmatpush1.msra.mxu0 %v3266
  %3324 = vmatprep.subr.mxu0 0.0
  %3325 = vmatpush2.msra.mxu0 0.0
  %3326 = vmatprep.subr.mxu0 0.0
  %3327 = vmatpush2.msra.mxu0 0.0
  %3328 = vmatprep.subr.mxu0 0.0
  %3329 = vmatpush2.msra.mxu0 0.0
  %3330 = vmatprep.subr.mxu0 0.0
  %3331 = vmatpush2.msra.mxu0 0.0
  %3332 = vmatprep.subr.mxu0 0.0
  %3333 = vmatpush2.msra.mxu0 0.0
  %3334 = vmatprep.subr.mxu0 0.0
  %3335 = vmatpush2.msra.mxu0 0.0
  %3336 = vmatprep.subr.mxu0 0.0
  %3337 = vmatpush2.msra.mxu0 0.0
  %3338 = vmatprep.subr.mxu0 0.0
  %3339 = vmatpush2.msra.mxu0 0.0
  %3340 = vmatprep.subr.mxu0 0.0
  %3341 = vmatpush2.msra.mxu0 0.0
  %3342 = vmatprep.subr.mxu0 0.0
  %3343 = vmatpush2.msra.mxu0 0.0
  %3344 = vmatprep.subr.mxu0 0.0
  %3345 = vmatpush2.msra.mxu0 0.0
  %3346 = vmatprep.subr.mxu0 0.0
  %3347 = vmatpush2.msra.mxu0 0.0
  %3348 = vmatprep.subr.mxu0 0.0
  %3349 = vmatpush2.msra.mxu0 0.0
  %3350 = vmatprep.subr.mxu0 0.0
  %3351 = vmatpush2.msra.mxu0 0.0
  %3352 = vmatprep.subr.mxu0 0.0
  %3353 = vmatpush2.msra.mxu0 0.0
  %3354 = vmatprep.subr.mxu0 0.0
  %3355 = vmatpush2.msra.mxu0 0.0
  %3356 = vmatprep.mubr.f32.mxu0 0.0
  %3357 = vmatmul.mubr.f32.gmra.mxu0 %v3281
  %v3358 = vpop.f32.mrf.mxu0
  %v3359 = vadd.f32 0.0, %v3358
  %v3360 = vpop.f32.mrf.mxu0
  %3361 = vmatprep.mubr.f32.mxu0 0.0
  %3362 = vmatmul.mubr.f32.gmra.mxu0 %v3284
  %v3363 = vpop.f32.mrf.mxu0
  %v3364 = vadd.f32 0.0, %v3363
  %v3365 = vpop.f32.mrf.mxu0
  %3366 = vmatprep.mubr.f32.mxu0 0.0
  %3367 = vmatmul.mubr.f32.gmra.mxu0 %v3287
  %v3368 = vpop.f32.mrf.mxu0
  %v3369 = vadd.f32 0.0, %v3368
  %v3370 = vpop.f32.mrf.mxu0
  %3371 = vmatprep.mubr.f32.mxu0 0.0
  %3372 = vmatmul.mubr.f32.gmra.mxu0 %v3290
  %v3373 = vpop.f32.mrf.mxu0
  %v3374 = vadd.f32 0.0, %v3373
  %v3375 = vpop.f32.mrf.mxu0
  %3376 = vdwg.mxu0
  %v3378 = vsel %vm3279, %v3186, 0
  %v3381 = vsel %vm3279, %v3187, 0
  %v3384 = vsel %vm3279, %v3188, 0
  %v3387 = vsel %vm3279, %v3189, 0
  %3389 = vmatprep.subr.mxu0 0.0
  %3390 = vmatpush1.msra.mxu0 0.0
  %3391 = vmatprep.subr.mxu0 0.0
  %3392 = vmatpush1.msra.mxu0 0.0
  %3393 = vmatprep.subr.mxu0 0.0
  %3394 = vmatpush1.msra.mxu0 0.0
  %3395 = vmatprep.subr.mxu0 0.0
  %3396 = vmatpush1.msra.mxu0 0.0
  %3397 = vmatprep.subr.mxu0 0.0
  %3398 = vmatpush1.msra.mxu0 0.0
  %3399 = vmatprep.subr.mxu0 0.0
  %3400 = vmatpush1.msra.mxu0 0.0
  %3401 = vmatprep.subr.mxu0 0.0
  %3402 = vmatpush1.msra.mxu0 0.0
  %3403 = vmatprep.subr.mxu0 0.0
  %3404 = vmatpush1.msra.mxu0 0.0
  %3405 = vmatprep.subr.mxu0 0.0
  %3406 = vmatpush1.msra.mxu0 0.0
  %3407 = vmatprep.subr.mxu0 0.0
  %3408 = vmatpush1.msra.mxu0 0.0
  %3409 = vmatprep.subr.mxu0 0.0
  %3410 = vmatpush1.msra.mxu0 0.0
  %3411 = vmatprep.subr.mxu0 0.0
  %3412 = vmatpush1.msra.mxu0 0.0
  %3413 = vmatprep.subr.mxu0 0.0
  %3414 = vmatpush1.msra.mxu0 0.0
  %3415 = vmatprep.subr.mxu0 0.0
  %3416 = vmatpush1.msra.mxu0 0.0
  %3417 = vmatprep.subr.mxu0 0.0
  %3418 = vmatpush1.msra.mxu0 %v3183
  %3419 = vmatprep.subr.mxu0 0.0
  %3420 = vmatpush1.msra.mxu0 %v3178
  %3421 = vmatprep.subr.mxu0 0.0
  %3422 = vmatpush2.msra.mxu0 0.0
  %3423 = vmatprep.subr.mxu0 0.0
  %3424 = vmatpush2.msra.mxu0 0.0
  %3425 = vmatprep.subr.mxu0 0.0
  %3426 = vmatpush2.msra.mxu0 0.0
  %3427 = vmatprep.subr.mxu0 0.0
  %3428 = vmatpush2.msra.mxu0 0.0
  %3429 = vmatprep.subr.mxu0 0.0
  %3430 = vmatpush2.msra.mxu0 0.0
  %3431 = vmatprep.subr.mxu0 0.0
  %3432 = vmatpush2.msra.mxu0 0.0
  %3433 = vmatprep.subr.mxu0 0.0
  %3434 = vmatpush2.msra.mxu0 0.0
  %3435 = vmatprep.subr.mxu0 0.0
  %3436 = vmatpush2.msra.mxu0 0.0
  %3437 = vmatprep.subr.mxu0 0.0
  %3438 = vmatpush2.msra.mxu0 0.0
  %3439 = vmatprep.subr.mxu0 0.0
  %3440 = vmatpush2.msra.mxu0 0.0
  %3441 = vmatprep.subr.mxu0 0.0
  %3442 = vmatpush2.msra.mxu0 0.0
  %3443 = vmatprep.subr.mxu0 0.0
  %3444 = vmatpush2.msra.mxu0 0.0
  %3445 = vmatprep.subr.mxu0 0.0
  %3446 = vmatpush2.msra.mxu0 0.0
  %3447 = vmatprep.subr.mxu0 0.0
  %3448 = vmatpush2.msra.mxu0 0.0
  %3449 = vmatprep.subr.mxu0 0.0
  %3450 = vmatpush2.msra.mxu0 0.0
  %3451 = vmatprep.subr.mxu0 0.0
  %3452 = vmatpush2.msra.mxu0 0.0
  %3453 = vmatprep.mubr.f32.mxu0 0.0
  %3454 = vmatmul.mubr.f32.gmra.mxu0 %v3378
  %v3455 = vpop.f32.mrf.mxu0
  %v3456 = vadd.f32 %v3359, %v3455
  %v3457 = vpop.f32.mrf.mxu0
  %3458 = vmatprep.mubr.f32.mxu0 0.0
  %3459 = vmatmul.mubr.f32.gmra.mxu0 %v3381
  %v3460 = vpop.f32.mrf.mxu0
  %v3461 = vadd.f32 %v3364, %v3460
  %v3462 = vpop.f32.mrf.mxu0
  %3463 = vmatprep.mubr.f32.mxu0 0.0
  %3464 = vmatmul.mubr.f32.gmra.mxu0 %v3384
  %v3465 = vpop.f32.mrf.mxu0
  %v3466 = vadd.f32 %v3369, %v3465
  %v3467 = vpop.f32.mrf.mxu0
  %3468 = vmatprep.mubr.f32.mxu0 0.0
  %3469 = vmatmul.mubr.f32.gmra.mxu0 %v3387
  %v3470 = vpop.f32.mrf.mxu0
  %v3471 = vadd.f32 %v3374, %v3470
  %v3472 = vpop.f32.mrf.mxu0
  %3473 = vdwg.mxu0
  %s3474 = scalar_lea.vmem %s4, 128
  %v3475 = vld [vmem:[%s3474] sm:$0xff]
  %v3476 = vld [vmem:[%s3474 + $0x8] sm:$0xff]
  %v3477 = vld [vmem:[%s3474 + $0x10] sm:$0xff]
  %v3478 = vld [vmem:[%s3474 + $0x18] sm:$0xff]
  %v3479 = vld [vmem:[%s3474 + $0x20] sm:$0xff]
  %v3480 = vld [vmem:[%s3474 + $0x28] sm:$0xff]
  %v3481 = vld [vmem:[%s3474 + $0x30] sm:$0xff]
  %v3482 = vld [vmem:[%s3474 + $0x38] sm:$0xff]
  %3483 = vmatprep.subr.mxu0 0.0
  %3484 = vmatpush1.msra.mxu0 0.0
  %3485 = vmatprep.subr.mxu0 0.0
  %3486 = vmatpush1.msra.mxu0 0.0
  %3487 = vmatprep.subr.mxu0 0.0
  %3488 = vmatpush1.msra.mxu0 0.0
  %3489 = vmatprep.subr.mxu0 0.0
  %3490 = vmatpush1.msra.mxu0 0.0
  %3491 = vmatprep.subr.mxu0 0.0
  %3492 = vmatpush1.msra.mxu0 0.0
  %3493 = vmatprep.subr.mxu0 0.0
  %3494 = vmatpush1.msra.mxu0 0.0
  %3495 = vmatprep.subr.mxu0 0.0
  %3496 = vmatpush1.msra.mxu0 0.0
  %3497 = vmatprep.subr.mxu0 0.0
  %3498 = vmatpush1.msra.mxu0 0.0
  %3499 = vmatprep.subr.mxu0 0.0
  %3500 = vmatpush1.msra.mxu0 %v3482
  %3501 = vmatprep.subr.mxu0 0.0
  %3502 = vmatpush1.msra.mxu0 %v3481
  %3503 = vmatprep.subr.mxu0 0.0
  %3504 = vmatpush1.msra.mxu0 %v3480
  %3505 = vmatprep.subr.mxu0 0.0
  %3506 = vmatpush1.msra.mxu0 %v3479
  %3507 = vmatprep.subr.mxu0 0.0
  %3508 = vmatpush1.msra.mxu0 %v3478
  %3509 = vmatprep.subr.mxu0 0.0
  %3510 = vmatpush1.msra.mxu0 %v3477
  %3511 = vmatprep.subr.mxu0 0.0
  %3512 = vmatpush1.msra.mxu0 %v3476
  %3513 = vmatprep.subr.mxu0 0.0
  %3514 = vmatpush1.msra.mxu0 %v3475
  %3515 = vmatprep.subr.mxu0 0.0
  %3516 = vmatpush2.msra.mxu0 0.0
  %3517 = vmatprep.subr.mxu0 0.0
  %3518 = vmatpush2.msra.mxu0 0.0
  %3519 = vmatprep.subr.mxu0 0.0
  %3520 = vmatpush2.msra.mxu0 0.0
  %3521 = vmatprep.subr.mxu0 0.0
  %3522 = vmatpush2.msra.mxu0 0.0
  %3523 = vmatprep.subr.mxu0 0.0
  %3524 = vmatpush2.msra.mxu0 0.0
  %3525 = vmatprep.subr.mxu0 0.0
  %3526 = vmatpush2.msra.mxu0 0.0
  %3527 = vmatprep.subr.mxu0 0.0
  %3528 = vmatpush2.msra.mxu0 0.0
  %3529 = vmatprep.subr.mxu0 0.0
  %3530 = vmatpush2.msra.mxu0 0.0
  %3531 = vmatprep.subr.mxu0 0.0
  %3532 = vmatpush2.msra.mxu0 0.0
  %3533 = vmatprep.subr.mxu0 0.0
  %3534 = vmatpush2.msra.mxu0 0.0
  %3535 = vmatprep.subr.mxu0 0.0
  %3536 = vmatpush2.msra.mxu0 0.0
  %3537 = vmatprep.subr.mxu0 0.0
  %3538 = vmatpush2.msra.mxu0 0.0
  %3539 = vmatprep.subr.mxu0 0.0
  %3540 = vmatpush2.msra.mxu0 0.0
  %3541 = vmatprep.subr.mxu0 0.0
  %3542 = vmatpush2.msra.mxu0 0.0
  %3543 = vmatprep.subr.mxu0 0.0
  %3544 = vmatpush2.msra.mxu0 0.0
  %3545 = vmatprep.subr.mxu0 0.0
  %3546 = vmatpush2.msra.mxu0 0.0
  %3547 = vmatprep.mubr.f32.mxu0 0.0
  %3548 = vmatmul.mubr.f32.gmra.mxu0 %v3106
  %v3549 = vpop.f32.mrf.mxu0
  %v3550 = vadd.f32 0.0, %v3549
  %v3551 = vpop.f32.mrf.mxu0
  %3552 = vmatprep.mubr.f32.mxu0 0.0
  %3553 = vmatmul.mubr.f32.gmra.mxu0 %v3109
  %v3554 = vpop.f32.mrf.mxu0
  %v3555 = vadd.f32 0.0, %v3554
  %v3556 = vpop.f32.mrf.mxu0
  %3557 = vdwg.mxu0
  %s3558 = scalar_lea.vmem %s5, 64
  %v3559 = vld [vmem:[%s3558] sm:$0xff]
  %v3560 = vld [vmem:[%s3558 + $0x8] sm:$0xff]
  %v3561 = vld [vmem:[%s3558 + $0x10] sm:$0xff]
  %v3562 = vld [vmem:[%s3558 + $0x18] sm:$0xff]
  %v3564 = vsel %vm3279, %v3559, 0
  %v3567 = vsel %vm3279, %v3560, 0
  %v3570 = vsel %vm3279, %v3561, 0
  %v3573 = vsel %vm3279, %v3562, 0
  %3575 = vmatprep.subr.mxu0 0.0
  %3576 = vmatpush1.msra.mxu0 0.0
  %3577 = vmatprep.subr.mxu0 0.0
  %3578 = vmatpush1.msra.mxu0 0.0
  %3579 = vmatprep.subr.mxu0 0.0
  %3580 = vmatpush1.msra.mxu0 0.0
  %3581 = vmatprep.subr.mxu0 0.0
  %3582 = vmatpush1.msra.mxu0 0.0
  %3583 = vmatprep.subr.mxu0 0.0
  %3584 = vmatpush1.msra.mxu0 0.0
  %3585 = vmatprep.subr.mxu0 0.0
  %3586 = vmatpush1.msra.mxu0 0.0
  %3587 = vmatprep.subr.mxu0 0.0
  %3588 = vmatpush1.msra.mxu0 0.0
  %3589 = vmatprep.subr.mxu0 0.0
  %3590 = vmatpush1.msra.mxu0 0.0
  %3591 = vmatprep.subr.mxu0 0.0
  %3592 = vmatpush1.msra.mxu0 0.0
  %3593 = vmatprep.subr.mxu0 0.0
  %3594 = vmatpush1.msra.mxu0 0.0
  %3595 = vmatprep.subr.mxu0 0.0
  %3596 = vmatpush1.msra.mxu0 0.0
  %3597 = vmatprep.subr.mxu0 0.0
  %3598 = vmatpush1.msra.mxu0 0.0
  %3599 = vmatprep.subr.mxu0 0.0
  %3600 = vmatpush1.msra.mxu0 0.0
  %3601 = vmatprep.subr.mxu0 0.0
  %3602 = vmatpush1.msra.mxu0 0.0
  %3603 = vmatprep.subr.mxu0 0.0
  %3604 = vmatpush1.msra.mxu0 %v3555
  %3605 = vmatprep.subr.mxu0 0.0
  %3606 = vmatpush1.msra.mxu0 %v3550
  %3607 = vmatprep.subr.mxu0 0.0
  %3608 = vmatpush2.msra.mxu0 0.0
  %3609 = vmatprep.subr.mxu0 0.0
  %3610 = vmatpush2.msra.mxu0 0.0
  %3611 = vmatprep.subr.mxu0 0.0
  %3612 = vmatpush2.msra.mxu0 0.0
  %3613 = vmatprep.subr.mxu0 0.0
  %3614 = vmatpush2.msra.mxu0 0.0
  %3615 = vmatprep.subr.mxu0 0.0
  %3616 = vmatpush2.msra.mxu0 0.0
  %3617 = vmatprep.subr.mxu0 0.0
  %3618 = vmatpush2.msra.mxu0 0.0
  %3619 = vmatprep.subr.mxu0 0.0
  %3620 = vmatpush2.msra.mxu0 0.0
  %3621 = vmatprep.subr.mxu0 0.0
  %3622 = vmatpush2.msra.mxu0 0.0
  %3623 = vmatprep.subr.mxu0 0.0
  %3624 = vmatpush2.msra.mxu0 0.0
  %3625 = vmatprep.subr.mxu0 0.0
  %3626 = vmatpush2.msra.mxu0 0.0
  %3627 = vmatprep.subr.mxu0 0.0
  %3628 = vmatpush2.msra.mxu0 0.0
  %3629 = vmatprep.subr.mxu0 0.0
  %3630 = vmatpush2.msra.mxu0 0.0
  %3631 = vmatprep.subr.mxu0 0.0
  %3632 = vmatpush2.msra.mxu0 0.0
  %3633 = vmatprep.subr.mxu0 0.0
  %3634 = vmatpush2.msra.mxu0 0.0
  %3635 = vmatprep.subr.mxu0 0.0
  %3636 = vmatpush2.msra.mxu0 0.0
  %3637 = vmatprep.subr.mxu0 0.0
  %3638 = vmatpush2.msra.mxu0 0.0
  %3639 = vmatprep.mubr.f32.mxu0 0.0
  %3640 = vmatmul.mubr.f32.gmra.mxu0 %v3564
  %v3641 = vpop.f32.mrf.mxu0
  %v3642 = vadd.f32 0.0, %v3641
  %v3643 = vpop.f32.mrf.mxu0
  %3644 = vmatprep.mubr.f32.mxu0 0.0
  %3645 = vmatmul.mubr.f32.gmra.mxu0 %v3567
  %v3646 = vpop.f32.mrf.mxu0
  %v3647 = vadd.f32 0.0, %v3646
  %v3648 = vpop.f32.mrf.mxu0
  %3649 = vmatprep.mubr.f32.mxu0 0.0
  %3650 = vmatmul.mubr.f32.gmra.mxu0 %v3570
  %v3651 = vpop.f32.mrf.mxu0
  %v3652 = vadd.f32 0.0, %v3651
  %v3653 = vpop.f32.mrf.mxu0
  %3654 = vmatprep.mubr.f32.mxu0 0.0
  %3655 = vmatmul.mubr.f32.gmra.mxu0 %v3573
  %v3656 = vpop.f32.mrf.mxu0
  %v3657 = vadd.f32 0.0, %v3656
  %v3658 = vpop.f32.mrf.mxu0
  %3659 = vdwg.mxu0
  %v3660 = vadd.f32 %v3456, %v3642
  %v3661 = vadd.f32 %v3461, %v3647
  %v3662 = vadd.f32 %v3466, %v3652
  %v3663 = vadd.f32 %v3471, %v3657
  %s3664 = scalar_lea.vmem %s4, 192
  %v3665 = vld [vmem:[%s3664] sm:$0xff]
  %v3666 = vld [vmem:[%s3664 + $0x8] sm:$0xff]
  %v3667 = vld [vmem:[%s3664 + $0x10] sm:$0xff]
  %v3668 = vld [vmem:[%s3664 + $0x18] sm:$0xff]
  %v3669 = vld [vmem:[%s3664 + $0x20] sm:$0xff]
  %v3670 = vld [vmem:[%s3664 + $0x28] sm:$0xff]
  %v3671 = vld [vmem:[%s3664 + $0x30] sm:$0xff]
  %v3672 = vld [vmem:[%s3664 + $0x38] sm:$0xff]
  %3673 = vmatprep.subr.mxu0 0.0
  %3674 = vmatpush1.msra.mxu0 0.0
  %3675 = vmatprep.subr.mxu0 0.0
  %3676 = vmatpush1.msra.mxu0 0.0
  %3677 = vmatprep.subr.mxu0 0.0
  %3678 = vmatpush1.msra.mxu0 0.0
  %3679 = vmatprep.subr.mxu0 0.0
  %3680 = vmatpush1.msra.mxu0 0.0
  %3681 = vmatprep.subr.mxu0 0.0
  %3682 = vmatpush1.msra.mxu0 0.0
  %3683 = vmatprep.subr.mxu0 0.0
  %3684 = vmatpush1.msra.mxu0 0.0
  %3685 = vmatprep.subr.mxu0 0.0
  %3686 = vmatpush1.msra.mxu0 0.0
  %3687 = vmatprep.subr.mxu0 0.0
  %3688 = vmatpush1.msra.mxu0 0.0
  %3689 = vmatprep.subr.mxu0 0.0
  %3690 = vmatpush1.msra.mxu0 %v3672
  %3691 = vmatprep.subr.mxu0 0.0
  %3692 = vmatpush1.msra.mxu0 %v3671
  %3693 = vmatprep.subr.mxu0 0.0
  %3694 = vmatpush1.msra.mxu0 %v3670
  %3695 = vmatprep.subr.mxu0 0.0
  %3696 = vmatpush1.msra.mxu0 %v3669
  %3697 = vmatprep.subr.mxu0 0.0
  %3698 = vmatpush1.msra.mxu0 %v3668
  %3699 = vmatprep.subr.mxu0 0.0
  %3700 = vmatpush1.msra.mxu0 %v3667
  %3701 = vmatprep.subr.mxu0 0.0
  %3702 = vmatpush1.msra.mxu0 %v3666
  %3703 = vmatprep.subr.mxu0 0.0
  %3704 = vmatpush1.msra.mxu0 %v3665
  %3705 = vmatprep.subr.mxu0 0.0
  %3706 = vmatpush2.msra.mxu0 0.0
  %3707 = vmatprep.subr.mxu0 0.0
  %3708 = vmatpush2.msra.mxu0 0.0
  %3709 = vmatprep.subr.mxu0 0.0
  %3710 = vmatpush2.msra.mxu0 0.0
  %3711 = vmatprep.subr.mxu0 0.0
  %3712 = vmatpush2.msra.mxu0 0.0
  %3713 = vmatprep.subr.mxu0 0.0
  %3714 = vmatpush2.msra.mxu0 0.0
  %3715 = vmatprep.subr.mxu0 0.0
  %3716 = vmatpush2.msra.mxu0 0.0
  %3717 = vmatprep.subr.mxu0 0.0
  %3718 = vmatpush2.msra.mxu0 0.0
  %3719 = vmatprep.subr.mxu0 0.0
  %3720 = vmatpush2.msra.mxu0 0.0
  %3721 = vmatprep.subr.mxu0 0.0
  %3722 = vmatpush2.msra.mxu0 0.0
  %3723 = vmatprep.subr.mxu0 0.0
  %3724 = vmatpush2.msra.mxu0 0.0
  %3725 = vmatprep.subr.mxu0 0.0
  %3726 = vmatpush2.msra.mxu0 0.0
  %3727 = vmatprep.subr.mxu0 0.0
  %3728 = vmatpush2.msra.mxu0 0.0
  %3729 = vmatprep.subr.mxu0 0.0
  %3730 = vmatpush2.msra.mxu0 0.0
  %3731 = vmatprep.subr.mxu0 0.0
  %3732 = vmatpush2.msra.mxu0 0.0
  %3733 = vmatprep.subr.mxu0 0.0
  %3734 = vmatpush2.msra.mxu0 0.0
  %3735 = vmatprep.subr.mxu0 0.0
  %3736 = vmatpush2.msra.mxu0 0.0
  %3737 = vmatprep.mubr.f32.mxu0 0.0
  %3738 = vmatmul.mubr.f32.gmra.mxu0 %v3106
  %v3739 = vpop.f32.mrf.mxu0
  %v3740 = vadd.f32 0.0, %v3739
  %v3741 = vpop.f32.mrf.mxu0
  %3742 = vmatprep.mubr.f32.mxu0 0.0
  %3743 = vmatmul.mubr.f32.gmra.mxu0 %v3109
  %v3744 = vpop.f32.mrf.mxu0
  %v3745 = vadd.f32 0.0, %v3744
  %v3746 = vpop.f32.mrf.mxu0
  %3747 = vdwg.mxu0
  %s3748 = scalar_lea.vmem %s5, 96
  %v3749 = vld [vmem:[%s3748] sm:$0xff]
  %v3750 = vld [vmem:[%s3748 + $0x8] sm:$0xff]
  %v3751 = vld [vmem:[%s3748 + $0x10] sm:$0xff]
  %v3752 = vld [vmem:[%s3748 + $0x18] sm:$0xff]
  %v3754 = vsel %vm3279, %v3749, 0
  %v3757 = vsel %vm3279, %v3750, 0
  %v3760 = vsel %vm3279, %v3751, 0
  %v3763 = vsel %vm3279, %v3752, 0
  %3765 = vmatprep.subr.mxu0 0.0
  %3766 = vmatpush1.msra.mxu0 0.0
  %3767 = vmatprep.subr.mxu0 0.0
  %3768 = vmatpush1.msra.mxu0 0.0
  %3769 = vmatprep.subr.mxu0 0.0
  %3770 = vmatpush1.msra.mxu0 0.0
  %3771 = vmatprep.subr.mxu0 0.0
  %3772 = vmatpush1.msra.mxu0 0.0
  %3773 = vmatprep.subr.mxu0 0.0
  %3774 = vmatpush1.msra.mxu0 0.0
  %3775 = vmatprep.subr.mxu0 0.0
  %3776 = vmatpush1.msra.mxu0 0.0
  %3777 = vmatprep.subr.mxu0 0.0
  %3778 = vmatpush1.msra.mxu0 0.0
  %3779 = vmatprep.subr.mxu0 0.0
  %3780 = vmatpush1.msra.mxu0 0.0
  %3781 = vmatprep.subr.mxu0 0.0
  %3782 = vmatpush1.msra.mxu0 0.0
  %3783 = vmatprep.subr.mxu0 0.0
  %3784 = vmatpush1.msra.mxu0 0.0
  %3785 = vmatprep.subr.mxu0 0.0
  %3786 = vmatpush1.msra.mxu0 0.0
  %3787 = vmatprep.subr.mxu0 0.0
  %3788 = vmatpush1.msra.mxu0 0.0
  %3789 = vmatprep.subr.mxu0 0.0
  %3790 = vmatpush1.msra.mxu0 0.0
  %3791 = vmatprep.subr.mxu0 0.0
  %3792 = vmatpush1.msra.mxu0 0.0
  %3793 = vmatprep.subr.mxu0 0.0
  %3794 = vmatpush1.msra.mxu0 %v3745
  %3795 = vmatprep.subr.mxu0 0.0
  %3796 = vmatpush1.msra.mxu0 %v3740
  %3797 = vmatprep.subr.mxu0 0.0
  %3798 = vmatpush2.msra.mxu0 0.0
  %3799 = vmatprep.subr.mxu0 0.0
  %3800 = vmatpush2.msra.mxu0 0.0
  %3801 = vmatprep.subr.mxu0 0.0
  %3802 = vmatpush2.msra.mxu0 0.0
  %3803 = vmatprep.subr.mxu0 0.0
  %3804 = vmatpush2.msra.mxu0 0.0
  %3805 = vmatprep.subr.mxu0 0.0
  %3806 = vmatpush2.msra.mxu0 0.0
  %3807 = vmatprep.subr.mxu0 0.0
  %3808 = vmatpush2.msra.mxu0 0.0
  %3809 = vmatprep.subr.mxu0 0.0
  %3810 = vmatpush2.msra.mxu0 0.0
  %3811 = vmatprep.subr.mxu0 0.0
  %3812 = vmatpush2.msra.mxu0 0.0
  %3813 = vmatprep.subr.mxu0 0.0
  %3814 = vmatpush2.msra.mxu0 0.0
  %3815 = vmatprep.subr.mxu0 0.0
  %3816 = vmatpush2.msra.mxu0 0.0
  %3817 = vmatprep.subr.mxu0 0.0
  %3818 = vmatpush2.msra.mxu0 0.0
  %3819 = vmatprep.subr.mxu0 0.0
  %3820 = vmatpush2.msra.mxu0 0.0
  %3821 = vmatprep.subr.mxu0 0.0
  %3822 = vmatpush2.msra.mxu0 0.0
  %3823 = vmatprep.subr.mxu0 0.0
  %3824 = vmatpush2.msra.mxu0 0.0
  %3825 = vmatprep.subr.mxu0 0.0
  %3826 = vmatpush2.msra.mxu0 0.0
  %3827 = vmatprep.subr.mxu0 0.0
  %3828 = vmatpush2.msra.mxu0 0.0
  %3829 = vmatprep.mubr.f32.mxu0 0.0
  %3830 = vmatmul.mubr.f32.gmra.mxu0 %v3754
  %v3831 = vpop.f32.mrf.mxu0
  %v3832 = vadd.f32 0.0, %v3831
  %v3833 = vpop.f32.mrf.mxu0
  %3834 = vmatprep.mubr.f32.mxu0 0.0
  %3835 = vmatmul.mubr.f32.gmra.mxu0 %v3757
  %v3836 = vpop.f32.mrf.mxu0
  %v3837 = vadd.f32 0.0, %v3836
  %v3838 = vpop.f32.mrf.mxu0
  %3839 = vmatprep.mubr.f32.mxu0 0.0
  %3840 = vmatmul.mubr.f32.gmra.mxu0 %v3760
  %v3841 = vpop.f32.mrf.mxu0
  %v3842 = vadd.f32 0.0, %v3841
  %v3843 = vpop.f32.mrf.mxu0
  %3844 = vmatprep.mubr.f32.mxu0 0.0
  %3845 = vmatmul.mubr.f32.gmra.mxu0 %v3763
  %v3846 = vpop.f32.mrf.mxu0
  %v3847 = vadd.f32 0.0, %v3846
  %v3848 = vpop.f32.mrf.mxu0
  %3849 = vdwg.mxu0
  %v3850 = vadd.f32 %v3660, %v3832
  %v3851 = vadd.f32 %v3661, %v3837
  %v3852 = vadd.f32 %v3662, %v3842
  %v3853 = vadd.f32 %v3663, %v3847
  %s3854 = scalar_lea.vmem %s4, 256
  %v3855 = vld [vmem:[%s3854] sm:$0xff]
  %v3856 = vld [vmem:[%s3854 + $0x8] sm:$0xff]
  %v3857 = vld [vmem:[%s3854 + $0x10] sm:$0xff]
  %v3858 = vld [vmem:[%s3854 + $0x18] sm:$0xff]
  %v3859 = vld [vmem:[%s3854 + $0x20] sm:$0xff]
  %v3860 = vld [vmem:[%s3854 + $0x28] sm:$0xff]
  %v3861 = vld [vmem:[%s3854 + $0x30] sm:$0xff]
  %v3862 = vld [vmem:[%s3854 + $0x38] sm:$0xff]
  %3863 = vmatprep.subr.mxu0 0.0
  %3864 = vmatpush1.msra.mxu0 0.0
  %3865 = vmatprep.subr.mxu0 0.0
  %3866 = vmatpush1.msra.mxu0 0.0
  %3867 = vmatprep.subr.mxu0 0.0
  %3868 = vmatpush1.msra.mxu0 0.0
  %3869 = vmatprep.subr.mxu0 0.0
  %3870 = vmatpush1.msra.mxu0 0.0
  %3871 = vmatprep.subr.mxu0 0.0
  %3872 = vmatpush1.msra.mxu0 0.0
  %3873 = vmatprep.subr.mxu0 0.0
  %3874 = vmatpush1.msra.mxu0 0.0
  %3875 = vmatprep.subr.mxu0 0.0
  %3876 = vmatpush1.msra.mxu0 0.0
  %3877 = vmatprep.subr.mxu0 0.0
  %3878 = vmatpush1.msra.mxu0 0.0
  %3879 = vmatprep.subr.mxu0 0.0
  %3880 = vmatpush1.msra.mxu0 %v3862
  %3881 = vmatprep.subr.mxu0 0.0
  %3882 = vmatpush1.msra.mxu0 %v3861
  %3883 = vmatprep.subr.mxu0 0.0
  %3884 = vmatpush1.msra.mxu0 %v3860
  %3885 = vmatprep.subr.mxu0 0.0
  %3886 = vmatpush1.msra.mxu0 %v3859
  %3887 = vmatprep.subr.mxu0 0.0
  %3888 = vmatpush1.msra.mxu0 %v3858
  %3889 = vmatprep.subr.mxu0 0.0
  %3890 = vmatpush1.msra.mxu0 %v3857
  %3891 = vmatprep.subr.mxu0 0.0
  %3892 = vmatpush1.msra.mxu0 %v3856
  %3893 = vmatprep.subr.mxu0 0.0
  %3894 = vmatpush1.msra.mxu0 %v3855
  %3895 = vmatprep.subr.mxu0 0.0
  %3896 = vmatpush2.msra.mxu0 0.0
  %3897 = vmatprep.subr.mxu0 0.0
  %3898 = vmatpush2.msra.mxu0 0.0
  %3899 = vmatprep.subr.mxu0 0.0
  %3900 = vmatpush2.msra.mxu0 0.0
  %3901 = vmatprep.subr.mxu0 0.0
  %3902 = vmatpush2.msra.mxu0 0.0
  %3903 = vmatprep.subr.mxu0 0.0
  %3904 = vmatpush2.msra.mxu0 0.0
  %3905 = vmatprep.subr.mxu0 0.0
  %3906 = vmatpush2.msra.mxu0 0.0
  %3907 = vmatprep.subr.mxu0 0.0
  %3908 = vmatpush2.msra.mxu0 0.0
  %3909 = vmatprep.subr.mxu0 0.0
  %3910 = vmatpush2.msra.mxu0 0.0
  %3911 = vmatprep.subr.mxu0 0.0
  %3912 = vmatpush2.msra.mxu0 0.0
  %3913 = vmatprep.subr.mxu0 0.0
  %3914 = vmatpush2.msra.mxu0 0.0
  %3915 = vmatprep.subr.mxu0 0.0
  %3916 = vmatpush2.msra.mxu0 0.0
  %3917 = vmatprep.subr.mxu0 0.0
  %3918 = vmatpush2.msra.mxu0 0.0
  %3919 = vmatprep.subr.mxu0 0.0
  %3920 = vmatpush2.msra.mxu0 0.0
  %3921 = vmatprep.subr.mxu0 0.0
  %3922 = vmatpush2.msra.mxu0 0.0
  %3923 = vmatprep.subr.mxu0 0.0
  %3924 = vmatpush2.msra.mxu0 0.0
  %3925 = vmatprep.subr.mxu0 0.0
  %3926 = vmatpush2.msra.mxu0 0.0
  %3927 = vmatprep.mubr.f32.mxu0 0.0
  %3928 = vmatmul.mubr.f32.gmra.mxu0 %v3106
  %v3929 = vpop.f32.mrf.mxu0
  %v3930 = vadd.f32 0.0, %v3929
  %v3931 = vpop.f32.mrf.mxu0
  %3932 = vmatprep.mubr.f32.mxu0 0.0
  %3933 = vmatmul.mubr.f32.gmra.mxu0 %v3109
  %v3934 = vpop.f32.mrf.mxu0
  %v3935 = vadd.f32 0.0, %v3934
  %v3936 = vpop.f32.mrf.mxu0
  %3937 = vdwg.mxu0
  %s3938 = scalar_lea.vmem %s5, 128
  %v3939 = vld [vmem:[%s3938] sm:$0xff]
  %v3940 = vld [vmem:[%s3938 + $0x8] sm:$0xff]
  %v3941 = vld [vmem:[%s3938 + $0x10] sm:$0xff]
  %v3942 = vld [vmem:[%s3938 + $0x18] sm:$0xff]
  %v3944 = vsel %vm3279, %v3939, 0
  %v3947 = vsel %vm3279, %v3940, 0
  %v3950 = vsel %vm3279, %v3941, 0
  %v3953 = vsel %vm3279, %v3942, 0
  %3955 = vmatprep.subr.mxu0 0.0
  %3956 = vmatpush1.msra.mxu0 0.0
  %3957 = vmatprep.subr.mxu0 0.0
  %3958 = vmatpush1.msra.mxu0 0.0
  %3959 = vmatprep.subr.mxu0 0.0
  %3960 = vmatpush1.msra.mxu0 0.0
  %3961 = vmatprep.subr.mxu0 0.0
  %3962 = vmatpush1.msra.mxu0 0.0
  %3963 = vmatprep.subr.mxu0 0.0
  %3964 = vmatpush1.msra.mxu0 0.0
  %3965 = vmatprep.subr.mxu0 0.0
  %3966 = vmatpush1.msra.mxu0 0.0
  %3967 = vmatprep.subr.mxu0 0.0
  %3968 = vmatpush1.msra.mxu0 0.0
  %3969 = vmatprep.subr.mxu0 0.0
  %3970 = vmatpush1.msra.mxu0 0.0
  %3971 = vmatprep.subr.mxu0 0.0
  %3972 = vmatpush1.msra.mxu0 0.0
  %3973 = vmatprep.subr.mxu0 0.0
  %3974 = vmatpush1.msra.mxu0 0.0
  %3975 = vmatprep.subr.mxu0 0.0
  %3976 = vmatpush1.msra.mxu0 0.0
  %3977 = vmatprep.subr.mxu0 0.0
  %3978 = vmatpush1.msra.mxu0 0.0
  %3979 = vmatprep.subr.mxu0 0.0
  %3980 = vmatpush1.msra.mxu0 0.0
  %3981 = vmatprep.subr.mxu0 0.0
  %3982 = vmatpush1.msra.mxu0 0.0
  %3983 = vmatprep.subr.mxu0 0.0
  %3984 = vmatpush1.msra.mxu0 %v3935
  %3985 = vmatprep.subr.mxu0 0.0
  %3986 = vmatpush1.msra.mxu0 %v3930
  %3987 = vmatprep.subr.mxu0 0.0
  %3988 = vmatpush2.msra.mxu0 0.0
  %3989 = vmatprep.subr.mxu0 0.0
  %3990 = vmatpush2.msra.mxu0 0.0
  %3991 = vmatprep.subr.mxu0 0.0
  %3992 = vmatpush2.msra.mxu0 0.0
  %3993 = vmatprep.subr.mxu0 0.0
  %3994 = vmatpush2.msra.mxu0 0.0
  %3995 = vmatprep.subr.mxu0 0.0
  %3996 = vmatpush2.msra.mxu0 0.0
  %3997 = vmatprep.subr.mxu0 0.0
  %3998 = vmatpush2.msra.mxu0 0.0
  %3999 = vmatprep.subr.mxu0 0.0
  %4000 = vmatpush2.msra.mxu0 0.0
  %4001 = vmatprep.subr.mxu0 0.0
  %4002 = vmatpush2.msra.mxu0 0.0
  %4003 = vmatprep.subr.mxu0 0.0
  %4004 = vmatpush2.msra.mxu0 0.0
  %4005 = vmatprep.subr.mxu0 0.0
  %4006 = vmatpush2.msra.mxu0 0.0
  %4007 = vmatprep.subr.mxu0 0.0
  %4008 = vmatpush2.msra.mxu0 0.0
  %4009 = vmatprep.subr.mxu0 0.0
  %4010 = vmatpush2.msra.mxu0 0.0
  %4011 = vmatprep.subr.mxu0 0.0
  %4012 = vmatpush2.msra.mxu0 0.0
  %4013 = vmatprep.subr.mxu0 0.0
  %4014 = vmatpush2.msra.mxu0 0.0
  %4015 = vmatprep.subr.mxu0 0.0
  %4016 = vmatpush2.msra.mxu0 0.0
  %4017 = vmatprep.subr.mxu0 0.0
  %4018 = vmatpush2.msra.mxu0 0.0
  %4019 = vmatprep.mubr.f32.mxu0 0.0
  %4020 = vmatmul.mubr.f32.gmra.mxu0 %v3944
  %v4021 = vpop.f32.mrf.mxu0
  %v4022 = vadd.f32 0.0, %v4021
  %v4023 = vpop.f32.mrf.mxu0
  %4024 = vmatprep.mubr.f32.mxu0 0.0
  %4025 = vmatmul.mubr.f32.gmra.mxu0 %v3947
  %v4026 = vpop.f32.mrf.mxu0
  %v4027 = vadd.f32 0.0, %v4026
  %v4028 = vpop.f32.mrf.mxu0
  %4029 = vmatprep.mubr.f32.mxu0 0.0
  %4030 = vmatmul.mubr.f32.gmra.mxu0 %v3950
  %v4031 = vpop.f32.mrf.mxu0
  %v4032 = vadd.f32 0.0, %v4031
  %v4033 = vpop.f32.mrf.mxu0
  %4034 = vmatprep.mubr.f32.mxu0 0.0
  %4035 = vmatmul.mubr.f32.gmra.mxu0 %v3953
  %v4036 = vpop.f32.mrf.mxu0
  %v4037 = vadd.f32 0.0, %v4036
  %v4038 = vpop.f32.mrf.mxu0
  %4039 = vdwg.mxu0
  %v4040 = vadd.f32 %v3850, %v4022
  %v4041 = vadd.f32 %v3851, %v4027
  %v4042 = vadd.f32 %v3852, %v4032
  %v4043 = vadd.f32 %v3853, %v4037
  %s4044 = scalar_lea.vmem %s4, 320
  %v4045 = vld [vmem:[%s4044] sm:$0xff]
  %v4046 = vld [vmem:[%s4044 + $0x8] sm:$0xff]
  %v4047 = vld [vmem:[%s4044 + $0x10] sm:$0xff]
  %v4048 = vld [vmem:[%s4044 + $0x18] sm:$0xff]
  %v4049 = vld [vmem:[%s4044 + $0x20] sm:$0xff]
  %v4050 = vld [vmem:[%s4044 + $0x28] sm:$0xff]
  %v4051 = vld [vmem:[%s4044 + $0x30] sm:$0xff]
  %v4052 = vld [vmem:[%s4044 + $0x38] sm:$0xff]
  %4053 = vmatprep.subr.mxu0 0.0
  %4054 = vmatpush1.msra.mxu0 0.0
  %4055 = vmatprep.subr.mxu0 0.0
  %4056 = vmatpush1.msra.mxu0 0.0
  %4057 = vmatprep.subr.mxu0 0.0
  %4058 = vmatpush1.msra.mxu0 0.0
  %4059 = vmatprep.subr.mxu0 0.0
  %4060 = vmatpush1.msra.mxu0 0.0
  %4061 = vmatprep.subr.mxu0 0.0
  %4062 = vmatpush1.msra.mxu0 0.0
  %4063 = vmatprep.subr.mxu0 0.0
  %4064 = vmatpush1.msra.mxu0 0.0
  %4065 = vmatprep.subr.mxu0 0.0
  %4066 = vmatpush1.msra.mxu0 0.0
  %4067 = vmatprep.subr.mxu0 0.0
  %4068 = vmatpush1.msra.mxu0 0.0
  %4069 = vmatprep.subr.mxu0 0.0
  %4070 = vmatpush1.msra.mxu0 %v4052
  %4071 = vmatprep.subr.mxu0 0.0
  %4072 = vmatpush1.msra.mxu0 %v4051
  %4073 = vmatprep.subr.mxu0 0.0
  %4074 = vmatpush1.msra.mxu0 %v4050
  %4075 = vmatprep.subr.mxu0 0.0
  %4076 = vmatpush1.msra.mxu0 %v4049
  %4077 = vmatprep.subr.mxu0 0.0
  %4078 = vmatpush1.msra.mxu0 %v4048
  %4079 = vmatprep.subr.mxu0 0.0
  %4080 = vmatpush1.msra.mxu0 %v4047
  %4081 = vmatprep.subr.mxu0 0.0
  %4082 = vmatpush1.msra.mxu0 %v4046
  %4083 = vmatprep.subr.mxu0 0.0
  %4084 = vmatpush1.msra.mxu0 %v4045
  %4085 = vmatprep.subr.mxu0 0.0
  %4086 = vmatpush2.msra.mxu0 0.0
  %4087 = vmatprep.subr.mxu0 0.0
  %4088 = vmatpush2.msra.mxu0 0.0
  %4089 = vmatprep.subr.mxu0 0.0
  %4090 = vmatpush2.msra.mxu0 0.0
  %4091 = vmatprep.subr.mxu0 0.0
  %4092 = vmatpush2.msra.mxu0 0.0
  %4093 = vmatprep.subr.mxu0 0.0
  %4094 = vmatpush2.msra.mxu0 0.0
  %4095 = vmatprep.subr.mxu0 0.0
  %4096 = vmatpush2.msra.mxu0 0.0
  %4097 = vmatprep.subr.mxu0 0.0
  %4098 = vmatpush2.msra.mxu0 0.0
  %4099 = vmatprep.subr.mxu0 0.0
  %4100 = vmatpush2.msra.mxu0 0.0
  %4101 = vmatprep.subr.mxu0 0.0
  %4102 = vmatpush2.msra.mxu0 0.0
  %4103 = vmatprep.subr.mxu0 0.0
  %4104 = vmatpush2.msra.mxu0 0.0
  %4105 = vmatprep.subr.mxu0 0.0
  %4106 = vmatpush2.msra.mxu0 0.0
  %4107 = vmatprep.subr.mxu0 0.0
  %4108 = vmatpush2.msra.mxu0 0.0
  %4109 = vmatprep.subr.mxu0 0.0
  %4110 = vmatpush2.msra.mxu0 0.0
  %4111 = vmatprep.subr.mxu0 0.0
  %4112 = vmatpush2.msra.mxu0 0.0
  %4113 = vmatprep.subr.mxu0 0.0
  %4114 = vmatpush2.msra.mxu0 0.0
  %4115 = vmatprep.subr.mxu0 0.0
  %4116 = vmatpush2.msra.mxu0 0.0
  %4117 = vmatprep.mubr.f32.mxu0 0.0
  %4118 = vmatmul.mubr.f32.gmra.mxu0 %v3106
  %v4119 = vpop.f32.mrf.mxu0
  %v4120 = vadd.f32 0.0, %v4119
  %v4121 = vpop.f32.mrf.mxu0
  %4122 = vmatprep.mubr.f32.mxu0 0.0
  %4123 = vmatmul.mubr.f32.gmra.mxu0 %v3109
  %v4124 = vpop.f32.mrf.mxu0
  %v4125 = vadd.f32 0.0, %v4124
  %v4126 = vpop.f32.mrf.mxu0
  %4127 = vdwg.mxu0
  %s4128 = scalar_lea.vmem %s5, 160
  %v4129 = vld [vmem:[%s4128] sm:$0xff]
  %v4130 = vld [vmem:[%s4128 + $0x8] sm:$0xff]
  %v4131 = vld [vmem:[%s4128 + $0x10] sm:$0xff]
  %v4132 = vld [vmem:[%s4128 + $0x18] sm:$0xff]
  %v4134 = vsel %vm3279, %v4129, 0
  %v4137 = vsel %vm3279, %v4130, 0
  %v4140 = vsel %vm3279, %v4131, 0
  %v4143 = vsel %vm3279, %v4132, 0
  %4145 = vmatprep.subr.mxu0 0.0
  %4146 = vmatpush1.msra.mxu0 0.0
  %4147 = vmatprep.subr.mxu0 0.0
  %4148 = vmatpush1.msra.mxu0 0.0
  %4149 = vmatprep.subr.mxu0 0.0
  %4150 = vmatpush1.msra.mxu0 0.0
  %4151 = vmatprep.subr.mxu0 0.0
  %4152 = vmatpush1.msra.mxu0 0.0
  %4153 = vmatprep.subr.mxu0 0.0
  %4154 = vmatpush1.msra.mxu0 0.0
  %4155 = vmatprep.subr.mxu0 0.0
  %4156 = vmatpush1.msra.mxu0 0.0
  %4157 = vmatprep.subr.mxu0 0.0
  %4158 = vmatpush1.msra.mxu0 0.0
  %4159 = vmatprep.subr.mxu0 0.0
  %4160 = vmatpush1.msra.mxu0 0.0
  %4161 = vmatprep.subr.mxu0 0.0
  %4162 = vmatpush1.msra.mxu0 0.0
  %4163 = vmatprep.subr.mxu0 0.0
  %4164 = vmatpush1.msra.mxu0 0.0
  %4165 = vmatprep.subr.mxu0 0.0
  %4166 = vmatpush1.msra.mxu0 0.0
  %4167 = vmatprep.subr.mxu0 0.0
  %4168 = vmatpush1.msra.mxu0 0.0
  %4169 = vmatprep.subr.mxu0 0.0
  %4170 = vmatpush1.msra.mxu0 0.0
  %4171 = vmatprep.subr.mxu0 0.0
  %4172 = vmatpush1.msra.mxu0 0.0
  %4173 = vmatprep.subr.mxu0 0.0
  %4174 = vmatpush1.msra.mxu0 %v4125
  %4175 = vmatprep.subr.mxu0 0.0
  %4176 = vmatpush1.msra.mxu0 %v4120
  %4177 = vmatprep.subr.mxu0 0.0
  %4178 = vmatpush2.msra.mxu0 0.0
  %4179 = vmatprep.subr.mxu0 0.0
  %4180 = vmatpush2.msra.mxu0 0.0
  %4181 = vmatprep.subr.mxu0 0.0
  %4182 = vmatpush2.msra.mxu0 0.0
  %4183 = vmatprep.subr.mxu0 0.0
  %4184 = vmatpush2.msra.mxu0 0.0
  %4185 = vmatprep.subr.mxu0 0.0
  %4186 = vmatpush2.msra.mxu0 0.0
  %4187 = vmatprep.subr.mxu0 0.0
  %4188 = vmatpush2.msra.mxu0 0.0
  %4189 = vmatprep.subr.mxu0 0.0
  %4190 = vmatpush2.msra.mxu0 0.0
  %4191 = vmatprep.subr.mxu0 0.0
  %4192 = vmatpush2.msra.mxu0 0.0
  %4193 = vmatprep.subr.mxu0 0.0
  %4194 = vmatpush2.msra.mxu0 0.0
  %4195 = vmatprep.subr.mxu0 0.0
  %4196 = vmatpush2.msra.mxu0 0.0
  %4197 = vmatprep.subr.mxu0 0.0
  %4198 = vmatpush2.msra.mxu0 0.0
  %4199 = vmatprep.subr.mxu0 0.0
  %4200 = vmatpush2.msra.mxu0 0.0
  %4201 = vmatprep.subr.mxu0 0.0
  %4202 = vmatpush2.msra.mxu0 0.0
  %4203 = vmatprep.subr.mxu0 0.0
  %4204 = vmatpush2.msra.mxu0 0.0
  %4205 = vmatprep.subr.mxu0 0.0
  %4206 = vmatpush2.msra.mxu0 0.0
  %4207 = vmatprep.subr.mxu0 0.0
  %4208 = vmatpush2.msra.mxu0 0.0
  %4209 = vmatprep.mubr.f32.mxu0 0.0
  %4210 = vmatmul.mubr.f32.gmra.mxu0 %v4134
  %v4211 = vpop.f32.mrf.mxu0
  %v4212 = vadd.f32 0.0, %v4211
  %v4213 = vpop.f32.mrf.mxu0
  %4214 = vmatprep.mubr.f32.mxu0 0.0
  %4215 = vmatmul.mubr.f32.gmra.mxu0 %v4137
  %v4216 = vpop.f32.mrf.mxu0
  %v4217 = vadd.f32 0.0, %v4216
  %v4218 = vpop.f32.mrf.mxu0
  %4219 = vmatprep.mubr.f32.mxu0 0.0
  %4220 = vmatmul.mubr.f32.gmra.mxu0 %v4140
  %v4221 = vpop.f32.mrf.mxu0
  %v4222 = vadd.f32 0.0, %v4221
  %v4223 = vpop.f32.mrf.mxu0
  %4224 = vmatprep.mubr.f32.mxu0 0.0
  %4225 = vmatmul.mubr.f32.gmra.mxu0 %v4143
  %v4226 = vpop.f32.mrf.mxu0
  %v4227 = vadd.f32 0.0, %v4226
  %v4228 = vpop.f32.mrf.mxu0
  %4229 = vdwg.mxu0
  %v4230 = vadd.f32 %v4040, %v4212
  %v4231 = vadd.f32 %v4041, %v4217
  %v4232 = vadd.f32 %v4042, %v4222
  %v4233 = vadd.f32 %v4043, %v4227
  %s4234 = scalar_lea.vmem %s4, 384
  %v4235 = vld [vmem:[%s4234] sm:$0xff]
  %v4236 = vld [vmem:[%s4234 + $0x8] sm:$0xff]
  %v4237 = vld [vmem:[%s4234 + $0x10] sm:$0xff]
  %v4238 = vld [vmem:[%s4234 + $0x18] sm:$0xff]
  %v4239 = vld [vmem:[%s4234 + $0x20] sm:$0xff]
  %v4240 = vld [vmem:[%s4234 + $0x28] sm:$0xff]
  %v4241 = vld [vmem:[%s4234 + $0x30] sm:$0xff]
  %v4242 = vld [vmem:[%s4234 + $0x38] sm:$0xff]
  %4243 = vmatprep.subr.mxu0 0.0
  %4244 = vmatpush1.msra.mxu0 0.0
  %4245 = vmatprep.subr.mxu0 0.0
  %4246 = vmatpush1.msra.mxu0 0.0
  %4247 = vmatprep.subr.mxu0 0.0
  %4248 = vmatpush1.msra.mxu0 0.0
  %4249 = vmatprep.subr.mxu0 0.0
  %4250 = vmatpush1.msra.mxu0 0.0
  %4251 = vmatprep.subr.mxu0 0.0
  %4252 = vmatpush1.msra.mxu0 0.0
  %4253 = vmatprep.subr.mxu0 0.0
  %4254 = vmatpush1.msra.mxu0 0.0
  %4255 = vmatprep.subr.mxu0 0.0
  %4256 = vmatpush1.msra.mxu0 0.0
  %4257 = vmatprep.subr.mxu0 0.0
  %4258 = vmatpush1.msra.mxu0 0.0
  %4259 = vmatprep.subr.mxu0 0.0
  %4260 = vmatpush1.msra.mxu0 %v4242
  %4261 = vmatprep.subr.mxu0 0.0
  %4262 = vmatpush1.msra.mxu0 %v4241
  %4263 = vmatprep.subr.mxu0 0.0
  %4264 = vmatpush1.msra.mxu0 %v4240
  %4265 = vmatprep.subr.mxu0 0.0
  %4266 = vmatpush1.msra.mxu0 %v4239
  %4267 = vmatprep.subr.mxu0 0.0
  %4268 = vmatpush1.msra.mxu0 %v4238
  %4269 = vmatprep.subr.mxu0 0.0
  %4270 = vmatpush1.msra.mxu0 %v4237
  %4271 = vmatprep.subr.mxu0 0.0
  %4272 = vmatpush1.msra.mxu0 %v4236
  %4273 = vmatprep.subr.mxu0 0.0
  %4274 = vmatpush1.msra.mxu0 %v4235
  %4275 = vmatprep.subr.mxu0 0.0
  %4276 = vmatpush2.msra.mxu0 0.0
  %4277 = vmatprep.subr.mxu0 0.0
  %4278 = vmatpush2.msra.mxu0 0.0
  %4279 = vmatprep.subr.mxu0 0.0
  %4280 = vmatpush2.msra.mxu0 0.0
  %4281 = vmatprep.subr.mxu0 0.0
  %4282 = vmatpush2.msra.mxu0 0.0
  %4283 = vmatprep.subr.mxu0 0.0
  %4284 = vmatpush2.msra.mxu0 0.0
  %4285 = vmatprep.subr.mxu0 0.0
  %4286 = vmatpush2.msra.mxu0 0.0
  %4287 = vmatprep.subr.mxu0 0.0
  %4288 = vmatpush2.msra.mxu0 0.0
  %4289 = vmatprep.subr.mxu0 0.0
  %4290 = vmatpush2.msra.mxu0 0.0
  %4291 = vmatprep.subr.mxu0 0.0
  %4292 = vmatpush2.msra.mxu0 0.0
  %4293 = vmatprep.subr.mxu0 0.0
  %4294 = vmatpush2.msra.mxu0 0.0
  %4295 = vmatprep.subr.mxu0 0.0
  %4296 = vmatpush2.msra.mxu0 0.0
  %4297 = vmatprep.subr.mxu0 0.0
  %4298 = vmatpush2.msra.mxu0 0.0
  %4299 = vmatprep.subr.mxu0 0.0
  %4300 = vmatpush2.msra.mxu0 0.0
  %4301 = vmatprep.subr.mxu0 0.0
  %4302 = vmatpush2.msra.mxu0 0.0
  %4303 = vmatprep.subr.mxu0 0.0
  %4304 = vmatpush2.msra.mxu0 0.0
  %4305 = vmatprep.subr.mxu0 0.0
  %4306 = vmatpush2.msra.mxu0 0.0
  %4307 = vmatprep.mubr.f32.mxu0 0.0
  %4308 = vmatmul.mubr.f32.gmra.mxu0 %v3106
  %v4309 = vpop.f32.mrf.mxu0
  %v4310 = vadd.f32 0.0, %v4309
  %v4311 = vpop.f32.mrf.mxu0
  %4312 = vmatprep.mubr.f32.mxu0 0.0
  %4313 = vmatmul.mubr.f32.gmra.mxu0 %v3109
  %v4314 = vpop.f32.mrf.mxu0
  %v4315 = vadd.f32 0.0, %v4314
  %v4316 = vpop.f32.mrf.mxu0
  %4317 = vdwg.mxu0
  %s4318 = scalar_lea.vmem %s5, 192
  %v4319 = vld [vmem:[%s4318] sm:$0xff]
  %v4320 = vld [vmem:[%s4318 + $0x8] sm:$0xff]
  %v4321 = vld [vmem:[%s4318 + $0x10] sm:$0xff]
  %v4322 = vld [vmem:[%s4318 + $0x18] sm:$0xff]
  %v4324 = vsel %vm3279, %v4319, 0
  %v4327 = vsel %vm3279, %v4320, 0
  %v4330 = vsel %vm3279, %v4321, 0
  %v4333 = vsel %vm3279, %v4322, 0
  %4335 = vmatprep.subr.mxu0 0.0
  %4336 = vmatpush1.msra.mxu0 0.0
  %4337 = vmatprep.subr.mxu0 0.0
  %4338 = vmatpush1.msra.mxu0 0.0
  %4339 = vmatprep.subr.mxu0 0.0
  %4340 = vmatpush1.msra.mxu0 0.0
  %4341 = vmatprep.subr.mxu0 0.0
  %4342 = vmatpush1.msra.mxu0 0.0
  %4343 = vmatprep.subr.mxu0 0.0
  %4344 = vmatpush1.msra.mxu0 0.0
  %4345 = vmatprep.subr.mxu0 0.0
  %4346 = vmatpush1.msra.mxu0 0.0
  %4347 = vmatprep.subr.mxu0 0.0
  %4348 = vmatpush1.msra.mxu0 0.0
  %4349 = vmatprep.subr.mxu0 0.0
  %4350 = vmatpush1.msra.mxu0 0.0
  %4351 = vmatprep.subr.mxu0 0.0
  %4352 = vmatpush1.msra.mxu0 0.0
  %4353 = vmatprep.subr.mxu0 0.0
  %4354 = vmatpush1.msra.mxu0 0.0
  %4355 = vmatprep.subr.mxu0 0.0
  %4356 = vmatpush1.msra.mxu0 0.0
  %4357 = vmatprep.subr.mxu0 0.0
  %4358 = vmatpush1.msra.mxu0 0.0
  %4359 = vmatprep.subr.mxu0 0.0
  %4360 = vmatpush1.msra.mxu0 0.0
  %4361 = vmatprep.subr.mxu0 0.0
  %4362 = vmatpush1.msra.mxu0 0.0
  %4363 = vmatprep.subr.mxu0 0.0
  %4364 = vmatpush1.msra.mxu0 %v4315
  %4365 = vmatprep.subr.mxu0 0.0
  %4366 = vmatpush1.msra.mxu0 %v4310
  %4367 = vmatprep.subr.mxu0 0.0
  %4368 = vmatpush2.msra.mxu0 0.0
  %4369 = vmatprep.subr.mxu0 0.0
  %4370 = vmatpush2.msra.mxu0 0.0
  %4371 = vmatprep.subr.mxu0 0.0
  %4372 = vmatpush2.msra.mxu0 0.0
  %4373 = vmatprep.subr.mxu0 0.0
  %4374 = vmatpush2.msra.mxu0 0.0
  %4375 = vmatprep.subr.mxu0 0.0
  %4376 = vmatpush2.msra.mxu0 0.0
  %4377 = vmatprep.subr.mxu0 0.0
  %4378 = vmatpush2.msra.mxu0 0.0
  %4379 = vmatprep.subr.mxu0 0.0
  %4380 = vmatpush2.msra.mxu0 0.0
  %4381 = vmatprep.subr.mxu0 0.0
  %4382 = vmatpush2.msra.mxu0 0.0
  %4383 = vmatprep.subr.mxu0 0.0
  %4384 = vmatpush2.msra.mxu0 0.0
  %4385 = vmatprep.subr.mxu0 0.0
  %4386 = vmatpush2.msra.mxu0 0.0
  %4387 = vmatprep.subr.mxu0 0.0
  %4388 = vmatpush2.msra.mxu0 0.0
  %4389 = vmatprep.subr.mxu0 0.0
  %4390 = vmatpush2.msra.mxu0 0.0
  %4391 = vmatprep.subr.mxu0 0.0
  %4392 = vmatpush2.msra.mxu0 0.0
  %4393 = vmatprep.subr.mxu0 0.0
  %4394 = vmatpush2.msra.mxu0 0.0
  %4395 = vmatprep.subr.mxu0 0.0
  %4396 = vmatpush2.msra.mxu0 0.0
  %4397 = vmatprep.subr.mxu0 0.0
  %4398 = vmatpush2.msra.mxu0 0.0
  %4399 = vmatprep.mubr.f32.mxu0 0.0
  %4400 = vmatmul.mubr.f32.gmra.mxu0 %v4324
  %v4401 = vpop.f32.mrf.mxu0
  %v4402 = vadd.f32 0.0, %v4401
  %v4403 = vpop.f32.mrf.mxu0
  %4404 = vmatprep.mubr.f32.mxu0 0.0
  %4405 = vmatmul.mubr.f32.gmra.mxu0 %v4327
  %v4406 = vpop.f32.mrf.mxu0
  %v4407 = vadd.f32 0.0, %v4406
  %v4408 = vpop.f32.mrf.mxu0
  %4409 = vmatprep.mubr.f32.mxu0 0.0
  %4410 = vmatmul.mubr.f32.gmra.mxu0 %v4330
  %v4411 = vpop.f32.mrf.mxu0
  %v4412 = vadd.f32 0.0, %v4411
  %v4413 = vpop.f32.mrf.mxu0
  %4414 = vmatprep.mubr.f32.mxu0 0.0
  %4415 = vmatmul.mubr.f32.gmra.mxu0 %v4333
  %v4416 = vpop.f32.mrf.mxu0
  %v4417 = vadd.f32 0.0, %v4416
  %v4418 = vpop.f32.mrf.mxu0
  %4419 = vdwg.mxu0
  %v4420 = vadd.f32 %v4230, %v4402
  %v4421 = vadd.f32 %v4231, %v4407
  %v4422 = vadd.f32 %v4232, %v4412
  %v4423 = vadd.f32 %v4233, %v4417
  %s4424 = scalar_lea.vmem %s4, 448
  %v4425 = vld [vmem:[%s4424] sm:$0xff]
  %v4426 = vld [vmem:[%s4424 + $0x8] sm:$0xff]
  %v4427 = vld [vmem:[%s4424 + $0x10] sm:$0xff]
  %v4428 = vld [vmem:[%s4424 + $0x18] sm:$0xff]
  %v4429 = vld [vmem:[%s4424 + $0x20] sm:$0xff]
  %v4430 = vld [vmem:[%s4424 + $0x28] sm:$0xff]
  %v4431 = vld [vmem:[%s4424 + $0x30] sm:$0xff]
  %v4432 = vld [vmem:[%s4424 + $0x38] sm:$0xff]
  %4433 = vmatprep.subr.mxu0 0.0
  %4434 = vmatpush1.msra.mxu0 0.0
  %4435 = vmatprep.subr.mxu0 0.0
  %4436 = vmatpush1.msra.mxu0 0.0
  %4437 = vmatprep.subr.mxu0 0.0
  %4438 = vmatpush1.msra.mxu0 0.0
  %4439 = vmatprep.subr.mxu0 0.0
  %4440 = vmatpush1.msra.mxu0 0.0
  %4441 = vmatprep.subr.mxu0 0.0
  %4442 = vmatpush1.msra.mxu0 0.0
  %4443 = vmatprep.subr.mxu0 0.0
  %4444 = vmatpush1.msra.mxu0 0.0
  %4445 = vmatprep.subr.mxu0 0.0
  %4446 = vmatpush1.msra.mxu0 0.0
  %4447 = vmatprep.subr.mxu0 0.0
  %4448 = vmatpush1.msra.mxu0 0.0
  %4449 = vmatprep.subr.mxu0 0.0
  %4450 = vmatpush1.msra.mxu0 %v4432
  %4451 = vmatprep.subr.mxu0 0.0
  %4452 = vmatpush1.msra.mxu0 %v4431
  %4453 = vmatprep.subr.mxu0 0.0
  %4454 = vmatpush1.msra.mxu0 %v4430
  %4455 = vmatprep.subr.mxu0 0.0
  %4456 = vmatpush1.msra.mxu0 %v4429
  %4457 = vmatprep.subr.mxu0 0.0
  %4458 = vmatpush1.msra.mxu0 %v4428
  %4459 = vmatprep.subr.mxu0 0.0
  %4460 = vmatpush1.msra.mxu0 %v4427
  %4461 = vmatprep.subr.mxu0 0.0
  %4462 = vmatpush1.msra.mxu0 %v4426
  %4463 = vmatprep.subr.mxu0 0.0
  %4464 = vmatpush1.msra.mxu0 %v4425
  %4465 = vmatprep.subr.mxu0 0.0
  %4466 = vmatpush2.msra.mxu0 0.0
  %4467 = vmatprep.subr.mxu0 0.0
  %4468 = vmatpush2.msra.mxu0 0.0
  %4469 = vmatprep.subr.mxu0 0.0
  %4470 = vmatpush2.msra.mxu0 0.0
  %4471 = vmatprep.subr.mxu0 0.0
  %4472 = vmatpush2.msra.mxu0 0.0
  %4473 = vmatprep.subr.mxu0 0.0
  %4474 = vmatpush2.msra.mxu0 0.0
  %4475 = vmatprep.subr.mxu0 0.0
  %4476 = vmatpush2.msra.mxu0 0.0
  %4477 = vmatprep.subr.mxu0 0.0
  %4478 = vmatpush2.msra.mxu0 0.0
  %4479 = vmatprep.subr.mxu0 0.0
  %4480 = vmatpush2.msra.mxu0 0.0
  %4481 = vmatprep.subr.mxu0 0.0
  %4482 = vmatpush2.msra.mxu0 0.0
  %4483 = vmatprep.subr.mxu0 0.0
  %4484 = vmatpush2.msra.mxu0 0.0
  %4485 = vmatprep.subr.mxu0 0.0
  %4486 = vmatpush2.msra.mxu0 0.0
  %4487 = vmatprep.subr.mxu0 0.0
  %4488 = vmatpush2.msra.mxu0 0.0
  %4489 = vmatprep.subr.mxu0 0.0
  %4490 = vmatpush2.msra.mxu0 0.0
  %4491 = vmatprep.subr.mxu0 0.0
  %4492 = vmatpush2.msra.mxu0 0.0
  %4493 = vmatprep.subr.mxu0 0.0
  %4494 = vmatpush2.msra.mxu0 0.0
  %4495 = vmatprep.subr.mxu0 0.0
  %4496 = vmatpush2.msra.mxu0 0.0
  %4497 = vmatprep.mubr.f32.mxu0 0.0
  %4498 = vmatmul.mubr.f32.gmra.mxu0 %v3106
  %v4499 = vpop.f32.mrf.mxu0
  %v4500 = vadd.f32 0.0, %v4499
  %v4501 = vpop.f32.mrf.mxu0
  %4502 = vmatprep.mubr.f32.mxu0 0.0
  %4503 = vmatmul.mubr.f32.gmra.mxu0 %v3109
  %v4504 = vpop.f32.mrf.mxu0
  %v4505 = vadd.f32 0.0, %v4504
  %v4506 = vpop.f32.mrf.mxu0
  %4507 = vdwg.mxu0
  %s4508 = scalar_lea.vmem %s5, 224
  %v4509 = vld [vmem:[%s4508] sm:$0xff]
  %v4510 = vld [vmem:[%s4508 + $0x8] sm:$0xff]
  %v4511 = vld [vmem:[%s4508 + $0x10] sm:$0xff]
  %v4512 = vld [vmem:[%s4508 + $0x18] sm:$0xff]
  %v4514 = vsel %vm3279, %v4509, 0
  %v4517 = vsel %vm3279, %v4510, 0
  %v4520 = vsel %vm3279, %v4511, 0
  %v4523 = vsel %vm3279, %v4512, 0
  %4525 = vmatprep.subr.mxu0 0.0
  %4526 = vmatpush1.msra.mxu0 0.0
  %4527 = vmatprep.subr.mxu0 0.0
  %4528 = vmatpush1.msra.mxu0 0.0
  %4529 = vmatprep.subr.mxu0 0.0
  %4530 = vmatpush1.msra.mxu0 0.0
  %4531 = vmatprep.subr.mxu0 0.0
  %4532 = vmatpush1.msra.mxu0 0.0
  %4533 = vmatprep.subr.mxu0 0.0
  %4534 = vmatpush1.msra.mxu0 0.0
  %4535 = vmatprep.subr.mxu0 0.0
  %4536 = vmatpush1.msra.mxu0 0.0
  %4537 = vmatprep.subr.mxu0 0.0
  %4538 = vmatpush1.msra.mxu0 0.0
  %4539 = vmatprep.subr.mxu0 0.0
  %4540 = vmatpush1.msra.mxu0 0.0
  %4541 = vmatprep.subr.mxu0 0.0
  %4542 = vmatpush1.msra.mxu0 0.0
  %4543 = vmatprep.subr.mxu0 0.0
  %4544 = vmatpush1.msra.mxu0 0.0
  %4545 = vmatprep.subr.mxu0 0.0
  %4546 = vmatpush1.msra.mxu0 0.0
  %4547 = vmatprep.subr.mxu0 0.0
  %4548 = vmatpush1.msra.mxu0 0.0
  %4549 = vmatprep.subr.mxu0 0.0
  %4550 = vmatpush1.msra.mxu0 0.0
  %4551 = vmatprep.subr.mxu0 0.0
  %4552 = vmatpush1.msra.mxu0 0.0
  %4553 = vmatprep.subr.mxu0 0.0
  %4554 = vmatpush1.msra.mxu0 %v4505
  %4555 = vmatprep.subr.mxu0 0.0
  %4556 = vmatpush1.msra.mxu0 %v4500
  %4557 = vmatprep.subr.mxu0 0.0
  %4558 = vmatpush2.msra.mxu0 0.0
  %4559 = vmatprep.subr.mxu0 0.0
  %4560 = vmatpush2.msra.mxu0 0.0
  %4561 = vmatprep.subr.mxu0 0.0
  %4562 = vmatpush2.msra.mxu0 0.0
  %4563 = vmatprep.subr.mxu0 0.0
  %4564 = vmatpush2.msra.mxu0 0.0
  %4565 = vmatprep.subr.mxu0 0.0
  %4566 = vmatpush2.msra.mxu0 0.0
  %4567 = vmatprep.subr.mxu0 0.0
  %4568 = vmatpush2.msra.mxu0 0.0
  %4569 = vmatprep.subr.mxu0 0.0
  %4570 = vmatpush2.msra.mxu0 0.0
  %4571 = vmatprep.subr.mxu0 0.0
  %4572 = vmatpush2.msra.mxu0 0.0
  %4573 = vmatprep.subr.mxu0 0.0
  %4574 = vmatpush2.msra.mxu0 0.0
  %4575 = vmatprep.subr.mxu0 0.0
  %4576 = vmatpush2.msra.mxu0 0.0
  %4577 = vmatprep.subr.mxu0 0.0
  %4578 = vmatpush2.msra.mxu0 0.0
  %4579 = vmatprep.subr.mxu0 0.0
  %4580 = vmatpush2.msra.mxu0 0.0
  %4581 = vmatprep.subr.mxu0 0.0
  %4582 = vmatpush2.msra.mxu0 0.0
  %4583 = vmatprep.subr.mxu0 0.0
  %4584 = vmatpush2.msra.mxu0 0.0
  %4585 = vmatprep.subr.mxu0 0.0
  %4586 = vmatpush2.msra.mxu0 0.0
  %4587 = vmatprep.subr.mxu0 0.0
  %4588 = vmatpush2.msra.mxu0 0.0
  %4589 = vmatprep.mubr.f32.mxu0 0.0
  %4590 = vmatmul.mubr.f32.gmra.mxu0 %v4514
  %v4591 = vpop.f32.mrf.mxu0
  %v4592 = vadd.f32 0.0, %v4591
  %v4593 = vpop.f32.mrf.mxu0
  %4594 = vmatprep.mubr.f32.mxu0 0.0
  %4595 = vmatmul.mubr.f32.gmra.mxu0 %v4517
  %v4596 = vpop.f32.mrf.mxu0
  %v4597 = vadd.f32 0.0, %v4596
  %v4598 = vpop.f32.mrf.mxu0
  %4599 = vmatprep.mubr.f32.mxu0 0.0
  %4600 = vmatmul.mubr.f32.gmra.mxu0 %v4520
  %v4601 = vpop.f32.mrf.mxu0
  %v4602 = vadd.f32 0.0, %v4601
  %v4603 = vpop.f32.mrf.mxu0
  %4604 = vmatprep.mubr.f32.mxu0 0.0
  %4605 = vmatmul.mubr.f32.gmra.mxu0 %v4523
  %v4606 = vpop.f32.mrf.mxu0
  %v4607 = vadd.f32 0.0, %v4606
  %v4608 = vpop.f32.mrf.mxu0
  %4609 = vdwg.mxu0
  %v4610 = vadd.f32 %v4420, %v4592
  %v4611 = vadd.f32 %v4421, %v4597
  %v4612 = vadd.f32 %v4422, %v4602
  %v4613 = vadd.f32 %v4423, %v4607
  %s4614 = scalar_lea.vmem %s4, 512
  %v4615 = vld [vmem:[%s4614] sm:$0xff]
  %v4616 = vld [vmem:[%s4614 + $0x8] sm:$0xff]
  %v4617 = vld [vmem:[%s4614 + $0x10] sm:$0xff]
  %v4618 = vld [vmem:[%s4614 + $0x18] sm:$0xff]
  %v4619 = vld [vmem:[%s4614 + $0x20] sm:$0xff]
  %v4620 = vld [vmem:[%s4614 + $0x28] sm:$0xff]
  %v4621 = vld [vmem:[%s4614 + $0x30] sm:$0xff]
  %v4622 = vld [vmem:[%s4614 + $0x38] sm:$0xff]
  %4623 = vmatprep.subr.mxu0 0.0
  %4624 = vmatpush1.msra.mxu0 0.0
  %4625 = vmatprep.subr.mxu0 0.0
  %4626 = vmatpush1.msra.mxu0 0.0
  %4627 = vmatprep.subr.mxu0 0.0
  %4628 = vmatpush1.msra.mxu0 0.0
  %4629 = vmatprep.subr.mxu0 0.0
  %4630 = vmatpush1.msra.mxu0 0.0
  %4631 = vmatprep.subr.mxu0 0.0
  %4632 = vmatpush1.msra.mxu0 0.0
  %4633 = vmatprep.subr.mxu0 0.0
  %4634 = vmatpush1.msra.mxu0 0.0
  %4635 = vmatprep.subr.mxu0 0.0
  %4636 = vmatpush1.msra.mxu0 0.0
  %4637 = vmatprep.subr.mxu0 0.0
  %4638 = vmatpush1.msra.mxu0 0.0
  %4639 = vmatprep.subr.mxu0 0.0
  %4640 = vmatpush1.msra.mxu0 %v4622
  %4641 = vmatprep.subr.mxu0 0.0
  %4642 = vmatpush1.msra.mxu0 %v4621
  %4643 = vmatprep.subr.mxu0 0.0
  %4644 = vmatpush1.msra.mxu0 %v4620
  %4645 = vmatprep.subr.mxu0 0.0
  %4646 = vmatpush1.msra.mxu0 %v4619
  %4647 = vmatprep.subr.mxu0 0.0
  %4648 = vmatpush1.msra.mxu0 %v4618
  %4649 = vmatprep.subr.mxu0 0.0
  %4650 = vmatpush1.msra.mxu0 %v4617
  %4651 = vmatprep.subr.mxu0 0.0
  %4652 = vmatpush1.msra.mxu0 %v4616
  %4653 = vmatprep.subr.mxu0 0.0
  %4654 = vmatpush1.msra.mxu0 %v4615
  %4655 = vmatprep.subr.mxu0 0.0
  %4656 = vmatpush2.msra.mxu0 0.0
  %4657 = vmatprep.subr.mxu0 0.0
  %4658 = vmatpush2.msra.mxu0 0.0
  %4659 = vmatprep.subr.mxu0 0.0
  %4660 = vmatpush2.msra.mxu0 0.0
  %4661 = vmatprep.subr.mxu0 0.0
  %4662 = vmatpush2.msra.mxu0 0.0
  %4663 = vmatprep.subr.mxu0 0.0
  %4664 = vmatpush2.msra.mxu0 0.0
  %4665 = vmatprep.subr.mxu0 0.0
  %4666 = vmatpush2.msra.mxu0 0.0
  %4667 = vmatprep.subr.mxu0 0.0
  %4668 = vmatpush2.msra.mxu0 0.0
  %4669 = vmatprep.subr.mxu0 0.0
  %4670 = vmatpush2.msra.mxu0 0.0
  %4671 = vmatprep.subr.mxu0 0.0
  %4672 = vmatpush2.msra.mxu0 0.0
  %4673 = vmatprep.subr.mxu0 0.0
  %4674 = vmatpush2.msra.mxu0 0.0
  %4675 = vmatprep.subr.mxu0 0.0
  %4676 = vmatpush2.msra.mxu0 0.0
  %4677 = vmatprep.subr.mxu0 0.0
  %4678 = vmatpush2.msra.mxu0 0.0
  %4679 = vmatprep.subr.mxu0 0.0
  %4680 = vmatpush2.msra.mxu0 0.0
  %4681 = vmatprep.subr.mxu0 0.0
  %4682 = vmatpush2.msra.mxu0 0.0
  %4683 = vmatprep.subr.mxu0 0.0
  %4684 = vmatpush2.msra.mxu0 0.0
  %4685 = vmatprep.subr.mxu0 0.0
  %4686 = vmatpush2.msra.mxu0 0.0
  %4687 = vmatprep.mubr.f32.mxu0 0.0
  %4688 = vmatmul.mubr.f32.gmra.mxu0 %v3106
  %v4689 = vpop.f32.mrf.mxu0
  %v4690 = vadd.f32 0.0, %v4689
  %v4691 = vpop.f32.mrf.mxu0
  %4692 = vmatprep.mubr.f32.mxu0 0.0
  %4693 = vmatmul.mubr.f32.gmra.mxu0 %v3109
  %v4694 = vpop.f32.mrf.mxu0
  %v4695 = vadd.f32 0.0, %v4694
  %v4696 = vpop.f32.mrf.mxu0
  %4697 = vdwg.mxu0
  %s4698 = scalar_lea.vmem %s5, 256
  %v4699 = vld [vmem:[%s4698] sm:$0xff]
  %v4700 = vld [vmem:[%s4698 + $0x8] sm:$0xff]
  %v4701 = vld [vmem:[%s4698 + $0x10] sm:$0xff]
  %v4702 = vld [vmem:[%s4698 + $0x18] sm:$0xff]
  %v4704 = vsel %vm3279, %v4699, 0
  %v4707 = vsel %vm3279, %v4700, 0
  %v4710 = vsel %vm3279, %v4701, 0
  %v4713 = vsel %vm3279, %v4702, 0
  %4715 = vmatprep.subr.mxu0 0.0
  %4716 = vmatpush1.msra.mxu0 0.0
  %4717 = vmatprep.subr.mxu0 0.0
  %4718 = vmatpush1.msra.mxu0 0.0
  %4719 = vmatprep.subr.mxu0 0.0
  %4720 = vmatpush1.msra.mxu0 0.0
  %4721 = vmatprep.subr.mxu0 0.0
  %4722 = vmatpush1.msra.mxu0 0.0
  %4723 = vmatprep.subr.mxu0 0.0
  %4724 = vmatpush1.msra.mxu0 0.0
  %4725 = vmatprep.subr.mxu0 0.0
  %4726 = vmatpush1.msra.mxu0 0.0
  %4727 = vmatprep.subr.mxu0 0.0
  %4728 = vmatpush1.msra.mxu0 0.0
  %4729 = vmatprep.subr.mxu0 0.0
  %4730 = vmatpush1.msra.mxu0 0.0
  %4731 = vmatprep.subr.mxu0 0.0
  %4732 = vmatpush1.msra.mxu0 0.0
  %4733 = vmatprep.subr.mxu0 0.0
  %4734 = vmatpush1.msra.mxu0 0.0
  %4735 = vmatprep.subr.mxu0 0.0
  %4736 = vmatpush1.msra.mxu0 0.0
  %4737 = vmatprep.subr.mxu0 0.0
  %4738 = vmatpush1.msra.mxu0 0.0
  %4739 = vmatprep.subr.mxu0 0.0
  %4740 = vmatpush1.msra.mxu0 0.0
  %4741 = vmatprep.subr.mxu0 0.0
  %4742 = vmatpush1.msra.mxu0 0.0
  %4743 = vmatprep.subr.mxu0 0.0
  %4744 = vmatpush1.msra.mxu0 %v4695
  %4745 = vmatprep.subr.mxu0 0.0
  %4746 = vmatpush1.msra.mxu0 %v4690
  %4747 = vmatprep.subr.mxu0 0.0
  %4748 = vmatpush2.msra.mxu0 0.0
  %4749 = vmatprep.subr.mxu0 0.0
  %4750 = vmatpush2.msra.mxu0 0.0
  %4751 = vmatprep.subr.mxu0 0.0
  %4752 = vmatpush2.msra.mxu0 0.0
  %4753 = vmatprep.subr.mxu0 0.0
  %4754 = vmatpush2.msra.mxu0 0.0
  %4755 = vmatprep.subr.mxu0 0.0
  %4756 = vmatpush2.msra.mxu0 0.0
  %4757 = vmatprep.subr.mxu0 0.0
  %4758 = vmatpush2.msra.mxu0 0.0
  %4759 = vmatprep.subr.mxu0 0.0
  %4760 = vmatpush2.msra.mxu0 0.0
  %4761 = vmatprep.subr.mxu0 0.0
  %4762 = vmatpush2.msra.mxu0 0.0
  %4763 = vmatprep.subr.mxu0 0.0
  %4764 = vmatpush2.msra.mxu0 0.0
  %4765 = vmatprep.subr.mxu0 0.0
  %4766 = vmatpush2.msra.mxu0 0.0
  %4767 = vmatprep.subr.mxu0 0.0
  %4768 = vmatpush2.msra.mxu0 0.0
  %4769 = vmatprep.subr.mxu0 0.0
  %4770 = vmatpush2.msra.mxu0 0.0
  %4771 = vmatprep.subr.mxu0 0.0
  %4772 = vmatpush2.msra.mxu0 0.0
  %4773 = vmatprep.subr.mxu0 0.0
  %4774 = vmatpush2.msra.mxu0 0.0
  %4775 = vmatprep.subr.mxu0 0.0
  %4776 = vmatpush2.msra.mxu0 0.0
  %4777 = vmatprep.subr.mxu0 0.0
  %4778 = vmatpush2.msra.mxu0 0.0
  %4779 = vmatprep.mubr.f32.mxu0 0.0
  %4780 = vmatmul.mubr.f32.gmra.mxu0 %v4704
  %v4781 = vpop.f32.mrf.mxu0
  %v4782 = vadd.f32 0.0, %v4781
  %v4783 = vpop.f32.mrf.mxu0
  %4784 = vmatprep.mubr.f32.mxu0 0.0
  %4785 = vmatmul.mubr.f32.gmra.mxu0 %v4707
  %v4786 = vpop.f32.mrf.mxu0
  %v4787 = vadd.f32 0.0, %v4786
  %v4788 = vpop.f32.mrf.mxu0
  %4789 = vmatprep.mubr.f32.mxu0 0.0
  %4790 = vmatmul.mubr.f32.gmra.mxu0 %v4710
  %v4791 = vpop.f32.mrf.mxu0
  %v4792 = vadd.f32 0.0, %v4791
  %v4793 = vpop.f32.mrf.mxu0
  %4794 = vmatprep.mubr.f32.mxu0 0.0
  %4795 = vmatmul.mubr.f32.gmra.mxu0 %v4713
  %v4796 = vpop.f32.mrf.mxu0
  %v4797 = vadd.f32 0.0, %v4796
  %v4798 = vpop.f32.mrf.mxu0
  %4799 = vdwg.mxu0
  %v4800 = vadd.f32 %v4610, %v4782
  %v4801 = vadd.f32 %v4611, %v4787
  %v4802 = vadd.f32 %v4612, %v4792
  %v4803 = vadd.f32 %v4613, %v4797
  %s4804 = scalar_lea.vmem %s4, 576
  %v4805 = vld [vmem:[%s4804] sm:$0xff]
  %v4806 = vld [vmem:[%s4804 + $0x8] sm:$0xff]
  %v4807 = vld [vmem:[%s4804 + $0x10] sm:$0xff]
  %v4808 = vld [vmem:[%s4804 + $0x18] sm:$0xff]
  %v4809 = vld [vmem:[%s4804 + $0x20] sm:$0xff]
  %v4810 = vld [vmem:[%s4804 + $0x28] sm:$0xff]
  %v4811 = vld [vmem:[%s4804 + $0x30] sm:$0xff]
  %v4812 = vld [vmem:[%s4804 + $0x38] sm:$0xff]
  %4813 = vmatprep.subr.mxu0 0.0
  %4814 = vmatpush1.msra.mxu0 0.0
  %4815 = vmatprep.subr.mxu0 0.0
  %4816 = vmatpush1.msra.mxu0 0.0
  %4817 = vmatprep.subr.mxu0 0.0
  %4818 = vmatpush1.msra.mxu0 0.0
  %4819 = vmatprep.subr.mxu0 0.0
  %4820 = vmatpush1.msra.mxu0 0.0
  %4821 = vmatprep.subr.mxu0 0.0
  %4822 = vmatpush1.msra.mxu0 0.0
  %4823 = vmatprep.subr.mxu0 0.0
  %4824 = vmatpush1.msra.mxu0 0.0
  %4825 = vmatprep.subr.mxu0 0.0
  %4826 = vmatpush1.msra.mxu0 0.0
  %4827 = vmatprep.subr.mxu0 0.0
  %4828 = vmatpush1.msra.mxu0 0.0
  %4829 = vmatprep.subr.mxu0 0.0
  %4830 = vmatpush1.msra.mxu0 %v4812
  %4831 = vmatprep.subr.mxu0 0.0
  %4832 = vmatpush1.msra.mxu0 %v4811
  %4833 = vmatprep.subr.mxu0 0.0
  %4834 = vmatpush1.msra.mxu0 %v4810
  %4835 = vmatprep.subr.mxu0 0.0
  %4836 = vmatpush1.msra.mxu0 %v4809
  %4837 = vmatprep.subr.mxu0 0.0
  %4838 = vmatpush1.msra.mxu0 %v4808
  %4839 = vmatprep.subr.mxu0 0.0
  %4840 = vmatpush1.msra.mxu0 %v4807
  %4841 = vmatprep.subr.mxu0 0.0
  %4842 = vmatpush1.msra.mxu0 %v4806
  %4843 = vmatprep.subr.mxu0 0.0
  %4844 = vmatpush1.msra.mxu0 %v4805
  %4845 = vmatprep.subr.mxu0 0.0
  %4846 = vmatpush2.msra.mxu0 0.0
  %4847 = vmatprep.subr.mxu0 0.0
  %4848 = vmatpush2.msra.mxu0 0.0
  %4849 = vmatprep.subr.mxu0 0.0
  %4850 = vmatpush2.msra.mxu0 0.0
  %4851 = vmatprep.subr.mxu0 0.0
  %4852 = vmatpush2.msra.mxu0 0.0
  %4853 = vmatprep.subr.mxu0 0.0
  %4854 = vmatpush2.msra.mxu0 0.0
  %4855 = vmatprep.subr.mxu0 0.0
  %4856 = vmatpush2.msra.mxu0 0.0
  %4857 = vmatprep.subr.mxu0 0.0
  %4858 = vmatpush2.msra.mxu0 0.0
  %4859 = vmatprep.subr.mxu0 0.0
  %4860 = vmatpush2.msra.mxu0 0.0
  %4861 = vmatprep.subr.mxu0 0.0
  %4862 = vmatpush2.msra.mxu0 0.0
  %4863 = vmatprep.subr.mxu0 0.0
  %4864 = vmatpush2.msra.mxu0 0.0
  %4865 = vmatprep.subr.mxu0 0.0
  %4866 = vmatpush2.msra.mxu0 0.0
  %4867 = vmatprep.subr.mxu0 0.0
  %4868 = vmatpush2.msra.mxu0 0.0
  %4869 = vmatprep.subr.mxu0 0.0
  %4870 = vmatpush2.msra.mxu0 0.0
  %4871 = vmatprep.subr.mxu0 0.0
  %4872 = vmatpush2.msra.mxu0 0.0
  %4873 = vmatprep.subr.mxu0 0.0
  %4874 = vmatpush2.msra.mxu0 0.0
  %4875 = vmatprep.subr.mxu0 0.0
  %4876 = vmatpush2.msra.mxu0 0.0
  %4877 = vmatprep.mubr.f32.mxu0 0.0
  %4878 = vmatmul.mubr.f32.gmra.mxu0 %v3106
  %v4879 = vpop.f32.mrf.mxu0
  %v4880 = vadd.f32 0.0, %v4879
  %v4881 = vpop.f32.mrf.mxu0
  %4882 = vmatprep.mubr.f32.mxu0 0.0
  %4883 = vmatmul.mubr.f32.gmra.mxu0 %v3109
  %v4884 = vpop.f32.mrf.mxu0
  %v4885 = vadd.f32 0.0, %v4884
  %v4886 = vpop.f32.mrf.mxu0
  %4887 = vdwg.mxu0
  %s4888 = scalar_lea.vmem %s5, 288
  %v4889 = vld [vmem:[%s4888] sm:$0xff]
  %v4890 = vld [vmem:[%s4888 + $0x8] sm:$0xff]
  %v4891 = vld [vmem:[%s4888 + $0x10] sm:$0xff]
  %v4892 = vld [vmem:[%s4888 + $0x18] sm:$0xff]
  %v4894 = vsel %vm3279, %v4889, 0
  %v4897 = vsel %vm3279, %v4890, 0
  %v4900 = vsel %vm3279, %v4891, 0
  %v4903 = vsel %vm3279, %v4892, 0
  %4905 = vmatprep.subr.mxu0 0.0
  %4906 = vmatpush1.msra.mxu0 0.0
  %4907 = vmatprep.subr.mxu0 0.0
  %4908 = vmatpush1.msra.mxu0 0.0
  %4909 = vmatprep.subr.mxu0 0.0
  %4910 = vmatpush1.msra.mxu0 0.0
  %4911 = vmatprep.subr.mxu0 0.0
  %4912 = vmatpush1.msra.mxu0 0.0
  %4913 = vmatprep.subr.mxu0 0.0
  %4914 = vmatpush1.msra.mxu0 0.0
  %4915 = vmatprep.subr.mxu0 0.0
  %4916 = vmatpush1.msra.mxu0 0.0
  %4917 = vmatprep.subr.mxu0 0.0
  %4918 = vmatpush1.msra.mxu0 0.0
  %4919 = vmatprep.subr.mxu0 0.0
  %4920 = vmatpush1.msra.mxu0 0.0
  %4921 = vmatprep.subr.mxu0 0.0
  %4922 = vmatpush1.msra.mxu0 0.0
  %4923 = vmatprep.subr.mxu0 0.0
  %4924 = vmatpush1.msra.mxu0 0.0
  %4925 = vmatprep.subr.mxu0 0.0
  %4926 = vmatpush1.msra.mxu0 0.0
  %4927 = vmatprep.subr.mxu0 0.0
  %4928 = vmatpush1.msra.mxu0 0.0
  %4929 = vmatprep.subr.mxu0 0.0
  %4930 = vmatpush1.msra.mxu0 0.0
  %4931 = vmatprep.subr.mxu0 0.0
  %4932 = vmatpush1.msra.mxu0 0.0
  %4933 = vmatprep.subr.mxu0 0.0
  %4934 = vmatpush1.msra.mxu0 %v4885
  %4935 = vmatprep.subr.mxu0 0.0
  %4936 = vmatpush1.msra.mxu0 %v4880
  %4937 = vmatprep.subr.mxu0 0.0
  %4938 = vmatpush2.msra.mxu0 0.0
  %4939 = vmatprep.subr.mxu0 0.0
  %4940 = vmatpush2.msra.mxu0 0.0
  %4941 = vmatprep.subr.mxu0 0.0
  %4942 = vmatpush2.msra.mxu0 0.0
  %4943 = vmatprep.subr.mxu0 0.0
  %4944 = vmatpush2.msra.mxu0 0.0
  %4945 = vmatprep.subr.mxu0 0.0
  %4946 = vmatpush2.msra.mxu0 0.0
  %4947 = vmatprep.subr.mxu0 0.0
  %4948 = vmatpush2.msra.mxu0 0.0
  %4949 = vmatprep.subr.mxu0 0.0
  %4950 = vmatpush2.msra.mxu0 0.0
  %4951 = vmatprep.subr.mxu0 0.0
  %4952 = vmatpush2.msra.mxu0 0.0
  %4953 = vmatprep.subr.mxu0 0.0
  %4954 = vmatpush2.msra.mxu0 0.0
  %4955 = vmatprep.subr.mxu0 0.0
  %4956 = vmatpush2.msra.mxu0 0.0
  %4957 = vmatprep.subr.mxu0 0.0
  %4958 = vmatpush2.msra.mxu0 0.0
  %4959 = vmatprep.subr.mxu0 0.0
  %4960 = vmatpush2.msra.mxu0 0.0
  %4961 = vmatprep.subr.mxu0 0.0
  %4962 = vmatpush2.msra.mxu0 0.0
  %4963 = vmatprep.subr.mxu0 0.0
  %4964 = vmatpush2.msra.mxu0 0.0
  %4965 = vmatprep.subr.mxu0 0.0
  %4966 = vmatpush2.msra.mxu0 0.0
  %4967 = vmatprep.subr.mxu0 0.0
  %4968 = vmatpush2.msra.mxu0 0.0
  %4969 = vmatprep.mubr.f32.mxu0 0.0
  %4970 = vmatmul.mubr.f32.gmra.mxu0 %v4894
  %v4971 = vpop.f32.mrf.mxu0
  %v4972 = vadd.f32 0.0, %v4971
  %v4973 = vpop.f32.mrf.mxu0
  %4974 = vmatprep.mubr.f32.mxu0 0.0
  %4975 = vmatmul.mubr.f32.gmra.mxu0 %v4897
  %v4976 = vpop.f32.mrf.mxu0
  %v4977 = vadd.f32 0.0, %v4976
  %v4978 = vpop.f32.mrf.mxu0
  %4979 = vmatprep.mubr.f32.mxu0 0.0
  %4980 = vmatmul.mubr.f32.gmra.mxu0 %v4900
  %v4981 = vpop.f32.mrf.mxu0
  %v4982 = vadd.f32 0.0, %v4981
  %v4983 = vpop.f32.mrf.mxu0
  %4984 = vmatprep.mubr.f32.mxu0 0.0
  %4985 = vmatmul.mubr.f32.gmra.mxu0 %v4903
  %v4986 = vpop.f32.mrf.mxu0
  %v4987 = vadd.f32 0.0, %v4986
  %v4988 = vpop.f32.mrf.mxu0
  %4989 = vdwg.mxu0
  %v4990 = vadd.f32 %v4800, %v4972
  %v4991 = vadd.f32 %v4801, %v4977
  %v4992 = vadd.f32 %v4802, %v4982
  %v4993 = vadd.f32 %v4803, %v4987
  %s4994 = scalar_lea.vmem %s4, 640
  %v4995 = vld [vmem:[%s4994] sm:$0xff]
  %v4996 = vld [vmem:[%s4994 + $0x8] sm:$0xff]
  %v4997 = vld [vmem:[%s4994 + $0x10] sm:$0xff]
  %v4998 = vld [vmem:[%s4994 + $0x18] sm:$0xff]
  %v4999 = vld [vmem:[%s4994 + $0x20] sm:$0xff]
  %v5000 = vld [vmem:[%s4994 + $0x28] sm:$0xff]
  %v5001 = vld [vmem:[%s4994 + $0x30] sm:$0xff]
  %v5002 = vld [vmem:[%s4994 + $0x38] sm:$0xff]
  %5003 = vmatprep.subr.mxu0 0.0
  %5004 = vmatpush1.msra.mxu0 0.0
  %5005 = vmatprep.subr.mxu0 0.0
  %5006 = vmatpush1.msra.mxu0 0.0
  %5007 = vmatprep.subr.mxu0 0.0
  %5008 = vmatpush1.msra.mxu0 0.0
  %5009 = vmatprep.subr.mxu0 0.0
  %5010 = vmatpush1.msra.mxu0 0.0
  %5011 = vmatprep.subr.mxu0 0.0
  %5012 = vmatpush1.msra.mxu0 0.0
  %5013 = vmatprep.subr.mxu0 0.0
  %5014 = vmatpush1.msra.mxu0 0.0
  %5015 = vmatprep.subr.mxu0 0.0
  %5016 = vmatpush1.msra.mxu0 0.0
  %5017 = vmatprep.subr.mxu0 0.0
  %5018 = vmatpush1.msra.mxu0 0.0
  %5019 = vmatprep.subr.mxu0 0.0
  %5020 = vmatpush1.msra.mxu0 %v5002
  %5021 = vmatprep.subr.mxu0 0.0
  %5022 = vmatpush1.msra.mxu0 %v5001
  %5023 = vmatprep.subr.mxu0 0.0
  %5024 = vmatpush1.msra.mxu0 %v5000
  %5025 = vmatprep.subr.mxu0 0.0
  %5026 = vmatpush1.msra.mxu0 %v4999
  %5027 = vmatprep.subr.mxu0 0.0
  %5028 = vmatpush1.msra.mxu0 %v4998
  %5029 = vmatprep.subr.mxu0 0.0
  %5030 = vmatpush1.msra.mxu0 %v4997
  %5031 = vmatprep.subr.mxu0 0.0
  %5032 = vmatpush1.msra.mxu0 %v4996
  %5033 = vmatprep.subr.mxu0 0.0
  %5034 = vmatpush1.msra.mxu0 %v4995
  %5035 = vmatprep.subr.mxu0 0.0
  %5036 = vmatpush2.msra.mxu0 0.0
  %5037 = vmatprep.subr.mxu0 0.0
  %5038 = vmatpush2.msra.mxu0 0.0
  %5039 = vmatprep.subr.mxu0 0.0
  %5040 = vmatpush2.msra.mxu0 0.0
  %5041 = vmatprep.subr.mxu0 0.0
  %5042 = vmatpush2.msra.mxu0 0.0
  %5043 = vmatprep.subr.mxu0 0.0
  %5044 = vmatpush2.msra.mxu0 0.0
  %5045 = vmatprep.subr.mxu0 0.0
  %5046 = vmatpush2.msra.mxu0 0.0
  %5047 = vmatprep.subr.mxu0 0.0
  %5048 = vmatpush2.msra.mxu0 0.0
  %5049 = vmatprep.subr.mxu0 0.0
  %5050 = vmatpush2.msra.mxu0 0.0
  %5051 = vmatprep.subr.mxu0 0.0
  %5052 = vmatpush2.msra.mxu0 0.0
  %5053 = vmatprep.subr.mxu0 0.0
  %5054 = vmatpush2.msra.mxu0 0.0
  %5055 = vmatprep.subr.mxu0 0.0
  %5056 = vmatpush2.msra.mxu0 0.0
  %5057 = vmatprep.subr.mxu0 0.0
  %5058 = vmatpush2.msra.mxu0 0.0
  %5059 = vmatprep.subr.mxu0 0.0
  %5060 = vmatpush2.msra.mxu0 0.0
  %5061 = vmatprep.subr.mxu0 0.0
  %5062 = vmatpush2.msra.mxu0 0.0
  %5063 = vmatprep.subr.mxu0 0.0
  %5064 = vmatpush2.msra.mxu0 0.0
  %5065 = vmatprep.subr.mxu0 0.0
  %5066 = vmatpush2.msra.mxu0 0.0
  %5067 = vmatprep.mubr.f32.mxu0 0.0
  %5068 = vmatmul.mubr.f32.gmra.mxu0 %v3106
  %v5069 = vpop.f32.mrf.mxu0
  %v5070 = vadd.f32 0.0, %v5069
  %v5071 = vpop.f32.mrf.mxu0
  %5072 = vmatprep.mubr.f32.mxu0 0.0
  %5073 = vmatmul.mubr.f32.gmra.mxu0 %v3109
  %v5074 = vpop.f32.mrf.mxu0
  %v5075 = vadd.f32 0.0, %v5074
  %v5076 = vpop.f32.mrf.mxu0
  %5077 = vdwg.mxu0
  %s5078 = scalar_lea.vmem %s5, 320
  %v5079 = vld [vmem:[%s5078] sm:$0xff]
  %v5080 = vld [vmem:[%s5078 + $0x8] sm:$0xff]
  %v5081 = vld [vmem:[%s5078 + $0x10] sm:$0xff]
  %v5082 = vld [vmem:[%s5078 + $0x18] sm:$0xff]
  %v5084 = vsel %vm3279, %v5079, 0
  %v5087 = vsel %vm3279, %v5080, 0
  %v5090 = vsel %vm3279, %v5081, 0
  %v5093 = vsel %vm3279, %v5082, 0
  %5095 = vmatprep.subr.mxu0 0.0
  %5096 = vmatpush1.msra.mxu0 0.0
  %5097 = vmatprep.subr.mxu0 0.0
  %5098 = vmatpush1.msra.mxu0 0.0
  %5099 = vmatprep.subr.mxu0 0.0
  %5100 = vmatpush1.msra.mxu0 0.0
  %5101 = vmatprep.subr.mxu0 0.0
  %5102 = vmatpush1.msra.mxu0 0.0
  %5103 = vmatprep.subr.mxu0 0.0
  %5104 = vmatpush1.msra.mxu0 0.0
  %5105 = vmatprep.subr.mxu0 0.0
  %5106 = vmatpush1.msra.mxu0 0.0
  %5107 = vmatprep.subr.mxu0 0.0
  %5108 = vmatpush1.msra.mxu0 0.0
  %5109 = vmatprep.subr.mxu0 0.0
  %5110 = vmatpush1.msra.mxu0 0.0
  %5111 = vmatprep.subr.mxu0 0.0
  %5112 = vmatpush1.msra.mxu0 0.0
  %5113 = vmatprep.subr.mxu0 0.0
  %5114 = vmatpush1.msra.mxu0 0.0
  %5115 = vmatprep.subr.mxu0 0.0
  %5116 = vmatpush1.msra.mxu0 0.0
  %5117 = vmatprep.subr.mxu0 0.0
  %5118 = vmatpush1.msra.mxu0 0.0
  %5119 = vmatprep.subr.mxu0 0.0
  %5120 = vmatpush1.msra.mxu0 0.0
  %5121 = vmatprep.subr.mxu0 0.0
  %5122 = vmatpush1.msra.mxu0 0.0
  %5123 = vmatprep.subr.mxu0 0.0
  %5124 = vmatpush1.msra.mxu0 %v5075
  %5125 = vmatprep.subr.mxu0 0.0
  %5126 = vmatpush1.msra.mxu0 %v5070
  %5127 = vmatprep.subr.mxu0 0.0
  %5128 = vmatpush2.msra.mxu0 0.0
  %5129 = vmatprep.subr.mxu0 0.0
  %5130 = vmatpush2.msra.mxu0 0.0
  %5131 = vmatprep.subr.mxu0 0.0
  %5132 = vmatpush2.msra.mxu0 0.0
  %5133 = vmatprep.subr.mxu0 0.0
  %5134 = vmatpush2.msra.mxu0 0.0
  %5135 = vmatprep.subr.mxu0 0.0
  %5136 = vmatpush2.msra.mxu0 0.0
  %5137 = vmatprep.subr.mxu0 0.0
  %5138 = vmatpush2.msra.mxu0 0.0
  %5139 = vmatprep.subr.mxu0 0.0
  %5140 = vmatpush2.msra.mxu0 0.0
  %5141 = vmatprep.subr.mxu0 0.0
  %5142 = vmatpush2.msra.mxu0 0.0
  %5143 = vmatprep.subr.mxu0 0.0
  %5144 = vmatpush2.msra.mxu0 0.0
  %5145 = vmatprep.subr.mxu0 0.0
  %5146 = vmatpush2.msra.mxu0 0.0
  %5147 = vmatprep.subr.mxu0 0.0
  %5148 = vmatpush2.msra.mxu0 0.0
  %5149 = vmatprep.subr.mxu0 0.0
  %5150 = vmatpush2.msra.mxu0 0.0
  %5151 = vmatprep.subr.mxu0 0.0
  %5152 = vmatpush2.msra.mxu0 0.0
  %5153 = vmatprep.subr.mxu0 0.0
  %5154 = vmatpush2.msra.mxu0 0.0
  %5155 = vmatprep.subr.mxu0 0.0
  %5156 = vmatpush2.msra.mxu0 0.0
  %5157 = vmatprep.subr.mxu0 0.0
  %5158 = vmatpush2.msra.mxu0 0.0
  %5159 = vmatprep.mubr.f32.mxu0 0.0
  %5160 = vmatmul.mubr.f32.gmra.mxu0 %v5084
  %v5161 = vpop.f32.mrf.mxu0
  %v5162 = vadd.f32 0.0, %v5161
  %v5163 = vpop.f32.mrf.mxu0
  %5164 = vmatprep.mubr.f32.mxu0 0.0
  %5165 = vmatmul.mubr.f32.gmra.mxu0 %v5087
  %v5166 = vpop.f32.mrf.mxu0
  %v5167 = vadd.f32 0.0, %v5166
  %v5168 = vpop.f32.mrf.mxu0
  %5169 = vmatprep.mubr.f32.mxu0 0.0
  %5170 = vmatmul.mubr.f32.gmra.mxu0 %v5090
  %v5171 = vpop.f32.mrf.mxu0
  %v5172 = vadd.f32 0.0, %v5171
  %v5173 = vpop.f32.mrf.mxu0
  %5174 = vmatprep.mubr.f32.mxu0 0.0
  %5175 = vmatmul.mubr.f32.gmra.mxu0 %v5093
  %v5176 = vpop.f32.mrf.mxu0
  %v5177 = vadd.f32 0.0, %v5176
  %v5178 = vpop.f32.mrf.mxu0
  %5179 = vdwg.mxu0
  %v5180 = vadd.f32 %v4990, %v5162
  %v5181 = vadd.f32 %v4991, %v5167
  %v5182 = vadd.f32 %v4992, %v5172
  %v5183 = vadd.f32 %v4993, %v5177
  %s5184 = scalar_lea.vmem %s4, 704
  %v5185 = vld [vmem:[%s5184] sm:$0xff]
  %v5186 = vld [vmem:[%s5184 + $0x8] sm:$0xff]
  %v5187 = vld [vmem:[%s5184 + $0x10] sm:$0xff]
  %v5188 = vld [vmem:[%s5184 + $0x18] sm:$0xff]
  %v5189 = vld [vmem:[%s5184 + $0x20] sm:$0xff]
  %v5190 = vld [vmem:[%s5184 + $0x28] sm:$0xff]
  %v5191 = vld [vmem:[%s5184 + $0x30] sm:$0xff]
  %v5192 = vld [vmem:[%s5184 + $0x38] sm:$0xff]
  %5193 = vmatprep.subr.mxu0 0.0
  %5194 = vmatpush1.msra.mxu0 0.0
  %5195 = vmatprep.subr.mxu0 0.0
  %5196 = vmatpush1.msra.mxu0 0.0
  %5197 = vmatprep.subr.mxu0 0.0
  %5198 = vmatpush1.msra.mxu0 0.0
  %5199 = vmatprep.subr.mxu0 0.0
  %5200 = vmatpush1.msra.mxu0 0.0
  %5201 = vmatprep.subr.mxu0 0.0
  %5202 = vmatpush1.msra.mxu0 0.0
  %5203 = vmatprep.subr.mxu0 0.0
  %5204 = vmatpush1.msra.mxu0 0.0
  %5205 = vmatprep.subr.mxu0 0.0
  %5206 = vmatpush1.msra.mxu0 0.0
  %5207 = vmatprep.subr.mxu0 0.0
  %5208 = vmatpush1.msra.mxu0 0.0
  %5209 = vmatprep.subr.mxu0 0.0
  %5210 = vmatpush1.msra.mxu0 %v5192
  %5211 = vmatprep.subr.mxu0 0.0
  %5212 = vmatpush1.msra.mxu0 %v5191
  %5213 = vmatprep.subr.mxu0 0.0
  %5214 = vmatpush1.msra.mxu0 %v5190
  %5215 = vmatprep.subr.mxu0 0.0
  %5216 = vmatpush1.msra.mxu0 %v5189
  %5217 = vmatprep.subr.mxu0 0.0
  %5218 = vmatpush1.msra.mxu0 %v5188
  %5219 = vmatprep.subr.mxu0 0.0
  %5220 = vmatpush1.msra.mxu0 %v5187
  %5221 = vmatprep.subr.mxu0 0.0
  %5222 = vmatpush1.msra.mxu0 %v5186
  %5223 = vmatprep.subr.mxu0 0.0
  %5224 = vmatpush1.msra.mxu0 %v5185
  %5225 = vmatprep.subr.mxu0 0.0
  %5226 = vmatpush2.msra.mxu0 0.0
  %5227 = vmatprep.subr.mxu0 0.0
  %5228 = vmatpush2.msra.mxu0 0.0
  %5229 = vmatprep.subr.mxu0 0.0
  %5230 = vmatpush2.msra.mxu0 0.0
  %5231 = vmatprep.subr.mxu0 0.0
  %5232 = vmatpush2.msra.mxu0 0.0
  %5233 = vmatprep.subr.mxu0 0.0
  %5234 = vmatpush2.msra.mxu0 0.0
  %5235 = vmatprep.subr.mxu0 0.0
  %5236 = vmatpush2.msra.mxu0 0.0
  %5237 = vmatprep.subr.mxu0 0.0
  %5238 = vmatpush2.msra.mxu0 0.0
  %5239 = vmatprep.subr.mxu0 0.0
  %5240 = vmatpush2.msra.mxu0 0.0
  %5241 = vmatprep.subr.mxu0 0.0
  %5242 = vmatpush2.msra.mxu0 0.0
  %5243 = vmatprep.subr.mxu0 0.0
  %5244 = vmatpush2.msra.mxu0 0.0
  %5245 = vmatprep.subr.mxu0 0.0
  %5246 = vmatpush2.msra.mxu0 0.0
  %5247 = vmatprep.subr.mxu0 0.0
  %5248 = vmatpush2.msra.mxu0 0.0
  %5249 = vmatprep.subr.mxu0 0.0
  %5250 = vmatpush2.msra.mxu0 0.0
  %5251 = vmatprep.subr.mxu0 0.0
  %5252 = vmatpush2.msra.mxu0 0.0
  %5253 = vmatprep.subr.mxu0 0.0
  %5254 = vmatpush2.msra.mxu0 0.0
  %5255 = vmatprep.subr.mxu0 0.0
  %5256 = vmatpush2.msra.mxu0 0.0
  %5257 = vmatprep.mubr.f32.mxu0 0.0
  %5258 = vmatmul.mubr.f32.gmra.mxu0 %v3106
  %v5259 = vpop.f32.mrf.mxu0
  %v5260 = vadd.f32 0.0, %v5259
  %v5261 = vpop.f32.mrf.mxu0
  %5262 = vmatprep.mubr.f32.mxu0 0.0
  %5263 = vmatmul.mubr.f32.gmra.mxu0 %v3109
  %v5264 = vpop.f32.mrf.mxu0
  %v5265 = vadd.f32 0.0, %v5264
  %v5266 = vpop.f32.mrf.mxu0
  %5267 = vdwg.mxu0
  %s5268 = scalar_lea.vmem %s5, 352
  %v5269 = vld [vmem:[%s5268] sm:$0xff]
  %v5270 = vld [vmem:[%s5268 + $0x8] sm:$0xff]
  %v5271 = vld [vmem:[%s5268 + $0x10] sm:$0xff]
  %v5272 = vld [vmem:[%s5268 + $0x18] sm:$0xff]
  %v5274 = vsel %vm3279, %v5269, 0
  %v5277 = vsel %vm3279, %v5270, 0
  %v5280 = vsel %vm3279, %v5271, 0
  %v5283 = vsel %vm3279, %v5272, 0
  %5285 = vmatprep.subr.mxu0 0.0
  %5286 = vmatpush1.msra.mxu0 0.0
  %5287 = vmatprep.subr.mxu0 0.0
  %5288 = vmatpush1.msra.mxu0 0.0
  %5289 = vmatprep.subr.mxu0 0.0
  %5290 = vmatpush1.msra.mxu0 0.0
  %5291 = vmatprep.subr.mxu0 0.0
  %5292 = vmatpush1.msra.mxu0 0.0
  %5293 = vmatprep.subr.mxu0 0.0
  %5294 = vmatpush1.msra.mxu0 0.0
  %5295 = vmatprep.subr.mxu0 0.0
  %5296 = vmatpush1.msra.mxu0 0.0
  %5297 = vmatprep.subr.mxu0 0.0
  %5298 = vmatpush1.msra.mxu0 0.0
  %5299 = vmatprep.subr.mxu0 0.0
  %5300 = vmatpush1.msra.mxu0 0.0
  %5301 = vmatprep.subr.mxu0 0.0
  %5302 = vmatpush1.msra.mxu0 0.0
  %5303 = vmatprep.subr.mxu0 0.0
  %5304 = vmatpush1.msra.mxu0 0.0
  %5305 = vmatprep.subr.mxu0 0.0
  %5306 = vmatpush1.msra.mxu0 0.0
  %5307 = vmatprep.subr.mxu0 0.0
  %5308 = vmatpush1.msra.mxu0 0.0
  %5309 = vmatprep.subr.mxu0 0.0
  %5310 = vmatpush1.msra.mxu0 0.0
  %5311 = vmatprep.subr.mxu0 0.0
  %5312 = vmatpush1.msra.mxu0 0.0
  %5313 = vmatprep.subr.mxu0 0.0
  %5314 = vmatpush1.msra.mxu0 %v5265
  %5315 = vmatprep.subr.mxu0 0.0
  %5316 = vmatpush1.msra.mxu0 %v5260
  %5317 = vmatprep.subr.mxu0 0.0
  %5318 = vmatpush2.msra.mxu0 0.0
  %5319 = vmatprep.subr.mxu0 0.0
  %5320 = vmatpush2.msra.mxu0 0.0
  %5321 = vmatprep.subr.mxu0 0.0
  %5322 = vmatpush2.msra.mxu0 0.0
  %5323 = vmatprep.subr.mxu0 0.0
  %5324 = vmatpush2.msra.mxu0 0.0
  %5325 = vmatprep.subr.mxu0 0.0
  %5326 = vmatpush2.msra.mxu0 0.0
  %5327 = vmatprep.subr.mxu0 0.0
  %5328 = vmatpush2.msra.mxu0 0.0
  %5329 = vmatprep.subr.mxu0 0.0
  %5330 = vmatpush2.msra.mxu0 0.0
  %5331 = vmatprep.subr.mxu0 0.0
  %5332 = vmatpush2.msra.mxu0 0.0
  %5333 = vmatprep.subr.mxu0 0.0
  %5334 = vmatpush2.msra.mxu0 0.0
  %5335 = vmatprep.subr.mxu0 0.0
  %5336 = vmatpush2.msra.mxu0 0.0
  %5337 = vmatprep.subr.mxu0 0.0
  %5338 = vmatpush2.msra.mxu0 0.0
  %5339 = vmatprep.subr.mxu0 0.0
  %5340 = vmatpush2.msra.mxu0 0.0
  %5341 = vmatprep.subr.mxu0 0.0
  %5342 = vmatpush2.msra.mxu0 0.0
  %5343 = vmatprep.subr.mxu0 0.0
  %5344 = vmatpush2.msra.mxu0 0.0
  %5345 = vmatprep.subr.mxu0 0.0
  %5346 = vmatpush2.msra.mxu0 0.0
  %5347 = vmatprep.subr.mxu0 0.0
  %5348 = vmatpush2.msra.mxu0 0.0
  %5349 = vmatprep.mubr.f32.mxu0 0.0
  %5350 = vmatmul.mubr.f32.gmra.mxu0 %v5274
  %v5351 = vpop.f32.mrf.mxu0
  %v5352 = vadd.f32 0.0, %v5351
  %v5353 = vpop.f32.mrf.mxu0
  %5354 = vmatprep.mubr.f32.mxu0 0.0
  %5355 = vmatmul.mubr.f32.gmra.mxu0 %v5277
  %v5356 = vpop.f32.mrf.mxu0
  %v5357 = vadd.f32 0.0, %v5356
  %v5358 = vpop.f32.mrf.mxu0
  %5359 = vmatprep.mubr.f32.mxu0 0.0
  %5360 = vmatmul.mubr.f32.gmra.mxu0 %v5280
  %v5361 = vpop.f32.mrf.mxu0
  %v5362 = vadd.f32 0.0, %v5361
  %v5363 = vpop.f32.mrf.mxu0
  %5364 = vmatprep.mubr.f32.mxu0 0.0
  %5365 = vmatmul.mubr.f32.gmra.mxu0 %v5283
  %v5366 = vpop.f32.mrf.mxu0
  %v5367 = vadd.f32 0.0, %v5366
  %v5368 = vpop.f32.mrf.mxu0
  %5369 = vdwg.mxu0
  %v5370 = vadd.f32 %v5180, %v5352
  %v5371 = vadd.f32 %v5181, %v5357
  %v5372 = vadd.f32 %v5182, %v5362
  %v5373 = vadd.f32 %v5183, %v5367
  %s5374 = scalar_lea.vmem %s4, 768
  %v5375 = vld [vmem:[%s5374] sm:$0xff]
  %v5376 = vld [vmem:[%s5374 + $0x8] sm:$0xff]
  %v5377 = vld [vmem:[%s5374 + $0x10] sm:$0xff]
  %v5378 = vld [vmem:[%s5374 + $0x18] sm:$0xff]
  %v5379 = vld [vmem:[%s5374 + $0x20] sm:$0xff]
  %v5380 = vld [vmem:[%s5374 + $0x28] sm:$0xff]
  %v5381 = vld [vmem:[%s5374 + $0x30] sm:$0xff]
  %v5382 = vld [vmem:[%s5374 + $0x38] sm:$0xff]
  %5383 = vmatprep.subr.mxu0 0.0
  %5384 = vmatpush1.msra.mxu0 0.0
  %5385 = vmatprep.subr.mxu0 0.0
  %5386 = vmatpush1.msra.mxu0 0.0
  %5387 = vmatprep.subr.mxu0 0.0
  %5388 = vmatpush1.msra.mxu0 0.0
  %5389 = vmatprep.subr.mxu0 0.0
  %5390 = vmatpush1.msra.mxu0 0.0
  %5391 = vmatprep.subr.mxu0 0.0
  %5392 = vmatpush1.msra.mxu0 0.0
  %5393 = vmatprep.subr.mxu0 0.0
  %5394 = vmatpush1.msra.mxu0 0.0
  %5395 = vmatprep.subr.mxu0 0.0
  %5396 = vmatpush1.msra.mxu0 0.0
  %5397 = vmatprep.subr.mxu0 0.0
  %5398 = vmatpush1.msra.mxu0 0.0
  %5399 = vmatprep.subr.mxu0 0.0
  %5400 = vmatpush1.msra.mxu0 %v5382
  %5401 = vmatprep.subr.mxu0 0.0
  %5402 = vmatpush1.msra.mxu0 %v5381
  %5403 = vmatprep.subr.mxu0 0.0
  %5404 = vmatpush1.msra.mxu0 %v5380
  %5405 = vmatprep.subr.mxu0 0.0
  %5406 = vmatpush1.msra.mxu0 %v5379
  %5407 = vmatprep.subr.mxu0 0.0
  %5408 = vmatpush1.msra.mxu0 %v5378
  %5409 = vmatprep.subr.mxu0 0.0
  %5410 = vmatpush1.msra.mxu0 %v5377
  %5411 = vmatprep.subr.mxu0 0.0
  %5412 = vmatpush1.msra.mxu0 %v5376
  %5413 = vmatprep.subr.mxu0 0.0
  %5414 = vmatpush1.msra.mxu0 %v5375
  %5415 = vmatprep.subr.mxu0 0.0
  %5416 = vmatpush2.msra.mxu0 0.0
  %5417 = vmatprep.subr.mxu0 0.0
  %5418 = vmatpush2.msra.mxu0 0.0
  %5419 = vmatprep.subr.mxu0 0.0
  %5420 = vmatpush2.msra.mxu0 0.0
  %5421 = vmatprep.subr.mxu0 0.0
  %5422 = vmatpush2.msra.mxu0 0.0
  %5423 = vmatprep.subr.mxu0 0.0
  %5424 = vmatpush2.msra.mxu0 0.0
  %5425 = vmatprep.subr.mxu0 0.0
  %5426 = vmatpush2.msra.mxu0 0.0
  %5427 = vmatprep.subr.mxu0 0.0
  %5428 = vmatpush2.msra.mxu0 0.0
  %5429 = vmatprep.subr.mxu0 0.0
  %5430 = vmatpush2.msra.mxu0 0.0
  %5431 = vmatprep.subr.mxu0 0.0
  %5432 = vmatpush2.msra.mxu0 0.0
  %5433 = vmatprep.subr.mxu0 0.0
  %5434 = vmatpush2.msra.mxu0 0.0
  %5435 = vmatprep.subr.mxu0 0.0
  %5436 = vmatpush2.msra.mxu0 0.0
  %5437 = vmatprep.subr.mxu0 0.0
  %5438 = vmatpush2.msra.mxu0 0.0
  %5439 = vmatprep.subr.mxu0 0.0
  %5440 = vmatpush2.msra.mxu0 0.0
  %5441 = vmatprep.subr.mxu0 0.0
  %5442 = vmatpush2.msra.mxu0 0.0
  %5443 = vmatprep.subr.mxu0 0.0
  %5444 = vmatpush2.msra.mxu0 0.0
  %5445 = vmatprep.subr.mxu0 0.0
  %5446 = vmatpush2.msra.mxu0 0.0
  %5447 = vmatprep.mubr.f32.mxu0 0.0
  %5448 = vmatmul.mubr.f32.gmra.mxu0 %v3106
  %v5449 = vpop.f32.mrf.mxu0
  %v5450 = vadd.f32 0.0, %v5449
  %v5451 = vpop.f32.mrf.mxu0
  %5452 = vmatprep.mubr.f32.mxu0 0.0
  %5453 = vmatmul.mubr.f32.gmra.mxu0 %v3109
  %v5454 = vpop.f32.mrf.mxu0
  %v5455 = vadd.f32 0.0, %v5454
  %v5456 = vpop.f32.mrf.mxu0
  %5457 = vdwg.mxu0
  %s5458 = scalar_lea.vmem %s5, 384
  %v5459 = vld [vmem:[%s5458] sm:$0xff]
  %v5460 = vld [vmem:[%s5458 + $0x8] sm:$0xff]
  %v5461 = vld [vmem:[%s5458 + $0x10] sm:$0xff]
  %v5462 = vld [vmem:[%s5458 + $0x18] sm:$0xff]
  %v5464 = vsel %vm3279, %v5459, 0
  %v5467 = vsel %vm3279, %v5460, 0
  %v5470 = vsel %vm3279, %v5461, 0
  %v5473 = vsel %vm3279, %v5462, 0
  %5475 = vmatprep.subr.mxu0 0.0
  %5476 = vmatpush1.msra.mxu0 0.0
  %5477 = vmatprep.subr.mxu0 0.0
  %5478 = vmatpush1.msra.mxu0 0.0
  %5479 = vmatprep.subr.mxu0 0.0
  %5480 = vmatpush1.msra.mxu0 0.0
  %5481 = vmatprep.subr.mxu0 0.0
  %5482 = vmatpush1.msra.mxu0 0.0
  %5483 = vmatprep.subr.mxu0 0.0
  %5484 = vmatpush1.msra.mxu0 0.0
  %5485 = vmatprep.subr.mxu0 0.0
  %5486 = vmatpush1.msra.mxu0 0.0
  %5487 = vmatprep.subr.mxu0 0.0
  %5488 = vmatpush1.msra.mxu0 0.0
  %5489 = vmatprep.subr.mxu0 0.0
  %5490 = vmatpush1.msra.mxu0 0.0
  %5491 = vmatprep.subr.mxu0 0.0
  %5492 = vmatpush1.msra.mxu0 0.0
  %5493 = vmatprep.subr.mxu0 0.0
  %5494 = vmatpush1.msra.mxu0 0.0
  %5495 = vmatprep.subr.mxu0 0.0
  %5496 = vmatpush1.msra.mxu0 0.0
  %5497 = vmatprep.subr.mxu0 0.0
  %5498 = vmatpush1.msra.mxu0 0.0
  %5499 = vmatprep.subr.mxu0 0.0
  %5500 = vmatpush1.msra.mxu0 0.0
  %5501 = vmatprep.subr.mxu0 0.0
  %5502 = vmatpush1.msra.mxu0 0.0
  %5503 = vmatprep.subr.mxu0 0.0
  %5504 = vmatpush1.msra.mxu0 %v5455
  %5505 = vmatprep.subr.mxu0 0.0
  %5506 = vmatpush1.msra.mxu0 %v5450
  %5507 = vmatprep.subr.mxu0 0.0
  %5508 = vmatpush2.msra.mxu0 0.0
  %5509 = vmatprep.subr.mxu0 0.0
  %5510 = vmatpush2.msra.mxu0 0.0
  %5511 = vmatprep.subr.mxu0 0.0
  %5512 = vmatpush2.msra.mxu0 0.0
  %5513 = vmatprep.subr.mxu0 0.0
  %5514 = vmatpush2.msra.mxu0 0.0
  %5515 = vmatprep.subr.mxu0 0.0
  %5516 = vmatpush2.msra.mxu0 0.0
  %5517 = vmatprep.subr.mxu0 0.0
  %5518 = vmatpush2.msra.mxu0 0.0
  %5519 = vmatprep.subr.mxu0 0.0
  %5520 = vmatpush2.msra.mxu0 0.0
  %5521 = vmatprep.subr.mxu0 0.0
  %5522 = vmatpush2.msra.mxu0 0.0
  %5523 = vmatprep.subr.mxu0 0.0
  %5524 = vmatpush2.msra.mxu0 0.0
  %5525 = vmatprep.subr.mxu0 0.0
  %5526 = vmatpush2.msra.mxu0 0.0
  %5527 = vmatprep.subr.mxu0 0.0
  %5528 = vmatpush2.msra.mxu0 0.0
  %5529 = vmatprep.subr.mxu0 0.0
  %5530 = vmatpush2.msra.mxu0 0.0
  %5531 = vmatprep.subr.mxu0 0.0
  %5532 = vmatpush2.msra.mxu0 0.0
  %5533 = vmatprep.subr.mxu0 0.0
  %5534 = vmatpush2.msra.mxu0 0.0
  %5535 = vmatprep.subr.mxu0 0.0
  %5536 = vmatpush2.msra.mxu0 0.0
  %5537 = vmatprep.subr.mxu0 0.0
  %5538 = vmatpush2.msra.mxu0 0.0
  %5539 = vmatprep.mubr.f32.mxu0 0.0
  %5540 = vmatmul.mubr.f32.gmra.mxu0 %v5464
  %v5541 = vpop.f32.mrf.mxu0
  %v5542 = vadd.f32 0.0, %v5541
  %v5543 = vpop.f32.mrf.mxu0
  %5544 = vmatprep.mubr.f32.mxu0 0.0
  %5545 = vmatmul.mubr.f32.gmra.mxu0 %v5467
  %v5546 = vpop.f32.mrf.mxu0
  %v5547 = vadd.f32 0.0, %v5546
  %v5548 = vpop.f32.mrf.mxu0
  %5549 = vmatprep.mubr.f32.mxu0 0.0
  %5550 = vmatmul.mubr.f32.gmra.mxu0 %v5470
  %v5551 = vpop.f32.mrf.mxu0
  %v5552 = vadd.f32 0.0, %v5551
  %v5553 = vpop.f32.mrf.mxu0
  %5554 = vmatprep.mubr.f32.mxu0 0.0
  %5555 = vmatmul.mubr.f32.gmra.mxu0 %v5473
  %v5556 = vpop.f32.mrf.mxu0
  %v5557 = vadd.f32 0.0, %v5556
  %v5558 = vpop.f32.mrf.mxu0
  %5559 = vdwg.mxu0
  %v5560 = vadd.f32 %v5370, %v5542
  %v5561 = vadd.f32 %v5371, %v5547
  %v5562 = vadd.f32 %v5372, %v5552
  %v5563 = vadd.f32 %v5373, %v5557
  %s5564 = scalar_lea.vmem %s4, 832
  %v5565 = vld [vmem:[%s5564] sm:$0xff]
  %v5566 = vld [vmem:[%s5564 + $0x8] sm:$0xff]
  %v5567 = vld [vmem:[%s5564 + $0x10] sm:$0xff]
  %v5568 = vld [vmem:[%s5564 + $0x18] sm:$0xff]
  %v5569 = vld [vmem:[%s5564 + $0x20] sm:$0xff]
  %v5570 = vld [vmem:[%s5564 + $0x28] sm:$0xff]
  %v5571 = vld [vmem:[%s5564 + $0x30] sm:$0xff]
  %v5572 = vld [vmem:[%s5564 + $0x38] sm:$0xff]
  %5573 = vmatprep.subr.mxu0 0.0
  %5574 = vmatpush1.msra.mxu0 0.0
  %5575 = vmatprep.subr.mxu0 0.0
  %5576 = vmatpush1.msra.mxu0 0.0
  %5577 = vmatprep.subr.mxu0 0.0
  %5578 = vmatpush1.msra.mxu0 0.0
  %5579 = vmatprep.subr.mxu0 0.0
  %5580 = vmatpush1.msra.mxu0 0.0
  %5581 = vmatprep.subr.mxu0 0.0
  %5582 = vmatpush1.msra.mxu0 0.0
  %5583 = vmatprep.subr.mxu0 0.0
  %5584 = vmatpush1.msra.mxu0 0.0
  %5585 = vmatprep.subr.mxu0 0.0
  %5586 = vmatpush1.msra.mxu0 0.0
  %5587 = vmatprep.subr.mxu0 0.0
  %5588 = vmatpush1.msra.mxu0 0.0
  %5589 = vmatprep.subr.mxu0 0.0
  %5590 = vmatpush1.msra.mxu0 %v5572
  %5591 = vmatprep.subr.mxu0 0.0
  %5592 = vmatpush1.msra.mxu0 %v5571
  %5593 = vmatprep.subr.mxu0 0.0
  %5594 = vmatpush1.msra.mxu0 %v5570
  %5595 = vmatprep.subr.mxu0 0.0
  %5596 = vmatpush1.msra.mxu0 %v5569
  %5597 = vmatprep.subr.mxu0 0.0
  %5598 = vmatpush1.msra.mxu0 %v5568
  %5599 = vmatprep.subr.mxu0 0.0
  %5600 = vmatpush1.msra.mxu0 %v5567
  %5601 = vmatprep.subr.mxu0 0.0
  %5602 = vmatpush1.msra.mxu0 %v5566
  %5603 = vmatprep.subr.mxu0 0.0
  %5604 = vmatpush1.msra.mxu0 %v5565
  %5605 = vmatprep.subr.mxu0 0.0
  %5606 = vmatpush2.msra.mxu0 0.0
  %5607 = vmatprep.subr.mxu0 0.0
  %5608 = vmatpush2.msra.mxu0 0.0
  %5609 = vmatprep.subr.mxu0 0.0
  %5610 = vmatpush2.msra.mxu0 0.0
  %5611 = vmatprep.subr.mxu0 0.0
  %5612 = vmatpush2.msra.mxu0 0.0
  %5613 = vmatprep.subr.mxu0 0.0
  %5614 = vmatpush2.msra.mxu0 0.0
  %5615 = vmatprep.subr.mxu0 0.0
  %5616 = vmatpush2.msra.mxu0 0.0
  %5617 = vmatprep.subr.mxu0 0.0
  %5618 = vmatpush2.msra.mxu0 0.0
  %5619 = vmatprep.subr.mxu0 0.0
  %5620 = vmatpush2.msra.mxu0 0.0
  %5621 = vmatprep.subr.mxu0 0.0
  %5622 = vmatpush2.msra.mxu0 0.0
  %5623 = vmatprep.subr.mxu0 0.0
  %5624 = vmatpush2.msra.mxu0 0.0
  %5625 = vmatprep.subr.mxu0 0.0
  %5626 = vmatpush2.msra.mxu0 0.0
  %5627 = vmatprep.subr.mxu0 0.0
  %5628 = vmatpush2.msra.mxu0 0.0
  %5629 = vmatprep.subr.mxu0 0.0
  %5630 = vmatpush2.msra.mxu0 0.0
  %5631 = vmatprep.subr.mxu0 0.0
  %5632 = vmatpush2.msra.mxu0 0.0
  %5633 = vmatprep.subr.mxu0 0.0
  %5634 = vmatpush2.msra.mxu0 0.0
  %5635 = vmatprep.subr.mxu0 0.0
  %5636 = vmatpush2.msra.mxu0 0.0
  %5637 = vmatprep.mubr.f32.mxu0 0.0
  %5638 = vmatmul.mubr.f32.gmra.mxu0 %v3106
  %v5639 = vpop.f32.mrf.mxu0
  %v5640 = vadd.f32 0.0, %v5639
  %v5641 = vpop.f32.mrf.mxu0
  %5642 = vmatprep.mubr.f32.mxu0 0.0
  %5643 = vmatmul.mubr.f32.gmra.mxu0 %v3109
  %v5644 = vpop.f32.mrf.mxu0
  %v5645 = vadd.f32 0.0, %v5644
  %v5646 = vpop.f32.mrf.mxu0
  %5647 = vdwg.mxu0
  %s5648 = scalar_lea.vmem %s5, 416
  %v5649 = vld [vmem:[%s5648] sm:$0xff]
  %v5650 = vld [vmem:[%s5648 + $0x8] sm:$0xff]
  %v5651 = vld [vmem:[%s5648 + $0x10] sm:$0xff]
  %v5652 = vld [vmem:[%s5648 + $0x18] sm:$0xff]
  %v5654 = vsel %vm3279, %v5649, 0
  %v5657 = vsel %vm3279, %v5650, 0
  %v5660 = vsel %vm3279, %v5651, 0
  %v5663 = vsel %vm3279, %v5652, 0
  %5665 = vmatprep.subr.mxu0 0.0
  %5666 = vmatpush1.msra.mxu0 0.0
  %5667 = vmatprep.subr.mxu0 0.0
  %5668 = vmatpush1.msra.mxu0 0.0
  %5669 = vmatprep.subr.mxu0 0.0
  %5670 = vmatpush1.msra.mxu0 0.0
  %5671 = vmatprep.subr.mxu0 0.0
  %5672 = vmatpush1.msra.mxu0 0.0
  %5673 = vmatprep.subr.mxu0 0.0
  %5674 = vmatpush1.msra.mxu0 0.0
  %5675 = vmatprep.subr.mxu0 0.0
  %5676 = vmatpush1.msra.mxu0 0.0
  %5677 = vmatprep.subr.mxu0 0.0
  %5678 = vmatpush1.msra.mxu0 0.0
  %5679 = vmatprep.subr.mxu0 0.0
  %5680 = vmatpush1.msra.mxu0 0.0
  %5681 = vmatprep.subr.mxu0 0.0
  %5682 = vmatpush1.msra.mxu0 0.0
  %5683 = vmatprep.subr.mxu0 0.0
  %5684 = vmatpush1.msra.mxu0 0.0
  %5685 = vmatprep.subr.mxu0 0.0
  %5686 = vmatpush1.msra.mxu0 0.0
  %5687 = vmatprep.subr.mxu0 0.0
  %5688 = vmatpush1.msra.mxu0 0.0
  %5689 = vmatprep.subr.mxu0 0.0
  %5690 = vmatpush1.msra.mxu0 0.0
  %5691 = vmatprep.subr.mxu0 0.0
  %5692 = vmatpush1.msra.mxu0 0.0
  %5693 = vmatprep.subr.mxu0 0.0
  %5694 = vmatpush1.msra.mxu0 %v5645
  %5695 = vmatprep.subr.mxu0 0.0
  %5696 = vmatpush1.msra.mxu0 %v5640
  %5697 = vmatprep.subr.mxu0 0.0
  %5698 = vmatpush2.msra.mxu0 0.0
  %5699 = vmatprep.subr.mxu0 0.0
  %5700 = vmatpush2.msra.mxu0 0.0
  %5701 = vmatprep.subr.mxu0 0.0
  %5702 = vmatpush2.msra.mxu0 0.0
  %5703 = vmatprep.subr.mxu0 0.0
  %5704 = vmatpush2.msra.mxu0 0.0
  %5705 = vmatprep.subr.mxu0 0.0
  %5706 = vmatpush2.msra.mxu0 0.0
  %5707 = vmatprep.subr.mxu0 0.0
  %5708 = vmatpush2.msra.mxu0 0.0
  %5709 = vmatprep.subr.mxu0 0.0
  %5710 = vmatpush2.msra.mxu0 0.0
  %5711 = vmatprep.subr.mxu0 0.0
  %5712 = vmatpush2.msra.mxu0 0.0
  %5713 = vmatprep.subr.mxu0 0.0
  %5714 = vmatpush2.msra.mxu0 0.0
  %5715 = vmatprep.subr.mxu0 0.0
  %5716 = vmatpush2.msra.mxu0 0.0
  %5717 = vmatprep.subr.mxu0 0.0
  %5718 = vmatpush2.msra.mxu0 0.0
  %5719 = vmatprep.subr.mxu0 0.0
  %5720 = vmatpush2.msra.mxu0 0.0
  %5721 = vmatprep.subr.mxu0 0.0
  %5722 = vmatpush2.msra.mxu0 0.0
  %5723 = vmatprep.subr.mxu0 0.0
  %5724 = vmatpush2.msra.mxu0 0.0
  %5725 = vmatprep.subr.mxu0 0.0
  %5726 = vmatpush2.msra.mxu0 0.0
  %5727 = vmatprep.subr.mxu0 0.0
  %5728 = vmatpush2.msra.mxu0 0.0
  %5729 = vmatprep.mubr.f32.mxu0 0.0
  %5730 = vmatmul.mubr.f32.gmra.mxu0 %v5654
  %v5731 = vpop.f32.mrf.mxu0
  %v5732 = vadd.f32 0.0, %v5731
  %v5733 = vpop.f32.mrf.mxu0
  %5734 = vmatprep.mubr.f32.mxu0 0.0
  %5735 = vmatmul.mubr.f32.gmra.mxu0 %v5657
  %v5736 = vpop.f32.mrf.mxu0
  %v5737 = vadd.f32 0.0, %v5736
  %v5738 = vpop.f32.mrf.mxu0
  %5739 = vmatprep.mubr.f32.mxu0 0.0
  %5740 = vmatmul.mubr.f32.gmra.mxu0 %v5660
  %v5741 = vpop.f32.mrf.mxu0
  %v5742 = vadd.f32 0.0, %v5741
  %v5743 = vpop.f32.mrf.mxu0
  %5744 = vmatprep.mubr.f32.mxu0 0.0
  %5745 = vmatmul.mubr.f32.gmra.mxu0 %v5663
  %v5746 = vpop.f32.mrf.mxu0
  %v5747 = vadd.f32 0.0, %v5746
  %v5748 = vpop.f32.mrf.mxu0
  %5749 = vdwg.mxu0
  %v5750 = vadd.f32 %v5560, %v5732
  %v5751 = vadd.f32 %v5561, %v5737
  %v5752 = vadd.f32 %v5562, %v5742
  %v5753 = vadd.f32 %v5563, %v5747
  %s5754 = scalar_lea.vmem %s4, 896
  %v5755 = vld [vmem:[%s5754] sm:$0xff]
  %v5756 = vld [vmem:[%s5754 + $0x8] sm:$0xff]
  %v5757 = vld [vmem:[%s5754 + $0x10] sm:$0xff]
  %v5758 = vld [vmem:[%s5754 + $0x18] sm:$0xff]
  %v5759 = vld [vmem:[%s5754 + $0x20] sm:$0xff]
  %v5760 = vld [vmem:[%s5754 + $0x28] sm:$0xff]
  %v5761 = vld [vmem:[%s5754 + $0x30] sm:$0xff]
  %v5762 = vld [vmem:[%s5754 + $0x38] sm:$0xff]
  %5763 = vmatprep.subr.mxu0 0.0
  %5764 = vmatpush1.msra.mxu0 0.0
  %5765 = vmatprep.subr.mxu0 0.0
  %5766 = vmatpush1.msra.mxu0 0.0
  %5767 = vmatprep.subr.mxu0 0.0
  %5768 = vmatpush1.msra.mxu0 0.0
  %5769 = vmatprep.subr.mxu0 0.0
  %5770 = vmatpush1.msra.mxu0 0.0
  %5771 = vmatprep.subr.mxu0 0.0
  %5772 = vmatpush1.msra.mxu0 0.0
  %5773 = vmatprep.subr.mxu0 0.0
  %5774 = vmatpush1.msra.mxu0 0.0
  %5775 = vmatprep.subr.mxu0 0.0
  %5776 = vmatpush1.msra.mxu0 0.0
  %5777 = vmatprep.subr.mxu0 0.0
  %5778 = vmatpush1.msra.mxu0 0.0
  %5779 = vmatprep.subr.mxu0 0.0
  %5780 = vmatpush1.msra.mxu0 %v5762
  %5781 = vmatprep.subr.mxu0 0.0
  %5782 = vmatpush1.msra.mxu0 %v5761
  %5783 = vmatprep.subr.mxu0 0.0
  %5784 = vmatpush1.msra.mxu0 %v5760
  %5785 = vmatprep.subr.mxu0 0.0
  %5786 = vmatpush1.msra.mxu0 %v5759
  %5787 = vmatprep.subr.mxu0 0.0
  %5788 = vmatpush1.msra.mxu0 %v5758
  %5789 = vmatprep.subr.mxu0 0.0
  %5790 = vmatpush1.msra.mxu0 %v5757
  %5791 = vmatprep.subr.mxu0 0.0
  %5792 = vmatpush1.msra.mxu0 %v5756
  %5793 = vmatprep.subr.mxu0 0.0
  %5794 = vmatpush1.msra.mxu0 %v5755
  %5795 = vmatprep.subr.mxu0 0.0
  %5796 = vmatpush2.msra.mxu0 0.0
  %5797 = vmatprep.subr.mxu0 0.0
  %5798 = vmatpush2.msra.mxu0 0.0
  %5799 = vmatprep.subr.mxu0 0.0
  %5800 = vmatpush2.msra.mxu0 0.0
  %5801 = vmatprep.subr.mxu0 0.0
  %5802 = vmatpush2.msra.mxu0 0.0
  %5803 = vmatprep.subr.mxu0 0.0
  %5804 = vmatpush2.msra.mxu0 0.0
  %5805 = vmatprep.subr.mxu0 0.0
  %5806 = vmatpush2.msra.mxu0 0.0
  %5807 = vmatprep.subr.mxu0 0.0
  %5808 = vmatpush2.msra.mxu0 0.0
  %5809 = vmatprep.subr.mxu0 0.0
  %5810 = vmatpush2.msra.mxu0 0.0
  %5811 = vmatprep.subr.mxu0 0.0
  %5812 = vmatpush2.msra.mxu0 0.0
  %5813 = vmatprep.subr.mxu0 0.0
  %5814 = vmatpush2.msra.mxu0 0.0
  %5815 = vmatprep.subr.mxu0 0.0
  %5816 = vmatpush2.msra.mxu0 0.0
  %5817 = vmatprep.subr.mxu0 0.0
  %5818 = vmatpush2.msra.mxu0 0.0
  %5819 = vmatprep.subr.mxu0 0.0
  %5820 = vmatpush2.msra.mxu0 0.0
  %5821 = vmatprep.subr.mxu0 0.0
  %5822 = vmatpush2.msra.mxu0 0.0
  %5823 = vmatprep.subr.mxu0 0.0
  %5824 = vmatpush2.msra.mxu0 0.0
  %5825 = vmatprep.subr.mxu0 0.0
  %5826 = vmatpush2.msra.mxu0 0.0
  %5827 = vmatprep.mubr.f32.mxu0 0.0
  %5828 = vmatmul.mubr.f32.gmra.mxu0 %v3106
  %v5829 = vpop.f32.mrf.mxu0
  %v5830 = vadd.f32 0.0, %v5829
  %v5831 = vpop.f32.mrf.mxu0
  %5832 = vmatprep.mubr.f32.mxu0 0.0
  %5833 = vmatmul.mubr.f32.gmra.mxu0 %v3109
  %v5834 = vpop.f32.mrf.mxu0
  %v5835 = vadd.f32 0.0, %v5834
  %v5836 = vpop.f32.mrf.mxu0
  %5837 = vdwg.mxu0
  %s5838 = scalar_lea.vmem %s5, 448
  %v5839 = vld [vmem:[%s5838] sm:$0xff]
  %v5840 = vld [vmem:[%s5838 + $0x8] sm:$0xff]
  %v5841 = vld [vmem:[%s5838 + $0x10] sm:$0xff]
  %v5842 = vld [vmem:[%s5838 + $0x18] sm:$0xff]
  %v5844 = vsel %vm3279, %v5839, 0
  %v5847 = vsel %vm3279, %v5840, 0
  %v5850 = vsel %vm3279, %v5841, 0
  %v5853 = vsel %vm3279, %v5842, 0
  %5855 = vmatprep.subr.mxu0 0.0
  %5856 = vmatpush1.msra.mxu0 0.0
  %5857 = vmatprep.subr.mxu0 0.0
  %5858 = vmatpush1.msra.mxu0 0.0
  %5859 = vmatprep.subr.mxu0 0.0
  %5860 = vmatpush1.msra.mxu0 0.0
  %5861 = vmatprep.subr.mxu0 0.0
  %5862 = vmatpush1.msra.mxu0 0.0
  %5863 = vmatprep.subr.mxu0 0.0
  %5864 = vmatpush1.msra.mxu0 0.0
  %5865 = vmatprep.subr.mxu0 0.0
  %5866 = vmatpush1.msra.mxu0 0.0
  %5867 = vmatprep.subr.mxu0 0.0
  %5868 = vmatpush1.msra.mxu0 0.0
  %5869 = vmatprep.subr.mxu0 0.0
  %5870 = vmatpush1.msra.mxu0 0.0
  %5871 = vmatprep.subr.mxu0 0.0
  %5872 = vmatpush1.msra.mxu0 0.0
  %5873 = vmatprep.subr.mxu0 0.0
  %5874 = vmatpush1.msra.mxu0 0.0
  %5875 = vmatprep.subr.mxu0 0.0
  %5876 = vmatpush1.msra.mxu0 0.0
  %5877 = vmatprep.subr.mxu0 0.0
  %5878 = vmatpush1.msra.mxu0 0.0
  %5879 = vmatprep.subr.mxu0 0.0
  %5880 = vmatpush1.msra.mxu0 0.0
  %5881 = vmatprep.subr.mxu0 0.0
  %5882 = vmatpush1.msra.mxu0 0.0
  %5883 = vmatprep.subr.mxu0 0.0
  %5884 = vmatpush1.msra.mxu0 %v5835
  %5885 = vmatprep.subr.mxu0 0.0
  %5886 = vmatpush1.msra.mxu0 %v5830
  %5887 = vmatprep.subr.mxu0 0.0
  %5888 = vmatpush2.msra.mxu0 0.0
  %5889 = vmatprep.subr.mxu0 0.0
  %5890 = vmatpush2.msra.mxu0 0.0
  %5891 = vmatprep.subr.mxu0 0.0
  %5892 = vmatpush2.msra.mxu0 0.0
  %5893 = vmatprep.subr.mxu0 0.0
  %5894 = vmatpush2.msra.mxu0 0.0
  %5895 = vmatprep.subr.mxu0 0.0
  %5896 = vmatpush2.msra.mxu0 0.0
  %5897 = vmatprep.subr.mxu0 0.0
  %5898 = vmatpush2.msra.mxu0 0.0
  %5899 = vmatprep.subr.mxu0 0.0
  %5900 = vmatpush2.msra.mxu0 0.0
  %5901 = vmatprep.subr.mxu0 0.0
  %5902 = vmatpush2.msra.mxu0 0.0
  %5903 = vmatprep.subr.mxu0 0.0
  %5904 = vmatpush2.msra.mxu0 0.0
  %5905 = vmatprep.subr.mxu0 0.0
  %5906 = vmatpush2.msra.mxu0 0.0
  %5907 = vmatprep.subr.mxu0 0.0
  %5908 = vmatpush2.msra.mxu0 0.0
  %5909 = vmatprep.subr.mxu0 0.0
  %5910 = vmatpush2.msra.mxu0 0.0
  %5911 = vmatprep.subr.mxu0 0.0
  %5912 = vmatpush2.msra.mxu0 0.0
  %5913 = vmatprep.subr.mxu0 0.0
  %5914 = vmatpush2.msra.mxu0 0.0
  %5915 = vmatprep.subr.mxu0 0.0
  %5916 = vmatpush2.msra.mxu0 0.0
  %5917 = vmatprep.subr.mxu0 0.0
  %5918 = vmatpush2.msra.mxu0 0.0
  %5919 = vmatprep.mubr.f32.mxu0 0.0
  %5920 = vmatmul.mubr.f32.gmra.mxu0 %v5844
  %v5921 = vpop.f32.mrf.mxu0
  %v5922 = vadd.f32 0.0, %v5921
  %v5923 = vpop.f32.mrf.mxu0
  %5924 = vmatprep.mubr.f32.mxu0 0.0
  %5925 = vmatmul.mubr.f32.gmra.mxu0 %v5847
  %v5926 = vpop.f32.mrf.mxu0
  %v5927 = vadd.f32 0.0, %v5926
  %v5928 = vpop.f32.mrf.mxu0
  %5929 = vmatprep.mubr.f32.mxu0 0.0
  %5930 = vmatmul.mubr.f32.gmra.mxu0 %v5850
  %v5931 = vpop.f32.mrf.mxu0
  %v5932 = vadd.f32 0.0, %v5931
  %v5933 = vpop.f32.mrf.mxu0
  %5934 = vmatprep.mubr.f32.mxu0 0.0
  %5935 = vmatmul.mubr.f32.gmra.mxu0 %v5853
  %v5936 = vpop.f32.mrf.mxu0
  %v5937 = vadd.f32 0.0, %v5936
  %v5938 = vpop.f32.mrf.mxu0
  %5939 = vdwg.mxu0
  %v5940 = vadd.f32 %v5750, %v5922
  %v5941 = vadd.f32 %v5751, %v5927
  %v5942 = vadd.f32 %v5752, %v5932
  %v5943 = vadd.f32 %v5753, %v5937
  %s5944 = scalar_lea.vmem %s4, 960
  %v5945 = vld [vmem:[%s5944] sm:$0xff]
  %v5946 = vld [vmem:[%s5944 + $0x8] sm:$0xff]
  %v5947 = vld [vmem:[%s5944 + $0x10] sm:$0xff]
  %v5948 = vld [vmem:[%s5944 + $0x18] sm:$0xff]
  %v5949 = vld [vmem:[%s5944 + $0x20] sm:$0xff]
  %v5950 = vld [vmem:[%s5944 + $0x28] sm:$0xff]
  %v5951 = vld [vmem:[%s5944 + $0x30] sm:$0xff]
  %v5952 = vld [vmem:[%s5944 + $0x38] sm:$0xff]
  %5953 = vmatprep.subr.mxu0 0.0
  %5954 = vmatpush1.msra.mxu0 0.0
  %5955 = vmatprep.subr.mxu0 0.0
  %5956 = vmatpush1.msra.mxu0 0.0
  %5957 = vmatprep.subr.mxu0 0.0
  %5958 = vmatpush1.msra.mxu0 0.0
  %5959 = vmatprep.subr.mxu0 0.0
  %5960 = vmatpush1.msra.mxu0 0.0
  %5961 = vmatprep.subr.mxu0 0.0
  %5962 = vmatpush1.msra.mxu0 0.0
  %5963 = vmatprep.subr.mxu0 0.0
  %5964 = vmatpush1.msra.mxu0 0.0
  %5965 = vmatprep.subr.mxu0 0.0
  %5966 = vmatpush1.msra.mxu0 0.0
  %5967 = vmatprep.subr.mxu0 0.0
  %5968 = vmatpush1.msra.mxu0 0.0
  %5969 = vmatprep.subr.mxu0 0.0
  %5970 = vmatpush1.msra.mxu0 %v5952
  %5971 = vmatprep.subr.mxu0 0.0
  %5972 = vmatpush1.msra.mxu0 %v5951
  %5973 = vmatprep.subr.mxu0 0.0
  %5974 = vmatpush1.msra.mxu0 %v5950
  %5975 = vmatprep.subr.mxu0 0.0
  %5976 = vmatpush1.msra.mxu0 %v5949
  %5977 = vmatprep.subr.mxu0 0.0
  %5978 = vmatpush1.msra.mxu0 %v5948
  %5979 = vmatprep.subr.mxu0 0.0
  %5980 = vmatpush1.msra.mxu0 %v5947
  %5981 = vmatprep.subr.mxu0 0.0
  %5982 = vmatpush1.msra.mxu0 %v5946
  %5983 = vmatprep.subr.mxu0 0.0
  %5984 = vmatpush1.msra.mxu0 %v5945
  %5985 = vmatprep.subr.mxu0 0.0
  %5986 = vmatpush2.msra.mxu0 0.0
  %5987 = vmatprep.subr.mxu0 0.0
  %5988 = vmatpush2.msra.mxu0 0.0
  %5989 = vmatprep.subr.mxu0 0.0
  %5990 = vmatpush2.msra.mxu0 0.0
  %5991 = vmatprep.subr.mxu0 0.0
  %5992 = vmatpush2.msra.mxu0 0.0
  %5993 = vmatprep.subr.mxu0 0.0
  %5994 = vmatpush2.msra.mxu0 0.0
  %5995 = vmatprep.subr.mxu0 0.0
  %5996 = vmatpush2.msra.mxu0 0.0
  %5997 = vmatprep.subr.mxu0 0.0
  %5998 = vmatpush2.msra.mxu0 0.0
  %5999 = vmatprep.subr.mxu0 0.0
  %6000 = vmatpush2.msra.mxu0 0.0
  %6001 = vmatprep.subr.mxu0 0.0
  %6002 = vmatpush2.msra.mxu0 0.0
  %6003 = vmatprep.subr.mxu0 0.0
  %6004 = vmatpush2.msra.mxu0 0.0
  %6005 = vmatprep.subr.mxu0 0.0
  %6006 = vmatpush2.msra.mxu0 0.0
  %6007 = vmatprep.subr.mxu0 0.0
  %6008 = vmatpush2.msra.mxu0 0.0
  %6009 = vmatprep.subr.mxu0 0.0
  %6010 = vmatpush2.msra.mxu0 0.0
  %6011 = vmatprep.subr.mxu0 0.0
  %6012 = vmatpush2.msra.mxu0 0.0
  %6013 = vmatprep.subr.mxu0 0.0
  %6014 = vmatpush2.msra.mxu0 0.0
  %6015 = vmatprep.subr.mxu0 0.0
  %6016 = vmatpush2.msra.mxu0 0.0
  %6017 = vmatprep.mubr.f32.mxu0 0.0
  %6018 = vmatmul.mubr.f32.gmra.mxu0 %v3106
  %v6019 = vpop.f32.mrf.mxu0
  %v6020 = vadd.f32 0.0, %v6019
  %v6021 = vpop.f32.mrf.mxu0
  %6022 = vmatprep.mubr.f32.mxu0 0.0
  %6023 = vmatmul.mubr.f32.gmra.mxu0 %v3109
  %v6024 = vpop.f32.mrf.mxu0
  %v6025 = vadd.f32 0.0, %v6024
  %v6026 = vpop.f32.mrf.mxu0
  %6027 = vdwg.mxu0
  %s6028 = scalar_lea.vmem %s5, 480
  %v6029 = vld [vmem:[%s6028] sm:$0xff]
  %v6030 = vld [vmem:[%s6028 + $0x8] sm:$0xff]
  %v6031 = vld [vmem:[%s6028 + $0x10] sm:$0xff]
  %v6032 = vld [vmem:[%s6028 + $0x18] sm:$0xff]
  %v6034 = vsel %vm3279, %v6029, 0
  %v6037 = vsel %vm3279, %v6030, 0
  %v6040 = vsel %vm3279, %v6031, 0
  %v6043 = vsel %vm3279, %v6032, 0
  %6045 = vmatprep.subr.mxu0 0.0
  %6046 = vmatpush1.msra.mxu0 0.0
  %6047 = vmatprep.subr.mxu0 0.0
  %6048 = vmatpush1.msra.mxu0 0.0
  %6049 = vmatprep.subr.mxu0 0.0
  %6050 = vmatpush1.msra.mxu0 0.0
  %6051 = vmatprep.subr.mxu0 0.0
  %6052 = vmatpush1.msra.mxu0 0.0
  %6053 = vmatprep.subr.mxu0 0.0
  %6054 = vmatpush1.msra.mxu0 0.0
  %6055 = vmatprep.subr.mxu0 0.0
  %6056 = vmatpush1.msra.mxu0 0.0
  %6057 = vmatprep.subr.mxu0 0.0
  %6058 = vmatpush1.msra.mxu0 0.0
  %6059 = vmatprep.subr.mxu0 0.0
  %6060 = vmatpush1.msra.mxu0 0.0
  %6061 = vmatprep.subr.mxu0 0.0
  %6062 = vmatpush1.msra.mxu0 0.0
  %6063 = vmatprep.subr.mxu0 0.0
  %6064 = vmatpush1.msra.mxu0 0.0
  %6065 = vmatprep.subr.mxu0 0.0
  %6066 = vmatpush1.msra.mxu0 0.0
  %6067 = vmatprep.subr.mxu0 0.0
  %6068 = vmatpush1.msra.mxu0 0.0
  %6069 = vmatprep.subr.mxu0 0.0
  %6070 = vmatpush1.msra.mxu0 0.0
  %6071 = vmatprep.subr.mxu0 0.0
  %6072 = vmatpush1.msra.mxu0 0.0
  %6073 = vmatprep.subr.mxu0 0.0
  %6074 = vmatpush1.msra.mxu0 %v6025
  %6075 = vmatprep.subr.mxu0 0.0
  %6076 = vmatpush1.msra.mxu0 %v6020
  %6077 = vmatprep.subr.mxu0 0.0
  %6078 = vmatpush2.msra.mxu0 0.0
  %6079 = vmatprep.subr.mxu0 0.0
  %6080 = vmatpush2.msra.mxu0 0.0
  %6081 = vmatprep.subr.mxu0 0.0
  %6082 = vmatpush2.msra.mxu0 0.0
  %6083 = vmatprep.subr.mxu0 0.0
  %6084 = vmatpush2.msra.mxu0 0.0
  %6085 = vmatprep.subr.mxu0 0.0
  %6086 = vmatpush2.msra.mxu0 0.0
  %6087 = vmatprep.subr.mxu0 0.0
  %6088 = vmatpush2.msra.mxu0 0.0
  %6089 = vmatprep.subr.mxu0 0.0
  %6090 = vmatpush2.msra.mxu0 0.0
  %6091 = vmatprep.subr.mxu0 0.0
  %6092 = vmatpush2.msra.mxu0 0.0
  %6093 = vmatprep.subr.mxu0 0.0
  %6094 = vmatpush2.msra.mxu0 0.0
  %6095 = vmatprep.subr.mxu0 0.0
  %6096 = vmatpush2.msra.mxu0 0.0
  %6097 = vmatprep.subr.mxu0 0.0
  %6098 = vmatpush2.msra.mxu0 0.0
  %6099 = vmatprep.subr.mxu0 0.0
  %6100 = vmatpush2.msra.mxu0 0.0
  %6101 = vmatprep.subr.mxu0 0.0
  %6102 = vmatpush2.msra.mxu0 0.0
  %6103 = vmatprep.subr.mxu0 0.0
  %6104 = vmatpush2.msra.mxu0 0.0
  %6105 = vmatprep.subr.mxu0 0.0
  %6106 = vmatpush2.msra.mxu0 0.0
  %6107 = vmatprep.subr.mxu0 0.0
  %6108 = vmatpush2.msra.mxu0 0.0
  %6109 = vmatprep.mubr.f32.mxu0 0.0
  %6110 = vmatmul.mubr.f32.gmra.mxu0 %v6034
  %v6111 = vpop.f32.mrf.mxu0
  %v6112 = vadd.f32 0.0, %v6111
  %v6113 = vpop.f32.mrf.mxu0
  %6114 = vmatprep.mubr.f32.mxu0 0.0
  %6115 = vmatmul.mubr.f32.gmra.mxu0 %v6037
  %v6116 = vpop.f32.mrf.mxu0
  %v6117 = vadd.f32 0.0, %v6116
  %v6118 = vpop.f32.mrf.mxu0
  %6119 = vmatprep.mubr.f32.mxu0 0.0
  %6120 = vmatmul.mubr.f32.gmra.mxu0 %v6040
  %v6121 = vpop.f32.mrf.mxu0
  %v6122 = vadd.f32 0.0, %v6121
  %v6123 = vpop.f32.mrf.mxu0
  %6124 = vmatprep.mubr.f32.mxu0 0.0
  %6125 = vmatmul.mubr.f32.gmra.mxu0 %v6043
  %v6126 = vpop.f32.mrf.mxu0
  %v6127 = vadd.f32 0.0, %v6126
  %v6128 = vpop.f32.mrf.mxu0
  %6129 = vdwg.mxu0
  %v6130 = vadd.f32 %v5940, %v6112
  %v6131 = vadd.f32 %v5941, %v6117
  %v6132 = vadd.f32 %v5942, %v6122
  %v6133 = vadd.f32 %v5943, %v6127
  %v6134 = vld [vmem:[%s6] sm:$0xff]
  %v6135 = vld [vmem:[%s6 + $0x8] sm:$0xff]
  %v6136 = vld [vmem:[%s6 + $0x10] sm:$0xff]
  %v6137 = vld [vmem:[%s6 + $0x18] sm:$0xff]
  %6139 = vset.pattern.permute.xlu0 0
  %6140 = vperm.xlu0 %6139, %v6134
  %v6141 = vpop.permute.xlu0 %6140
  %6144 = vset.pattern.permute.xlu0 0
  %6145 = vperm.xlu0 %6144, %v6135
  %v6146 = vpop.permute.xlu0 %6145
  %6149 = vset.pattern.permute.xlu0 0
  %6150 = vperm.xlu0 %6149, %v6136
  %v6151 = vpop.permute.xlu0 %6150
  %6154 = vset.pattern.permute.xlu0 0
  %6155 = vperm.xlu0 %6154, %v6137
  %v6156 = vpop.permute.xlu0 %6155
  %v6158 = vadd.f32 %v6130, %v6141
  %v6159 = vadd.f32 %v6131, %v6146
  %v6160 = vadd.f32 %v6132, %v6151
  %v6161 = vadd.f32 %v6133, %v6156
  %6162 = vst.msk [vmem:[%s14] sm:$0xff] %vm3279, %v6158
  %6163 = vst.msk [vmem:[%s14 + $0x8] sm:$0xff] %vm3279, %v6159
  %6164 = vst.msk [vmem:[%s14 + $0x10] sm:$0xff] %vm3279, %v6160
  %6165 = vst.msk [vmem:[%s14 + $0x18] sm:$0xff] %vm3279, %v6161
  %v6166 = vsel %vm3279, %v6158, 0.0
  %6167 = vadd.xlane.f32.xlu0 %v6166
  %v6168 = vpop.xlane.xlu0 %6167
  %v6169 = vsel %vm3279, %v6159, 0.0
  %6170 = vadd.xlane.f32.xlu0 %v6169
  %v6171 = vpop.xlane.xlu0 %6170
  %v6172 = vsel %vm3279, %v6160, 0.0
  %6173 = vadd.xlane.f32.xlu0 %v6172
  %v6174 = vpop.xlane.xlu0 %6173
  %v6175 = vsel %vm3279, %v6161, 0.0
  %6176 = vadd.xlane.f32.xlu0 %v6175
  %v6177 = vpop.xlane.xlu0 %6176
  %v6178 = vrcp.pop 16.0
  %v6179 = vmul.f32 %v6168, %v6178
  %v6180 = vmul.f32 %v6171, %v6178
  %v6181 = vmul.f32 %v6174, %v6178
  %v6182 = vmul.f32 %v6177, %v6178
  %v6183 = vsub.f32 %v6158, %v6179
  %v6184 = vsub.f32 %v6159, %v6180
  %v6185 = vsub.f32 %v6160, %v6181
  %v6186 = vsub.f32 %v6161, %v6182
  %v6187 = vmul.f32 %v6183, %v6183
  %v6188 = vmul.f32 %v6184, %v6184
  %v6189 = vmul.f32 %v6185, %v6185
  %v6190 = vmul.f32 %v6186, %v6186
  %v6191 = vsel %vm3279, %v6187, 0.0
  %6192 = vadd.xlane.f32.xlu0 %v6191
  %v6193 = vpop.xlane.xlu0 %6192
  %v6194 = vsel %vm3279, %v6188, 0.0
  %6195 = vadd.xlane.f32.xlu0 %v6194
  %v6196 = vpop.xlane.xlu0 %6195
  %v6197 = vsel %vm3279, %v6189, 0.0
  %6198 = vadd.xlane.f32.xlu0 %v6197
  %v6199 = vpop.xlane.xlu0 %6198
  %v6200 = vsel %vm3279, %v6190, 0.0
  %6201 = vadd.xlane.f32.xlu0 %v6200
  %v6202 = vpop.xlane.xlu0 %6201
  %v6203 = vmul.f32 %v6193, %v6178
  %v6204 = vmul.f32 %v6196, %v6178
  %v6205 = vmul.f32 %v6199, %v6178
  %v6206 = vmul.f32 %v6202, %v6178
  %v6207 = vadd.f32 %v6203, 1e-05
  %v6208 = vadd.f32 %v6204, 1e-05
  %v6209 = vadd.f32 %v6205, 1e-05
  %v6210 = vadd.f32 %v6206, 1e-05
  %v6211 = vrsqrt.pop %v6207
  %v6212 = vrsqrt.pop %v6208
  %v6213 = vrsqrt.pop %v6209
  %v6214 = vrsqrt.pop %v6210
  %v6215 = vmul.f32 %v6183, %v6211
  %v6216 = vmul.f32 %v6184, %v6212
  %v6217 = vmul.f32 %v6185, %v6213
  %v6218 = vmul.f32 %v6186, %v6214
  %6219 = vst.msk [vmem:[%s15] sm:$0xff] %vm3279, %v6215
  %6220 = vst.msk [vmem:[%s15 + $0x8] sm:$0xff] %vm3279, %v6216
  %6221 = vst.msk [vmem:[%s15 + $0x10] sm:$0xff] %vm3279, %v6217
  %6222 = vst.msk [vmem:[%s15 + $0x18] sm:$0xff] %vm3279, %v6218
  %vm6223 = vcmp.ge.f32.partialorder %v6215, 0.0
  %vm6224 = vcmp.ge.f32.partialorder %v6216, 0.0
  %vm6225 = vcmp.ge.f32.partialorder %v6217, 0.0
  %vm6226 = vcmp.ge.f32.partialorder %v6218, 0.0
  %v6227 = vmul.f32 %v6215, 0.2
  %v6228 = vmul.f32 %v6216, 0.2
  %v6229 = vmul.f32 %v6217, 0.2
  %v6230 = vmul.f32 %v6218, 0.2
  %v6231 = vsel %vm6223, %v6215, %v6227
  %v6232 = vsel %vm6224, %v6216, %v6228
  %v6233 = vsel %vm6225, %v6217, %v6229
  %v6234 = vsel %vm6226, %v6218, %v6230
  %6235 = vst.msk [vmem:[%s16] sm:$0xff] %vm3279, %v6231
  %6236 = vst.msk [vmem:[%s16 + $0x8] sm:$0xff] %vm3279, %v6232
  %6237 = vst.msk [vmem:[%s16 + $0x10] sm:$0xff] %vm3279, %v6233
  %6238 = vst.msk [vmem:[%s16 + $0x18] sm:$0xff] %vm3279, %v6234
  %v6239 = vld [vmem:[%s7] sm:$0xff]
  %v6240 = vld [vmem:[%s7 + $0x8] sm:$0xff]
  %v6242 = vsel %vm3279, %v6231, 0
  %v6245 = vsel %vm3279, %v6232, 0
  %v6248 = vsel %vm3279, %v6233, 0
  %v6251 = vsel %vm3279, %v6234, 0
  %6253 = vmatprep.subr.mxu0 0.0
  %6254 = vmatpush1.msra.mxu0 0.0
  %6255 = vmatprep.subr.mxu0 0.0
  %6256 = vmatpush1.msra.mxu0 0.0
  %6257 = vmatprep.subr.mxu0 0.0
  %6258 = vmatpush1.msra.mxu0 0.0
  %6259 = vmatprep.subr.mxu0 0.0
  %6260 = vmatpush1.msra.mxu0 0.0
  %6261 = vmatprep.subr.mxu0 0.0
  %6262 = vmatpush1.msra.mxu0 0.0
  %6263 = vmatprep.subr.mxu0 0.0
  %6264 = vmatpush1.msra.mxu0 0.0
  %6265 = vmatprep.subr.mxu0 0.0
  %6266 = vmatpush1.msra.mxu0 0.0
  %6267 = vmatprep.subr.mxu0 0.0
  %6268 = vmatpush1.msra.mxu0 0.0
  %6269 = vmatprep.subr.mxu0 0.0
  %6270 = vmatpush1.msra.mxu0 0.0
  %6271 = vmatprep.subr.mxu0 0.0
  %6272 = vmatpush1.msra.mxu0 0.0
  %6273 = vmatprep.subr.mxu0 0.0
  %6274 = vmatpush1.msra.mxu0 0.0
  %6275 = vmatprep.subr.mxu0 0.0
  %6276 = vmatpush1.msra.mxu0 0.0
  %6277 = vmatprep.subr.mxu0 0.0
  %6278 = vmatpush1.msra.mxu0 0.0
  %6279 = vmatprep.subr.mxu0 0.0
  %6280 = vmatpush1.msra.mxu0 0.0
  %6281 = vmatprep.subr.mxu0 0.0
  %6282 = vmatpush1.msra.mxu0 %v6240
  %6283 = vmatprep.subr.mxu0 0.0
  %6284 = vmatpush1.msra.mxu0 %v6239
  %6285 = vmatprep.subr.mxu0 0.0
  %6286 = vmatpush2.msra.mxu0 0.0
  %6287 = vmatprep.subr.mxu0 0.0
  %6288 = vmatpush2.msra.mxu0 0.0
  %6289 = vmatprep.subr.mxu0 0.0
  %6290 = vmatpush2.msra.mxu0 0.0
  %6291 = vmatprep.subr.mxu0 0.0
  %6292 = vmatpush2.msra.mxu0 0.0
  %6293 = vmatprep.subr.mxu0 0.0
  %6294 = vmatpush2.msra.mxu0 0.0
  %6295 = vmatprep.subr.mxu0 0.0
  %6296 = vmatpush2.msra.mxu0 0.0
  %6297 = vmatprep.subr.mxu0 0.0
  %6298 = vmatpush2.msra.mxu0 0.0
  %6299 = vmatprep.subr.mxu0 0.0
  %6300 = vmatpush2.msra.mxu0 0.0
  %6301 = vmatprep.subr.mxu0 0.0
  %6302 = vmatpush2.msra.mxu0 0.0
  %6303 = vmatprep.subr.mxu0 0.0
  %6304 = vmatpush2.msra.mxu0 0.0
  %6305 = vmatprep.subr.mxu0 0.0
  %6306 = vmatpush2.msra.mxu0 0.0
  %6307 = vmatprep.subr.mxu0 0.0
  %6308 = vmatpush2.msra.mxu0 0.0
  %6309 = vmatprep.subr.mxu0 0.0
  %6310 = vmatpush2.msra.mxu0 0.0
  %6311 = vmatprep.subr.mxu0 0.0
  %6312 = vmatpush2.msra.mxu0 0.0
  %6313 = vmatprep.subr.mxu0 0.0
  %6314 = vmatpush2.msra.mxu0 0.0
  %6315 = vmatprep.subr.mxu0 0.0
  %6316 = vmatpush2.msra.mxu0 0.0
  %6317 = vmatprep.mubr.f32.mxu0 0.0
  %6318 = vmatmul.mubr.f32.gmra.mxu0 %v6242
  %v6319 = vpop.f32.mrf.mxu0
  %v6320 = vadd.f32 0.0, %v6319
  %v6321 = vpop.f32.mrf.mxu0
  %6322 = vmatprep.mubr.f32.mxu0 0.0
  %6323 = vmatmul.mubr.f32.gmra.mxu0 %v6245
  %v6324 = vpop.f32.mrf.mxu0
  %v6325 = vadd.f32 0.0, %v6324
  %v6326 = vpop.f32.mrf.mxu0
  %6327 = vmatprep.mubr.f32.mxu0 0.0
  %6328 = vmatmul.mubr.f32.gmra.mxu0 %v6248
  %v6329 = vpop.f32.mrf.mxu0
  %v6330 = vadd.f32 0.0, %v6329
  %v6331 = vpop.f32.mrf.mxu0
  %6332 = vmatprep.mubr.f32.mxu0 0.0
  %6333 = vmatmul.mubr.f32.gmra.mxu0 %v6251
  %v6334 = vpop.f32.mrf.mxu0
  %v6335 = vadd.f32 0.0, %v6334
  %v6336 = vpop.f32.mrf.mxu0
  %6337 = vdwg.mxu0
  %v6338 = vld [vmem:[%s8] sm:$0x3]
  %s6339 = scalar_lea.vmem %s7, 16
  %v6340 = vld [vmem:[%s6339] sm:$0xff]
  %v6341 = vld [vmem:[%s6339 + $0x8] sm:$0xff]
  %6342 = vmatprep.subr.mxu0 0.0
  %6343 = vmatpush1.msra.mxu0 0.0
  %6344 = vmatprep.subr.mxu0 0.0
  %6345 = vmatpush1.msra.mxu0 0.0
  %6346 = vmatprep.subr.mxu0 0.0
  %6347 = vmatpush1.msra.mxu0 0.0
  %6348 = vmatprep.subr.mxu0 0.0
  %6349 = vmatpush1.msra.mxu0 0.0
  %6350 = vmatprep.subr.mxu0 0.0
  %6351 = vmatpush1.msra.mxu0 0.0
  %6352 = vmatprep.subr.mxu0 0.0
  %6353 = vmatpush1.msra.mxu0 0.0
  %6354 = vmatprep.subr.mxu0 0.0
  %6355 = vmatpush1.msra.mxu0 0.0
  %6356 = vmatprep.subr.mxu0 0.0
  %6357 = vmatpush1.msra.mxu0 0.0
  %6358 = vmatprep.subr.mxu0 0.0
  %6359 = vmatpush1.msra.mxu0 0.0
  %6360 = vmatprep.subr.mxu0 0.0
  %6361 = vmatpush1.msra.mxu0 0.0
  %6362 = vmatprep.subr.mxu0 0.0
  %6363 = vmatpush1.msra.mxu0 0.0
  %6364 = vmatprep.subr.mxu0 0.0
  %6365 = vmatpush1.msra.mxu0 0.0
  %6366 = vmatprep.subr.mxu0 0.0
  %6367 = vmatpush1.msra.mxu0 0.0
  %6368 = vmatprep.subr.mxu0 0.0
  %6369 = vmatpush1.msra.mxu0 0.0
  %6370 = vmatprep.subr.mxu0 0.0
  %6371 = vmatpush1.msra.mxu0 %v6341
  %6372 = vmatprep.subr.mxu0 0.0
  %6373 = vmatpush1.msra.mxu0 %v6340
  %6374 = vmatprep.subr.mxu0 0.0
  %6375 = vmatpush2.msra.mxu0 0.0
  %6376 = vmatprep.subr.mxu0 0.0
  %6377 = vmatpush2.msra.mxu0 0.0
  %6378 = vmatprep.subr.mxu0 0.0
  %6379 = vmatpush2.msra.mxu0 0.0
  %6380 = vmatprep.subr.mxu0 0.0
  %6381 = vmatpush2.msra.mxu0 0.0
  %6382 = vmatprep.subr.mxu0 0.0
  %6383 = vmatpush2.msra.mxu0 0.0
  %6384 = vmatprep.subr.mxu0 0.0
  %6385 = vmatpush2.msra.mxu0 0.0
  %6386 = vmatprep.subr.mxu0 0.0
  %6387 = vmatpush2.msra.mxu0 0.0
  %6388 = vmatprep.subr.mxu0 0.0
  %6389 = vmatpush2.msra.mxu0 0.0
  %6390 = vmatprep.subr.mxu0 0.0
  %6391 = vmatpush2.msra.mxu0 0.0
  %6392 = vmatprep.subr.mxu0 0.0
  %6393 = vmatpush2.msra.mxu0 0.0
  %6394 = vmatprep.subr.mxu0 0.0
  %6395 = vmatpush2.msra.mxu0 0.0
  %6396 = vmatprep.subr.mxu0 0.0
  %6397 = vmatpush2.msra.mxu0 0.0
  %6398 = vmatprep.subr.mxu0 0.0
  %6399 = vmatpush2.msra.mxu0 0.0
  %6400 = vmatprep.subr.mxu0 0.0
  %6401 = vmatpush2.msra.mxu0 0.0
  %6402 = vmatprep.subr.mxu0 0.0
  %6403 = vmatpush2.msra.mxu0 0.0
  %6404 = vmatprep.subr.mxu0 0.0
  %6405 = vmatpush2.msra.mxu0 0.0
  %6406 = vmatprep.mubr.f32.mxu0 0.0
  %6407 = vmatmul.mubr.f32.gmra.mxu0 %v6242
  %v6408 = vpop.f32.mrf.mxu0
  %v6409 = vadd.f32 0.0, %v6408
  %v6410 = vpop.f32.mrf.mxu0
  %6411 = vmatprep.mubr.f32.mxu0 0.0
  %6412 = vmatmul.mubr.f32.gmra.mxu0 %v6245
  %v6413 = vpop.f32.mrf.mxu0
  %v6414 = vadd.f32 0.0, %v6413
  %v6415 = vpop.f32.mrf.mxu0
  %6416 = vmatprep.mubr.f32.mxu0 0.0
  %6417 = vmatmul.mubr.f32.gmra.mxu0 %v6248
  %v6418 = vpop.f32.mrf.mxu0
  %v6419 = vadd.f32 0.0, %v6418
  %v6420 = vpop.f32.mrf.mxu0
  %6421 = vmatprep.mubr.f32.mxu0 0.0
  %6422 = vmatmul.mubr.f32.gmra.mxu0 %v6251
  %v6423 = vpop.f32.mrf.mxu0
  %v6424 = vadd.f32 0.0, %v6423
  %v6425 = vpop.f32.mrf.mxu0
  %6426 = vdwg.mxu0
  %s6427 = scalar_lea.vmem %s8, 2
  %v6428 = vld [vmem:[%s6427] sm:$0x3]
  %vm6429 = vcmask 261120
  %v6431 = vsel %vm6429, %v6428, 0
  %6433 = vmatprep.subr.mxu0 0.0
  %6434 = vmatpush1.msra.mxu0 0.0
  %6435 = vmatprep.subr.mxu0 0.0
  %6436 = vmatpush1.msra.mxu0 0.0
  %6437 = vmatprep.subr.mxu0 0.0
  %6438 = vmatpush1.msra.mxu0 0.0
  %6439 = vmatprep.subr.mxu0 0.0
  %6440 = vmatpush1.msra.mxu0 0.0
  %6441 = vmatprep.subr.mxu0 0.0
  %6442 = vmatpush1.msra.mxu0 0.0
  %6443 = vmatprep.subr.mxu0 0.0
  %6444 = vmatpush1.msra.mxu0 0.0
  %6445 = vmatprep.subr.mxu0 0.0
  %6446 = vmatpush1.msra.mxu0 0.0
  %6447 = vmatprep.subr.mxu0 0.0
  %6448 = vmatpush1.msra.mxu0 0.0
  %6449 = vmatprep.subr.mxu0 0.0
  %6450 = vmatpush1.msra.mxu0 0.0
  %6451 = vmatprep.subr.mxu0 0.0
  %6452 = vmatpush1.msra.mxu0 0.0
  %6453 = vmatprep.subr.mxu0 0.0
  %6454 = vmatpush1.msra.mxu0 0.0
  %6455 = vmatprep.subr.mxu0 0.0
  %6456 = vmatpush1.msra.mxu0 0.0
  %6457 = vmatprep.subr.mxu0 0.0
  %6458 = vmatpush1.msra.mxu0 %v6424
  %6459 = vmatprep.subr.mxu0 0.0
  %6460 = vmatpush1.msra.mxu0 %v6419
  %6461 = vmatprep.subr.mxu0 0.0
  %6462 = vmatpush1.msra.mxu0 %v6414
  %6463 = vmatprep.subr.mxu0 0.0
  %6464 = vmatpush1.msra.mxu0 %v6409
  %6465 = vmatprep.subr.mxu0 0.0
  %6466 = vmatpush2.msra.mxu0 0.0
  %6467 = vmatprep.subr.mxu0 0.0
  %6468 = vmatpush2.msra.mxu0 0.0
  %6469 = vmatprep.subr.mxu0 0.0
  %6470 = vmatpush2.msra.mxu0 0.0
  %6471 = vmatprep.subr.mxu0 0.0
  %6472 = vmatpush2.msra.mxu0 0.0
  %6473 = vmatprep.subr.mxu0 0.0
  %6474 = vmatpush2.msra.mxu0 0.0
  %6475 = vmatprep.subr.mxu0 0.0
  %6476 = vmatpush2.msra.mxu0 0.0
  %6477 = vmatprep.subr.mxu0 0.0
  %6478 = vmatpush2.msra.mxu0 0.0
  %6479 = vmatprep.subr.mxu0 0.0
  %6480 = vmatpush2.msra.mxu0 0.0
  %6481 = vmatprep.subr.mxu0 0.0
  %6482 = vmatpush2.msra.mxu0 0.0
  %6483 = vmatprep.subr.mxu0 0.0
  %6484 = vmatpush2.msra.mxu0 0.0
  %6485 = vmatprep.subr.mxu0 0.0
  %6486 = vmatpush2.msra.mxu0 0.0
  %6487 = vmatprep.subr.mxu0 0.0
  %6488 = vmatpush2.msra.mxu0 0.0
  %6489 = vmatprep.subr.mxu0 0.0
  %6490 = vmatpush2.msra.mxu0 0.0
  %6491 = vmatprep.subr.mxu0 0.0
  %6492 = vmatpush2.msra.mxu0 0.0
  %6493 = vmatprep.subr.mxu0 0.0
  %6494 = vmatpush2.msra.mxu0 0.0
  %6495 = vmatprep.subr.mxu0 0.0
  %6496 = vmatpush2.msra.mxu0 0.0
  %6497 = vmatprep.mubr.f32.mxu0 0.0
  %6498 = vmatmul.mubr.f32.gmra.mxu0 %v6431
  %v6499 = vpop.f32.mrf.mxu0
  %v6500 = vadd.f32 0.0, %v6499
  %v6501 = vpop.f32.mrf.mxu0
  %6502 = vdwg.mxu0
  %v6504 = vsel %vm6429, %v6338, 0
  %6506 = vmatprep.subr.mxu0 0.0
  %6507 = vmatpush1.msra.mxu0 0.0
  %6508 = vmatprep.subr.mxu0 0.0
  %6509 = vmatpush1.msra.mxu0 0.0
  %6510 = vmatprep.subr.mxu0 0.0
  %6511 = vmatpush1.msra.mxu0 0.0
  %6512 = vmatprep.subr.mxu0 0.0
  %6513 = vmatpush1.msra.mxu0 0.0
  %6514 = vmatprep.subr.mxu0 0.0
  %6515 = vmatpush1.msra.mxu0 0.0
  %6516 = vmatprep.subr.mxu0 0.0
  %6517 = vmatpush1.msra.mxu0 0.0
  %6518 = vmatprep.subr.mxu0 0.0
  %6519 = vmatpush1.msra.mxu0 0.0
  %6520 = vmatprep.subr.mxu0 0.0
  %6521 = vmatpush1.msra.mxu0 0.0
  %6522 = vmatprep.subr.mxu0 0.0
  %6523 = vmatpush1.msra.mxu0 0.0
  %6524 = vmatprep.subr.mxu0 0.0
  %6525 = vmatpush1.msra.mxu0 0.0
  %6526 = vmatprep.subr.mxu0 0.0
  %6527 = vmatpush1.msra.mxu0 0.0
  %6528 = vmatprep.subr.mxu0 0.0
  %6529 = vmatpush1.msra.mxu0 0.0
  %6530 = vmatprep.subr.mxu0 0.0
  %6531 = vmatpush1.msra.mxu0 %v6335
  %6532 = vmatprep.subr.mxu0 0.0
  %6533 = vmatpush1.msra.mxu0 %v6330
  %6534 = vmatprep.subr.mxu0 0.0
  %6535 = vmatpush1.msra.mxu0 %v6325
  %6536 = vmatprep.subr.mxu0 0.0
  %6537 = vmatpush1.msra.mxu0 %v6320
  %6538 = vmatprep.subr.mxu0 0.0
  %6539 = vmatpush2.msra.mxu0 0.0
  %6540 = vmatprep.subr.mxu0 0.0
  %6541 = vmatpush2.msra.mxu0 0.0
  %6542 = vmatprep.subr.mxu0 0.0
  %6543 = vmatpush2.msra.mxu0 0.0
  %6544 = vmatprep.subr.mxu0 0.0
  %6545 = vmatpush2.msra.mxu0 0.0
  %6546 = vmatprep.subr.mxu0 0.0
  %6547 = vmatpush2.msra.mxu0 0.0
  %6548 = vmatprep.subr.mxu0 0.0
  %6549 = vmatpush2.msra.mxu0 0.0
  %6550 = vmatprep.subr.mxu0 0.0
  %6551 = vmatpush2.msra.mxu0 0.0
  %6552 = vmatprep.subr.mxu0 0.0
  %6553 = vmatpush2.msra.mxu0 0.0
  %6554 = vmatprep.subr.mxu0 0.0
  %6555 = vmatpush2.msra.mxu0 0.0
  %6556 = vmatprep.subr.mxu0 0.0
  %6557 = vmatpush2.msra.mxu0 0.0
  %6558 = vmatprep.subr.mxu0 0.0
  %6559 = vmatpush2.msra.mxu0 0.0
  %6560 = vmatprep.subr.mxu0 0.0
  %6561 = vmatpush2.msra.mxu0 0.0
  %6562 = vmatprep.subr.mxu0 0.0
  %6563 = vmatpush2.msra.mxu0 0.0
  %6564 = vmatprep.subr.mxu0 0.0
  %6565 = vmatpush2.msra.mxu0 0.0
  %6566 = vmatprep.subr.mxu0 0.0
  %6567 = vmatpush2.msra.mxu0 0.0
  %6568 = vmatprep.subr.mxu0 0.0
  %6569 = vmatpush2.msra.mxu0 0.0
  %6570 = vmatprep.mubr.f32.mxu0 0.0
  %6571 = vmatmul.mubr.f32.gmra.mxu0 %v6504
  %v6572 = vpop.f32.mrf.mxu0
  %v6573 = vadd.f32 %v6500, %v6572
  %v6574 = vpop.f32.mrf.mxu0
  %6575 = vdwg.mxu0
  %s6576 = scalar_lea.vmem %s7, 32
  %v6577 = vld [vmem:[%s6576] sm:$0xff]
  %v6578 = vld [vmem:[%s6576 + $0x8] sm:$0xff]
  %6579 = vmatprep.subr.mxu0 0.0
  %6580 = vmatpush1.msra.mxu0 0.0
  %6581 = vmatprep.subr.mxu0 0.0
  %6582 = vmatpush1.msra.mxu0 0.0
  %6583 = vmatprep.subr.mxu0 0.0
  %6584 = vmatpush1.msra.mxu0 0.0
  %6585 = vmatprep.subr.mxu0 0.0
  %6586 = vmatpush1.msra.mxu0 0.0
  %6587 = vmatprep.subr.mxu0 0.0
  %6588 = vmatpush1.msra.mxu0 0.0
  %6589 = vmatprep.subr.mxu0 0.0
  %6590 = vmatpush1.msra.mxu0 0.0
  %6591 = vmatprep.subr.mxu0 0.0
  %6592 = vmatpush1.msra.mxu0 0.0
  %6593 = vmatprep.subr.mxu0 0.0
  %6594 = vmatpush1.msra.mxu0 0.0
  %6595 = vmatprep.subr.mxu0 0.0
  %6596 = vmatpush1.msra.mxu0 0.0
  %6597 = vmatprep.subr.mxu0 0.0
  %6598 = vmatpush1.msra.mxu0 0.0
  %6599 = vmatprep.subr.mxu0 0.0
  %6600 = vmatpush1.msra.mxu0 0.0
  %6601 = vmatprep.subr.mxu0 0.0
  %6602 = vmatpush1.msra.mxu0 0.0
  %6603 = vmatprep.subr.mxu0 0.0
  %6604 = vmatpush1.msra.mxu0 0.0
  %6605 = vmatprep.subr.mxu0 0.0
  %6606 = vmatpush1.msra.mxu0 0.0
  %6607 = vmatprep.subr.mxu0 0.0
  %6608 = vmatpush1.msra.mxu0 %v6578
  %6609 = vmatprep.subr.mxu0 0.0
  %6610 = vmatpush1.msra.mxu0 %v6577
  %6611 = vmatprep.subr.mxu0 0.0
  %6612 = vmatpush2.msra.mxu0 0.0
  %6613 = vmatprep.subr.mxu0 0.0
  %6614 = vmatpush2.msra.mxu0 0.0
  %6615 = vmatprep.subr.mxu0 0.0
  %6616 = vmatpush2.msra.mxu0 0.0
  %6617 = vmatprep.subr.mxu0 0.0
  %6618 = vmatpush2.msra.mxu0 0.0
  %6619 = vmatprep.subr.mxu0 0.0
  %6620 = vmatpush2.msra.mxu0 0.0
  %6621 = vmatprep.subr.mxu0 0.0
  %6622 = vmatpush2.msra.mxu0 0.0
  %6623 = vmatprep.subr.mxu0 0.0
  %6624 = vmatpush2.msra.mxu0 0.0
  %6625 = vmatprep.subr.mxu0 0.0
  %6626 = vmatpush2.msra.mxu0 0.0
  %6627 = vmatprep.subr.mxu0 0.0
  %6628 = vmatpush2.msra.mxu0 0.0
  %6629 = vmatprep.subr.mxu0 0.0
  %6630 = vmatpush2.msra.mxu0 0.0
  %6631 = vmatprep.subr.mxu0 0.0
  %6632 = vmatpush2.msra.mxu0 0.0
  %6633 = vmatprep.subr.mxu0 0.0
  %6634 = vmatpush2.msra.mxu0 0.0
  %6635 = vmatprep.subr.mxu0 0.0
  %6636 = vmatpush2.msra.mxu0 0.0
  %6637 = vmatprep.subr.mxu0 0.0
  %6638 = vmatpush2.msra.mxu0 0.0
  %6639 = vmatprep.subr.mxu0 0.0
  %6640 = vmatpush2.msra.mxu0 0.0
  %6641 = vmatprep.subr.mxu0 0.0
  %6642 = vmatpush2.msra.mxu0 0.0
  %6643 = vmatprep.mubr.f32.mxu0 0.0
  %6644 = vmatmul.mubr.f32.gmra.mxu0 %v6242
  %v6645 = vpop.f32.mrf.mxu0
  %v6646 = vadd.f32 0.0, %v6645
  %v6647 = vpop.f32.mrf.mxu0
  %6648 = vmatprep.mubr.f32.mxu0 0.0
  %6649 = vmatmul.mubr.f32.gmra.mxu0 %v6245
  %v6650 = vpop.f32.mrf.mxu0
  %v6651 = vadd.f32 0.0, %v6650
  %v6652 = vpop.f32.mrf.mxu0
  %6653 = vmatprep.mubr.f32.mxu0 0.0
  %6654 = vmatmul.mubr.f32.gmra.mxu0 %v6248
  %v6655 = vpop.f32.mrf.mxu0
  %v6656 = vadd.f32 0.0, %v6655
  %v6657 = vpop.f32.mrf.mxu0
  %6658 = vmatprep.mubr.f32.mxu0 0.0
  %6659 = vmatmul.mubr.f32.gmra.mxu0 %v6251
  %v6660 = vpop.f32.mrf.mxu0
  %v6661 = vadd.f32 0.0, %v6660
  %v6662 = vpop.f32.mrf.mxu0
  %6663 = vdwg.mxu0
  %s6664 = scalar_lea.vmem %s8, 4
  %v6665 = vld [vmem:[%s6664] sm:$0x3]
  %v6667 = vsel %vm6429, %v6665, 0
  %6669 = vmatprep.subr.mxu0 0.0
  %6670 = vmatpush1.msra.mxu0 0.0
  %6671 = vmatprep.subr.mxu0 0.0
  %6672 = vmatpush1.msra.mxu0 0.0
  %6673 = vmatprep.subr.mxu0 0.0
  %6674 = vmatpush1.msra.mxu0 0.0
  %6675 = vmatprep.subr.mxu0 0.0
  %6676 = vmatpush1.msra.mxu0 0.0
  %6677 = vmatprep.subr.mxu0 0.0
  %6678 = vmatpush1.msra.mxu0 0.0
  %6679 = vmatprep.subr.mxu0 0.0
  %6680 = vmatpush1.msra.mxu0 0.0
  %6681 = vmatprep.subr.mxu0 0.0
  %6682 = vmatpush1.msra.mxu0 0.0
  %6683 = vmatprep.subr.mxu0 0.0
  %6684 = vmatpush1.msra.mxu0 0.0
  %6685 = vmatprep.subr.mxu0 0.0
  %6686 = vmatpush1.msra.mxu0 0.0
  %6687 = vmatprep.subr.mxu0 0.0
  %6688 = vmatpush1.msra.mxu0 0.0
  %6689 = vmatprep.subr.mxu0 0.0
  %6690 = vmatpush1.msra.mxu0 0.0
  %6691 = vmatprep.subr.mxu0 0.0
  %6692 = vmatpush1.msra.mxu0 0.0
  %6693 = vmatprep.subr.mxu0 0.0
  %6694 = vmatpush1.msra.mxu0 %v6661
  %6695 = vmatprep.subr.mxu0 0.0
  %6696 = vmatpush1.msra.mxu0 %v6656
  %6697 = vmatprep.subr.mxu0 0.0
  %6698 = vmatpush1.msra.mxu0 %v6651
  %6699 = vmatprep.subr.mxu0 0.0
  %6700 = vmatpush1.msra.mxu0 %v6646
  %6701 = vmatprep.subr.mxu0 0.0
  %6702 = vmatpush2.msra.mxu0 0.0
  %6703 = vmatprep.subr.mxu0 0.0
  %6704 = vmatpush2.msra.mxu0 0.0
  %6705 = vmatprep.subr.mxu0 0.0
  %6706 = vmatpush2.msra.mxu0 0.0
  %6707 = vmatprep.subr.mxu0 0.0
  %6708 = vmatpush2.msra.mxu0 0.0
  %6709 = vmatprep.subr.mxu0 0.0
  %6710 = vmatpush2.msra.mxu0 0.0
  %6711 = vmatprep.subr.mxu0 0.0
  %6712 = vmatpush2.msra.mxu0 0.0
  %6713 = vmatprep.subr.mxu0 0.0
  %6714 = vmatpush2.msra.mxu0 0.0
  %6715 = vmatprep.subr.mxu0 0.0
  %6716 = vmatpush2.msra.mxu0 0.0
  %6717 = vmatprep.subr.mxu0 0.0
  %6718 = vmatpush2.msra.mxu0 0.0
  %6719 = vmatprep.subr.mxu0 0.0
  %6720 = vmatpush2.msra.mxu0 0.0
  %6721 = vmatprep.subr.mxu0 0.0
  %6722 = vmatpush2.msra.mxu0 0.0
  %6723 = vmatprep.subr.mxu0 0.0
  %6724 = vmatpush2.msra.mxu0 0.0
  %6725 = vmatprep.subr.mxu0 0.0
  %6726 = vmatpush2.msra.mxu0 0.0
  %6727 = vmatprep.subr.mxu0 0.0
  %6728 = vmatpush2.msra.mxu0 0.0
  %6729 = vmatprep.subr.mxu0 0.0
  %6730 = vmatpush2.msra.mxu0 0.0
  %6731 = vmatprep.subr.mxu0 0.0
  %6732 = vmatpush2.msra.mxu0 0.0
  %6733 = vmatprep.mubr.f32.mxu0 0.0
  %6734 = vmatmul.mubr.f32.gmra.mxu0 %v6667
  %v6735 = vpop.f32.mrf.mxu0
  %v6736 = vadd.f32 0.0, %v6735
  %v6737 = vpop.f32.mrf.mxu0
  %6738 = vdwg.mxu0
  %v6739 = vadd.f32 %v6573, %v6736
  %s6740 = scalar_lea.vmem %s7, 48
  %v6741 = vld [vmem:[%s6740] sm:$0xff]
  %v6742 = vld [vmem:[%s6740 + $0x8] sm:$0xff]
  %6743 = vmatprep.subr.mxu0 0.0
  %6744 = vmatpush1.msra.mxu0 0.0
  %6745 = vmatprep.subr.mxu0 0.0
  %6746 = vmatpush1.msra.mxu0 0.0
  %6747 = vmatprep.subr.mxu0 0.0
  %6748 = vmatpush1.msra.mxu0 0.0
  %6749 = vmatprep.subr.mxu0 0.0
  %6750 = vmatpush1.msra.mxu0 0.0
  %6751 = vmatprep.subr.mxu0 0.0
  %6752 = vmatpush1.msra.mxu0 0.0
  %6753 = vmatprep.subr.mxu0 0.0
  %6754 = vmatpush1.msra.mxu0 0.0
  %6755 = vmatprep.subr.mxu0 0.0
  %6756 = vmatpush1.msra.mxu0 0.0
  %6757 = vmatprep.subr.mxu0 0.0
  %6758 = vmatpush1.msra.mxu0 0.0
  %6759 = vmatprep.subr.mxu0 0.0
  %6760 = vmatpush1.msra.mxu0 0.0
  %6761 = vmatprep.subr.mxu0 0.0
  %6762 = vmatpush1.msra.mxu0 0.0
  %6763 = vmatprep.subr.mxu0 0.0
  %6764 = vmatpush1.msra.mxu0 0.0
  %6765 = vmatprep.subr.mxu0 0.0
  %6766 = vmatpush1.msra.mxu0 0.0
  %6767 = vmatprep.subr.mxu0 0.0
  %6768 = vmatpush1.msra.mxu0 0.0
  %6769 = vmatprep.subr.mxu0 0.0
  %6770 = vmatpush1.msra.mxu0 0.0
  %6771 = vmatprep.subr.mxu0 0.0
  %6772 = vmatpush1.msra.mxu0 %v6742
  %6773 = vmatprep.subr.mxu0 0.0
  %6774 = vmatpush1.msra.mxu0 %v6741
  %6775 = vmatprep.subr.mxu0 0.0
  %6776 = vmatpush2.msra.mxu0 0.0
  %6777 = vmatprep.subr.mxu0 0.0
  %6778 = vmatpush2.msra.mxu0 0.0
  %6779 = vmatprep.subr.mxu0 0.0
  %6780 = vmatpush2.msra.mxu0 0.0
  %6781 = vmatprep.subr.mxu0 0.0
  %6782 = vmatpush2.msra.mxu0 0.0
  %6783 = vmatprep.subr.mxu0 0.0
  %6784 = vmatpush2.msra.mxu0 0.0
  %6785 = vmatprep.subr.mxu0 0.0
  %6786 = vmatpush2.msra.mxu0 0.0
  %6787 = vmatprep.subr.mxu0 0.0
  %6788 = vmatpush2.msra.mxu0 0.0
  %6789 = vmatprep.subr.mxu0 0.0
  %6790 = vmatpush2.msra.mxu0 0.0
  %6791 = vmatprep.subr.mxu0 0.0
  %6792 = vmatpush2.msra.mxu0 0.0
  %6793 = vmatprep.subr.mxu0 0.0
  %6794 = vmatpush2.msra.mxu0 0.0
  %6795 = vmatprep.subr.mxu0 0.0
  %6796 = vmatpush2.msra.mxu0 0.0
  %6797 = vmatprep.subr.mxu0 0.0
  %6798 = vmatpush2.msra.mxu0 0.0
  %6799 = vmatprep.subr.mxu0 0.0
  %6800 = vmatpush2.msra.mxu0 0.0
  %6801 = vmatprep.subr.mxu0 0.0
  %6802 = vmatpush2.msra.mxu0 0.0
  %6803 = vmatprep.subr.mxu0 0.0
  %6804 = vmatpush2.msra.mxu0 0.0
  %6805 = vmatprep.subr.mxu0 0.0
  %6806 = vmatpush2.msra.mxu0 0.0
  %6807 = vmatprep.mubr.f32.mxu0 0.0
  %6808 = vmatmul.mubr.f32.gmra.mxu0 %v6242
  %v6809 = vpop.f32.mrf.mxu0
  %v6810 = vadd.f32 0.0, %v6809
  %v6811 = vpop.f32.mrf.mxu0
  %6812 = vmatprep.mubr.f32.mxu0 0.0
  %6813 = vmatmul.mubr.f32.gmra.mxu0 %v6245
  %v6814 = vpop.f32.mrf.mxu0
  %v6815 = vadd.f32 0.0, %v6814
  %v6816 = vpop.f32.mrf.mxu0
  %6817 = vmatprep.mubr.f32.mxu0 0.0
  %6818 = vmatmul.mubr.f32.gmra.mxu0 %v6248
  %v6819 = vpop.f32.mrf.mxu0
  %v6820 = vadd.f32 0.0, %v6819
  %v6821 = vpop.f32.mrf.mxu0
  %6822 = vmatprep.mubr.f32.mxu0 0.0
  %6823 = vmatmul.mubr.f32.gmra.mxu0 %v6251
  %v6824 = vpop.f32.mrf.mxu0
  %v6825 = vadd.f32 0.0, %v6824
  %v6826 = vpop.f32.mrf.mxu0
  %6827 = vdwg.mxu0
  %s6828 = scalar_lea.vmem %s8, 6
  %v6829 = vld [vmem:[%s6828] sm:$0x3]
  %v6831 = vsel %vm6429, %v6829, 0
  %6833 = vmatprep.subr.mxu0 0.0
  %6834 = vmatpush1.msra.mxu0 0.0
  %6835 = vmatprep.subr.mxu0 0.0
  %6836 = vmatpush1.msra.mxu0 0.0
  %6837 = vmatprep.subr.mxu0 0.0
  %6838 = vmatpush1.msra.mxu0 0.0
  %6839 = vmatprep.subr.mxu0 0.0
  %6840 = vmatpush1.msra.mxu0 0.0
  %6841 = vmatprep.subr.mxu0 0.0
  %6842 = vmatpush1.msra.mxu0 0.0
  %6843 = vmatprep.subr.mxu0 0.0
  %6844 = vmatpush1.msra.mxu0 0.0
  %6845 = vmatprep.subr.mxu0 0.0
  %6846 = vmatpush1.msra.mxu0 0.0
  %6847 = vmatprep.subr.mxu0 0.0
  %6848 = vmatpush1.msra.mxu0 0.0
  %6849 = vmatprep.subr.mxu0 0.0
  %6850 = vmatpush1.msra.mxu0 0.0
  %6851 = vmatprep.subr.mxu0 0.0
  %6852 = vmatpush1.msra.mxu0 0.0
  %6853 = vmatprep.subr.mxu0 0.0
  %6854 = vmatpush1.msra.mxu0 0.0
  %6855 = vmatprep.subr.mxu0 0.0
  %6856 = vmatpush1.msra.mxu0 0.0
  %6857 = vmatprep.subr.mxu0 0.0
  %6858 = vmatpush1.msra.mxu0 %v6825
  %6859 = vmatprep.subr.mxu0 0.0
  %6860 = vmatpush1.msra.mxu0 %v6820
  %6861 = vmatprep.subr.mxu0 0.0
  %6862 = vmatpush1.msra.mxu0 %v6815
  %6863 = vmatprep.subr.mxu0 0.0
  %6864 = vmatpush1.msra.mxu0 %v6810
  %6865 = vmatprep.subr.mxu0 0.0
  %6866 = vmatpush2.msra.mxu0 0.0
  %6867 = vmatprep.subr.mxu0 0.0
  %6868 = vmatpush2.msra.mxu0 0.0
  %6869 = vmatprep.subr.mxu0 0.0
  %6870 = vmatpush2.msra.mxu0 0.0
  %6871 = vmatprep.subr.mxu0 0.0
  %6872 = vmatpush2.msra.mxu0 0.0
  %6873 = vmatprep.subr.mxu0 0.0
  %6874 = vmatpush2.msra.mxu0 0.0
  %6875 = vmatprep.subr.mxu0 0.0
  %6876 = vmatpush2.msra.mxu0 0.0
  %6877 = vmatprep.subr.mxu0 0.0
  %6878 = vmatpush2.msra.mxu0 0.0
  %6879 = vmatprep.subr.mxu0 0.0
  %6880 = vmatpush2.msra.mxu0 0.0
  %6881 = vmatprep.subr.mxu0 0.0
  %6882 = vmatpush2.msra.mxu0 0.0
  %6883 = vmatprep.subr.mxu0 0.0
  %6884 = vmatpush2.msra.mxu0 0.0
  %6885 = vmatprep.subr.mxu0 0.0
  %6886 = vmatpush2.msra.mxu0 0.0
  %6887 = vmatprep.subr.mxu0 0.0
  %6888 = vmatpush2.msra.mxu0 0.0
  %6889 = vmatprep.subr.mxu0 0.0
  %6890 = vmatpush2.msra.mxu0 0.0
  %6891 = vmatprep.subr.mxu0 0.0
  %6892 = vmatpush2.msra.mxu0 0.0
  %6893 = vmatprep.subr.mxu0 0.0
  %6894 = vmatpush2.msra.mxu0 0.0
  %6895 = vmatprep.subr.mxu0 0.0
  %6896 = vmatpush2.msra.mxu0 0.0
  %6897 = vmatprep.mubr.f32.mxu0 0.0
  %6898 = vmatmul.mubr.f32.gmra.mxu0 %v6831
  %v6899 = vpop.f32.mrf.mxu0
  %v6900 = vadd.f32 0.0, %v6899
  %v6901 = vpop.f32.mrf.mxu0
  %6902 = vdwg.mxu0
  %v6903 = vadd.f32 %v6739, %v6900
  %s6904 = scalar_lea.vmem %s7, 64
  %v6905 = vld [vmem:[%s6904] sm:$0xff]
  %v6906 = vld [vmem:[%s6904 + $0x8] sm:$0xff]
  %6907 = vmatprep.subr.mxu0 0.0
  %6908 = vmatpush1.msra.mxu0 0.0
  %6909 = vmatprep.subr.mxu0 0.0
  %6910 = vmatpush1.msra.mxu0 0.0
  %6911 = vmatprep.subr.mxu0 0.0
  %6912 = vmatpush1.msra.mxu0 0.0
  %6913 = vmatprep.subr.mxu0 0.0
  %6914 = vmatpush1.msra.mxu0 0.0
  %6915 = vmatprep.subr.mxu0 0.0
  %6916 = vmatpush1.msra.mxu0 0.0
  %6917 = vmatprep.subr.mxu0 0.0
  %6918 = vmatpush1.msra.mxu0 0.0
  %6919 = vmatprep.subr.mxu0 0.0
  %6920 = vmatpush1.msra.mxu0 0.0
  %6921 = vmatprep.subr.mxu0 0.0
  %6922 = vmatpush1.msra.mxu0 0.0
  %6923 = vmatprep.subr.mxu0 0.0
  %6924 = vmatpush1.msra.mxu0 0.0
  %6925 = vmatprep.subr.mxu0 0.0
  %6926 = vmatpush1.msra.mxu0 0.0
  %6927 = vmatprep.subr.mxu0 0.0
  %6928 = vmatpush1.msra.mxu0 0.0
  %6929 = vmatprep.subr.mxu0 0.0
  %6930 = vmatpush1.msra.mxu0 0.0
  %6931 = vmatprep.subr.mxu0 0.0
  %6932 = vmatpush1.msra.mxu0 0.0
  %6933 = vmatprep.subr.mxu0 0.0
  %6934 = vmatpush1.msra.mxu0 0.0
  %6935 = vmatprep.subr.mxu0 0.0
  %6936 = vmatpush1.msra.mxu0 %v6906
  %6937 = vmatprep.subr.mxu0 0.0
  %6938 = vmatpush1.msra.mxu0 %v6905
  %6939 = vmatprep.subr.mxu0 0.0
  %6940 = vmatpush2.msra.mxu0 0.0
  %6941 = vmatprep.subr.mxu0 0.0
  %6942 = vmatpush2.msra.mxu0 0.0
  %6943 = vmatprep.subr.mxu0 0.0
  %6944 = vmatpush2.msra.mxu0 0.0
  %6945 = vmatprep.subr.mxu0 0.0
  %6946 = vmatpush2.msra.mxu0 0.0
  %6947 = vmatprep.subr.mxu0 0.0
  %6948 = vmatpush2.msra.mxu0 0.0
  %6949 = vmatprep.subr.mxu0 0.0
  %6950 = vmatpush2.msra.mxu0 0.0
  %6951 = vmatprep.subr.mxu0 0.0
  %6952 = vmatpush2.msra.mxu0 0.0
  %6953 = vmatprep.subr.mxu0 0.0
  %6954 = vmatpush2.msra.mxu0 0.0
  %6955 = vmatprep.subr.mxu0 0.0
  %6956 = vmatpush2.msra.mxu0 0.0
  %6957 = vmatprep.subr.mxu0 0.0
  %6958 = vmatpush2.msra.mxu0 0.0
  %6959 = vmatprep.subr.mxu0 0.0
  %6960 = vmatpush2.msra.mxu0 0.0
  %6961 = vmatprep.subr.mxu0 0.0
  %6962 = vmatpush2.msra.mxu0 0.0
  %6963 = vmatprep.subr.mxu0 0.0
  %6964 = vmatpush2.msra.mxu0 0.0
  %6965 = vmatprep.subr.mxu0 0.0
  %6966 = vmatpush2.msra.mxu0 0.0
  %6967 = vmatprep.subr.mxu0 0.0
  %6968 = vmatpush2.msra.mxu0 0.0
  %6969 = vmatprep.subr.mxu0 0.0
  %6970 = vmatpush2.msra.mxu0 0.0
  %6971 = vmatprep.mubr.f32.mxu0 0.0
  %6972 = vmatmul.mubr.f32.gmra.mxu0 %v6242
  %v6973 = vpop.f32.mrf.mxu0
  %v6974 = vadd.f32 0.0, %v6973
  %v6975 = vpop.f32.mrf.mxu0
  %6976 = vmatprep.mubr.f32.mxu0 0.0
  %6977 = vmatmul.mubr.f32.gmra.mxu0 %v6245
  %v6978 = vpop.f32.mrf.mxu0
  %v6979 = vadd.f32 0.0, %v6978
  %v6980 = vpop.f32.mrf.mxu0
  %6981 = vmatprep.mubr.f32.mxu0 0.0
  %6982 = vmatmul.mubr.f32.gmra.mxu0 %v6248
  %v6983 = vpop.f32.mrf.mxu0
  %v6984 = vadd.f32 0.0, %v6983
  %v6985 = vpop.f32.mrf.mxu0
  %6986 = vmatprep.mubr.f32.mxu0 0.0
  %6987 = vmatmul.mubr.f32.gmra.mxu0 %v6251
  %v6988 = vpop.f32.mrf.mxu0
  %v6989 = vadd.f32 0.0, %v6988
  %v6990 = vpop.f32.mrf.mxu0
  %6991 = vdwg.mxu0
  %s6992 = scalar_lea.vmem %s8, 8
  %v6993 = vld [vmem:[%s6992] sm:$0x3]
  %v6995 = vsel %vm6429, %v6993, 0
  %6997 = vmatprep.subr.mxu0 0.0
  %6998 = vmatpush1.msra.mxu0 0.0
  %6999 = vmatprep.subr.mxu0 0.0
  %7000 = vmatpush1.msra.mxu0 0.0
  %7001 = vmatprep.subr.mxu0 0.0
  %7002 = vmatpush1.msra.mxu0 0.0
  %7003 = vmatprep.subr.mxu0 0.0
  %7004 = vmatpush1.msra.mxu0 0.0
  %7005 = vmatprep.subr.mxu0 0.0
  %7006 = vmatpush1.msra.mxu0 0.0
  %7007 = vmatprep.subr.mxu0 0.0
  %7008 = vmatpush1.msra.mxu0 0.0
  %7009 = vmatprep.subr.mxu0 0.0
  %7010 = vmatpush1.msra.mxu0 0.0
  %7011 = vmatprep.subr.mxu0 0.0
  %7012 = vmatpush1.msra.mxu0 0.0
  %7013 = vmatprep.subr.mxu0 0.0
  %7014 = vmatpush1.msra.mxu0 0.0
  %7015 = vmatprep.subr.mxu0 0.0
  %7016 = vmatpush1.msra.mxu0 0.0
  %7017 = vmatprep.subr.mxu0 0.0
  %7018 = vmatpush1.msra.mxu0 0.0
  %7019 = vmatprep.subr.mxu0 0.0
  %7020 = vmatpush1.msra.mxu0 0.0
  %7021 = vmatprep.subr.mxu0 0.0
  %7022 = vmatpush1.msra.mxu0 %v6989
  %7023 = vmatprep.subr.mxu0 0.0
  %7024 = vmatpush1.msra.mxu0 %v6984
  %7025 = vmatprep.subr.mxu0 0.0
  %7026 = vmatpush1.msra.mxu0 %v6979
  %7027 = vmatprep.subr.mxu0 0.0
  %7028 = vmatpush1.msra.mxu0 %v6974
  %7029 = vmatprep.subr.mxu0 0.0
  %7030 = vmatpush2.msra.mxu0 0.0
  %7031 = vmatprep.subr.mxu0 0.0
  %7032 = vmatpush2.msra.mxu0 0.0
  %7033 = vmatprep.subr.mxu0 0.0
  %7034 = vmatpush2.msra.mxu0 0.0
  %7035 = vmatprep.subr.mxu0 0.0
  %7036 = vmatpush2.msra.mxu0 0.0
  %7037 = vmatprep.subr.mxu0 0.0
  %7038 = vmatpush2.msra.mxu0 0.0
  %7039 = vmatprep.subr.mxu0 0.0
  %7040 = vmatpush2.msra.mxu0 0.0
  %7041 = vmatprep.subr.mxu0 0.0
  %7042 = vmatpush2.msra.mxu0 0.0
  %7043 = vmatprep.subr.mxu0 0.0
  %7044 = vmatpush2.msra.mxu0 0.0
  %7045 = vmatprep.subr.mxu0 0.0
  %7046 = vmatpush2.msra.mxu0 0.0
  %7047 = vmatprep.subr.mxu0 0.0
  %7048 = vmatpush2.msra.mxu0 0.0
  %7049 = vmatprep.subr.mxu0 0.0
  %7050 = vmatpush2.msra.mxu0 0.0
  %7051 = vmatprep.subr.mxu0 0.0
  %7052 = vmatpush2.msra.mxu0 0.0
  %7053 = vmatprep.subr.mxu0 0.0
  %7054 = vmatpush2.msra.mxu0 0.0
  %7055 = vmatprep.subr.mxu0 0.0
  %7056 = vmatpush2.msra.mxu0 0.0
  %7057 = vmatprep.subr.mxu0 0.0
  %7058 = vmatpush2.msra.mxu0 0.0
  %7059 = vmatprep.subr.mxu0 0.0
  %7060 = vmatpush2.msra.mxu0 0.0
  %7061 = vmatprep.mubr.f32.mxu0 0.0
  %7062 = vmatmul.mubr.f32.gmra.mxu0 %v6995
  %v7063 = vpop.f32.mrf.mxu0
  %v7064 = vadd.f32 0.0, %v7063
  %v7065 = vpop.f32.mrf.mxu0
  %7066 = vdwg.mxu0
  %v7067 = vadd.f32 %v6903, %v7064
  %s7068 = scalar_lea.vmem %s7, 80
  %v7069 = vld [vmem:[%s7068] sm:$0xff]
  %v7070 = vld [vmem:[%s7068 + $0x8] sm:$0xff]
  %7071 = vmatprep.subr.mxu0 0.0
  %7072 = vmatpush1.msra.mxu0 0.0
  %7073 = vmatprep.subr.mxu0 0.0
  %7074 = vmatpush1.msra.mxu0 0.0
  %7075 = vmatprep.subr.mxu0 0.0
  %7076 = vmatpush1.msra.mxu0 0.0
  %7077 = vmatprep.subr.mxu0 0.0
  %7078 = vmatpush1.msra.mxu0 0.0
  %7079 = vmatprep.subr.mxu0 0.0
  %7080 = vmatpush1.msra.mxu0 0.0
  %7081 = vmatprep.subr.mxu0 0.0
  %7082 = vmatpush1.msra.mxu0 0.0
  %7083 = vmatprep.subr.mxu0 0.0
  %7084 = vmatpush1.msra.mxu0 0.0
  %7085 = vmatprep.subr.mxu0 0.0
  %7086 = vmatpush1.msra.mxu0 0.0
  %7087 = vmatprep.subr.mxu0 0.0
  %7088 = vmatpush1.msra.mxu0 0.0
  %7089 = vmatprep.subr.mxu0 0.0
  %7090 = vmatpush1.msra.mxu0 0.0
  %7091 = vmatprep.subr.mxu0 0.0
  %7092 = vmatpush1.msra.mxu0 0.0
  %7093 = vmatprep.subr.mxu0 0.0
  %7094 = vmatpush1.msra.mxu0 0.0
  %7095 = vmatprep.subr.mxu0 0.0
  %7096 = vmatpush1.msra.mxu0 0.0
  %7097 = vmatprep.subr.mxu0 0.0
  %7098 = vmatpush1.msra.mxu0 0.0
  %7099 = vmatprep.subr.mxu0 0.0
  %7100 = vmatpush1.msra.mxu0 %v7070
  %7101 = vmatprep.subr.mxu0 0.0
  %7102 = vmatpush1.msra.mxu0 %v7069
  %7103 = vmatprep.subr.mxu0 0.0
  %7104 = vmatpush2.msra.mxu0 0.0
  %7105 = vmatprep.subr.mxu0 0.0
  %7106 = vmatpush2.msra.mxu0 0.0
  %7107 = vmatprep.subr.mxu0 0.0
  %7108 = vmatpush2.msra.mxu0 0.0
  %7109 = vmatprep.subr.mxu0 0.0
  %7110 = vmatpush2.msra.mxu0 0.0
  %7111 = vmatprep.subr.mxu0 0.0
  %7112 = vmatpush2.msra.mxu0 0.0
  %7113 = vmatprep.subr.mxu0 0.0
  %7114 = vmatpush2.msra.mxu0 0.0
  %7115 = vmatprep.subr.mxu0 0.0
  %7116 = vmatpush2.msra.mxu0 0.0
  %7117 = vmatprep.subr.mxu0 0.0
  %7118 = vmatpush2.msra.mxu0 0.0
  %7119 = vmatprep.subr.mxu0 0.0
  %7120 = vmatpush2.msra.mxu0 0.0
  %7121 = vmatprep.subr.mxu0 0.0
  %7122 = vmatpush2.msra.mxu0 0.0
  %7123 = vmatprep.subr.mxu0 0.0
  %7124 = vmatpush2.msra.mxu0 0.0
  %7125 = vmatprep.subr.mxu0 0.0
  %7126 = vmatpush2.msra.mxu0 0.0
  %7127 = vmatprep.subr.mxu0 0.0
  %7128 = vmatpush2.msra.mxu0 0.0
  %7129 = vmatprep.subr.mxu0 0.0
  %7130 = vmatpush2.msra.mxu0 0.0
  %7131 = vmatprep.subr.mxu0 0.0
  %7132 = vmatpush2.msra.mxu0 0.0
  %7133 = vmatprep.subr.mxu0 0.0
  %7134 = vmatpush2.msra.mxu0 0.0
  %7135 = vmatprep.mubr.f32.mxu0 0.0
  %7136 = vmatmul.mubr.f32.gmra.mxu0 %v6242
  %v7137 = vpop.f32.mrf.mxu0
  %v7138 = vadd.f32 0.0, %v7137
  %v7139 = vpop.f32.mrf.mxu0
  %7140 = vmatprep.mubr.f32.mxu0 0.0
  %7141 = vmatmul.mubr.f32.gmra.mxu0 %v6245
  %v7142 = vpop.f32.mrf.mxu0
  %v7143 = vadd.f32 0.0, %v7142
  %v7144 = vpop.f32.mrf.mxu0
  %7145 = vmatprep.mubr.f32.mxu0 0.0
  %7146 = vmatmul.mubr.f32.gmra.mxu0 %v6248
  %v7147 = vpop.f32.mrf.mxu0
  %v7148 = vadd.f32 0.0, %v7147
  %v7149 = vpop.f32.mrf.mxu0
  %7150 = vmatprep.mubr.f32.mxu0 0.0
  %7151 = vmatmul.mubr.f32.gmra.mxu0 %v6251
  %v7152 = vpop.f32.mrf.mxu0
  %v7153 = vadd.f32 0.0, %v7152
  %v7154 = vpop.f32.mrf.mxu0
  %7155 = vdwg.mxu0
  %s7156 = scalar_lea.vmem %s8, 10
  %v7157 = vld [vmem:[%s7156] sm:$0x3]
  %v7159 = vsel %vm6429, %v7157, 0
  %7161 = vmatprep.subr.mxu0 0.0
  %7162 = vmatpush1.msra.mxu0 0.0
  %7163 = vmatprep.subr.mxu0 0.0
  %7164 = vmatpush1.msra.mxu0 0.0
  %7165 = vmatprep.subr.mxu0 0.0
  %7166 = vmatpush1.msra.mxu0 0.0
  %7167 = vmatprep.subr.mxu0 0.0
  %7168 = vmatpush1.msra.mxu0 0.0
  %7169 = vmatprep.subr.mxu0 0.0
  %7170 = vmatpush1.msra.mxu0 0.0
  %7171 = vmatprep.subr.mxu0 0.0
  %7172 = vmatpush1.msra.mxu0 0.0
  %7173 = vmatprep.subr.mxu0 0.0
  %7174 = vmatpush1.msra.mxu0 0.0
  %7175 = vmatprep.subr.mxu0 0.0
  %7176 = vmatpush1.msra.mxu0 0.0
  %7177 = vmatprep.subr.mxu0 0.0
  %7178 = vmatpush1.msra.mxu0 0.0
  %7179 = vmatprep.subr.mxu0 0.0
  %7180 = vmatpush1.msra.mxu0 0.0
  %7181 = vmatprep.subr.mxu0 0.0
  %7182 = vmatpush1.msra.mxu0 0.0
  %7183 = vmatprep.subr.mxu0 0.0
  %7184 = vmatpush1.msra.mxu0 0.0
  %7185 = vmatprep.subr.mxu0 0.0
  %7186 = vmatpush1.msra.mxu0 %v7153
  %7187 = vmatprep.subr.mxu0 0.0
  %7188 = vmatpush1.msra.mxu0 %v7148
  %7189 = vmatprep.subr.mxu0 0.0
  %7190 = vmatpush1.msra.mxu0 %v7143
  %7191 = vmatprep.subr.mxu0 0.0
  %7192 = vmatpush1.msra.mxu0 %v7138
  %7193 = vmatprep.subr.mxu0 0.0
  %7194 = vmatpush2.msra.mxu0 0.0
  %7195 = vmatprep.subr.mxu0 0.0
  %7196 = vmatpush2.msra.mxu0 0.0
  %7197 = vmatprep.subr.mxu0 0.0
  %7198 = vmatpush2.msra.mxu0 0.0
  %7199 = vmatprep.subr.mxu0 0.0
  %7200 = vmatpush2.msra.mxu0 0.0
  %7201 = vmatprep.subr.mxu0 0.0
  %7202 = vmatpush2.msra.mxu0 0.0
  %7203 = vmatprep.subr.mxu0 0.0
  %7204 = vmatpush2.msra.mxu0 0.0
  %7205 = vmatprep.subr.mxu0 0.0
  %7206 = vmatpush2.msra.mxu0 0.0
  %7207 = vmatprep.subr.mxu0 0.0
  %7208 = vmatpush2.msra.mxu0 0.0
  %7209 = vmatprep.subr.mxu0 0.0
  %7210 = vmatpush2.msra.mxu0 0.0
  %7211 = vmatprep.subr.mxu0 0.0
  %7212 = vmatpush2.msra.mxu0 0.0
  %7213 = vmatprep.subr.mxu0 0.0
  %7214 = vmatpush2.msra.mxu0 0.0
  %7215 = vmatprep.subr.mxu0 0.0
  %7216 = vmatpush2.msra.mxu0 0.0
  %7217 = vmatprep.subr.mxu0 0.0
  %7218 = vmatpush2.msra.mxu0 0.0
  %7219 = vmatprep.subr.mxu0 0.0
  %7220 = vmatpush2.msra.mxu0 0.0
  %7221 = vmatprep.subr.mxu0 0.0
  %7222 = vmatpush2.msra.mxu0 0.0
  %7223 = vmatprep.subr.mxu0 0.0
  %7224 = vmatpush2.msra.mxu0 0.0
  %7225 = vmatprep.mubr.f32.mxu0 0.0
  %7226 = vmatmul.mubr.f32.gmra.mxu0 %v7159
  %v7227 = vpop.f32.mrf.mxu0
  %v7228 = vadd.f32 0.0, %v7227
  %v7229 = vpop.f32.mrf.mxu0
  %7230 = vdwg.mxu0
  %v7231 = vadd.f32 %v7067, %v7228
  %s7232 = scalar_lea.vmem %s7, 96
  %v7233 = vld [vmem:[%s7232] sm:$0xff]
  %v7234 = vld [vmem:[%s7232 + $0x8] sm:$0xff]
  %7235 = vmatprep.subr.mxu0 0.0
  %7236 = vmatpush1.msra.mxu0 0.0
  %7237 = vmatprep.subr.mxu0 0.0
  %7238 = vmatpush1.msra.mxu0 0.0
  %7239 = vmatprep.subr.mxu0 0.0
  %7240 = vmatpush1.msra.mxu0 0.0
  %7241 = vmatprep.subr.mxu0 0.0
  %7242 = vmatpush1.msra.mxu0 0.0
  %7243 = vmatprep.subr.mxu0 0.0
  %7244 = vmatpush1.msra.mxu0 0.0
  %7245 = vmatprep.subr.mxu0 0.0
  %7246 = vmatpush1.msra.mxu0 0.0
  %7247 = vmatprep.subr.mxu0 0.0
  %7248 = vmatpush1.msra.mxu0 0.0
  %7249 = vmatprep.subr.mxu0 0.0
  %7250 = vmatpush1.msra.mxu0 0.0
  %7251 = vmatprep.subr.mxu0 0.0
  %7252 = vmatpush1.msra.mxu0 0.0
  %7253 = vmatprep.subr.mxu0 0.0
  %7254 = vmatpush1.msra.mxu0 0.0
  %7255 = vmatprep.subr.mxu0 0.0
  %7256 = vmatpush1.msra.mxu0 0.0
  %7257 = vmatprep.subr.mxu0 0.0
  %7258 = vmatpush1.msra.mxu0 0.0
  %7259 = vmatprep.subr.mxu0 0.0
  %7260 = vmatpush1.msra.mxu0 0.0
  %7261 = vmatprep.subr.mxu0 0.0
  %7262 = vmatpush1.msra.mxu0 0.0
  %7263 = vmatprep.subr.mxu0 0.0
  %7264 = vmatpush1.msra.mxu0 %v7234
  %7265 = vmatprep.subr.mxu0 0.0
  %7266 = vmatpush1.msra.mxu0 %v7233
  %7267 = vmatprep.subr.mxu0 0.0
  %7268 = vmatpush2.msra.mxu0 0.0
  %7269 = vmatprep.subr.mxu0 0.0
  %7270 = vmatpush2.msra.mxu0 0.0
  %7271 = vmatprep.subr.mxu0 0.0
  %7272 = vmatpush2.msra.mxu0 0.0
  %7273 = vmatprep.subr.mxu0 0.0
  %7274 = vmatpush2.msra.mxu0 0.0
  %7275 = vmatprep.subr.mxu0 0.0
  %7276 = vmatpush2.msra.mxu0 0.0
  %7277 = vmatprep.subr.mxu0 0.0
  %7278 = vmatpush2.msra.mxu0 0.0
  %7279 = vmatprep.subr.mxu0 0.0
  %7280 = vmatpush2.msra.mxu0 0.0
  %7281 = vmatprep.subr.mxu0 0.0
  %7282 = vmatpush2.msra.mxu0 0.0
  %7283 = vmatprep.subr.mxu0 0.0
  %7284 = vmatpush2.msra.mxu0 0.0
  %7285 = vmatprep.subr.mxu0 0.0
  %7286 = vmatpush2.msra.mxu0 0.0
  %7287 = vmatprep.subr.mxu0 0.0
  %7288 = vmatpush2.msra.mxu0 0.0
  %7289 = vmatprep.subr.mxu0 0.0
  %7290 = vmatpush2.msra.mxu0 0.0
  %7291 = vmatprep.subr.mxu0 0.0
  %7292 = vmatpush2.msra.mxu0 0.0
  %7293 = vmatprep.subr.mxu0 0.0
  %7294 = vmatpush2.msra.mxu0 0.0
  %7295 = vmatprep.subr.mxu0 0.0
  %7296 = vmatpush2.msra.mxu0 0.0
  %7297 = vmatprep.subr.mxu0 0.0
  %7298 = vmatpush2.msra.mxu0 0.0
  %7299 = vmatprep.mubr.f32.mxu0 0.0
  %7300 = vmatmul.mubr.f32.gmra.mxu0 %v6242
  %v7301 = vpop.f32.mrf.mxu0
  %v7302 = vadd.f32 0.0, %v7301
  %v7303 = vpop.f32.mrf.mxu0
  %7304 = vmatprep.mubr.f32.mxu0 0.0
  %7305 = vmatmul.mubr.f32.gmra.mxu0 %v6245
  %v7306 = vpop.f32.mrf.mxu0
  %v7307 = vadd.f32 0.0, %v7306
  %v7308 = vpop.f32.mrf.mxu0
  %7309 = vmatprep.mubr.f32.mxu0 0.0
  %7310 = vmatmul.mubr.f32.gmra.mxu0 %v6248
  %v7311 = vpop.f32.mrf.mxu0
  %v7312 = vadd.f32 0.0, %v7311
  %v7313 = vpop.f32.mrf.mxu0
  %7314 = vmatprep.mubr.f32.mxu0 0.0
  %7315 = vmatmul.mubr.f32.gmra.mxu0 %v6251
  %v7316 = vpop.f32.mrf.mxu0
  %v7317 = vadd.f32 0.0, %v7316
  %v7318 = vpop.f32.mrf.mxu0
  %7319 = vdwg.mxu0
  %s7320 = scalar_lea.vmem %s8, 12
  %v7321 = vld [vmem:[%s7320] sm:$0x3]
  %v7323 = vsel %vm6429, %v7321, 0
  %7325 = vmatprep.subr.mxu0 0.0
  %7326 = vmatpush1.msra.mxu0 0.0
  %7327 = vmatprep.subr.mxu0 0.0
  %7328 = vmatpush1.msra.mxu0 0.0
  %7329 = vmatprep.subr.mxu0 0.0
  %7330 = vmatpush1.msra.mxu0 0.0
  %7331 = vmatprep.subr.mxu0 0.0
  %7332 = vmatpush1.msra.mxu0 0.0
  %7333 = vmatprep.subr.mxu0 0.0
  %7334 = vmatpush1.msra.mxu0 0.0
  %7335 = vmatprep.subr.mxu0 0.0
  %7336 = vmatpush1.msra.mxu0 0.0
  %7337 = vmatprep.subr.mxu0 0.0
  %7338 = vmatpush1.msra.mxu0 0.0
  %7339 = vmatprep.subr.mxu0 0.0
  %7340 = vmatpush1.msra.mxu0 0.0
  %7341 = vmatprep.subr.mxu0 0.0
  %7342 = vmatpush1.msra.mxu0 0.0
  %7343 = vmatprep.subr.mxu0 0.0
  %7344 = vmatpush1.msra.mxu0 0.0
  %7345 = vmatprep.subr.mxu0 0.0
  %7346 = vmatpush1.msra.mxu0 0.0
  %7347 = vmatprep.subr.mxu0 0.0
  %7348 = vmatpush1.msra.mxu0 0.0
  %7349 = vmatprep.subr.mxu0 0.0
  %7350 = vmatpush1.msra.mxu0 %v7317
  %7351 = vmatprep.subr.mxu0 0.0
  %7352 = vmatpush1.msra.mxu0 %v7312
  %7353 = vmatprep.subr.mxu0 0.0
  %7354 = vmatpush1.msra.mxu0 %v7307
  %7355 = vmatprep.subr.mxu0 0.0
  %7356 = vmatpush1.msra.mxu0 %v7302
  %7357 = vmatprep.subr.mxu0 0.0
  %7358 = vmatpush2.msra.mxu0 0.0
  %7359 = vmatprep.subr.mxu0 0.0
  %7360 = vmatpush2.msra.mxu0 0.0
  %7361 = vmatprep.subr.mxu0 0.0
  %7362 = vmatpush2.msra.mxu0 0.0
  %7363 = vmatprep.subr.mxu0 0.0
  %7364 = vmatpush2.msra.mxu0 0.0
  %7365 = vmatprep.subr.mxu0 0.0
  %7366 = vmatpush2.msra.mxu0 0.0
  %7367 = vmatprep.subr.mxu0 0.0
  %7368 = vmatpush2.msra.mxu0 0.0
  %7369 = vmatprep.subr.mxu0 0.0
  %7370 = vmatpush2.msra.mxu0 0.0
  %7371 = vmatprep.subr.mxu0 0.0
  %7372 = vmatpush2.msra.mxu0 0.0
  %7373 = vmatprep.subr.mxu0 0.0
  %7374 = vmatpush2.msra.mxu0 0.0
  %7375 = vmatprep.subr.mxu0 0.0
  %7376 = vmatpush2.msra.mxu0 0.0
  %7377 = vmatprep.subr.mxu0 0.0
  %7378 = vmatpush2.msra.mxu0 0.0
  %7379 = vmatprep.subr.mxu0 0.0
  %7380 = vmatpush2.msra.mxu0 0.0
  %7381 = vmatprep.subr.mxu0 0.0
  %7382 = vmatpush2.msra.mxu0 0.0
  %7383 = vmatprep.subr.mxu0 0.0
  %7384 = vmatpush2.msra.mxu0 0.0
  %7385 = vmatprep.subr.mxu0 0.0
  %7386 = vmatpush2.msra.mxu0 0.0
  %7387 = vmatprep.subr.mxu0 0.0
  %7388 = vmatpush2.msra.mxu0 0.0
  %7389 = vmatprep.mubr.f32.mxu0 0.0
  %7390 = vmatmul.mubr.f32.gmra.mxu0 %v7323
  %v7391 = vpop.f32.mrf.mxu0
  %v7392 = vadd.f32 0.0, %v7391
  %v7393 = vpop.f32.mrf.mxu0
  %7394 = vdwg.mxu0
  %v7395 = vadd.f32 %v7231, %v7392
  %s7396 = scalar_lea.vmem %s7, 112
  %v7397 = vld [vmem:[%s7396] sm:$0xff]
  %v7398 = vld [vmem:[%s7396 + $0x8] sm:$0xff]
  %7399 = vmatprep.subr.mxu0 0.0
  %7400 = vmatpush1.msra.mxu0 0.0
  %7401 = vmatprep.subr.mxu0 0.0
  %7402 = vmatpush1.msra.mxu0 0.0
  %7403 = vmatprep.subr.mxu0 0.0
  %7404 = vmatpush1.msra.mxu0 0.0
  %7405 = vmatprep.subr.mxu0 0.0
  %7406 = vmatpush1.msra.mxu0 0.0
  %7407 = vmatprep.subr.mxu0 0.0
  %7408 = vmatpush1.msra.mxu0 0.0
  %7409 = vmatprep.subr.mxu0 0.0
  %7410 = vmatpush1.msra.mxu0 0.0
  %7411 = vmatprep.subr.mxu0 0.0
  %7412 = vmatpush1.msra.mxu0 0.0
  %7413 = vmatprep.subr.mxu0 0.0
  %7414 = vmatpush1.msra.mxu0 0.0
  %7415 = vmatprep.subr.mxu0 0.0
  %7416 = vmatpush1.msra.mxu0 0.0
  %7417 = vmatprep.subr.mxu0 0.0
  %7418 = vmatpush1.msra.mxu0 0.0
  %7419 = vmatprep.subr.mxu0 0.0
  %7420 = vmatpush1.msra.mxu0 0.0
  %7421 = vmatprep.subr.mxu0 0.0
  %7422 = vmatpush1.msra.mxu0 0.0
  %7423 = vmatprep.subr.mxu0 0.0
  %7424 = vmatpush1.msra.mxu0 0.0
  %7425 = vmatprep.subr.mxu0 0.0
  %7426 = vmatpush1.msra.mxu0 0.0
  %7427 = vmatprep.subr.mxu0 0.0
  %7428 = vmatpush1.msra.mxu0 %v7398
  %7429 = vmatprep.subr.mxu0 0.0
  %7430 = vmatpush1.msra.mxu0 %v7397
  %7431 = vmatprep.subr.mxu0 0.0
  %7432 = vmatpush2.msra.mxu0 0.0
  %7433 = vmatprep.subr.mxu0 0.0
  %7434 = vmatpush2.msra.mxu0 0.0
  %7435 = vmatprep.subr.mxu0 0.0
  %7436 = vmatpush2.msra.mxu0 0.0
  %7437 = vmatprep.subr.mxu0 0.0
  %7438 = vmatpush2.msra.mxu0 0.0
  %7439 = vmatprep.subr.mxu0 0.0
  %7440 = vmatpush2.msra.mxu0 0.0
  %7441 = vmatprep.subr.mxu0 0.0
  %7442 = vmatpush2.msra.mxu0 0.0
  %7443 = vmatprep.subr.mxu0 0.0
  %7444 = vmatpush2.msra.mxu0 0.0
  %7445 = vmatprep.subr.mxu0 0.0
  %7446 = vmatpush2.msra.mxu0 0.0
  %7447 = vmatprep.subr.mxu0 0.0
  %7448 = vmatpush2.msra.mxu0 0.0
  %7449 = vmatprep.subr.mxu0 0.0
  %7450 = vmatpush2.msra.mxu0 0.0
  %7451 = vmatprep.subr.mxu0 0.0
  %7452 = vmatpush2.msra.mxu0 0.0
  %7453 = vmatprep.subr.mxu0 0.0
  %7454 = vmatpush2.msra.mxu0 0.0
  %7455 = vmatprep.subr.mxu0 0.0
  %7456 = vmatpush2.msra.mxu0 0.0
  %7457 = vmatprep.subr.mxu0 0.0
  %7458 = vmatpush2.msra.mxu0 0.0
  %7459 = vmatprep.subr.mxu0 0.0
  %7460 = vmatpush2.msra.mxu0 0.0
  %7461 = vmatprep.subr.mxu0 0.0
  %7462 = vmatpush2.msra.mxu0 0.0
  %7463 = vmatprep.mubr.f32.mxu0 0.0
  %7464 = vmatmul.mubr.f32.gmra.mxu0 %v6242
  %v7465 = vpop.f32.mrf.mxu0
  %v7466 = vadd.f32 0.0, %v7465
  %v7467 = vpop.f32.mrf.mxu0
  %7468 = vmatprep.mubr.f32.mxu0 0.0
  %7469 = vmatmul.mubr.f32.gmra.mxu0 %v6245
  %v7470 = vpop.f32.mrf.mxu0
  %v7471 = vadd.f32 0.0, %v7470
  %v7472 = vpop.f32.mrf.mxu0
  %7473 = vmatprep.mubr.f32.mxu0 0.0
  %7474 = vmatmul.mubr.f32.gmra.mxu0 %v6248
  %v7475 = vpop.f32.mrf.mxu0
  %v7476 = vadd.f32 0.0, %v7475
  %v7477 = vpop.f32.mrf.mxu0
  %7478 = vmatprep.mubr.f32.mxu0 0.0
  %7479 = vmatmul.mubr.f32.gmra.mxu0 %v6251
  %v7480 = vpop.f32.mrf.mxu0
  %v7481 = vadd.f32 0.0, %v7480
  %v7482 = vpop.f32.mrf.mxu0
  %7483 = vdwg.mxu0
  %s7484 = scalar_lea.vmem %s8, 14
  %v7485 = vld [vmem:[%s7484] sm:$0x3]
  %v7487 = vsel %vm6429, %v7485, 0
  %7489 = vmatprep.subr.mxu0 0.0
  %7490 = vmatpush1.msra.mxu0 0.0
  %7491 = vmatprep.subr.mxu0 0.0
  %7492 = vmatpush1.msra.mxu0 0.0
  %7493 = vmatprep.subr.mxu0 0.0
  %7494 = vmatpush1.msra.mxu0 0.0
  %7495 = vmatprep.subr.mxu0 0.0
  %7496 = vmatpush1.msra.mxu0 0.0
  %7497 = vmatprep.subr.mxu0 0.0
  %7498 = vmatpush1.msra.mxu0 0.0
  %7499 = vmatprep.subr.mxu0 0.0
  %7500 = vmatpush1.msra.mxu0 0.0
  %7501 = vmatprep.subr.mxu0 0.0
  %7502 = vmatpush1.msra.mxu0 0.0
  %7503 = vmatprep.subr.mxu0 0.0
  %7504 = vmatpush1.msra.mxu0 0.0
  %7505 = vmatprep.subr.mxu0 0.0
  %7506 = vmatpush1.msra.mxu0 0.0
  %7507 = vmatprep.subr.mxu0 0.0
  %7508 = vmatpush1.msra.mxu0 0.0
  %7509 = vmatprep.subr.mxu0 0.0
  %7510 = vmatpush1.msra.mxu0 0.0
  %7511 = vmatprep.subr.mxu0 0.0
  %7512 = vmatpush1.msra.mxu0 0.0
  %7513 = vmatprep.subr.mxu0 0.0
  %7514 = vmatpush1.msra.mxu0 %v7481
  %7515 = vmatprep.subr.mxu0 0.0
  %7516 = vmatpush1.msra.mxu0 %v7476
  %7517 = vmatprep.subr.mxu0 0.0
  %7518 = vmatpush1.msra.mxu0 %v7471
  %7519 = vmatprep.subr.mxu0 0.0
  %7520 = vmatpush1.msra.mxu0 %v7466
  %7521 = vmatprep.subr.mxu0 0.0
  %7522 = vmatpush2.msra.mxu0 0.0
  %7523 = vmatprep.subr.mxu0 0.0
  %7524 = vmatpush2.msra.mxu0 0.0
  %7525 = vmatprep.subr.mxu0 0.0
  %7526 = vmatpush2.msra.mxu0 0.0
  %7527 = vmatprep.subr.mxu0 0.0
  %7528 = vmatpush2.msra.mxu0 0.0
  %7529 = vmatprep.subr.mxu0 0.0
  %7530 = vmatpush2.msra.mxu0 0.0
  %7531 = vmatprep.subr.mxu0 0.0
  %7532 = vmatpush2.msra.mxu0 0.0
  %7533 = vmatprep.subr.mxu0 0.0
  %7534 = vmatpush2.msra.mxu0 0.0
  %7535 = vmatprep.subr.mxu0 0.0
  %7536 = vmatpush2.msra.mxu0 0.0
  %7537 = vmatprep.subr.mxu0 0.0
  %7538 = vmatpush2.msra.mxu0 0.0
  %7539 = vmatprep.subr.mxu0 0.0
  %7540 = vmatpush2.msra.mxu0 0.0
  %7541 = vmatprep.subr.mxu0 0.0
  %7542 = vmatpush2.msra.mxu0 0.0
  %7543 = vmatprep.subr.mxu0 0.0
  %7544 = vmatpush2.msra.mxu0 0.0
  %7545 = vmatprep.subr.mxu0 0.0
  %7546 = vmatpush2.msra.mxu0 0.0
  %7547 = vmatprep.subr.mxu0 0.0
  %7548 = vmatpush2.msra.mxu0 0.0
  %7549 = vmatprep.subr.mxu0 0.0
  %7550 = vmatpush2.msra.mxu0 0.0
  %7551 = vmatprep.subr.mxu0 0.0
  %7552 = vmatpush2.msra.mxu0 0.0
  %7553 = vmatprep.mubr.f32.mxu0 0.0
  %7554 = vmatmul.mubr.f32.gmra.mxu0 %v7487
  %v7555 = vpop.f32.mrf.mxu0
  %v7556 = vadd.f32 0.0, %v7555
  %v7557 = vpop.f32.mrf.mxu0
  %7558 = vdwg.mxu0
  %v7559 = vadd.f32 %v7395, %v7556
  %s7560 = scalar_lea.vmem %s7, 128
  %v7561 = vld [vmem:[%s7560] sm:$0xff]
  %v7562 = vld [vmem:[%s7560 + $0x8] sm:$0xff]
  %7563 = vmatprep.subr.mxu0 0.0
  %7564 = vmatpush1.msra.mxu0 0.0
  %7565 = vmatprep.subr.mxu0 0.0
  %7566 = vmatpush1.msra.mxu0 0.0
  %7567 = vmatprep.subr.mxu0 0.0
  %7568 = vmatpush1.msra.mxu0 0.0
  %7569 = vmatprep.subr.mxu0 0.0
  %7570 = vmatpush1.msra.mxu0 0.0
  %7571 = vmatprep.subr.mxu0 0.0
  %7572 = vmatpush1.msra.mxu0 0.0
  %7573 = vmatprep.subr.mxu0 0.0
  %7574 = vmatpush1.msra.mxu0 0.0
  %7575 = vmatprep.subr.mxu0 0.0
  %7576 = vmatpush1.msra.mxu0 0.0
  %7577 = vmatprep.subr.mxu0 0.0
  %7578 = vmatpush1.msra.mxu0 0.0
  %7579 = vmatprep.subr.mxu0 0.0
  %7580 = vmatpush1.msra.mxu0 0.0
  %7581 = vmatprep.subr.mxu0 0.0
  %7582 = vmatpush1.msra.mxu0 0.0
  %7583 = vmatprep.subr.mxu0 0.0
  %7584 = vmatpush1.msra.mxu0 0.0
  %7585 = vmatprep.subr.mxu0 0.0
  %7586 = vmatpush1.msra.mxu0 0.0
  %7587 = vmatprep.subr.mxu0 0.0
  %7588 = vmatpush1.msra.mxu0 0.0
  %7589 = vmatprep.subr.mxu0 0.0
  %7590 = vmatpush1.msra.mxu0 0.0
  %7591 = vmatprep.subr.mxu0 0.0
  %7592 = vmatpush1.msra.mxu0 %v7562
  %7593 = vmatprep.subr.mxu0 0.0
  %7594 = vmatpush1.msra.mxu0 %v7561
  %7595 = vmatprep.subr.mxu0 0.0
  %7596 = vmatpush2.msra.mxu0 0.0
  %7597 = vmatprep.subr.mxu0 0.0
  %7598 = vmatpush2.msra.mxu0 0.0
  %7599 = vmatprep.subr.mxu0 0.0
  %7600 = vmatpush2.msra.mxu0 0.0
  %7601 = vmatprep.subr.mxu0 0.0
  %7602 = vmatpush2.msra.mxu0 0.0
  %7603 = vmatprep.subr.mxu0 0.0
  %7604 = vmatpush2.msra.mxu0 0.0
  %7605 = vmatprep.subr.mxu0 0.0
  %7606 = vmatpush2.msra.mxu0 0.0
  %7607 = vmatprep.subr.mxu0 0.0
  %7608 = vmatpush2.msra.mxu0 0.0
  %7609 = vmatprep.subr.mxu0 0.0
  %7610 = vmatpush2.msra.mxu0 0.0
  %7611 = vmatprep.subr.mxu0 0.0
  %7612 = vmatpush2.msra.mxu0 0.0
  %7613 = vmatprep.subr.mxu0 0.0
  %7614 = vmatpush2.msra.mxu0 0.0
  %7615 = vmatprep.subr.mxu0 0.0
  %7616 = vmatpush2.msra.mxu0 0.0
  %7617 = vmatprep.subr.mxu0 0.0
  %7618 = vmatpush2.msra.mxu0 0.0
  %7619 = vmatprep.subr.mxu0 0.0
  %7620 = vmatpush2.msra.mxu0 0.0
  %7621 = vmatprep.subr.mxu0 0.0
  %7622 = vmatpush2.msra.mxu0 0.0
  %7623 = vmatprep.subr.mxu0 0.0
  %7624 = vmatpush2.msra.mxu0 0.0
  %7625 = vmatprep.subr.mxu0 0.0
  %7626 = vmatpush2.msra.mxu0 0.0
  %7627 = vmatprep.mubr.f32.mxu0 0.0
  %7628 = vmatmul.mubr.f32.gmra.mxu0 %v6242
  %v7629 = vpop.f32.mrf.mxu0
  %v7630 = vadd.f32 0.0, %v7629
  %v7631 = vpop.f32.mrf.mxu0
  %7632 = vmatprep.mubr.f32.mxu0 0.0
  %7633 = vmatmul.mubr.f32.gmra.mxu0 %v6245
  %v7634 = vpop.f32.mrf.mxu0
  %v7635 = vadd.f32 0.0, %v7634
  %v7636 = vpop.f32.mrf.mxu0
  %7637 = vmatprep.mubr.f32.mxu0 0.0
  %7638 = vmatmul.mubr.f32.gmra.mxu0 %v6248
  %v7639 = vpop.f32.mrf.mxu0
  %v7640 = vadd.f32 0.0, %v7639
  %v7641 = vpop.f32.mrf.mxu0
  %7642 = vmatprep.mubr.f32.mxu0 0.0
  %7643 = vmatmul.mubr.f32.gmra.mxu0 %v6251
  %v7644 = vpop.f32.mrf.mxu0
  %v7645 = vadd.f32 0.0, %v7644
  %v7646 = vpop.f32.mrf.mxu0
  %7647 = vdwg.mxu0
  %s7648 = scalar_lea.vmem %s8, 16
  %v7649 = vld [vmem:[%s7648] sm:$0x3]
  %v7651 = vsel %vm6429, %v7649, 0
  %7653 = vmatprep.subr.mxu0 0.0
  %7654 = vmatpush1.msra.mxu0 0.0
  %7655 = vmatprep.subr.mxu0 0.0
  %7656 = vmatpush1.msra.mxu0 0.0
  %7657 = vmatprep.subr.mxu0 0.0
  %7658 = vmatpush1.msra.mxu0 0.0
  %7659 = vmatprep.subr.mxu0 0.0
  %7660 = vmatpush1.msra.mxu0 0.0
  %7661 = vmatprep.subr.mxu0 0.0
  %7662 = vmatpush1.msra.mxu0 0.0
  %7663 = vmatprep.subr.mxu0 0.0
  %7664 = vmatpush1.msra.mxu0 0.0
  %7665 = vmatprep.subr.mxu0 0.0
  %7666 = vmatpush1.msra.mxu0 0.0
  %7667 = vmatprep.subr.mxu0 0.0
  %7668 = vmatpush1.msra.mxu0 0.0
  %7669 = vmatprep.subr.mxu0 0.0
  %7670 = vmatpush1.msra.mxu0 0.0
  %7671 = vmatprep.subr.mxu0 0.0
  %7672 = vmatpush1.msra.mxu0 0.0
  %7673 = vmatprep.subr.mxu0 0.0
  %7674 = vmatpush1.msra.mxu0 0.0
  %7675 = vmatprep.subr.mxu0 0.0
  %7676 = vmatpush1.msra.mxu0 0.0
  %7677 = vmatprep.subr.mxu0 0.0
  %7678 = vmatpush1.msra.mxu0 %v7645
  %7679 = vmatprep.subr.mxu0 0.0
  %7680 = vmatpush1.msra.mxu0 %v7640
  %7681 = vmatprep.subr.mxu0 0.0
  %7682 = vmatpush1.msra.mxu0 %v7635
  %7683 = vmatprep.subr.mxu0 0.0
  %7684 = vmatpush1.msra.mxu0 %v7630
  %7685 = vmatprep.subr.mxu0 0.0
  %7686 = vmatpush2.msra.mxu0 0.0
  %7687 = vmatprep.subr.mxu0 0.0
  %7688 = vmatpush2.msra.mxu0 0.0
  %7689 = vmatprep.subr.mxu0 0.0
  %7690 = vmatpush2.msra.mxu0 0.0
  %7691 = vmatprep.subr.mxu0 0.0
  %7692 = vmatpush2.msra.mxu0 0.0
  %7693 = vmatprep.subr.mxu0 0.0
  %7694 = vmatpush2.msra.mxu0 0.0
  %7695 = vmatprep.subr.mxu0 0.0
  %7696 = vmatpush2.msra.mxu0 0.0
  %7697 = vmatprep.subr.mxu0 0.0
  %7698 = vmatpush2.msra.mxu0 0.0
  %7699 = vmatprep.subr.mxu0 0.0
  %7700 = vmatpush2.msra.mxu0 0.0
  %7701 = vmatprep.subr.mxu0 0.0
  %7702 = vmatpush2.msra.mxu0 0.0
  %7703 = vmatprep.subr.mxu0 0.0
  %7704 = vmatpush2.msra.mxu0 0.0
  %7705 = vmatprep.subr.mxu0 0.0
  %7706 = vmatpush2.msra.mxu0 0.0
  %7707 = vmatprep.subr.mxu0 0.0
  %7708 = vmatpush2.msra.mxu0 0.0
  %7709 = vmatprep.subr.mxu0 0.0
  %7710 = vmatpush2.msra.mxu0 0.0
  %7711 = vmatprep.subr.mxu0 0.0
  %7712 = vmatpush2.msra.mxu0 0.0
  %7713 = vmatprep.subr.mxu0 0.0
  %7714 = vmatpush2.msra.mxu0 0.0
  %7715 = vmatprep.subr.mxu0 0.0
  %7716 = vmatpush2.msra.mxu0 0.0
  %7717 = vmatprep.mubr.f32.mxu0 0.0
  %7718 = vmatmul.mubr.f32.gmra.mxu0 %v7651
  %v7719 = vpop.f32.mrf.mxu0
  %v7720 = vadd.f32 0.0, %v7719
  %v7721 = vpop.f32.mrf.mxu0
  %7722 = vdwg.mxu0
  %v7723 = vadd.f32 %v7559, %v7720
  %s7724 = scalar_lea.vmem %s7, 144
  %v7725 = vld [vmem:[%s7724] sm:$0xff]
  %v7726 = vld [vmem:[%s7724 + $0x8] sm:$0xff]
  %7727 = vmatprep.subr.mxu0 0.0
  %7728 = vmatpush1.msra.mxu0 0.0
  %7729 = vmatprep.subr.mxu0 0.0
  %7730 = vmatpush1.msra.mxu0 0.0
  %7731 = vmatprep.subr.mxu0 0.0
  %7732 = vmatpush1.msra.mxu0 0.0
  %7733 = vmatprep.subr.mxu0 0.0
  %7734 = vmatpush1.msra.mxu0 0.0
  %7735 = vmatprep.subr.mxu0 0.0
  %7736 = vmatpush1.msra.mxu0 0.0
  %7737 = vmatprep.subr.mxu0 0.0
  %7738 = vmatpush1.msra.mxu0 0.0
  %7739 = vmatprep.subr.mxu0 0.0
  %7740 = vmatpush1.msra.mxu0 0.0
  %7741 = vmatprep.subr.mxu0 0.0
  %7742 = vmatpush1.msra.mxu0 0.0
  %7743 = vmatprep.subr.mxu0 0.0
  %7744 = vmatpush1.msra.mxu0 0.0
  %7745 = vmatprep.subr.mxu0 0.0
  %7746 = vmatpush1.msra.mxu0 0.0
  %7747 = vmatprep.subr.mxu0 0.0
  %7748 = vmatpush1.msra.mxu0 0.0
  %7749 = vmatprep.subr.mxu0 0.0
  %7750 = vmatpush1.msra.mxu0 0.0
  %7751 = vmatprep.subr.mxu0 0.0
  %7752 = vmatpush1.msra.mxu0 0.0
  %7753 = vmatprep.subr.mxu0 0.0
  %7754 = vmatpush1.msra.mxu0 0.0
  %7755 = vmatprep.subr.mxu0 0.0
  %7756 = vmatpush1.msra.mxu0 %v7726
  %7757 = vmatprep.subr.mxu0 0.0
  %7758 = vmatpush1.msra.mxu0 %v7725
  %7759 = vmatprep.subr.mxu0 0.0
  %7760 = vmatpush2.msra.mxu0 0.0
  %7761 = vmatprep.subr.mxu0 0.0
  %7762 = vmatpush2.msra.mxu0 0.0
  %7763 = vmatprep.subr.mxu0 0.0
  %7764 = vmatpush2.msra.mxu0 0.0
  %7765 = vmatprep.subr.mxu0 0.0
  %7766 = vmatpush2.msra.mxu0 0.0
  %7767 = vmatprep.subr.mxu0 0.0
  %7768 = vmatpush2.msra.mxu0 0.0
  %7769 = vmatprep.subr.mxu0 0.0
  %7770 = vmatpush2.msra.mxu0 0.0
  %7771 = vmatprep.subr.mxu0 0.0
  %7772 = vmatpush2.msra.mxu0 0.0
  %7773 = vmatprep.subr.mxu0 0.0
  %7774 = vmatpush2.msra.mxu0 0.0
  %7775 = vmatprep.subr.mxu0 0.0
  %7776 = vmatpush2.msra.mxu0 0.0
  %7777 = vmatprep.subr.mxu0 0.0
  %7778 = vmatpush2.msra.mxu0 0.0
  %7779 = vmatprep.subr.mxu0 0.0
  %7780 = vmatpush2.msra.mxu0 0.0
  %7781 = vmatprep.subr.mxu0 0.0
  %7782 = vmatpush2.msra.mxu0 0.0
  %7783 = vmatprep.subr.mxu0 0.0
  %7784 = vmatpush2.msra.mxu0 0.0
  %7785 = vmatprep.subr.mxu0 0.0
  %7786 = vmatpush2.msra.mxu0 0.0
  %7787 = vmatprep.subr.mxu0 0.0
  %7788 = vmatpush2.msra.mxu0 0.0
  %7789 = vmatprep.subr.mxu0 0.0
  %7790 = vmatpush2.msra.mxu0 0.0
  %7791 = vmatprep.mubr.f32.mxu0 0.0
  %7792 = vmatmul.mubr.f32.gmra.mxu0 %v6242
  %v7793 = vpop.f32.mrf.mxu0
  %v7794 = vadd.f32 0.0, %v7793
  %v7795 = vpop.f32.mrf.mxu0
  %7796 = vmatprep.mubr.f32.mxu0 0.0
  %7797 = vmatmul.mubr.f32.gmra.mxu0 %v6245
  %v7798 = vpop.f32.mrf.mxu0
  %v7799 = vadd.f32 0.0, %v7798
  %v7800 = vpop.f32.mrf.mxu0
  %7801 = vmatprep.mubr.f32.mxu0 0.0
  %7802 = vmatmul.mubr.f32.gmra.mxu0 %v6248
  %v7803 = vpop.f32.mrf.mxu0
  %v7804 = vadd.f32 0.0, %v7803
  %v7805 = vpop.f32.mrf.mxu0
  %7806 = vmatprep.mubr.f32.mxu0 0.0
  %7807 = vmatmul.mubr.f32.gmra.mxu0 %v6251
  %v7808 = vpop.f32.mrf.mxu0
  %v7809 = vadd.f32 0.0, %v7808
  %v7810 = vpop.f32.mrf.mxu0
  %7811 = vdwg.mxu0
  %s7812 = scalar_lea.vmem %s8, 18
  %v7813 = vld [vmem:[%s7812] sm:$0x3]
  %v7815 = vsel %vm6429, %v7813, 0
  %7817 = vmatprep.subr.mxu0 0.0
  %7818 = vmatpush1.msra.mxu0 0.0
  %7819 = vmatprep.subr.mxu0 0.0
  %7820 = vmatpush1.msra.mxu0 0.0
  %7821 = vmatprep.subr.mxu0 0.0
  %7822 = vmatpush1.msra.mxu0 0.0
  %7823 = vmatprep.subr.mxu0 0.0
  %7824 = vmatpush1.msra.mxu0 0.0
  %7825 = vmatprep.subr.mxu0 0.0
  %7826 = vmatpush1.msra.mxu0 0.0
  %7827 = vmatprep.subr.mxu0 0.0
  %7828 = vmatpush1.msra.mxu0 0.0
  %7829 = vmatprep.subr.mxu0 0.0
  %7830 = vmatpush1.msra.mxu0 0.0
  %7831 = vmatprep.subr.mxu0 0.0
  %7832 = vmatpush1.msra.mxu0 0.0
  %7833 = vmatprep.subr.mxu0 0.0
  %7834 = vmatpush1.msra.mxu0 0.0
  %7835 = vmatprep.subr.mxu0 0.0
  %7836 = vmatpush1.msra.mxu0 0.0
  %7837 = vmatprep.subr.mxu0 0.0
  %7838 = vmatpush1.msra.mxu0 0.0
  %7839 = vmatprep.subr.mxu0 0.0
  %7840 = vmatpush1.msra.mxu0 0.0
  %7841 = vmatprep.subr.mxu0 0.0
  %7842 = vmatpush1.msra.mxu0 %v7809
  %7843 = vmatprep.subr.mxu0 0.0
  %7844 = vmatpush1.msra.mxu0 %v7804
  %7845 = vmatprep.subr.mxu0 0.0
  %7846 = vmatpush1.msra.mxu0 %v7799
  %7847 = vmatprep.subr.mxu0 0.0
  %7848 = vmatpush1.msra.mxu0 %v7794
  %7849 = vmatprep.subr.mxu0 0.0
  %7850 = vmatpush2.msra.mxu0 0.0
  %7851 = vmatprep.subr.mxu0 0.0
  %7852 = vmatpush2.msra.mxu0 0.0
  %7853 = vmatprep.subr.mxu0 0.0
  %7854 = vmatpush2.msra.mxu0 0.0
  %7855 = vmatprep.subr.mxu0 0.0
  %7856 = vmatpush2.msra.mxu0 0.0
  %7857 = vmatprep.subr.mxu0 0.0
  %7858 = vmatpush2.msra.mxu0 0.0
  %7859 = vmatprep.subr.mxu0 0.0
  %7860 = vmatpush2.msra.mxu0 0.0
  %7861 = vmatprep.subr.mxu0 0.0
  %7862 = vmatpush2.msra.mxu0 0.0
  %7863 = vmatprep.subr.mxu0 0.0
  %7864 = vmatpush2.msra.mxu0 0.0
  %7865 = vmatprep.subr.mxu0 0.0
  %7866 = vmatpush2.msra.mxu0 0.0
  %7867 = vmatprep.subr.mxu0 0.0
  %7868 = vmatpush2.msra.mxu0 0.0
  %7869 = vmatprep.subr.mxu0 0.0
  %7870 = vmatpush2.msra.mxu0 0.0
  %7871 = vmatprep.subr.mxu0 0.0
  %7872 = vmatpush2.msra.mxu0 0.0
  %7873 = vmatprep.subr.mxu0 0.0
  %7874 = vmatpush2.msra.mxu0 0.0
  %7875 = vmatprep.subr.mxu0 0.0
  %7876 = vmatpush2.msra.mxu0 0.0
  %7877 = vmatprep.subr.mxu0 0.0
  %7878 = vmatpush2.msra.mxu0 0.0
  %7879 = vmatprep.subr.mxu0 0.0
  %7880 = vmatpush2.msra.mxu0 0.0
  %7881 = vmatprep.mubr.f32.mxu0 0.0
  %7882 = vmatmul.mubr.f32.gmra.mxu0 %v7815
  %v7883 = vpop.f32.mrf.mxu0
  %v7884 = vadd.f32 0.0, %v7883
  %v7885 = vpop.f32.mrf.mxu0
  %7886 = vdwg.mxu0
  %v7887 = vadd.f32 %v7723, %v7884
  %s7888 = scalar_lea.vmem %s7, 160
  %v7889 = vld [vmem:[%s7888] sm:$0xff]
  %v7890 = vld [vmem:[%s7888 + $0x8] sm:$0xff]
  %7891 = vmatprep.subr.mxu0 0.0
  %7892 = vmatpush1.msra.mxu0 0.0
  %7893 = vmatprep.subr.mxu0 0.0
  %7894 = vmatpush1.msra.mxu0 0.0
  %7895 = vmatprep.subr.mxu0 0.0
  %7896 = vmatpush1.msra.mxu0 0.0
  %7897 = vmatprep.subr.mxu0 0.0
  %7898 = vmatpush1.msra.mxu0 0.0
  %7899 = vmatprep.subr.mxu0 0.0
  %7900 = vmatpush1.msra.mxu0 0.0
  %7901 = vmatprep.subr.mxu0 0.0
  %7902 = vmatpush1.msra.mxu0 0.0
  %7903 = vmatprep.subr.mxu0 0.0
  %7904 = vmatpush1.msra.mxu0 0.0
  %7905 = vmatprep.subr.mxu0 0.0
  %7906 = vmatpush1.msra.mxu0 0.0
  %7907 = vmatprep.subr.mxu0 0.0
  %7908 = vmatpush1.msra.mxu0 0.0
  %7909 = vmatprep.subr.mxu0 0.0
  %7910 = vmatpush1.msra.mxu0 0.0
  %7911 = vmatprep.subr.mxu0 0.0
  %7912 = vmatpush1.msra.mxu0 0.0
  %7913 = vmatprep.subr.mxu0 0.0
  %7914 = vmatpush1.msra.mxu0 0.0
  %7915 = vmatprep.subr.mxu0 0.0
  %7916 = vmatpush1.msra.mxu0 0.0
  %7917 = vmatprep.subr.mxu0 0.0
  %7918 = vmatpush1.msra.mxu0 0.0
  %7919 = vmatprep.subr.mxu0 0.0
  %7920 = vmatpush1.msra.mxu0 %v7890
  %7921 = vmatprep.subr.mxu0 0.0
  %7922 = vmatpush1.msra.mxu0 %v7889
  %7923 = vmatprep.subr.mxu0 0.0
  %7924 = vmatpush2.msra.mxu0 0.0
  %7925 = vmatprep.subr.mxu0 0.0
  %7926 = vmatpush2.msra.mxu0 0.0
  %7927 = vmatprep.subr.mxu0 0.0
  %7928 = vmatpush2.msra.mxu0 0.0
  %7929 = vmatprep.subr.mxu0 0.0
  %7930 = vmatpush2.msra.mxu0 0.0
  %7931 = vmatprep.subr.mxu0 0.0
  %7932 = vmatpush2.msra.mxu0 0.0
  %7933 = vmatprep.subr.mxu0 0.0
  %7934 = vmatpush2.msra.mxu0 0.0
  %7935 = vmatprep.subr.mxu0 0.0
  %7936 = vmatpush2.msra.mxu0 0.0
  %7937 = vmatprep.subr.mxu0 0.0
  %7938 = vmatpush2.msra.mxu0 0.0
  %7939 = vmatprep.subr.mxu0 0.0
  %7940 = vmatpush2.msra.mxu0 0.0
  %7941 = vmatprep.subr.mxu0 0.0
  %7942 = vmatpush2.msra.mxu0 0.0
  %7943 = vmatprep.subr.mxu0 0.0
  %7944 = vmatpush2.msra.mxu0 0.0
  %7945 = vmatprep.subr.mxu0 0.0
  %7946 = vmatpush2.msra.mxu0 0.0
  %7947 = vmatprep.subr.mxu0 0.0
  %7948 = vmatpush2.msra.mxu0 0.0
  %7949 = vmatprep.subr.mxu0 0.0
  %7950 = vmatpush2.msra.mxu0 0.0
  %7951 = vmatprep.subr.mxu0 0.0
  %7952 = vmatpush2.msra.mxu0 0.0
  %7953 = vmatprep.subr.mxu0 0.0
  %7954 = vmatpush2.msra.mxu0 0.0
  %7955 = vmatprep.mubr.f32.mxu0 0.0
  %7956 = vmatmul.mubr.f32.gmra.mxu0 %v6242
  %v7957 = vpop.f32.mrf.mxu0
  %v7958 = vadd.f32 0.0, %v7957
  %v7959 = vpop.f32.mrf.mxu0
  %7960 = vmatprep.mubr.f32.mxu0 0.0
  %7961 = vmatmul.mubr.f32.gmra.mxu0 %v6245
  %v7962 = vpop.f32.mrf.mxu0
  %v7963 = vadd.f32 0.0, %v7962
  %v7964 = vpop.f32.mrf.mxu0
  %7965 = vmatprep.mubr.f32.mxu0 0.0
  %7966 = vmatmul.mubr.f32.gmra.mxu0 %v6248
  %v7967 = vpop.f32.mrf.mxu0
  %v7968 = vadd.f32 0.0, %v7967
  %v7969 = vpop.f32.mrf.mxu0
  %7970 = vmatprep.mubr.f32.mxu0 0.0
  %7971 = vmatmul.mubr.f32.gmra.mxu0 %v6251
  %v7972 = vpop.f32.mrf.mxu0
  %v7973 = vadd.f32 0.0, %v7972
  %v7974 = vpop.f32.mrf.mxu0
  %7975 = vdwg.mxu0
  %s7976 = scalar_lea.vmem %s8, 20
  %v7977 = vld [vmem:[%s7976] sm:$0x3]
  %v7979 = vsel %vm6429, %v7977, 0
  %7981 = vmatprep.subr.mxu0 0.0
  %7982 = vmatpush1.msra.mxu0 0.0
  %7983 = vmatprep.subr.mxu0 0.0
  %7984 = vmatpush1.msra.mxu0 0.0
  %7985 = vmatprep.subr.mxu0 0.0
  %7986 = vmatpush1.msra.mxu0 0.0
  %7987 = vmatprep.subr.mxu0 0.0
  %7988 = vmatpush1.msra.mxu0 0.0
  %7989 = vmatprep.subr.mxu0 0.0
  %7990 = vmatpush1.msra.mxu0 0.0
  %7991 = vmatprep.subr.mxu0 0.0
  %7992 = vmatpush1.msra.mxu0 0.0
  %7993 = vmatprep.subr.mxu0 0.0
  %7994 = vmatpush1.msra.mxu0 0.0
  %7995 = vmatprep.subr.mxu0 0.0
  %7996 = vmatpush1.msra.mxu0 0.0
  %7997 = vmatprep.subr.mxu0 0.0
  %7998 = vmatpush1.msra.mxu0 0.0
  %7999 = vmatprep.subr.mxu0 0.0
  %8000 = vmatpush1.msra.mxu0 0.0
  %8001 = vmatprep.subr.mxu0 0.0
  %8002 = vmatpush1.msra.mxu0 0.0
  %8003 = vmatprep.subr.mxu0 0.0
  %8004 = vmatpush1.msra.mxu0 0.0
  %8005 = vmatprep.subr.mxu0 0.0
  %8006 = vmatpush1.msra.mxu0 %v7973
  %8007 = vmatprep.subr.mxu0 0.0
  %8008 = vmatpush1.msra.mxu0 %v7968
  %8009 = vmatprep.subr.mxu0 0.0
  %8010 = vmatpush1.msra.mxu0 %v7963
  %8011 = vmatprep.subr.mxu0 0.0
  %8012 = vmatpush1.msra.mxu0 %v7958
  %8013 = vmatprep.subr.mxu0 0.0
  %8014 = vmatpush2.msra.mxu0 0.0
  %8015 = vmatprep.subr.mxu0 0.0
  %8016 = vmatpush2.msra.mxu0 0.0
  %8017 = vmatprep.subr.mxu0 0.0
  %8018 = vmatpush2.msra.mxu0 0.0
  %8019 = vmatprep.subr.mxu0 0.0
  %8020 = vmatpush2.msra.mxu0 0.0
  %8021 = vmatprep.subr.mxu0 0.0
  %8022 = vmatpush2.msra.mxu0 0.0
  %8023 = vmatprep.subr.mxu0 0.0
  %8024 = vmatpush2.msra.mxu0 0.0
  %8025 = vmatprep.subr.mxu0 0.0
  %8026 = vmatpush2.msra.mxu0 0.0
  %8027 = vmatprep.subr.mxu0 0.0
  %8028 = vmatpush2.msra.mxu0 0.0
  %8029 = vmatprep.subr.mxu0 0.0
  %8030 = vmatpush2.msra.mxu0 0.0
  %8031 = vmatprep.subr.mxu0 0.0
  %8032 = vmatpush2.msra.mxu0 0.0
  %8033 = vmatprep.subr.mxu0 0.0
  %8034 = vmatpush2.msra.mxu0 0.0
  %8035 = vmatprep.subr.mxu0 0.0
  %8036 = vmatpush2.msra.mxu0 0.0
  %8037 = vmatprep.subr.mxu0 0.0
  %8038 = vmatpush2.msra.mxu0 0.0
  %8039 = vmatprep.subr.mxu0 0.0
  %8040 = vmatpush2.msra.mxu0 0.0
  %8041 = vmatprep.subr.mxu0 0.0
  %8042 = vmatpush2.msra.mxu0 0.0
  %8043 = vmatprep.subr.mxu0 0.0
  %8044 = vmatpush2.msra.mxu0 0.0
  %8045 = vmatprep.mubr.f32.mxu0 0.0
  %8046 = vmatmul.mubr.f32.gmra.mxu0 %v7979
  %v8047 = vpop.f32.mrf.mxu0
  %v8048 = vadd.f32 0.0, %v8047
  %v8049 = vpop.f32.mrf.mxu0
  %8050 = vdwg.mxu0
  %v8051 = vadd.f32 %v7887, %v8048
  %s8052 = scalar_lea.vmem %s7, 176
  %v8053 = vld [vmem:[%s8052] sm:$0xff]
  %v8054 = vld [vmem:[%s8052 + $0x8] sm:$0xff]
  %8055 = vmatprep.subr.mxu0 0.0
  %8056 = vmatpush1.msra.mxu0 0.0
  %8057 = vmatprep.subr.mxu0 0.0
  %8058 = vmatpush1.msra.mxu0 0.0
  %8059 = vmatprep.subr.mxu0 0.0
  %8060 = vmatpush1.msra.mxu0 0.0
  %8061 = vmatprep.subr.mxu0 0.0
  %8062 = vmatpush1.msra.mxu0 0.0
  %8063 = vmatprep.subr.mxu0 0.0
  %8064 = vmatpush1.msra.mxu0 0.0
  %8065 = vmatprep.subr.mxu0 0.0
  %8066 = vmatpush1.msra.mxu0 0.0
  %8067 = vmatprep.subr.mxu0 0.0
  %8068 = vmatpush1.msra.mxu0 0.0
  %8069 = vmatprep.subr.mxu0 0.0
  %8070 = vmatpush1.msra.mxu0 0.0
  %8071 = vmatprep.subr.mxu0 0.0
  %8072 = vmatpush1.msra.mxu0 0.0
  %8073 = vmatprep.subr.mxu0 0.0
  %8074 = vmatpush1.msra.mxu0 0.0
  %8075 = vmatprep.subr.mxu0 0.0
  %8076 = vmatpush1.msra.mxu0 0.0
  %8077 = vmatprep.subr.mxu0 0.0
  %8078 = vmatpush1.msra.mxu0 0.0
  %8079 = vmatprep.subr.mxu0 0.0
  %8080 = vmatpush1.msra.mxu0 0.0
  %8081 = vmatprep.subr.mxu0 0.0
  %8082 = vmatpush1.msra.mxu0 0.0
  %8083 = vmatprep.subr.mxu0 0.0
  %8084 = vmatpush1.msra.mxu0 %v8054
  %8085 = vmatprep.subr.mxu0 0.0
  %8086 = vmatpush1.msra.mxu0 %v8053
  %8087 = vmatprep.subr.mxu0 0.0
  %8088 = vmatpush2.msra.mxu0 0.0
  %8089 = vmatprep.subr.mxu0 0.0
  %8090 = vmatpush2.msra.mxu0 0.0
  %8091 = vmatprep.subr.mxu0 0.0
  %8092 = vmatpush2.msra.mxu0 0.0
  %8093 = vmatprep.subr.mxu0 0.0
  %8094 = vmatpush2.msra.mxu0 0.0
  %8095 = vmatprep.subr.mxu0 0.0
  %8096 = vmatpush2.msra.mxu0 0.0
  %8097 = vmatprep.subr.mxu0 0.0
  %8098 = vmatpush2.msra.mxu0 0.0
  %8099 = vmatprep.subr.mxu0 0.0
  %8100 = vmatpush2.msra.mxu0 0.0
  %8101 = vmatprep.subr.mxu0 0.0
  %8102 = vmatpush2.msra.mxu0 0.0
  %8103 = vmatprep.subr.mxu0 0.0
  %8104 = vmatpush2.msra.mxu0 0.0
  %8105 = vmatprep.subr.mxu0 0.0
  %8106 = vmatpush2.msra.mxu0 0.0
  %8107 = vmatprep.subr.mxu0 0.0
  %8108 = vmatpush2.msra.mxu0 0.0
  %8109 = vmatprep.subr.mxu0 0.0
  %8110 = vmatpush2.msra.mxu0 0.0
  %8111 = vmatprep.subr.mxu0 0.0
  %8112 = vmatpush2.msra.mxu0 0.0
  %8113 = vmatprep.subr.mxu0 0.0
  %8114 = vmatpush2.msra.mxu0 0.0
  %8115 = vmatprep.subr.mxu0 0.0
  %8116 = vmatpush2.msra.mxu0 0.0
  %8117 = vmatprep.subr.mxu0 0.0
  %8118 = vmatpush2.msra.mxu0 0.0
  %8119 = vmatprep.mubr.f32.mxu0 0.0
  %8120 = vmatmul.mubr.f32.gmra.mxu0 %v6242
  %v8121 = vpop.f32.mrf.mxu0
  %v8122 = vadd.f32 0.0, %v8121
  %v8123 = vpop.f32.mrf.mxu0
  %8124 = vmatprep.mubr.f32.mxu0 0.0
  %8125 = vmatmul.mubr.f32.gmra.mxu0 %v6245
  %v8126 = vpop.f32.mrf.mxu0
  %v8127 = vadd.f32 0.0, %v8126
  %v8128 = vpop.f32.mrf.mxu0
  %8129 = vmatprep.mubr.f32.mxu0 0.0
  %8130 = vmatmul.mubr.f32.gmra.mxu0 %v6248
  %v8131 = vpop.f32.mrf.mxu0
  %v8132 = vadd.f32 0.0, %v8131
  %v8133 = vpop.f32.mrf.mxu0
  %8134 = vmatprep.mubr.f32.mxu0 0.0
  %8135 = vmatmul.mubr.f32.gmra.mxu0 %v6251
  %v8136 = vpop.f32.mrf.mxu0
  %v8137 = vadd.f32 0.0, %v8136
  %v8138 = vpop.f32.mrf.mxu0
  %8139 = vdwg.mxu0
  %s8140 = scalar_lea.vmem %s8, 22
  %v8141 = vld [vmem:[%s8140] sm:$0x3]
  %v8143 = vsel %vm6429, %v8141, 0
  %8145 = vmatprep.subr.mxu0 0.0
  %8146 = vmatpush1.msra.mxu0 0.0
  %8147 = vmatprep.subr.mxu0 0.0
  %8148 = vmatpush1.msra.mxu0 0.0
  %8149 = vmatprep.subr.mxu0 0.0
  %8150 = vmatpush1.msra.mxu0 0.0
  %8151 = vmatprep.subr.mxu0 0.0
  %8152 = vmatpush1.msra.mxu0 0.0
  %8153 = vmatprep.subr.mxu0 0.0
  %8154 = vmatpush1.msra.mxu0 0.0
  %8155 = vmatprep.subr.mxu0 0.0
  %8156 = vmatpush1.msra.mxu0 0.0
  %8157 = vmatprep.subr.mxu0 0.0
  %8158 = vmatpush1.msra.mxu0 0.0
  %8159 = vmatprep.subr.mxu0 0.0
  %8160 = vmatpush1.msra.mxu0 0.0
  %8161 = vmatprep.subr.mxu0 0.0
  %8162 = vmatpush1.msra.mxu0 0.0
  %8163 = vmatprep.subr.mxu0 0.0
  %8164 = vmatpush1.msra.mxu0 0.0
  %8165 = vmatprep.subr.mxu0 0.0
  %8166 = vmatpush1.msra.mxu0 0.0
  %8167 = vmatprep.subr.mxu0 0.0
  %8168 = vmatpush1.msra.mxu0 0.0
  %8169 = vmatprep.subr.mxu0 0.0
  %8170 = vmatpush1.msra.mxu0 %v8137
  %8171 = vmatprep.subr.mxu0 0.0
  %8172 = vmatpush1.msra.mxu0 %v8132
  %8173 = vmatprep.subr.mxu0 0.0
  %8174 = vmatpush1.msra.mxu0 %v8127
  %8175 = vmatprep.subr.mxu0 0.0
  %8176 = vmatpush1.msra.mxu0 %v8122
  %8177 = vmatprep.subr.mxu0 0.0
  %8178 = vmatpush2.msra.mxu0 0.0
  %8179 = vmatprep.subr.mxu0 0.0
  %8180 = vmatpush2.msra.mxu0 0.0
  %8181 = vmatprep.subr.mxu0 0.0
  %8182 = vmatpush2.msra.mxu0 0.0
  %8183 = vmatprep.subr.mxu0 0.0
  %8184 = vmatpush2.msra.mxu0 0.0
  %8185 = vmatprep.subr.mxu0 0.0
  %8186 = vmatpush2.msra.mxu0 0.0
  %8187 = vmatprep.subr.mxu0 0.0
  %8188 = vmatpush2.msra.mxu0 0.0
  %8189 = vmatprep.subr.mxu0 0.0
  %8190 = vmatpush2.msra.mxu0 0.0
  %8191 = vmatprep.subr.mxu0 0.0
  %8192 = vmatpush2.msra.mxu0 0.0
  %8193 = vmatprep.subr.mxu0 0.0
  %8194 = vmatpush2.msra.mxu0 0.0
  %8195 = vmatprep.subr.mxu0 0.0
  %8196 = vmatpush2.msra.mxu0 0.0
  %8197 = vmatprep.subr.mxu0 0.0
  %8198 = vmatpush2.msra.mxu0 0.0
  %8199 = vmatprep.subr.mxu0 0.0
  %8200 = vmatpush2.msra.mxu0 0.0
  %8201 = vmatprep.subr.mxu0 0.0
  %8202 = vmatpush2.msra.mxu0 0.0
  %8203 = vmatprep.subr.mxu0 0.0
  %8204 = vmatpush2.msra.mxu0 0.0
  %8205 = vmatprep.subr.mxu0 0.0
  %8206 = vmatpush2.msra.mxu0 0.0
  %8207 = vmatprep.subr.mxu0 0.0
  %8208 = vmatpush2.msra.mxu0 0.0
  %8209 = vmatprep.mubr.f32.mxu0 0.0
  %8210 = vmatmul.mubr.f32.gmra.mxu0 %v8143
  %v8211 = vpop.f32.mrf.mxu0
  %v8212 = vadd.f32 0.0, %v8211
  %v8213 = vpop.f32.mrf.mxu0
  %8214 = vdwg.mxu0
  %v8215 = vadd.f32 %v8051, %v8212
  %s8216 = scalar_lea.vmem %s7, 192
  %v8217 = vld [vmem:[%s8216] sm:$0xff]
  %v8218 = vld [vmem:[%s8216 + $0x8] sm:$0xff]
  %8219 = vmatprep.subr.mxu0 0.0
  %8220 = vmatpush1.msra.mxu0 0.0
  %8221 = vmatprep.subr.mxu0 0.0
  %8222 = vmatpush1.msra.mxu0 0.0
  %8223 = vmatprep.subr.mxu0 0.0
  %8224 = vmatpush1.msra.mxu0 0.0
  %8225 = vmatprep.subr.mxu0 0.0
  %8226 = vmatpush1.msra.mxu0 0.0
  %8227 = vmatprep.subr.mxu0 0.0
  %8228 = vmatpush1.msra.mxu0 0.0
  %8229 = vmatprep.subr.mxu0 0.0
  %8230 = vmatpush1.msra.mxu0 0.0
  %8231 = vmatprep.subr.mxu0 0.0
  %8232 = vmatpush1.msra.mxu0 0.0
  %8233 = vmatprep.subr.mxu0 0.0
  %8234 = vmatpush1.msra.mxu0 0.0
  %8235 = vmatprep.subr.mxu0 0.0
  %8236 = vmatpush1.msra.mxu0 0.0
  %8237 = vmatprep.subr.mxu0 0.0
  %8238 = vmatpush1.msra.mxu0 0.0
  %8239 = vmatprep.subr.mxu0 0.0
  %8240 = vmatpush1.msra.mxu0 0.0
  %8241 = vmatprep.subr.mxu0 0.0
  %8242 = vmatpush1.msra.mxu0 0.0
  %8243 = vmatprep.subr.mxu0 0.0
  %8244 = vmatpush1.msra.mxu0 0.0
  %8245 = vmatprep.subr.mxu0 0.0
  %8246 = vmatpush1.msra.mxu0 0.0
  %8247 = vmatprep.subr.mxu0 0.0
  %8248 = vmatpush1.msra.mxu0 %v8218
  %8249 = vmatprep.subr.mxu0 0.0
  %8250 = vmatpush1.msra.mxu0 %v8217
  %8251 = vmatprep.subr.mxu0 0.0
  %8252 = vmatpush2.msra.mxu0 0.0
  %8253 = vmatprep.subr.mxu0 0.0
  %8254 = vmatpush2.msra.mxu0 0.0
  %8255 = vmatprep.subr.mxu0 0.0
  %8256 = vmatpush2.msra.mxu0 0.0
  %8257 = vmatprep.subr.mxu0 0.0
  %8258 = vmatpush2.msra.mxu0 0.0
  %8259 = vmatprep.subr.mxu0 0.0
  %8260 = vmatpush2.msra.mxu0 0.0
  %8261 = vmatprep.subr.mxu0 0.0
  %8262 = vmatpush2.msra.mxu0 0.0
  %8263 = vmatprep.subr.mxu0 0.0
  %8264 = vmatpush2.msra.mxu0 0.0
  %8265 = vmatprep.subr.mxu0 0.0
  %8266 = vmatpush2.msra.mxu0 0.0
  %8267 = vmatprep.subr.mxu0 0.0
  %8268 = vmatpush2.msra.mxu0 0.0
  %8269 = vmatprep.subr.mxu0 0.0
  %8270 = vmatpush2.msra.mxu0 0.0
  %8271 = vmatprep.subr.mxu0 0.0
  %8272 = vmatpush2.msra.mxu0 0.0
  %8273 = vmatprep.subr.mxu0 0.0
  %8274 = vmatpush2.msra.mxu0 0.0
  %8275 = vmatprep.subr.mxu0 0.0
  %8276 = vmatpush2.msra.mxu0 0.0
  %8277 = vmatprep.subr.mxu0 0.0
  %8278 = vmatpush2.msra.mxu0 0.0
  %8279 = vmatprep.subr.mxu0 0.0
  %8280 = vmatpush2.msra.mxu0 0.0
  %8281 = vmatprep.subr.mxu0 0.0
  %8282 = vmatpush2.msra.mxu0 0.0
  %8283 = vmatprep.mubr.f32.mxu0 0.0
  %8284 = vmatmul.mubr.f32.gmra.mxu0 %v6242
  %v8285 = vpop.f32.mrf.mxu0
  %v8286 = vadd.f32 0.0, %v8285
  %v8287 = vpop.f32.mrf.mxu0
  %8288 = vmatprep.mubr.f32.mxu0 0.0
  %8289 = vmatmul.mubr.f32.gmra.mxu0 %v6245
  %v8290 = vpop.f32.mrf.mxu0
  %v8291 = vadd.f32 0.0, %v8290
  %v8292 = vpop.f32.mrf.mxu0
  %8293 = vmatprep.mubr.f32.mxu0 0.0
  %8294 = vmatmul.mubr.f32.gmra.mxu0 %v6248
  %v8295 = vpop.f32.mrf.mxu0
  %v8296 = vadd.f32 0.0, %v8295
  %v8297 = vpop.f32.mrf.mxu0
  %8298 = vmatprep.mubr.f32.mxu0 0.0
  %8299 = vmatmul.mubr.f32.gmra.mxu0 %v6251
  %v8300 = vpop.f32.mrf.mxu0
  %v8301 = vadd.f32 0.0, %v8300
  %v8302 = vpop.f32.mrf.mxu0
  %8303 = vdwg.mxu0
  %s8304 = scalar_lea.vmem %s8, 24
  %v8305 = vld [vmem:[%s8304] sm:$0x3]
  %v8307 = vsel %vm6429, %v8305, 0
  %8309 = vmatprep.subr.mxu0 0.0
  %8310 = vmatpush1.msra.mxu0 0.0
  %8311 = vmatprep.subr.mxu0 0.0
  %8312 = vmatpush1.msra.mxu0 0.0
  %8313 = vmatprep.subr.mxu0 0.0
  %8314 = vmatpush1.msra.mxu0 0.0
  %8315 = vmatprep.subr.mxu0 0.0
  %8316 = vmatpush1.msra.mxu0 0.0
  %8317 = vmatprep.subr.mxu0 0.0
  %8318 = vmatpush1.msra.mxu0 0.0
  %8319 = vmatprep.subr.mxu0 0.0
  %8320 = vmatpush1.msra.mxu0 0.0
  %8321 = vmatprep.subr.mxu0 0.0
  %8322 = vmatpush1.msra.mxu0 0.0
  %8323 = vmatprep.subr.mxu0 0.0
  %8324 = vmatpush1.msra.mxu0 0.0
  %8325 = vmatprep.subr.mxu0 0.0
  %8326 = vmatpush1.msra.mxu0 0.0
  %8327 = vmatprep.subr.mxu0 0.0
  %8328 = vmatpush1.msra.mxu0 0.0
  %8329 = vmatprep.subr.mxu0 0.0
  %8330 = vmatpush1.msra.mxu0 0.0
  %8331 = vmatprep.subr.mxu0 0.0
  %8332 = vmatpush1.msra.mxu0 0.0
  %8333 = vmatprep.subr.mxu0 0.0
  %8334 = vmatpush1.msra.mxu0 %v8301
  %8335 = vmatprep.subr.mxu0 0.0
  %8336 = vmatpush1.msra.mxu0 %v8296
  %8337 = vmatprep.subr.mxu0 0.0
  %8338 = vmatpush1.msra.mxu0 %v8291
  %8339 = vmatprep.subr.mxu0 0.0
  %8340 = vmatpush1.msra.mxu0 %v8286
  %8341 = vmatprep.subr.mxu0 0.0
  %8342 = vmatpush2.msra.mxu0 0.0
  %8343 = vmatprep.subr.mxu0 0.0
  %8344 = vmatpush2.msra.mxu0 0.0
  %8345 = vmatprep.subr.mxu0 0.0
  %8346 = vmatpush2.msra.mxu0 0.0
  %8347 = vmatprep.subr.mxu0 0.0
  %8348 = vmatpush2.msra.mxu0 0.0
  %8349 = vmatprep.subr.mxu0 0.0
  %8350 = vmatpush2.msra.mxu0 0.0
  %8351 = vmatprep.subr.mxu0 0.0
  %8352 = vmatpush2.msra.mxu0 0.0
  %8353 = vmatprep.subr.mxu0 0.0
  %8354 = vmatpush2.msra.mxu0 0.0
  %8355 = vmatprep.subr.mxu0 0.0
  %8356 = vmatpush2.msra.mxu0 0.0
  %8357 = vmatprep.subr.mxu0 0.0
  %8358 = vmatpush2.msra.mxu0 0.0
  %8359 = vmatprep.subr.mxu0 0.0
  %8360 = vmatpush2.msra.mxu0 0.0
  %8361 = vmatprep.subr.mxu0 0.0
  %8362 = vmatpush2.msra.mxu0 0.0
  %8363 = vmatprep.subr.mxu0 0.0
  %8364 = vmatpush2.msra.mxu0 0.0
  %8365 = vmatprep.subr.mxu0 0.0
  %8366 = vmatpush2.msra.mxu0 0.0
  %8367 = vmatprep.subr.mxu0 0.0
  %8368 = vmatpush2.msra.mxu0 0.0
  %8369 = vmatprep.subr.mxu0 0.0
  %8370 = vmatpush2.msra.mxu0 0.0
  %8371 = vmatprep.subr.mxu0 0.0
  %8372 = vmatpush2.msra.mxu0 0.0
  %8373 = vmatprep.mubr.f32.mxu0 0.0
  %8374 = vmatmul.mubr.f32.gmra.mxu0 %v8307
  %v8375 = vpop.f32.mrf.mxu0
  %v8376 = vadd.f32 0.0, %v8375
  %v8377 = vpop.f32.mrf.mxu0
  %8378 = vdwg.mxu0
  %v8379 = vadd.f32 %v8215, %v8376
  %s8380 = scalar_lea.vmem %s7, 208
  %v8381 = vld [vmem:[%s8380] sm:$0xff]
  %v8382 = vld [vmem:[%s8380 + $0x8] sm:$0xff]
  %8383 = vmatprep.subr.mxu0 0.0
  %8384 = vmatpush1.msra.mxu0 0.0
  %8385 = vmatprep.subr.mxu0 0.0
  %8386 = vmatpush1.msra.mxu0 0.0
  %8387 = vmatprep.subr.mxu0 0.0
  %8388 = vmatpush1.msra.mxu0 0.0
  %8389 = vmatprep.subr.mxu0 0.0
  %8390 = vmatpush1.msra.mxu0 0.0
  %8391 = vmatprep.subr.mxu0 0.0
  %8392 = vmatpush1.msra.mxu0 0.0
  %8393 = vmatprep.subr.mxu0 0.0
  %8394 = vmatpush1.msra.mxu0 0.0
  %8395 = vmatprep.subr.mxu0 0.0
  %8396 = vmatpush1.msra.mxu0 0.0
  %8397 = vmatprep.subr.mxu0 0.0
  %8398 = vmatpush1.msra.mxu0 0.0
  %8399 = vmatprep.subr.mxu0 0.0
  %8400 = vmatpush1.msra.mxu0 0.0
  %8401 = vmatprep.subr.mxu0 0.0
  %8402 = vmatpush1.msra.mxu0 0.0
  %8403 = vmatprep.subr.mxu0 0.0
  %8404 = vmatpush1.msra.mxu0 0.0
  %8405 = vmatprep.subr.mxu0 0.0
  %8406 = vmatpush1.msra.mxu0 0.0
  %8407 = vmatprep.subr.mxu0 0.0
  %8408 = vmatpush1.msra.mxu0 0.0
  %8409 = vmatprep.subr.mxu0 0.0
  %8410 = vmatpush1.msra.mxu0 0.0
  %8411 = vmatprep.subr.mxu0 0.0
  %8412 = vmatpush1.msra.mxu0 %v8382
  %8413 = vmatprep.subr.mxu0 0.0
  %8414 = vmatpush1.msra.mxu0 %v8381
  %8415 = vmatprep.subr.mxu0 0.0
  %8416 = vmatpush2.msra.mxu0 0.0
  %8417 = vmatprep.subr.mxu0 0.0
  %8418 = vmatpush2.msra.mxu0 0.0
  %8419 = vmatprep.subr.mxu0 0.0
  %8420 = vmatpush2.msra.mxu0 0.0
  %8421 = vmatprep.subr.mxu0 0.0
  %8422 = vmatpush2.msra.mxu0 0.0
  %8423 = vmatprep.subr.mxu0 0.0
  %8424 = vmatpush2.msra.mxu0 0.0
  %8425 = vmatprep.subr.mxu0 0.0
  %8426 = vmatpush2.msra.mxu0 0.0
  %8427 = vmatprep.subr.mxu0 0.0
  %8428 = vmatpush2.msra.mxu0 0.0
  %8429 = vmatprep.subr.mxu0 0.0
  %8430 = vmatpush2.msra.mxu0 0.0
  %8431 = vmatprep.subr.mxu0 0.0
  %8432 = vmatpush2.msra.mxu0 0.0
  %8433 = vmatprep.subr.mxu0 0.0
  %8434 = vmatpush2.msra.mxu0 0.0
  %8435 = vmatprep.subr.mxu0 0.0
  %8436 = vmatpush2.msra.mxu0 0.0
  %8437 = vmatprep.subr.mxu0 0.0
  %8438 = vmatpush2.msra.mxu0 0.0
  %8439 = vmatprep.subr.mxu0 0.0
  %8440 = vmatpush2.msra.mxu0 0.0
  %8441 = vmatprep.subr.mxu0 0.0
  %8442 = vmatpush2.msra.mxu0 0.0
  %8443 = vmatprep.subr.mxu0 0.0
  %8444 = vmatpush2.msra.mxu0 0.0
  %8445 = vmatprep.subr.mxu0 0.0
  %8446 = vmatpush2.msra.mxu0 0.0
  %8447 = vmatprep.mubr.f32.mxu0 0.0
  %8448 = vmatmul.mubr.f32.gmra.mxu0 %v6242
  %v8449 = vpop.f32.mrf.mxu0
  %v8450 = vadd.f32 0.0, %v8449
  %v8451 = vpop.f32.mrf.mxu0
  %8452 = vmatprep.mubr.f32.mxu0 0.0
  %8453 = vmatmul.mubr.f32.gmra.mxu0 %v6245
  %v8454 = vpop.f32.mrf.mxu0
  %v8455 = vadd.f32 0.0, %v8454
  %v8456 = vpop.f32.mrf.mxu0
  %8457 = vmatprep.mubr.f32.mxu0 0.0
  %8458 = vmatmul.mubr.f32.gmra.mxu0 %v6248
  %v8459 = vpop.f32.mrf.mxu0
  %v8460 = vadd.f32 0.0, %v8459
  %v8461 = vpop.f32.mrf.mxu0
  %8462 = vmatprep.mubr.f32.mxu0 0.0
  %8463 = vmatmul.mubr.f32.gmra.mxu0 %v6251
  %v8464 = vpop.f32.mrf.mxu0
  %v8465 = vadd.f32 0.0, %v8464
  %v8466 = vpop.f32.mrf.mxu0
  %8467 = vdwg.mxu0
  %s8468 = scalar_lea.vmem %s8, 26
  %v8469 = vld [vmem:[%s8468] sm:$0x3]
  %v8471 = vsel %vm6429, %v8469, 0
  %8473 = vmatprep.subr.mxu0 0.0
  %8474 = vmatpush1.msra.mxu0 0.0
  %8475 = vmatprep.subr.mxu0 0.0
  %8476 = vmatpush1.msra.mxu0 0.0
  %8477 = vmatprep.subr.mxu0 0.0
  %8478 = vmatpush1.msra.mxu0 0.0
  %8479 = vmatprep.subr.mxu0 0.0
  %8480 = vmatpush1.msra.mxu0 0.0
  %8481 = vmatprep.subr.mxu0 0.0
  %8482 = vmatpush1.msra.mxu0 0.0
  %8483 = vmatprep.subr.mxu0 0.0
  %8484 = vmatpush1.msra.mxu0 0.0
  %8485 = vmatprep.subr.mxu0 0.0
  %8486 = vmatpush1.msra.mxu0 0.0
  %8487 = vmatprep.subr.mxu0 0.0
  %8488 = vmatpush1.msra.mxu0 0.0
  %8489 = vmatprep.subr.mxu0 0.0
  %8490 = vmatpush1.msra.mxu0 0.0
  %8491 = vmatprep.subr.mxu0 0.0
  %8492 = vmatpush1.msra.mxu0 0.0
  %8493 = vmatprep.subr.mxu0 0.0
  %8494 = vmatpush1.msra.mxu0 0.0
  %8495 = vmatprep.subr.mxu0 0.0
  %8496 = vmatpush1.msra.mxu0 0.0
  %8497 = vmatprep.subr.mxu0 0.0
  %8498 = vmatpush1.msra.mxu0 %v8465
  %8499 = vmatprep.subr.mxu0 0.0
  %8500 = vmatpush1.msra.mxu0 %v8460
  %8501 = vmatprep.subr.mxu0 0.0
  %8502 = vmatpush1.msra.mxu0 %v8455
  %8503 = vmatprep.subr.mxu0 0.0
  %8504 = vmatpush1.msra.mxu0 %v8450
  %8505 = vmatprep.subr.mxu0 0.0
  %8506 = vmatpush2.msra.mxu0 0.0
  %8507 = vmatprep.subr.mxu0 0.0
  %8508 = vmatpush2.msra.mxu0 0.0
  %8509 = vmatprep.subr.mxu0 0.0
  %8510 = vmatpush2.msra.mxu0 0.0
  %8511 = vmatprep.subr.mxu0 0.0
  %8512 = vmatpush2.msra.mxu0 0.0
  %8513 = vmatprep.subr.mxu0 0.0
  %8514 = vmatpush2.msra.mxu0 0.0
  %8515 = vmatprep.subr.mxu0 0.0
  %8516 = vmatpush2.msra.mxu0 0.0
  %8517 = vmatprep.subr.mxu0 0.0
  %8518 = vmatpush2.msra.mxu0 0.0
  %8519 = vmatprep.subr.mxu0 0.0
  %8520 = vmatpush2.msra.mxu0 0.0
  %8521 = vmatprep.subr.mxu0 0.0
  %8522 = vmatpush2.msra.mxu0 0.0
  %8523 = vmatprep.subr.mxu0 0.0
  %8524 = vmatpush2.msra.mxu0 0.0
  %8525 = vmatprep.subr.mxu0 0.0
  %8526 = vmatpush2.msra.mxu0 0.0
  %8527 = vmatprep.subr.mxu0 0.0
  %8528 = vmatpush2.msra.mxu0 0.0
  %8529 = vmatprep.subr.mxu0 0.0
  %8530 = vmatpush2.msra.mxu0 0.0
  %8531 = vmatprep.subr.mxu0 0.0
  %8532 = vmatpush2.msra.mxu0 0.0
  %8533 = vmatprep.subr.mxu0 0.0
  %8534 = vmatpush2.msra.mxu0 0.0
  %8535 = vmatprep.subr.mxu0 0.0
  %8536 = vmatpush2.msra.mxu0 0.0
  %8537 = vmatprep.mubr.f32.mxu0 0.0
  %8538 = vmatmul.mubr.f32.gmra.mxu0 %v8471
  %v8539 = vpop.f32.mrf.mxu0
  %v8540 = vadd.f32 0.0, %v8539
  %v8541 = vpop.f32.mrf.mxu0
  %8542 = vdwg.mxu0
  %v8543 = vadd.f32 %v8379, %v8540
  %s8544 = scalar_lea.vmem %s7, 224
  %v8545 = vld [vmem:[%s8544] sm:$0xff]
  %v8546 = vld [vmem:[%s8544 + $0x8] sm:$0xff]
  %8547 = vmatprep.subr.mxu0 0.0
  %8548 = vmatpush1.msra.mxu0 0.0
  %8549 = vmatprep.subr.mxu0 0.0
  %8550 = vmatpush1.msra.mxu0 0.0
  %8551 = vmatprep.subr.mxu0 0.0
  %8552 = vmatpush1.msra.mxu0 0.0
  %8553 = vmatprep.subr.mxu0 0.0
  %8554 = vmatpush1.msra.mxu0 0.0
  %8555 = vmatprep.subr.mxu0 0.0
  %8556 = vmatpush1.msra.mxu0 0.0
  %8557 = vmatprep.subr.mxu0 0.0
  %8558 = vmatpush1.msra.mxu0 0.0
  %8559 = vmatprep.subr.mxu0 0.0
  %8560 = vmatpush1.msra.mxu0 0.0
  %8561 = vmatprep.subr.mxu0 0.0
  %8562 = vmatpush1.msra.mxu0 0.0
  %8563 = vmatprep.subr.mxu0 0.0
  %8564 = vmatpush1.msra.mxu0 0.0
  %8565 = vmatprep.subr.mxu0 0.0
  %8566 = vmatpush1.msra.mxu0 0.0
  %8567 = vmatprep.subr.mxu0 0.0
  %8568 = vmatpush1.msra.mxu0 0.0
  %8569 = vmatprep.subr.mxu0 0.0
  %8570 = vmatpush1.msra.mxu0 0.0
  %8571 = vmatprep.subr.mxu0 0.0
  %8572 = vmatpush1.msra.mxu0 0.0
  %8573 = vmatprep.subr.mxu0 0.0
  %8574 = vmatpush1.msra.mxu0 0.0
  %8575 = vmatprep.subr.mxu0 0.0
  %8576 = vmatpush1.msra.mxu0 %v8546
  %8577 = vmatprep.subr.mxu0 0.0
  %8578 = vmatpush1.msra.mxu0 %v8545
  %8579 = vmatprep.subr.mxu0 0.0
  %8580 = vmatpush2.msra.mxu0 0.0
  %8581 = vmatprep.subr.mxu0 0.0
  %8582 = vmatpush2.msra.mxu0 0.0
  %8583 = vmatprep.subr.mxu0 0.0
  %8584 = vmatpush2.msra.mxu0 0.0
  %8585 = vmatprep.subr.mxu0 0.0
  %8586 = vmatpush2.msra.mxu0 0.0
  %8587 = vmatprep.subr.mxu0 0.0
  %8588 = vmatpush2.msra.mxu0 0.0
  %8589 = vmatprep.subr.mxu0 0.0
  %8590 = vmatpush2.msra.mxu0 0.0
  %8591 = vmatprep.subr.mxu0 0.0
  %8592 = vmatpush2.msra.mxu0 0.0
  %8593 = vmatprep.subr.mxu0 0.0
  %8594 = vmatpush2.msra.mxu0 0.0
  %8595 = vmatprep.subr.mxu0 0.0
  %8596 = vmatpush2.msra.mxu0 0.0
  %8597 = vmatprep.subr.mxu0 0.0
  %8598 = vmatpush2.msra.mxu0 0.0
  %8599 = vmatprep.subr.mxu0 0.0
  %8600 = vmatpush2.msra.mxu0 0.0
  %8601 = vmatprep.subr.mxu0 0.0
  %8602 = vmatpush2.msra.mxu0 0.0
  %8603 = vmatprep.subr.mxu0 0.0
  %8604 = vmatpush2.msra.mxu0 0.0
  %8605 = vmatprep.subr.mxu0 0.0
  %8606 = vmatpush2.msra.mxu0 0.0
  %8607 = vmatprep.subr.mxu0 0.0
  %8608 = vmatpush2.msra.mxu0 0.0
  %8609 = vmatprep.subr.mxu0 0.0
  %8610 = vmatpush2.msra.mxu0 0.0
  %8611 = vmatprep.mubr.f32.mxu0 0.0
  %8612 = vmatmul.mubr.f32.gmra.mxu0 %v6242
  %v8613 = vpop.f32.mrf.mxu0
  %v8614 = vadd.f32 0.0, %v8613
  %v8615 = vpop.f32.mrf.mxu0
  %8616 = vmatprep.mubr.f32.mxu0 0.0
  %8617 = vmatmul.mubr.f32.gmra.mxu0 %v6245
  %v8618 = vpop.f32.mrf.mxu0
  %v8619 = vadd.f32 0.0, %v8618
  %v8620 = vpop.f32.mrf.mxu0
  %8621 = vmatprep.mubr.f32.mxu0 0.0
  %8622 = vmatmul.mubr.f32.gmra.mxu0 %v6248
  %v8623 = vpop.f32.mrf.mxu0
  %v8624 = vadd.f32 0.0, %v8623
  %v8625 = vpop.f32.mrf.mxu0
  %8626 = vmatprep.mubr.f32.mxu0 0.0
  %8627 = vmatmul.mubr.f32.gmra.mxu0 %v6251
  %v8628 = vpop.f32.mrf.mxu0
  %v8629 = vadd.f32 0.0, %v8628
  %v8630 = vpop.f32.mrf.mxu0
  %8631 = vdwg.mxu0
  %s8632 = scalar_lea.vmem %s8, 28
  %v8633 = vld [vmem:[%s8632] sm:$0x3]
  %v8635 = vsel %vm6429, %v8633, 0
  %8637 = vmatprep.subr.mxu0 0.0
  %8638 = vmatpush1.msra.mxu0 0.0
  %8639 = vmatprep.subr.mxu0 0.0
  %8640 = vmatpush1.msra.mxu0 0.0
  %8641 = vmatprep.subr.mxu0 0.0
  %8642 = vmatpush1.msra.mxu0 0.0
  %8643 = vmatprep.subr.mxu0 0.0
  %8644 = vmatpush1.msra.mxu0 0.0
  %8645 = vmatprep.subr.mxu0 0.0
  %8646 = vmatpush1.msra.mxu0 0.0
  %8647 = vmatprep.subr.mxu0 0.0
  %8648 = vmatpush1.msra.mxu0 0.0
  %8649 = vmatprep.subr.mxu0 0.0
  %8650 = vmatpush1.msra.mxu0 0.0
  %8651 = vmatprep.subr.mxu0 0.0
  %8652 = vmatpush1.msra.mxu0 0.0
  %8653 = vmatprep.subr.mxu0 0.0
  %8654 = vmatpush1.msra.mxu0 0.0
  %8655 = vmatprep.subr.mxu0 0.0
  %8656 = vmatpush1.msra.mxu0 0.0
  %8657 = vmatprep.subr.mxu0 0.0
  %8658 = vmatpush1.msra.mxu0 0.0
  %8659 = vmatprep.subr.mxu0 0.0
  %8660 = vmatpush1.msra.mxu0 0.0
  %8661 = vmatprep.subr.mxu0 0.0
  %8662 = vmatpush1.msra.mxu0 %v8629
  %8663 = vmatprep.subr.mxu0 0.0
  %8664 = vmatpush1.msra.mxu0 %v8624
  %8665 = vmatprep.subr.mxu0 0.0
  %8666 = vmatpush1.msra.mxu0 %v8619
  %8667 = vmatprep.subr.mxu0 0.0
  %8668 = vmatpush1.msra.mxu0 %v8614
  %8669 = vmatprep.subr.mxu0 0.0
  %8670 = vmatpush2.msra.mxu0 0.0
  %8671 = vmatprep.subr.mxu0 0.0
  %8672 = vmatpush2.msra.mxu0 0.0
  %8673 = vmatprep.subr.mxu0 0.0
  %8674 = vmatpush2.msra.mxu0 0.0
  %8675 = vmatprep.subr.mxu0 0.0
  %8676 = vmatpush2.msra.mxu0 0.0
  %8677 = vmatprep.subr.mxu0 0.0
  %8678 = vmatpush2.msra.mxu0 0.0
  %8679 = vmatprep.subr.mxu0 0.0
  %8680 = vmatpush2.msra.mxu0 0.0
  %8681 = vmatprep.subr.mxu0 0.0
  %8682 = vmatpush2.msra.mxu0 0.0
  %8683 = vmatprep.subr.mxu0 0.0
  %8684 = vmatpush2.msra.mxu0 0.0
  %8685 = vmatprep.subr.mxu0 0.0
  %8686 = vmatpush2.msra.mxu0 0.0
  %8687 = vmatprep.subr.mxu0 0.0
  %8688 = vmatpush2.msra.mxu0 0.0
  %8689 = vmatprep.subr.mxu0 0.0
  %8690 = vmatpush2.msra.mxu0 0.0
  %8691 = vmatprep.subr.mxu0 0.0
  %8692 = vmatpush2.msra.mxu0 0.0
  %8693 = vmatprep.subr.mxu0 0.0
  %8694 = vmatpush2.msra.mxu0 0.0
  %8695 = vmatprep.subr.mxu0 0.0
  %8696 = vmatpush2.msra.mxu0 0.0
  %8697 = vmatprep.subr.mxu0 0.0
  %8698 = vmatpush2.msra.mxu0 0.0
  %8699 = vmatprep.subr.mxu0 0.0
  %8700 = vmatpush2.msra.mxu0 0.0
  %8701 = vmatprep.mubr.f32.mxu0 0.0
  %8702 = vmatmul.mubr.f32.gmra.mxu0 %v8635
  %v8703 = vpop.f32.mrf.mxu0
  %v8704 = vadd.f32 0.0, %v8703
  %v8705 = vpop.f32.mrf.mxu0
  %8706 = vdwg.mxu0
  %v8707 = vadd.f32 %v8543, %v8704
  %s8708 = scalar_lea.vmem %s7, 240
  %v8709 = vld [vmem:[%s8708] sm:$0xff]
  %v8710 = vld [vmem:[%s8708 + $0x8] sm:$0xff]
  %8711 = vmatprep.subr.mxu0 0.0
  %8712 = vmatpush1.msra.mxu0 0.0
  %8713 = vmatprep.subr.mxu0 0.0
  %8714 = vmatpush1.msra.mxu0 0.0
  %8715 = vmatprep.subr.mxu0 0.0
  %8716 = vmatpush1.msra.mxu0 0.0
  %8717 = vmatprep.subr.mxu0 0.0
  %8718 = vmatpush1.msra.mxu0 0.0
  %8719 = vmatprep.subr.mxu0 0.0
  %8720 = vmatpush1.msra.mxu0 0.0
  %8721 = vmatprep.subr.mxu0 0.0
  %8722 = vmatpush1.msra.mxu0 0.0
  %8723 = vmatprep.subr.mxu0 0.0
  %8724 = vmatpush1.msra.mxu0 0.0
  %8725 = vmatprep.subr.mxu0 0.0
  %8726 = vmatpush1.msra.mxu0 0.0
  %8727 = vmatprep.subr.mxu0 0.0
  %8728 = vmatpush1.msra.mxu0 0.0
  %8729 = vmatprep.subr.mxu0 0.0
  %8730 = vmatpush1.msra.mxu0 0.0
  %8731 = vmatprep.subr.mxu0 0.0
  %8732 = vmatpush1.msra.mxu0 0.0
  %8733 = vmatprep.subr.mxu0 0.0
  %8734 = vmatpush1.msra.mxu0 0.0
  %8735 = vmatprep.subr.mxu0 0.0
  %8736 = vmatpush1.msra.mxu0 0.0
  %8737 = vmatprep.subr.mxu0 0.0
  %8738 = vmatpush1.msra.mxu0 0.0
  %8739 = vmatprep.subr.mxu0 0.0
  %8740 = vmatpush1.msra.mxu0 %v8710
  %8741 = vmatprep.subr.mxu0 0.0
  %8742 = vmatpush1.msra.mxu0 %v8709
  %8743 = vmatprep.subr.mxu0 0.0
  %8744 = vmatpush2.msra.mxu0 0.0
  %8745 = vmatprep.subr.mxu0 0.0
  %8746 = vmatpush2.msra.mxu0 0.0
  %8747 = vmatprep.subr.mxu0 0.0
  %8748 = vmatpush2.msra.mxu0 0.0
  %8749 = vmatprep.subr.mxu0 0.0
  %8750 = vmatpush2.msra.mxu0 0.0
  %8751 = vmatprep.subr.mxu0 0.0
  %8752 = vmatpush2.msra.mxu0 0.0
  %8753 = vmatprep.subr.mxu0 0.0
  %8754 = vmatpush2.msra.mxu0 0.0
  %8755 = vmatprep.subr.mxu0 0.0
  %8756 = vmatpush2.msra.mxu0 0.0
  %8757 = vmatprep.subr.mxu0 0.0
  %8758 = vmatpush2.msra.mxu0 0.0
  %8759 = vmatprep.subr.mxu0 0.0
  %8760 = vmatpush2.msra.mxu0 0.0
  %8761 = vmatprep.subr.mxu0 0.0
  %8762 = vmatpush2.msra.mxu0 0.0
  %8763 = vmatprep.subr.mxu0 0.0
  %8764 = vmatpush2.msra.mxu0 0.0
  %8765 = vmatprep.subr.mxu0 0.0
  %8766 = vmatpush2.msra.mxu0 0.0
  %8767 = vmatprep.subr.mxu0 0.0
  %8768 = vmatpush2.msra.mxu0 0.0
  %8769 = vmatprep.subr.mxu0 0.0
  %8770 = vmatpush2.msra.mxu0 0.0
  %8771 = vmatprep.subr.mxu0 0.0
  %8772 = vmatpush2.msra.mxu0 0.0
  %8773 = vmatprep.subr.mxu0 0.0
  %8774 = vmatpush2.msra.mxu0 0.0
  %8775 = vmatprep.mubr.f32.mxu0 0.0
  %8776 = vmatmul.mubr.f32.gmra.mxu0 %v6242
  %v8777 = vpop.f32.mrf.mxu0
  %v8778 = vadd.f32 0.0, %v8777
  %v8779 = vpop.f32.mrf.mxu0
  %8780 = vmatprep.mubr.f32.mxu0 0.0
  %8781 = vmatmul.mubr.f32.gmra.mxu0 %v6245
  %v8782 = vpop.f32.mrf.mxu0
  %v8783 = vadd.f32 0.0, %v8782
  %v8784 = vpop.f32.mrf.mxu0
  %8785 = vmatprep.mubr.f32.mxu0 0.0
  %8786 = vmatmul.mubr.f32.gmra.mxu0 %v6248
  %v8787 = vpop.f32.mrf.mxu0
  %v8788 = vadd.f32 0.0, %v8787
  %v8789 = vpop.f32.mrf.mxu0
  %8790 = vmatprep.mubr.f32.mxu0 0.0
  %8791 = vmatmul.mubr.f32.gmra.mxu0 %v6251
  %v8792 = vpop.f32.mrf.mxu0
  %v8793 = vadd.f32 0.0, %v8792
  %v8794 = vpop.f32.mrf.mxu0
  %8795 = vdwg.mxu0
  %s8796 = scalar_lea.vmem %s8, 30
  %v8797 = vld [vmem:[%s8796] sm:$0x3]
  %v8799 = vsel %vm6429, %v8797, 0
  %8801 = vmatprep.subr.mxu0 0.0
  %8802 = vmatpush1.msra.mxu0 0.0
  %8803 = vmatprep.subr.mxu0 0.0
  %8804 = vmatpush1.msra.mxu0 0.0
  %8805 = vmatprep.subr.mxu0 0.0
  %8806 = vmatpush1.msra.mxu0 0.0
  %8807 = vmatprep.subr.mxu0 0.0
  %8808 = vmatpush1.msra.mxu0 0.0
  %8809 = vmatprep.subr.mxu0 0.0
  %8810 = vmatpush1.msra.mxu0 0.0
  %8811 = vmatprep.subr.mxu0 0.0
  %8812 = vmatpush1.msra.mxu0 0.0
  %8813 = vmatprep.subr.mxu0 0.0
  %8814 = vmatpush1.msra.mxu0 0.0
  %8815 = vmatprep.subr.mxu0 0.0
  %8816 = vmatpush1.msra.mxu0 0.0
  %8817 = vmatprep.subr.mxu0 0.0
  %8818 = vmatpush1.msra.mxu0 0.0
  %8819 = vmatprep.subr.mxu0 0.0
  %8820 = vmatpush1.msra.mxu0 0.0
  %8821 = vmatprep.subr.mxu0 0.0
  %8822 = vmatpush1.msra.mxu0 0.0
  %8823 = vmatprep.subr.mxu0 0.0
  %8824 = vmatpush1.msra.mxu0 0.0
  %8825 = vmatprep.subr.mxu0 0.0
  %8826 = vmatpush1.msra.mxu0 %v8793
  %8827 = vmatprep.subr.mxu0 0.0
  %8828 = vmatpush1.msra.mxu0 %v8788
  %8829 = vmatprep.subr.mxu0 0.0
  %8830 = vmatpush1.msra.mxu0 %v8783
  %8831 = vmatprep.subr.mxu0 0.0
  %8832 = vmatpush1.msra.mxu0 %v8778
  %8833 = vmatprep.subr.mxu0 0.0
  %8834 = vmatpush2.msra.mxu0 0.0
  %8835 = vmatprep.subr.mxu0 0.0
  %8836 = vmatpush2.msra.mxu0 0.0
  %8837 = vmatprep.subr.mxu0 0.0
  %8838 = vmatpush2.msra.mxu0 0.0
  %8839 = vmatprep.subr.mxu0 0.0
  %8840 = vmatpush2.msra.mxu0 0.0
  %8841 = vmatprep.subr.mxu0 0.0
  %8842 = vmatpush2.msra.mxu0 0.0
  %8843 = vmatprep.subr.mxu0 0.0
  %8844 = vmatpush2.msra.mxu0 0.0
  %8845 = vmatprep.subr.mxu0 0.0
  %8846 = vmatpush2.msra.mxu0 0.0
  %8847 = vmatprep.subr.mxu0 0.0
  %8848 = vmatpush2.msra.mxu0 0.0
  %8849 = vmatprep.subr.mxu0 0.0
  %8850 = vmatpush2.msra.mxu0 0.0
  %8851 = vmatprep.subr.mxu0 0.0
  %8852 = vmatpush2.msra.mxu0 0.0
  %8853 = vmatprep.subr.mxu0 0.0
  %8854 = vmatpush2.msra.mxu0 0.0
  %8855 = vmatprep.subr.mxu0 0.0
  %8856 = vmatpush2.msra.mxu0 0.0
  %8857 = vmatprep.subr.mxu0 0.0
  %8858 = vmatpush2.msra.mxu0 0.0
  %8859 = vmatprep.subr.mxu0 0.0
  %8860 = vmatpush2.msra.mxu0 0.0
  %8861 = vmatprep.subr.mxu0 0.0
  %8862 = vmatpush2.msra.mxu0 0.0
  %8863 = vmatprep.subr.mxu0 0.0
  %8864 = vmatpush2.msra.mxu0 0.0
  %8865 = vmatprep.mubr.f32.mxu0 0.0
  %8866 = vmatmul.mubr.f32.gmra.mxu0 %v8799
  %v8867 = vpop.f32.mrf.mxu0
  %v8868 = vadd.f32 0.0, %v8867
  %v8869 = vpop.f32.mrf.mxu0
  %8870 = vdwg.mxu0
  %v8871 = vadd.f32 %v8707, %v8868
  %v8872 = vld [vmem:[%s9] sm:$0x3]
  %8874 = vset.pattern.permute.xlu0 0
  %8875 = vperm.xlu0 %8874, %v8872
  %v8876 = vpop.permute.xlu0 %8875
  %v8878 = vadd.f32 %v8871, %v8876
  %vm8879 = vcmask 66560
  %8880 = vst.msk [vmem:[%s17] sm:$0x3] %vm8879, %v8878
  %v8881 = vld [vmem:[%s10] sm:$0xff]
  %v8882 = vld [vmem:[%s10 + $0x8] sm:$0x1]
  %v8883 = vld [vmem:[#allocation2] sm:$0x1]
  %v8885 = vlaneseq
  %v8886 = vshrl.u32 %v8885, 7
  %v8887 = vsub.s32 0, %v8886
  %v8888 = vrot.slane %v8883, %v8887
  %vm8890 = vcmask 72704
  %v8892 = vsel %vm8890, %v8878, 0
  %vm8894 = vcmask 1040384
  %v8896 = vsel %vm8894, %v8882, 0
  %8898 = vmatprep.subr.mxu0 0.0
  %8899 = vmatpush1.msra.mxu0 0.0
  %8900 = vmatprep.subr.mxu0 0.0
  %8901 = vmatpush1.msra.mxu0 0.0
  %8902 = vmatprep.subr.mxu0 0.0
  %8903 = vmatpush1.msra.mxu0 0.0
  %8904 = vmatprep.subr.mxu0 0.0
  %8905 = vmatpush1.msra.mxu0 0.0
  %8906 = vmatprep.subr.mxu0 0.0
  %8907 = vmatpush1.msra.mxu0 0.0
  %8908 = vmatprep.subr.mxu0 0.0
  %8909 = vmatpush1.msra.mxu0 0.0
  %8910 = vmatprep.subr.mxu0 0.0
  %8911 = vmatpush1.msra.mxu0 0.0
  %8912 = vmatprep.subr.mxu0 0.0
  %8913 = vmatpush1.msra.mxu0 0.0
  %8914 = vmatprep.subr.mxu0 0.0
  %8915 = vmatpush1.msra.mxu0 0.0
  %8916 = vmatprep.subr.mxu0 0.0
  %8917 = vmatpush1.msra.mxu0 0.0
  %8918 = vmatprep.subr.mxu0 0.0
  %8919 = vmatpush1.msra.mxu0 0.0
  %8920 = vmatprep.subr.mxu0 0.0
  %8921 = vmatpush1.msra.mxu0 0.0
  %8922 = vmatprep.subr.mxu0 0.0
  %8923 = vmatpush1.msra.mxu0 0.0
  %8924 = vmatprep.subr.mxu0 0.0
  %8925 = vmatpush1.msra.mxu0 0.0
  %8926 = vmatprep.subr.mxu0 0.0
  %8927 = vmatpush1.msra.mxu0 %v8896
  %8928 = vmatprep.subr.mxu0 0.0
  %8929 = vmatpush1.msra.mxu0 %v8881
  %8930 = vmatprep.subr.mxu0 0.0
  %8931 = vmatpush2.msra.mxu0 0.0
  %8932 = vmatprep.subr.mxu0 0.0
  %8933 = vmatpush2.msra.mxu0 0.0
  %8934 = vmatprep.subr.mxu0 0.0
  %8935 = vmatpush2.msra.mxu0 0.0
  %8936 = vmatprep.subr.mxu0 0.0
  %8937 = vmatpush2.msra.mxu0 0.0
  %8938 = vmatprep.subr.mxu0 0.0
  %8939 = vmatpush2.msra.mxu0 0.0
  %8940 = vmatprep.subr.mxu0 0.0
  %8941 = vmatpush2.msra.mxu0 0.0
  %8942 = vmatprep.subr.mxu0 0.0
  %8943 = vmatpush2.msra.mxu0 0.0
  %8944 = vmatprep.subr.mxu0 0.0
  %8945 = vmatpush2.msra.mxu0 0.0
  %8946 = vmatprep.subr.mxu0 0.0
  %8947 = vmatpush2.msra.mxu0 0.0
  %8948 = vmatprep.subr.mxu0 0.0
  %8949 = vmatpush2.msra.mxu0 0.0
  %8950 = vmatprep.subr.mxu0 0.0
  %8951 = vmatpush2.msra.mxu0 0.0
  %8952 = vmatprep.subr.mxu0 0.0
  %8953 = vmatpush2.msra.mxu0 0.0
  %8954 = vmatprep.subr.mxu0 0.0
  %8955 = vmatpush2.msra.mxu0 0.0
  %8956 = vmatprep.subr.mxu0 0.0
  %8957 = vmatpush2.msra.mxu0 0.0
  %8958 = vmatprep.subr.mxu0 0.0
  %8959 = vmatpush2.msra.mxu0 0.0
  %8960 = vmatprep.subr.mxu0 0.0
  %8961 = vmatpush2.msra.mxu0 0.0
  %8962 = vmatprep.mubr.f32.mxu0 0.0
  %8963 = vmatmul.mubr.f32.gmra.mxu0 %v8892
  %v8964 = vpop.f32.mrf.mxu0
  %v8965 = vadd.f32 %v8888, %v8964
  %v8966 = vpop.f32.mrf.mxu0
  %8967 = vdwg.mxu0
  %vm8968 = vcmask 1024
  %8969 = vst.msk [vmem:[%s18] sm:$0x3] %vm8968, %v8965
  %v8970 = vadd.f32 %v8965, 0.0
  %8971 = vst.msk [vmem:[%s19] sm:$0x3] %vm8968, %v8970
  // Predicated region
  $region50: #{forward.1} parent=0 // pred_check
    _
  $region51: #{forward.1} parent=0 // pred_check_branch
    %8973 = sbr.rel (0) target = $region53
  $region52: #{forward.1} parent=0 // pred_region
    _
  $region53: #{forward.1} parent=0 // pred_fallthru
    _
  // Predicated region
  $region54: #{forward.1} parent=0 // pred_check
    _
  $region55: #{forward.1} parent=0 // pred_check_branch
    %8975 = sbr.rel (0) target = $region57
  $region56: #{forward.1} parent=0 // pred_region
    _
  $region57: #{forward.1} parent=0 // pred_fallthru
    _
  // Predicated region
  $region58: #{forward.1} parent=0 // pred_check
    _
  $region59: #{forward.1} parent=0 // pred_check_branch
    %8977 = sbr.rel (0) target = $region61
  $region60: #{forward.1} parent=0 // pred_region
    _
  $region61: #{forward.1} parent=0 // pred_fallthru
    _
  // Predicated region
  $region62: #{forward.1} parent=0 // pred_check
    _
  $region63: #{forward.1} parent=0 // pred_check_branch
    %8979 = sbr.rel (0) target = $region65
  $region64: #{forward.1} parent=0 // pred_region
    _
  $region65: #{forward.1} parent=0 // pred_fallthru
    _
  // Predicated region
  $region66: #{forward.1} parent=0 // pred_check
    _
  $region67: #{forward.1} parent=0 // pred_check_branch
    %8981 = sbr.rel (0) target = $region69
  $region68: #{forward.1} parent=0 // pred_region
    _
  $region69: #{forward.1} parent=0 // pred_fallthru
    _
  // Predicated region
  $region70: #{forward.1} parent=0 // pred_check
    _
  $region71: #{forward.1} parent=0 // pred_check_branch
    %8983 = sbr.rel (0) target = $region73
  $region72: #{forward.1} parent=0 // pred_region
    _
  $region73: #{forward.1} parent=0 // pred_fallthru
    _
  // Predicated region
  $region74: #{forward.1} parent=0 // pred_check
    _
  $region75: #{forward.1} parent=0 // pred_check_branch
    %8985 = sbr.rel (0) target = $region77
  $region76: #{forward.1} parent=0 // pred_region
    _
  $region77: #{forward.1} parent=0 // pred_fallthru
    _
  // Predicated region
  $region78: #{forward.1} parent=0 // pred_check
    _
  $region79: #{forward.1} parent=0 // pred_check_branch
    %8987 = sbr.rel (0) target = $region81
  $region80: #{forward.1} parent=0 // pred_region
    _
  $region81: #{forward.1} parent=0 // pred_fallthru
    _
  // Predicated region
  $region82: #{forward.1} parent=0 // pred_check
    _
  $region83: #{forward.1} parent=0 // pred_check_branch
    %8989 = sbr.rel (0) target = $region85
  $region84: #{forward.1} parent=0 // pred_region
    _
  $region85: #{forward.1} parent=0 // pred_fallthru
    _
  // Predicated region
  $region86: #{forward.1} parent=0 // pred_check
    _
  $region87: #{forward.1} parent=0 // pred_check_branch
    %8991 = sbr.rel (0) target = $region89
  $region88: #{forward.1} parent=0 // pred_region
    _
  $region89: #{forward.1} parent=0 // pred_fallthru
    _
  // Predicated region
  $region90: #{forward.1} parent=0 // pred_check
    _
  $region91: #{forward.1} parent=0 // pred_check_branch
    %8993 = sbr.rel (0) target = $region93
  $region92: #{forward.1} parent=0 // pred_region
    _
  $region93: #{forward.1} parent=0 // pred_fallthru
    _
  // Predicated region
  $region94: #{forward.1} parent=0 // pred_check
    _
  $region95: #{forward.1} parent=0 // pred_check_branch
    %8995 = sbr.rel (0) target = $region97
  $region96: #{forward.1} parent=0 // pred_region
    _
  $region97: #{forward.1} parent=0 // pred_fallthru
    _
  // Predicated region
  $region98: #{forward.1} parent=0 // pred_check
    _
  $region99: #{forward.1} parent=0 // pred_check_branch
    %8997 = sbr.rel (0) target = $region101
  $region100: #{forward.1} parent=0 // pred_region
    _
  $region101: #{forward.1} parent=0 // pred_fallthru
    _
  // Predicated region
  $region102: #{forward.1} parent=0 // pred_check
    _
  $region103: #{forward.1} parent=0 // pred_check_branch
    %8999 = sbr.rel (0) target = $region105
  $region104: #{forward.1} parent=0 // pred_region
    _
  $region105: #{forward.1} parent=0 // pred_fallthru
    _
  // Predicated region
  $region106: #{forward.1} parent=0 // pred_check
    _
  $region107: #{forward.1} parent=0 // pred_check_branch
    %9001 = sbr.rel (0) target = $region109
  $region108: #{forward.1} parent=0 // pred_region
    _
  $region109: #{forward.1} parent=0 // pred_fallthru
    _
  // Predicated region
  $region110: #{forward.1} parent=0 // pred_check
    _
  $region111: #{forward.1} parent=0 // pred_check_branch
    %9003 = sbr.rel (0) target = $region113
  $region112: #{forward.1} parent=0 // pred_region
    _
  $region113: #{forward.1} parent=0 // pred_fallthru
    _

</llo_original>
